<compile_context>
chip_gen: v7x
topology: tpu7x:2x2x1
jax: 0.10.0
libtpu: 0.0.40
codegen_flags: <defaults>
</compile_context>

<pallas_src>
import functools

import jax
import jax.numpy as jnp
from jax.experimental import pallas as pl
from jax.experimental.pallas import tpu as pltpu

WINDOW_SIZE = 35
NEG_MAX = float(-jnp.finfo(jnp.float32).max)
LN_EPS = 1e-5


def _round_up(v, m):
    return ((v + m - 1) // m) * m


def _layer_norm(x, w, b):
    mu = jnp.mean(x, axis=-1, keepdims=True)
    xc = x - mu
    var = jnp.mean(xc * xc, axis=-1, keepdims=True)
    return xc * jax.lax.rsqrt(var + LN_EPS) * w + b


# --------------------------------------------------------------------------
# Kernel 1: fused PreNorm + qkv + windowed cosine attention + window
#           embeddings (pooled) + out_proj (attention half).
# --------------------------------------------------------------------------
def _attn_we_kernel(x_ref, keep_ref, temp_ref, lnw_ref, lnb_ref,
                    wq_ref, wk_ref, wv_ref, bias_ref,
                    we_in_ref, we_q_ref, we_k_ref, we_v_ref, sinu_ref, wo1_ref,
                    y_ref, pool_ref, *, heads, dim_head, causal):
    x = x_ref[...]                                   # (Wb, n, C)  float32
    keep = keep_ref[...]                             # (Wb, n)     1.0 keep / 0.0 pad
    Wb, n, C = x.shape
    H, D = heads, dim_head
    HD = H * D

    temperature = temp_ref[0]                        # scalar from SMEM

    # broadcast-weight batched matmul: (Wb, m, c) @ (c, k) -> (Wb, m, k)
    def bmm(lhs, w2d):
        wb = jnp.broadcast_to(w2d, (Wb,) + w2d.shape)
        return jnp.einsum('wqc,wck->wqk', lhs, wb,
                          preferred_element_type=jnp.float32)

    # ---- PreNorm (LayerNorm folded into the attention prologue) ----
    h = _layer_norm(x, lnw_ref[...], lnb_ref[...])   # (Wb, n, C)

    # ---- qkv projection (weights pre-split, (head, dim) minor layout) ----
    q = bmm(h, wq_ref[...])                          # (Wb, n, HD)
    k = bmm(h, wk_ref[...])
    v = bmm(h, wv_ref[...])

    # ---- padding (+ causal) mask built in-kernel from the keep vector ----
    keep_q = keep[:, :, None] > 0.5                  # (Wb, n, 1)
    keep_k = keep[:, None, :] > 0.5                  # (Wb, 1, n)
    allow = keep_q & keep_k                          # (Wb, n, n)
    if causal:
        row = jax.lax.broadcasted_iota(jnp.int32, (n, n), 0)
        col = jax.lax.broadcasted_iota(jnp.int32, (n, n), 1)
        allow = allow & (row >= col)[None, :, :]

    bias = bias_ref[...]                             # (H, n, n) dynamic pos bias

    # ---- qk-norm ("cosine") attention, one head at a time (lane slices) ----
    head_outs = []
    for hh in range(H):
        sl = slice(hh * D, (hh + 1) * D)
        qh, kh, vh = q[:, :, sl], k[:, :, sl], v[:, :, sl]       # (Wb, n, D)
        # l2-normalise via rsqrt (EUP); temperature folded into q scaling
        qn = qh * (jax.lax.rsqrt(jnp.sum(qh * qh, axis=-1, keepdims=True) + 1e-12)
                   * temperature)
        kn = kh * jax.lax.rsqrt(jnp.sum(kh * kh, axis=-1, keepdims=True) + 1e-12)
        dots = jnp.einsum('wid,wjd->wij', qn, kn,
                          preferred_element_type=jnp.float32)    # (Wb, n, n)
        dots = dots + bias[hh]
        dots = jnp.where(allow, dots, NEG_MAX)
        p = jax.nn.softmax(dots, axis=-1)
        head_outs.append(jnp.einsum('wij,wjd->wid', p, vh,
                                    preferred_element_type=jnp.float32))
    a = jnp.concatenate(head_outs, axis=-1)          # (Wb, n, HD) lane-dense

    # ---- window_embeddings (pooled 1-query attention), algebraically fused.
    #      linear_in / k_proj / v_proj are bias-free so they commute with the
    #      pooling sums; only (Wb, 1, x) intermediates are materialised. ----
    keep_row = keep[:, None, :]                                       # (Wb, 1, n)
    lengths = jnp.maximum(jnp.sum(keep_row, axis=-1, keepdims=True), 1.0)
    pooled_x = jnp.einsum('wqj,wjc->wqc', keep_row, a,
                          preferred_element_type=jnp.float32) / lengths   # (Wb,1,HD)
    we = jax.nn.relu(bmm(pooled_x, we_in_ref[...]))                   # (Wb, 1, P)
    we_q = bmm(we, we_q_ref[...])                                     # (Wb, 1, P)
    u = bmm(we_q, we_k_ref[...])                                      # (Wb, 1, HD)
    t1 = jnp.einsum('wqc,wjc->wqj', u, a,
                    preferred_element_type=jnp.float32)               # (Wb, 1, n)
    t2 = bmm(we_q, sinu_ref[...])                                     # (Wb, 1, n)
    proj_dim = we_q_ref.shape[0]
    dots_we = (t1 + t2) * (float(proj_dim) ** -0.5)
    dots_we = jnp.where(keep_k, dots_we, NEG_MAX)
    p_we = jax.nn.softmax(dots_we, axis=-1)                           # (Wb, 1, n)
    pooled_av = jnp.einsum('wqj,wjc->wqc', p_we, a,
                           preferred_element_type=jnp.float32)        # (Wb, 1, HD)
    pool_ref[...] = bmm(pooled_av, we_v_ref[...]).astype(pool_ref.dtype)  # (Wb,1,Vd)

    # ---- out_proj, attention-feature half (the window-embedding half is added
    #      after the cross-window shift, outside the kernel). ----
    y_ref[...] = bmm(a, wo1_ref[...]).astype(y_ref.dtype)             # (Wb, n, C)


def cosine_attention_layer(ap, ln_w, ln_b, x, mask, pos_bias, heads, dim_head,
                           causal=True, window_block=8):
    """PreNorm + CosineAttention (windowed) + window_embeddings + out_proj."""
    B, N, C = x.shape
    H, D = heads, dim_head
    HD = H * D
    assert HD == C, "module requires heads * dim_head == dim"
    n = WINDOW_SIZE
    pad_n = (-N) % n
    Np = N + pad_n
    W = Np // n
    BW = B * W

    xp = jnp.pad(x, ((0, 0), (0, pad_n), (0, 0))) if pad_n else x
    mp = (jnp.pad(mask, ((0, 0), (0, pad_n)), constant_values=True)
          if pad_n else mask)
    xw = xp.reshape(BW, n, C)
    keep = (~mp).astype(jnp.float32).reshape(BW, n)

    # block groups of windows per grid step (amortises per-step overhead)
    Wblk = window_block if BW >= window_block else BW
    BWp = _round_up(BW, Wblk)
    if BWp != BW:                      # pad with fully-masked dummy windows
        xw = jnp.pad(xw, ((0, BWp - BW), (0, 0), (0, 0)))
        keep = jnp.pad(keep, ((0, BWp - BW), (0, 0)))

    # ---- host-side weight prep (tiny, folded into the jit graph) ----
    P = C // 2                         # window_embeddings proj_dim
    Vd = C // 4                        # window_embeddings v_dim
    wqkv = ap['wqkv'].reshape(H, D, 3, C)        # rows are laid out as (h, d, qkv)
    wq_t = wqkv[:, :, 0, :].reshape(HD, C).T     # (C, HD), (head, dim) minor
    wk_t = wqkv[:, :, 1, :].reshape(HD, C).T
    wv_t = wqkv[:, :, 2, :].reshape(HD, C).T
    wep = ap['we']
    we_in_t = wep['w_in'].T                      # (HD, P)
    we_q_t = wep['w_q'].T                        # (P, P)
    we_k = wep['w_k']                            # (P, HD)  (used un-transposed)
    we_v_t = wep['w_v'].T                        # (HD, Vd)
    sinu_t = scaled_sinu_embedding(n, P, wep['pos_scale']).T   # (P, n)
    wout = ap['wout']                            # (C, HD + Vd)
    wo1_t = wout[:, :HD].T                       # (HD, C)
    wo2_t = wout[:, HD:].T                       # (Vd, C)

    kernel = functools.partial(_attn_we_kernel, heads=H, dim_head=D,
                               causal=causal)
    const2 = lambda i: (0, 0)

    y1, pool = pl.pallas_call(
        kernel,
        out_shape=(jax.ShapeDtypeStruct((BWp, n, C), jnp.float32),
                   jax.ShapeDtypeStruct((BWp, 1, Vd), jnp.float32)),
        grid=(BWp // Wblk,),
        in_specs=[
            pl.BlockSpec((Wblk, n, C), lambda i: (i, 0, 0)),        # x windows
            pl.BlockSpec((Wblk, n), lambda i: (i, 0)),              # keep vector
            pl.BlockSpec(memory_space=pltpu.MemorySpace.SMEM),      # temperature
            pl.BlockSpec((1, C), const2),                           # ln1 weight
            pl.BlockSpec((1, C), const2),                           # ln1 bias
            pl.BlockSpec((C, HD), const2),                          # Wq
            pl.BlockSpec((C, HD), const2),                          # Wk
            pl.BlockSpec((C, HD), const2),                          # Wv
            pl.BlockSpec((H, n, n), lambda i: (0, 0, 0)),           # position bias
            pl.BlockSpec((HD, P), const2),                          # WE linear_in
            pl.BlockSpec((P, P), const2),                           # WE q_proj
            pl.BlockSpec((P, HD), const2),                          # WE k_proj
            pl.BlockSpec((HD, Vd), const2),                         # WE v_proj
            pl.BlockSpec((P, n), const2),                           # sinu pos (T)
            pl.BlockSpec((HD, C), const2),                          # out_proj[:HD]
        ],
        out_specs=(pl.BlockSpec((Wblk, n, C), lambda i: (i, 0, 0)),
                   pl.BlockSpec((Wblk, 1, Vd), lambda i: (i, 0, 0))),
        compiler_params=pltpu.CompilerParams(
            dimension_semantics=("parallel",)),
    )(xw, keep, ap['temperature'], ln_w[None, :], ln_b[None, :],
      wq_t, wk_t, wv_t, pos_bias, we_in_t, we_q_t, we_k, we_v_t, sinu_t, wo1_t)

    # ---- cross-window shift: window w receives the pooled embedding of w-1
    #      (bos for w == 0), then the WE half of out_proj is added. ----
    y1 = y1[:BW].reshape(B, W, n, C)
    pool = pool[:BW].reshape(B, W, Vd)
    bos = jnp.broadcast_to(wep['bos'].reshape(1, 1, Vd), (B, 1, Vd))
    we_shift = jnp.concatenate([bos, pool[:, :W - 1]], axis=1)      # (B, W, Vd)
    y = y1 + (we_shift @ wo2_t)[:, :, None, :]
    y = y.reshape(B, Np, C)
    if pad_n:
        y = y[:, :N]
    return y


# --------------------------------------------------------------------------
# Kernel 2: fused PreNorm + GLU(SiLU) feed-forward, tiled over rows.
# --------------------------------------------------------------------------
def _glu_ff_kernel(x_ref, lnw_ref, lnb_ref, wa_ref, ba_ref, wg_ref, bg_ref,
                   w2_ref, b2_ref, o_ref):
    h = _layer_norm(x_ref[...], lnw_ref[...], lnb_ref[...])         # (tm, C)
    a = jnp.dot(h, wa_ref[...], preferred_element_type=jnp.float32) + ba_ref[...]
    g = jnp.dot(h, wg_ref[...], preferred_element_type=jnp.float32) + bg_ref[...]
    y = a * (g * jax.nn.sigmoid(g))                                 # GLU, SiLU gate
    o_ref[...] = (jnp.dot(y, w2_ref[...], preferred_element_type=jnp.float32)
                  + b2_ref[...]).astype(o_ref.dtype)


def glu_ff_layer(fp, ln_w, ln_b, x, row_block=512):
    B, N, C = x.shape
    M = B * N
    x2d = x.reshape(M, C)
    Hh = fp['w1'].shape[0] // 2                 # split value / gate halves
    wa_t = fp['w1'][:Hh].T                      # (C, Hh)
    wg_t = fp['w1'][Hh:].T
    ba = fp['b1'][:Hh][None, :]
    bg = fp['b1'][Hh:][None, :]
    w2_t = fp['w2'].T                           # (Hh, C)
    b2 = fp['b2'][None, :]

    tm = min(row_block, _round_up(M, 8))
    const2 = lambda i: (0, 0)
    y = pl.pallas_call(
        _glu_ff_kernel,
        out_shape=jax.ShapeDtypeStruct((M, C), jnp.float32),
        grid=(pl.cdiv(M, tm),),
        in_specs=[pl.BlockSpec((tm, C), lambda i: (i, 0)),
                  pl.BlockSpec((1, C), const2),
                  pl.BlockSpec((1, C), const2),
                  pl.BlockSpec((C, Hh), const2),
                  pl.BlockSpec((1, Hh), const2),
                  pl.BlockSpec((C, Hh), const2),
                  pl.BlockSpec((1, Hh), const2),
                  pl.BlockSpec((Hh, C), const2),
                  pl.BlockSpec((1, C), const2)],
        out_specs=pl.BlockSpec((tm, C), lambda i: (i, 0)),
        compiler_params=pltpu.CompilerParams(
            dimension_semantics=("parallel",)),
    )(x2d, ln_w[None, :], ln_b[None, :], wa_t, ba, wg_t, bg, w2_t, b2)
    return y.reshape(B, N, C)


# --------------------------------------------------------------------------
# Tiny host-side (XLA) helpers, computed once per forward inside the jit.
# --------------------------------------------------------------------------
def dynamic_position_bias(p, n):
    """DynamicPositionBias(dim=dim//4, depth=2, log_distance=False, norm=False)."""
    pos = jnp.arange(-n + 1, n, dtype=jnp.float32)[:, None]          # (2n-1, 1)
    h = jax.nn.relu(pos @ p['w0'].T + p['b0'])
    h = jax.nn.relu(h @ p['w1'].T + p['b1'])
    h = h @ p['w2'].T + p['b2']                                      # (2n-1, heads)
    i = jnp.arange(n)[:, None]
    j = jnp.arange(n)[None, :]
    idx = i - j + n - 1
    bias = h[idx]                                                    # (n, n, heads)
    return jnp.transpose(bias, (2, 0, 1))                            # (heads, n, n)


def scaled_sinu_embedding(n, dim, scale):
    inv_freq = 1.0 / (10000.0 ** (jnp.arange(0, dim, 2, dtype=jnp.float32) / dim))
    t = jnp.arange(n, dtype=jnp.float32)
    sinu = t[:, None] * inv_freq[None, :]
    emb = jnp.concatenate([jnp.sin(sinu), jnp.cos(sinu)], axis=-1)
    return emb * scale


# --------------------------------------------------------------------------
# Forward pass (matches the PyTorch transformer.forward in eval mode).
# --------------------------------------------------------------------------
@functools.partial(jax.jit, static_argnames=("heads", "dim_head", "causal"))
def _transformer_forward(params, x, mask, *, heads, dim_head, causal):
    pos_bias = dynamic_position_bias(params['pos_mlp'], WINDOW_SIZE)  # (H, n, n)
    for lyr in params['layers']:
        x = cosine_attention_layer(lyr['attn'], lyr['ln1_w'], lyr['ln1_b'],
                                   x, mask, pos_bias, heads, dim_head,
                                   causal=causal) + x
        x = glu_ff_layer(lyr['ff'], lyr['ln2_w'], lyr['ln2_b'], x) + x
    return x


def transformer_forward(params, x, mask=None, heads=4, dim_head=16, causal=True):
    B, N, _ = x.shape
    if mask is None:
        mask = jnp.zeros((B, N), dtype=bool)
    out = _transformer_forward(params, x, mask,
                               heads=heads, dim_head=dim_head, causal=causal)
    # no self-conditioning -> intermediate logits is empty (matches torch)
    return out, []


# --------------------------------------------------------------------------
# Deterministic parameter init (PyTorch nn.Linear weight convention).
# --------------------------------------------------------------------------
def init_params(key, dim, depth, heads, dim_head, ff_mult=4):
    keys = iter(jax.random.split(key, 16 + 16 * depth))

    def w(shape, scale=0.02):
        return jax.random.normal(next(keys), shape, dtype=jnp.float32) * scale

    d4 = dim // 4
    inner = heads * dim_head            # == dim in this architecture
    proj_dim = dim // 2
    v_dim = dim // 4
    params = {
        'pos_mlp': {
            'w0': w((d4, 1)), 'b0': jnp.zeros((d4,), jnp.float32),
            'w1': w((d4, d4)), 'b1': jnp.zeros((d4,), jnp.float32),
            'w2': w((heads, d4)), 'b2': jnp.zeros((heads,), jnp.float32),
        },
        'layers': [],
    }
    for _ in range(depth):
        params['layers'].append({
            'ln1_w': jnp.ones((dim,), jnp.float32), 'ln1_b': jnp.zeros((dim,), jnp.float32),
            'ln2_w': jnp.ones((dim,), jnp.float32), 'ln2_b': jnp.zeros((dim,), jnp.float32),
            'attn': {
                'temperature': jnp.full((1,), 15.5, jnp.float32),
                'wqkv': w((3 * inner, dim)),                      # Linear(dim, 3*H*D), no bias
                'wout': w((dim, inner + inner // 4)),             # Linear(H*D + H*D//4, dim), no bias
                'we': {
                    'w_in': w((proj_dim, dim)),
                    'w_q': w((proj_dim, proj_dim)),
                    'w_k': w((proj_dim, dim)),
                    'w_v': w((v_dim, dim)),
                    'pos_scale': jnp.ones((1,), jnp.float32),
                    'bos': jnp.zeros((v_dim,), jnp.float32),      # nn.init.zeros_
                },
            },
            'ff': {
                'w1': w((2 * dim * ff_mult, dim)),
                'b1': jnp.zeros((2 * dim * ff_mult,), jnp.float32),
                'w2': w((dim, dim * ff_mult)),
                'b2': jnp.zeros((dim,), jnp.float32),
            },
        })
    return params


# TODO(synk): dropout and gradient checkpointing are training-only; this forward is eval-mode.

if __name__ == "__main__":
    dim, depth, heads, dim_head = 64, 2, 4, 16     # module requires dim == heads * dim_head
    B, N = 2, 50                                   # padded to 70 = 2 windows of 35
    key = jax.random.PRNGKey(0)
    pkey, xkey = jax.random.split(key)
    params = init_params(pkey, dim, depth, heads, dim_head)
    x = jax.random.normal(xkey, (B, N, dim), dtype=jnp.float32)
    out, _ = transformer_forward(params, x, mask=None, heads=heads, dim_head=dim_head)
    out = jax.block_until_ready(out)
    assert out.shape == (B, N, dim)
    print("KERNEL_OK")
</pallas_src>

<mosaic_0001>
module attributes {stable_mosaic.version = 11 : i64} {
  func.func @_attn_we_kernel(%arg0: i32, %arg1: memref<4x35x64xf32, #tpu.memory_space<vmem>>, %arg2: memref<4x35xf32, #tpu.memory_space<vmem>>, %arg3: memref<1xf32, #tpu.memory_space<smem>>, %arg4: memref<1x64xf32, #tpu.memory_space<vmem>>, %arg5: memref<1x64xf32, #tpu.memory_space<vmem>>, %arg6: memref<64x64xf32, #tpu.memory_space<vmem>>, %arg7: memref<64x64xf32, #tpu.memory_space<vmem>>, %arg8: memref<64x64xf32, #tpu.memory_space<vmem>>, %arg9: memref<4x35x35xf32, #tpu.memory_space<vmem>>, %arg10: memref<64x32xf32, #tpu.memory_space<vmem>>, %arg11: memref<32x32xf32, #tpu.memory_space<vmem>>, %arg12: memref<32x64xf32, #tpu.memory_space<vmem>>, %arg13: memref<64x16xf32, #tpu.memory_space<vmem>>, %arg14: memref<32x35xf32, #tpu.memory_space<vmem>>, %arg15: memref<64x64xf32, #tpu.memory_space<vmem>>, %arg16: memref<4x35x64xf32, #tpu.memory_space<vmem>>, %arg17: memref<4x1x16xf32, #tpu.memory_space<vmem>>) attributes {dimension_semantics = [#tpu.dimension_semantics<parallel>], iteration_bounds = array<i64: 1>, scalar_prefetch = 0 : i64, scratch_operands = 0 : i64, tpu.core_type = #tpu.core_type<tc>, window_params = [{transform_indices = @transform_0, window_bounds = array<i64: 4, 35, 64>}, {transform_indices = @transform_1, window_bounds = array<i64: 4, 35>}, {transform_indices = @transform_2, window_bounds = array<i64: 1>}, {pipeline_mode = #tpu.pipeline_mode<synchronous>, transform_indices = @transform_3, window_bounds = array<i64: 1, 64>}, {pipeline_mode = #tpu.pipeline_mode<synchronous>, transform_indices = @transform_4, window_bounds = array<i64: 1, 64>}, {pipeline_mode = #tpu.pipeline_mode<synchronous>, transform_indices = @transform_5, window_bounds = array<i64: 64, 64>}, {pipeline_mode = #tpu.pipeline_mode<synchronous>, transform_indices = @transform_6, window_bounds = array<i64: 64, 64>}, {pipeline_mode = #tpu.pipeline_mode<synchronous>, transform_indices = @transform_7, window_bounds = array<i64: 64, 64>}, {pipeline_mode = #tpu.pipeline_mode<synchronous>, transform_indices = @transform_8, window_bounds = array<i64: 4, 35, 35>}, {pipeline_mode = #tpu.pipeline_mode<synchronous>, transform_indices = @transform_9, window_bounds = array<i64: 64, 32>}, {pipeline_mode = #tpu.pipeline_mode<synchronous>, transform_indices = @transform_10, window_bounds = array<i64: 32, 32>}, {pipeline_mode = #tpu.pipeline_mode<synchronous>, transform_indices = @transform_11, window_bounds = array<i64: 32, 64>}, {pipeline_mode = #tpu.pipeline_mode<synchronous>, transform_indices = @transform_12, window_bounds = array<i64: 64, 16>}, {pipeline_mode = #tpu.pipeline_mode<synchronous>, transform_indices = @transform_13, window_bounds = array<i64: 32, 35>}, {pipeline_mode = #tpu.pipeline_mode<synchronous>, transform_indices = @transform_14, window_bounds = array<i64: 64, 64>}, {transform_indices = @transform_15, window_bounds = array<i64: 4, 35, 64>}, {transform_indices = @transform_16, window_bounds = array<i64: 4, 1, 16>}]} {
    %c0 = arith.constant 0 : index
    %c0_0 = arith.constant 0 : index
    %c0_1 = arith.constant 0 : index
    %0 = vector.load %arg1[%c0, %c0_0, %c0_1] : memref<4x35x64xf32, #tpu.memory_space<vmem>>, vector<4x35x64xf32>
    %c0_2 = arith.constant 0 : index
    %c0_3 = arith.constant 0 : index
    %1 = vector.load %arg2[%c0_2, %c0_3] : memref<4x35xf32, #tpu.memory_space<vmem>>, vector<4x35xf32>
    %c0_4 = arith.constant 0 : index
    %2 = memref.load %arg3[%c0_4] : memref<1xf32, #tpu.memory_space<smem>>
    %c0_5 = arith.constant 0 : index
    %c0_6 = arith.constant 0 : index
    %3 = vector.load %arg4[%c0_5, %c0_6] : memref<1x64xf32, #tpu.memory_space<vmem>>, vector<1x64xf32>
    %c0_7 = arith.constant 0 : index
    %c0_8 = arith.constant 0 : index
    %4 = vector.load %arg5[%c0_7, %c0_8] : memref<1x64xf32, #tpu.memory_space<vmem>>, vector<1x64xf32>
    %cst = arith.constant dense<0.000000e+00> : vector<4x35xf32>
    %5 = vector.multi_reduction <add>, %0, %cst [2] : vector<4x35x64xf32> to vector<4x35xf32>
    %6 = vector.shape_cast %5 : vector<4x35xf32> to vector<4x35x1xf32>
    %cst_9 = arith.constant 6.400000e+01 : f32
    %7 = vector.broadcast %cst_9 : f32 to vector<4x35x1xf32>
    %8 = arith.divf %6, %7 : vector<4x35x1xf32>
    %9 = vector.broadcast %8 : vector<4x35x1xf32> to vector<4x35x64xf32>
    %10 = arith.subf %0, %9 : vector<4x35x64xf32>
    %11 = arith.mulf %10, %10 : vector<4x35x64xf32>
    %cst_10 = arith.constant dense<0.000000e+00> : vector<4x35xf32>
    %12 = vector.multi_reduction <add>, %11, %cst_10 [2] : vector<4x35x64xf32> to vector<4x35xf32>
    %13 = vector.shape_cast %12 : vector<4x35xf32> to vector<4x35x1xf32>
    %cst_11 = arith.constant 6.400000e+01 : f32
    %14 = vector.broadcast %cst_11 : f32 to vector<4x35x1xf32>
    %15 = arith.divf %13, %14 : vector<4x35x1xf32>
    %cst_12 = arith.constant 9.99999974E-6 : f32
    %16 = vector.broadcast %cst_12 : f32 to vector<4x35x1xf32>
    %17 = arith.addf %15, %16 : vector<4x35x1xf32>
    %18 = math.rsqrt %17 : vector<4x35x1xf32>
    %19 = vector.broadcast %18 : vector<4x35x1xf32> to vector<4x35x64xf32>
    %20 = arith.mulf %10, %19 : vector<4x35x64xf32>
    %21 = vector.shape_cast %3 : vector<1x64xf32> to vector<1x1x64xf32>
    %22 = vector.broadcast %21 : vector<1x1x64xf32> to vector<4x35x64xf32>
    %23 = arith.mulf %20, %22 : vector<4x35x64xf32>
    %24 = vector.shape_cast %4 : vector<1x64xf32> to vector<1x1x64xf32>
    %25 = vector.broadcast %24 : vector<1x1x64xf32> to vector<4x35x64xf32>
    %26 = arith.addf %23, %25 : vector<4x35x64xf32>
    %c0_13 = arith.constant 0 : index
    %c0_14 = arith.constant 0 : index
    %27 = vector.load %arg6[%c0_13, %c0_14] : memref<64x64xf32, #tpu.memory_space<vmem>>, vector<64x64xf32>
    %28 = vector.shape_cast %27 : vector<64x64xf32> to vector<1x64x64xf32>
    %29 = vector.broadcast %28 : vector<1x64x64xf32> to vector<4x64x64xf32>
    "tpu.trace_start"() <{level = 10 : i32, message = "wqc,wck->wqk"}> : () -> ()
    %cst_15 = arith.constant dense<0.000000e+00> : vector<4x35x64xf32>
    %30 = tpu.matmul %26, %29, %cst_15 {dimension_numbers = #tpu.dot_dimension_numbers<[2], [1], [1], [2], [0, 0, 0, 1, 1, 2], [0], [0]>} : vector<4x35x64xf32>, vector<4x64x64xf32>, vector<4x35x64xf32> -> vector<4x35x64xf32>
    "tpu.trace_stop"() : () -> ()
    %c0_16 = arith.constant 0 : index
    %c0_17 = arith.constant 0 : index
    %31 = vector.load %arg7[%c0_16, %c0_17] : memref<64x64xf32, #tpu.memory_space<vmem>>, vector<64x64xf32>
    %32 = vector.shape_cast %31 : vector<64x64xf32> to vector<1x64x64xf32>
    %33 = vector.broadcast %32 : vector<1x64x64xf32> to vector<4x64x64xf32>
    "tpu.trace_start"() <{level = 10 : i32, message = "wqc,wck->wqk"}> : () -> ()
    %cst_18 = arith.constant dense<0.000000e+00> : vector<4x35x64xf32>
    %34 = tpu.matmul %26, %33, %cst_18 {dimension_numbers = #tpu.dot_dimension_numbers<[2], [1], [1], [2], [0, 0, 0, 1, 1, 2], [0], [0]>} : vector<4x35x64xf32>, vector<4x64x64xf32>, vector<4x35x64xf32> -> vector<4x35x64xf32>
    "tpu.trace_stop"() : () -> ()
    %c0_19 = arith.constant 0 : index
    %c0_20 = arith.constant 0 : index
    %35 = vector.load %arg8[%c0_19, %c0_20] : memref<64x64xf32, #tpu.memory_space<vmem>>, vector<64x64xf32>
    %36 = vector.shape_cast %35 : vector<64x64xf32> to vector<1x64x64xf32>
    %37 = vector.broadcast %36 : vector<1x64x64xf32> to vector<4x64x64xf32>
    "tpu.trace_start"() <{level = 10 : i32, message = "wqc,wck->wqk"}> : () -> ()
    %cst_21 = arith.constant dense<0.000000e+00> : vector<4x35x64xf32>
    %38 = tpu.matmul %26, %37, %cst_21 {dimension_numbers = #tpu.dot_dimension_numbers<[2], [1], [1], [2], [0, 0, 0, 1, 1, 2], [0], [0]>} : vector<4x35x64xf32>, vector<4x64x64xf32>, vector<4x35x64xf32> -> vector<4x35x64xf32>
    "tpu.trace_stop"() : () -> ()
    %39 = vector.shape_cast %1 : vector<4x35xf32> to vector<4x35x1xf32>
    %cst_22 = arith.constant 5.000000e-01 : f32
    %40 = vector.broadcast %cst_22 : f32 to vector<4x35x1xf32>
    %41 = arith.cmpf ogt, %39, %40 : vector<4x35x1xf32>
    %42 = vector.shape_cast %1 : vector<4x35xf32> to vector<4x1x35xf32>
    %cst_23 = arith.constant 5.000000e-01 : f32
    %43 = vector.broadcast %cst_23 : f32 to vector<4x1x35xf32>
    %44 = arith.cmpf ogt, %42, %43 : vector<4x1x35xf32>
    %45 = vector.broadcast %41 : vector<4x35x1xi1> to vector<4x35x35xi1>
    %46 = vector.broadcast %44 : vector<4x1x35xi1> to vector<4x35x35xi1>
    %47 = arith.andi %45, %46 : vector<4x35x35xi1>
    %48 = tpu.iota {dimensions = array<i32: 0>} : vector<35x35xi32>
    %49 = tpu.iota {dimensions = array<i32: 1>} : vector<35x35xi32>
    %50 = arith.cmpi sge, %48, %49 : vector<35x35xi32>
    %51 = vector.shape_cast %50 : vector<35x35xi1> to vector<1x35x35xi1>
    %52 = vector.broadcast %51 : vector<1x35x35xi1> to vector<4x35x35xi1>
    %53 = arith.andi %47, %52 : vector<4x35x35xi1>
    %c0_24 = arith.constant 0 : index
    %c0_25 = arith.constant 0 : index
    %c0_26 = arith.constant 0 : index
    %54 = vector.load %arg9[%c0_24, %c0_25, %c0_26] : memref<4x35x35xf32, #tpu.memory_space<vmem>>, vector<4x35x35xf32>
    %55 = vector.extract_strided_slice %30 {offsets = [0, 0, 0], sizes = [4, 35, 16], strides = [1, 1, 1]} : vector<4x35x64xf32> to vector<4x35x16xf32>
    %56 = vector.extract_strided_slice %34 {offsets = [0, 0, 0], sizes = [4, 35, 16], strides = [1, 1, 1]} : vector<4x35x64xf32> to vector<4x35x16xf32>
    %57 = vector.extract_strided_slice %38 {offsets = [0, 0, 0], sizes = [4, 35, 16], strides = [1, 1, 1]} : vector<4x35x64xf32> to vector<4x35x16xf32>
    %58 = arith.mulf %55, %55 : vector<4x35x16xf32>
    %cst_27 = arith.constant dense<0.000000e+00> : vector<4x35xf32>
    %59 = vector.multi_reduction <add>, %58, %cst_27 [2] : vector<4x35x16xf32> to vector<4x35xf32>
    %60 = vector.shape_cast %59 : vector<4x35xf32> to vector<4x35x1xf32>
    %cst_28 = arith.constant 9.99999996E-13 : f32
    %61 = vector.broadcast %cst_28 : f32 to vector<4x35x1xf32>
    %62 = arith.addf %60, %61 : vector<4x35x1xf32>
    %63 = math.rsqrt %62 : vector<4x35x1xf32>
    %64 = vector.broadcast %2 : f32 to vector<4x35x1xf32>
    %65 = arith.mulf %63, %64 : vector<4x35x1xf32>
    %66 = vector.broadcast %65 : vector<4x35x1xf32> to vector<4x35x16xf32>
    %67 = arith.mulf %55, %66 : vector<4x35x16xf32>
    %68 = arith.mulf %56, %56 : vector<4x35x16xf32>
    %cst_29 = arith.constant dense<0.000000e+00> : vector<4x35xf32>
    %69 = vector.multi_reduction <add>, %68, %cst_29 [2] : vector<4x35x16xf32> to vector<4x35xf32>
    %70 = vector.shape_cast %69 : vector<4x35xf32> to vector<4x35x1xf32>
    %cst_30 = arith.constant 9.99999996E-13 : f32
    %71 = vector.broadcast %cst_30 : f32 to vector<4x35x1xf32>
    %72 = arith.addf %70, %71 : vector<4x35x1xf32>
    %73 = math.rsqrt %72 : vector<4x35x1xf32>
    %74 = vector.broadcast %73 : vector<4x35x1xf32> to vector<4x35x16xf32>
    %75 = arith.mulf %56, %74 : vector<4x35x16xf32>
    "tpu.trace_start"() <{level = 10 : i32, message = "wid,wjd->wij"}> : () -> ()
    %cst_31 = arith.constant dense<0.000000e+00> : vector<4x35x35xf32>
    %76 = tpu.matmul %67, %75, %cst_31 {dimension_numbers = #tpu.dot_dimension_numbers<[2], [2], [1], [1], [0, 0, 0, 1, 1, 1], [0], [0]>} : vector<4x35x16xf32>, vector<4x35x16xf32>, vector<4x35x35xf32> -> vector<4x35x35xf32>
    "tpu.trace_stop"() : () -> ()
    %77 = vector.extract_strided_slice %54 {offsets = [0, 0, 0], sizes = [1, 35, 35], strides = [1, 1, 1]} : vector<4x35x35xf32> to vector<1x35x35xf32>
    %78 = vector.shape_cast %77 : vector<1x35x35xf32> to vector<35x35xf32>
    %79 = vector.shape_cast %78 : vector<35x35xf32> to vector<1x35x35xf32>
    %80 = vector.broadcast %79 : vector<1x35x35xf32> to vector<4x35x35xf32>
    %81 = arith.addf %76, %80 : vector<4x35x35xf32>
    %cst_32 = arith.constant -3.40282347E+38 : f32
    %82 = vector.broadcast %cst_32 : f32 to vector<4x35x35xf32>
    %83 = arith.select %53, %81, %82 : vector<4x35x35xi1>, vector<4x35x35xf32>
    %cst_33 = arith.constant dense<0xFF800000> : vector<4x35xf32>
    %84 = vector.multi_reduction <maximumf>, %83, %cst_33 [2] : vector<4x35x35xf32> to vector<4x35xf32>
    %cst_34 = arith.constant 0xFF800000 : f32
    %85 = vector.broadcast %cst_34 : f32 to vector<4x35xf32>
    %86 = arith.maximumf %85, %84 : vector<4x35xf32>
    %87 = vector.shape_cast %86 : vector<4x35xf32> to vector<4x35x1xf32>
    %88 = vector.broadcast %87 : vector<4x35x1xf32> to vector<4x35x35xf32>
    %89 = arith.subf %83, %88 : vector<4x35x35xf32>
    %90 = math.exp %89 : vector<4x35x35xf32>
    %cst_35 = arith.constant dense<0.000000e+00> : vector<4x35xf32>
    %91 = vector.multi_reduction <add>, %90, %cst_35 [2] : vector<4x35x35xf32> to vector<4x35xf32>
    %92 = vector.shape_cast %91 : vector<4x35xf32> to vector<4x35x1xf32>
    %93 = vector.broadcast %92 : vector<4x35x1xf32> to vector<4x35x35xf32>
    %94 = arith.divf %90, %93 : vector<4x35x35xf32>
    "tpu.trace_start"() <{level = 10 : i32, message = "wij,wjd->wid"}> : () -> ()
    %cst_36 = arith.constant dense<0.000000e+00> : vector<4x35x16xf32>
    %95 = tpu.matmul %94, %57, %cst_36 {dimension_numbers = #tpu.dot_dimension_numbers<[2], [1], [1], [2], [0, 0, 0, 1, 1, 2], [0], [0]>} : vector<4x35x35xf32>, vector<4x35x16xf32>, vector<4x35x16xf32> -> vector<4x35x16xf32>
    "tpu.trace_stop"() : () -> ()
    %96 = vector.extract_strided_slice %30 {offsets = [0, 0, 16], sizes = [4, 35, 16], strides = [1, 1, 1]} : vector<4x35x64xf32> to vector<4x35x16xf32>
    %97 = vector.extract_strided_slice %34 {offsets = [0, 0, 16], sizes = [4, 35, 16], strides = [1, 1, 1]} : vector<4x35x64xf32> to vector<4x35x16xf32>
    %98 = vector.extract_strided_slice %38 {offsets = [0, 0, 16], sizes = [4, 35, 16], strides = [1, 1, 1]} : vector<4x35x64xf32> to vector<4x35x16xf32>
    %99 = arith.mulf %96, %96 : vector<4x35x16xf32>
    %cst_37 = arith.constant dense<0.000000e+00> : vector<4x35xf32>
    %100 = vector.multi_reduction <add>, %99, %cst_37 [2] : vector<4x35x16xf32> to vector<4x35xf32>
    %101 = vector.shape_cast %100 : vector<4x35xf32> to vector<4x35x1xf32>
    %cst_38 = arith.constant 9.99999996E-13 : f32
    %102 = vector.broadcast %cst_38 : f32 to vector<4x35x1xf32>
    %103 = arith.addf %101, %102 : vector<4x35x1xf32>
    %104 = math.rsqrt %103 : vector<4x35x1xf32>
    %105 = vector.broadcast %2 : f32 to vector<4x35x1xf32>
    %106 = arith.mulf %104, %105 : vector<4x35x1xf32>
    %107 = vector.broadcast %106 : vector<4x35x1xf32> to vector<4x35x16xf32>
    %108 = arith.mulf %96, %107 : vector<4x35x16xf32>
    %109 = arith.mulf %97, %97 : vector<4x35x16xf32>
    %cst_39 = arith.constant dense<0.000000e+00> : vector<4x35xf32>
    %110 = vector.multi_reduction <add>, %109, %cst_39 [2] : vector<4x35x16xf32> to vector<4x35xf32>
    %111 = vector.shape_cast %110 : vector<4x35xf32> to vector<4x35x1xf32>
    %cst_40 = arith.constant 9.99999996E-13 : f32
    %112 = vector.broadcast %cst_40 : f32 to vector<4x35x1xf32>
    %113 = arith.addf %111, %112 : vector<4x35x1xf32>
    %114 = math.rsqrt %113 : vector<4x35x1xf32>
    %115 = vector.broadcast %114 : vector<4x35x1xf32> to vector<4x35x16xf32>
    %116 = arith.mulf %97, %115 : vector<4x35x16xf32>
    "tpu.trace_start"() <{level = 10 : i32, message = "wid,wjd->wij"}> : () -> ()
    %cst_41 = arith.constant dense<0.000000e+00> : vector<4x35x35xf32>
    %117 = tpu.matmul %108, %116, %cst_41 {dimension_numbers = #tpu.dot_dimension_numbers<[2], [2], [1], [1], [0, 0, 0, 1, 1, 1], [0], [0]>} : vector<4x35x16xf32>, vector<4x35x16xf32>, vector<4x35x35xf32> -> vector<4x35x35xf32>
    "tpu.trace_stop"() : () -> ()
    %118 = vector.extract_strided_slice %54 {offsets = [1, 0, 0], sizes = [1, 35, 35], strides = [1, 1, 1]} : vector<4x35x35xf32> to vector<1x35x35xf32>
    %119 = vector.shape_cast %118 : vector<1x35x35xf32> to vector<35x35xf32>
    %120 = vector.shape_cast %119 : vector<35x35xf32> to vector<1x35x35xf32>
    %121 = vector.broadcast %120 : vector<1x35x35xf32> to vector<4x35x35xf32>
    %122 = arith.addf %117, %121 : vector<4x35x35xf32>
    %cst_42 = arith.constant -3.40282347E+38 : f32
    %123 = vector.broadcast %cst_42 : f32 to vector<4x35x35xf32>
    %124 = arith.select %53, %122, %123 : vector<4x35x35xi1>, vector<4x35x35xf32>
    %cst_43 = arith.constant dense<0xFF800000> : vector<4x35xf32>
    %125 = vector.multi_reduction <maximumf>, %124, %cst_43 [2] : vector<4x35x35xf32> to vector<4x35xf32>
    %cst_44 = arith.constant 0xFF800000 : f32
    %126 = vector.broadcast %cst_44 : f32 to vector<4x35xf32>
    %127 = arith.maximumf %126, %125 : vector<4x35xf32>
    %128 = vector.shape_cast %127 : vector<4x35xf32> to vector<4x35x1xf32>
    %129 = vector.broadcast %128 : vector<4x35x1xf32> to vector<4x35x35xf32>
    %130 = arith.subf %124, %129 : vector<4x35x35xf32>
    %131 = math.exp %130 : vector<4x35x35xf32>
    %cst_45 = arith.constant dense<0.000000e+00> : vector<4x35xf32>
    %132 = vector.multi_reduction <add>, %131, %cst_45 [2] : vector<4x35x35xf32> to vector<4x35xf32>
    %133 = vector.shape_cast %132 : vector<4x35xf32> to vector<4x35x1xf32>
    %134 = vector.broadcast %133 : vector<4x35x1xf32> to vector<4x35x35xf32>
    %135 = arith.divf %131, %134 : vector<4x35x35xf32>
    "tpu.trace_start"() <{level = 10 : i32, message = "wij,wjd->wid"}> : () -> ()
    %cst_46 = arith.constant dense<0.000000e+00> : vector<4x35x16xf32>
    %136 = tpu.matmul %135, %98, %cst_46 {dimension_numbers = #tpu.dot_dimension_numbers<[2], [1], [1], [2], [0, 0, 0, 1, 1, 2], [0], [0]>} : vector<4x35x35xf32>, vector<4x35x16xf32>, vector<4x35x16xf32> -> vector<4x35x16xf32>
    "tpu.trace_stop"() : () -> ()
    %137 = vector.extract_strided_slice %30 {offsets = [0, 0, 32], sizes = [4, 35, 16], strides = [1, 1, 1]} : vector<4x35x64xf32> to vector<4x35x16xf32>
    %138 = vector.extract_strided_slice %34 {offsets = [0, 0, 32], sizes = [4, 35, 16], strides = [1, 1, 1]} : vector<4x35x64xf32> to vector<4x35x16xf32>
    %139 = vector.extract_strided_slice %38 {offsets = [0, 0, 32], sizes = [4, 35, 16], strides = [1, 1, 1]} : vector<4x35x64xf32> to vector<4x35x16xf32>
    %140 = arith.mulf %137, %137 : vector<4x35x16xf32>
    %cst_47 = arith.constant dense<0.000000e+00> : vector<4x35xf32>
    %141 = vector.multi_reduction <add>, %140, %cst_47 [2] : vector<4x35x16xf32> to vector<4x35xf32>
    %142 = vector.shape_cast %141 : vector<4x35xf32> to vector<4x35x1xf32>
    %cst_48 = arith.constant 9.99999996E-13 : f32
    %143 = vector.broadcast %cst_48 : f32 to vector<4x35x1xf32>
    %144 = arith.addf %142, %143 : vector<4x35x1xf32>
    %145 = math.rsqrt %144 : vector<4x35x1xf32>
    %146 = vector.broadcast %2 : f32 to vector<4x35x1xf32>
    %147 = arith.mulf %145, %146 : vector<4x35x1xf32>
    %148 = vector.broadcast %147 : vector<4x35x1xf32> to vector<4x35x16xf32>
    %149 = arith.mulf %137, %148 : vector<4x35x16xf32>
    %150 = arith.mulf %138, %138 : vector<4x35x16xf32>
    %cst_49 = arith.constant dense<0.000000e+00> : vector<4x35xf32>
    %151 = vector.multi_reduction <add>, %150, %cst_49 [2] : vector<4x35x16xf32> to vector<4x35xf32>
    %152 = vector.shape_cast %151 : vector<4x35xf32> to vector<4x35x1xf32>
    %cst_50 = arith.constant 9.99999996E-13 : f32
    %153 = vector.broadcast %cst_50 : f32 to vector<4x35x1xf32>
    %154 = arith.addf %152, %153 : vector<4x35x1xf32>
    %155 = math.rsqrt %154 : vector<4x35x1xf32>
    %156 = vector.broadcast %155 : vector<4x35x1xf32> to vector<4x35x16xf32>
    %157 = arith.mulf %138, %156 : vector<4x35x16xf32>
    "tpu.trace_start"() <{level = 10 : i32, message = "wid,wjd->wij"}> : () -> ()
    %cst_51 = arith.constant dense<0.000000e+00> : vector<4x35x35xf32>
    %158 = tpu.matmul %149, %157, %cst_51 {dimension_numbers = #tpu.dot_dimension_numbers<[2], [2], [1], [1], [0, 0, 0, 1, 1, 1], [0], [0]>} : vector<4x35x16xf32>, vector<4x35x16xf32>, vector<4x35x35xf32> -> vector<4x35x35xf32>
    "tpu.trace_stop"() : () -> ()
    %159 = vector.extract_strided_slice %54 {offsets = [2, 0, 0], sizes = [1, 35, 35], strides = [1, 1, 1]} : vector<4x35x35xf32> to vector<1x35x35xf32>
    %160 = vector.shape_cast %159 : vector<1x35x35xf32> to vector<35x35xf32>
    %161 = vector.shape_cast %160 : vector<35x35xf32> to vector<1x35x35xf32>
    %162 = vector.broadcast %161 : vector<1x35x35xf32> to vector<4x35x35xf32>
    %163 = arith.addf %158, %162 : vector<4x35x35xf32>
    %cst_52 = arith.constant -3.40282347E+38 : f32
    %164 = vector.broadcast %cst_52 : f32 to vector<4x35x35xf32>
    %165 = arith.select %53, %163, %164 : vector<4x35x35xi1>, vector<4x35x35xf32>
    %cst_53 = arith.constant dense<0xFF800000> : vector<4x35xf32>
    %166 = vector.multi_reduction <maximumf>, %165, %cst_53 [2] : vector<4x35x35xf32> to vector<4x35xf32>
    %cst_54 = arith.constant 0xFF800000 : f32
    %167 = vector.broadcast %cst_54 : f32 to vector<4x35xf32>
    %168 = arith.maximumf %167, %166 : vector<4x35xf32>
    %169 = vector.shape_cast %168 : vector<4x35xf32> to vector<4x35x1xf32>
    %170 = vector.broadcast %169 : vector<4x35x1xf32> to vector<4x35x35xf32>
    %171 = arith.subf %165, %170 : vector<4x35x35xf32>
    %172 = math.exp %171 : vector<4x35x35xf32>
    %cst_55 = arith.constant dense<0.000000e+00> : vector<4x35xf32>
    %173 = vector.multi_reduction <add>, %172, %cst_55 [2] : vector<4x35x35xf32> to vector<4x35xf32>
    %174 = vector.shape_cast %173 : vector<4x35xf32> to vector<4x35x1xf32>
    %175 = vector.broadcast %174 : vector<4x35x1xf32> to vector<4x35x35xf32>
    %176 = arith.divf %172, %175 : vector<4x35x35xf32>
    "tpu.trace_start"() <{level = 10 : i32, message = "wij,wjd->wid"}> : () -> ()
    %cst_56 = arith.constant dense<0.000000e+00> : vector<4x35x16xf32>
    %177 = tpu.matmul %176, %139, %cst_56 {dimension_numbers = #tpu.dot_dimension_numbers<[2], [1], [1], [2], [0, 0, 0, 1, 1, 2], [0], [0]>} : vector<4x35x35xf32>, vector<4x35x16xf32>, vector<4x35x16xf32> -> vector<4x35x16xf32>
    "tpu.trace_stop"() : () -> ()
    %178 = vector.extract_strided_slice %30 {offsets = [0, 0, 48], sizes = [4, 35, 16], strides = [1, 1, 1]} : vector<4x35x64xf32> to vector<4x35x16xf32>
    %179 = vector.extract_strided_slice %34 {offsets = [0, 0, 48], sizes = [4, 35, 16], strides = [1, 1, 1]} : vector<4x35x64xf32> to vector<4x35x16xf32>
    %180 = vector.extract_strided_slice %38 {offsets = [0, 0, 48], sizes = [4, 35, 16], strides = [1, 1, 1]} : vector<4x35x64xf32> to vector<4x35x16xf32>
    %181 = arith.mulf %178, %178 : vector<4x35x16xf32>
    %cst_57 = arith.constant dense<0.000000e+00> : vector<4x35xf32>
    %182 = vector.multi_reduction <add>, %181, %cst_57 [2] : vector<4x35x16xf32> to vector<4x35xf32>
    %183 = vector.shape_cast %182 : vector<4x35xf32> to vector<4x35x1xf32>
    %cst_58 = arith.constant 9.99999996E-13 : f32
    %184 = vector.broadcast %cst_58 : f32 to vector<4x35x1xf32>
    %185 = arith.addf %183, %184 : vector<4x35x1xf32>
    %186 = math.rsqrt %185 : vector<4x35x1xf32>
    %187 = vector.broadcast %2 : f32 to vector<4x35x1xf32>
    %188 = arith.mulf %186, %187 : vector<4x35x1xf32>
    %189 = vector.broadcast %188 : vector<4x35x1xf32> to vector<4x35x16xf32>
    %190 = arith.mulf %178, %189 : vector<4x35x16xf32>
    %191 = arith.mulf %179, %179 : vector<4x35x16xf32>
    %cst_59 = arith.constant dense<0.000000e+00> : vector<4x35xf32>
    %192 = vector.multi_reduction <add>, %191, %cst_59 [2] : vector<4x35x16xf32> to vector<4x35xf32>
    %193 = vector.shape_cast %192 : vector<4x35xf32> to vector<4x35x1xf32>
    %cst_60 = arith.constant 9.99999996E-13 : f32
    %194 = vector.broadcast %cst_60 : f32 to vector<4x35x1xf32>
    %195 = arith.addf %193, %194 : vector<4x35x1xf32>
    %196 = math.rsqrt %195 : vector<4x35x1xf32>
    %197 = vector.broadcast %196 : vector<4x35x1xf32> to vector<4x35x16xf32>
    %198 = arith.mulf %179, %197 : vector<4x35x16xf32>
    "tpu.trace_start"() <{level = 10 : i32, message = "wid,wjd->wij"}> : () -> ()
    %cst_61 = arith.constant dense<0.000000e+00> : vector<4x35x35xf32>
    %199 = tpu.matmul %190, %198, %cst_61 {dimension_numbers = #tpu.dot_dimension_numbers<[2], [2], [1], [1], [0, 0, 0, 1, 1, 1], [0], [0]>} : vector<4x35x16xf32>, vector<4x35x16xf32>, vector<4x35x35xf32> -> vector<4x35x35xf32>
    "tpu.trace_stop"() : () -> ()
    %200 = vector.extract_strided_slice %54 {offsets = [3, 0, 0], sizes = [1, 35, 35], strides = [1, 1, 1]} : vector<4x35x35xf32> to vector<1x35x35xf32>
    %201 = vector.shape_cast %200 : vector<1x35x35xf32> to vector<35x35xf32>
    %202 = vector.shape_cast %201 : vector<35x35xf32> to vector<1x35x35xf32>
    %203 = vector.broadcast %202 : vector<1x35x35xf32> to vector<4x35x35xf32>
    %204 = arith.addf %199, %203 : vector<4x35x35xf32>
    %cst_62 = arith.constant -3.40282347E+38 : f32
    %205 = vector.broadcast %cst_62 : f32 to vector<4x35x35xf32>
    %206 = arith.select %53, %204, %205 : vector<4x35x35xi1>, vector<4x35x35xf32>
    %cst_63 = arith.constant dense<0xFF800000> : vector<4x35xf32>
    %207 = vector.multi_reduction <maximumf>, %206, %cst_63 [2] : vector<4x35x35xf32> to vector<4x35xf32>
    %cst_64 = arith.constant 0xFF800000 : f32
    %208 = vector.broadcast %cst_64 : f32 to vector<4x35xf32>
    %209 = arith.maximumf %208, %207 : vector<4x35xf32>
    %210 = vector.shape_cast %209 : vector<4x35xf32> to vector<4x35x1xf32>
    %211 = vector.broadcast %210 : vector<4x35x1xf32> to vector<4x35x35xf32>
    %212 = arith.subf %206, %211 : vector<4x35x35xf32>
    %213 = math.exp %212 : vector<4x35x35xf32>
    %cst_65 = arith.constant dense<0.000000e+00> : vector<4x35xf32>
    %214 = vector.multi_reduction <add>, %213, %cst_65 [2] : vector<4x35x35xf32> to vector<4x35xf32>
    %215 = vector.shape_cast %214 : vector<4x35xf32> to vector<4x35x1xf32>
    %216 = vector.broadcast %215 : vector<4x35x1xf32> to vector<4x35x35xf32>
    %217 = arith.divf %213, %216 : vector<4x35x35xf32>
    "tpu.trace_start"() <{level = 10 : i32, message = "wij,wjd->wid"}> : () -> ()
    %cst_66 = arith.constant dense<0.000000e+00> : vector<4x35x16xf32>
    %218 = tpu.matmul %217, %180, %cst_66 {dimension_numbers = #tpu.dot_dimension_numbers<[2], [1], [1], [2], [0, 0, 0, 1, 1, 2], [0], [0]>} : vector<4x35x35xf32>, vector<4x35x16xf32>, vector<4x35x16xf32> -> vector<4x35x16xf32>
    "tpu.trace_stop"() : () -> ()
    %219 = tpu.concatenate %95, %136, %177, %218 in 2 : vector<4x35x16xf32>, vector<4x35x16xf32>, vector<4x35x16xf32>, vector<4x35x16xf32> -> vector<4x35x64xf32>
    %220 = vector.shape_cast %1 : vector<4x35xf32> to vector<4x1x35xf32>
    %cst_67 = arith.constant dense<0.000000e+00> : vector<4x1xf32>
    %221 = vector.multi_reduction <add>, %220, %cst_67 [2] : vector<4x1x35xf32> to vector<4x1xf32>
    %222 = vector.shape_cast %221 : vector<4x1xf32> to vector<4x1x1xf32>
    %cst_68 = arith.constant 1.000000e+00 : f32
    %223 = vector.broadcast %cst_68 : f32 to vector<4x1x1xf32>
    %224 = arith.maximumf %222, %223 : vector<4x1x1xf32>
    "tpu.trace_start"() <{level = 10 : i32, message = "wqj,wjc->wqc"}> : () -> ()
    %cst_69 = arith.constant dense<0.000000e+00> : vector<4x1x64xf32>
    %225 = tpu.matmul %220, %219, %cst_69 {dimension_numbers = #tpu.dot_dimension_numbers<[2], [1], [1], [2], [0, 0, 0, 1, 1, 2], [0], [0]>} : vector<4x1x35xf32>, vector<4x35x64xf32>, vector<4x1x64xf32> -> vector<4x1x64xf32>
    "tpu.trace_stop"() : () -> ()
    %226 = vector.broadcast %224 : vector<4x1x1xf32> to vector<4x1x64xf32>
    %227 = arith.divf %225, %226 : vector<4x1x64xf32>
    %c0_70 = arith.constant 0 : index
    %c0_71 = arith.constant 0 : index
    %228 = vector.load %arg10[%c0_70, %c0_71] : memref<64x32xf32, #tpu.memory_space<vmem>>, vector<64x32xf32>
    %229 = vector.shape_cast %228 : vector<64x32xf32> to vector<1x64x32xf32>
    %230 = vector.broadcast %229 : vector<1x64x32xf32> to vector<4x64x32xf32>
    "tpu.trace_start"() <{level = 10 : i32, message = "wqc,wck->wqk"}> : () -> ()
    %cst_72 = arith.constant dense<0.000000e+00> : vector<4x1x32xf32>
    %231 = tpu.matmul %227, %230, %cst_72 {dimension_numbers = #tpu.dot_dimension_numbers<[2], [1], [1], [2], [0, 0, 0, 1, 1, 2], [0], [0]>} : vector<4x1x64xf32>, vector<4x64x32xf32>, vector<4x1x32xf32> -> vector<4x1x32xf32>
    "tpu.trace_stop"() : () -> ()
    %cst_73 = arith.constant 0.000000e+00 : f32
    %232 = vector.broadcast %cst_73 : f32 to vector<4x1x32xf32>
    %233 = arith.maximumf %231, %232 : vector<4x1x32xf32>
    %c0_74 = arith.constant 0 : index
    %c0_75 = arith.constant 0 : index
    %234 = vector.load %arg11[%c0_74, %c0_75] : memref<32x32xf32, #tpu.memory_space<vmem>>, vector<32x32xf32>
    %235 = vector.shape_cast %234 : vector<32x32xf32> to vector<1x32x32xf32>
    %236 = vector.broadcast %235 : vector<1x32x32xf32> to vector<4x32x32xf32>
    "tpu.trace_start"() <{level = 10 : i32, message = "wqc,wck->wqk"}> : () -> ()
    %cst_76 = arith.constant dense<0.000000e+00> : vector<4x1x32xf32>
    %237 = tpu.matmul %233, %236, %cst_76 {dimension_numbers = #tpu.dot_dimension_numbers<[2], [1], [1], [2], [0, 0, 0, 1, 1, 2], [0], [0]>} : vector<4x1x32xf32>, vector<4x32x32xf32>, vector<4x1x32xf32> -> vector<4x1x32xf32>
    "tpu.trace_stop"() : () -> ()
    %c0_77 = arith.constant 0 : index
    %c0_78 = arith.constant 0 : index
    %238 = vector.load %arg12[%c0_77, %c0_78] : memref<32x64xf32, #tpu.memory_space<vmem>>, vector<32x64xf32>
    %239 = vector.shape_cast %238 : vector<32x64xf32> to vector<1x32x64xf32>
    %240 = vector.broadcast %239 : vector<1x32x64xf32> to vector<4x32x64xf32>
    "tpu.trace_start"() <{level = 10 : i32, message = "wqc,wck->wqk"}> : () -> ()
    %cst_79 = arith.constant dense<0.000000e+00> : vector<4x1x64xf32>
    %241 = tpu.matmul %237, %240, %cst_79 {dimension_numbers = #tpu.dot_dimension_numbers<[2], [1], [1], [2], [0, 0, 0, 1, 1, 2], [0], [0]>} : vector<4x1x32xf32>, vector<4x32x64xf32>, vector<4x1x64xf32> -> vector<4x1x64xf32>
    "tpu.trace_stop"() : () -> ()
    "tpu.trace_start"() <{level = 10 : i32, message = "wqc,wjc->wqj"}> : () -> ()
    %cst_80 = arith.constant dense<0.000000e+00> : vector<4x1x35xf32>
    %242 = tpu.matmul %241, %219, %cst_80 {dimension_numbers = #tpu.dot_dimension_numbers<[2], [2], [1], [1], [0, 0, 0, 1, 1, 1], [0], [0]>} : vector<4x1x64xf32>, vector<4x35x64xf32>, vector<4x1x35xf32> -> vector<4x1x35xf32>
    "tpu.trace_stop"() : () -> ()
    %c0_81 = arith.constant 0 : index
    %c0_82 = arith.constant 0 : index
    %243 = vector.load %arg14[%c0_81, %c0_82] : memref<32x35xf32, #tpu.memory_space<vmem>>, vector<32x35xf32>
    %244 = vector.shape_cast %243 : vector<32x35xf32> to vector<1x32x35xf32>
    %245 = vector.broadcast %244 : vector<1x32x35xf32> to vector<4x32x35xf32>
    "tpu.trace_start"() <{level = 10 : i32, message = "wqc,wck->wqk"}> : () -> ()
    %cst_83 = arith.constant dense<0.000000e+00> : vector<4x1x35xf32>
    %246 = tpu.matmul %237, %245, %cst_83 {dimension_numbers = #tpu.dot_dimension_numbers<[2], [1], [1], [2], [0, 0, 0, 1, 1, 2], [0], [0]>} : vector<4x1x32xf32>, vector<4x32x35xf32>, vector<4x1x35xf32> -> vector<4x1x35xf32>
    "tpu.trace_stop"() : () -> ()
    %247 = arith.addf %242, %246 : vector<4x1x35xf32>
    %cst_84 = arith.constant 0.176776692 : f32
    %248 = vector.broadcast %cst_84 : f32 to vector<4x1x35xf32>
    %249 = arith.mulf %247, %248 : vector<4x1x35xf32>
    %cst_85 = arith.constant -3.40282347E+38 : f32
    %250 = vector.broadcast %cst_85 : f32 to vector<4x1x35xf32>
    %251 = arith.select %44, %249, %250 : vector<4x1x35xi1>, vector<4x1x35xf32>
    %cst_86 = arith.constant dense<0xFF800000> : vector<4x1xf32>
    %252 = vector.multi_reduction <maximumf>, %251, %cst_86 [2] : vector<4x1x35xf32> to vector<4x1xf32>
    %cst_87 = arith.constant 0xFF800000 : f32
    %253 = vector.broadcast %cst_87 : f32 to vector<4x1xf32>
    %254 = arith.maximumf %253, %252 : vector<4x1xf32>
    %255 = vector.shape_cast %254 : vector<4x1xf32> to vector<4x1x1xf32>
    %256 = vector.broadcast %255 : vector<4x1x1xf32> to vector<4x1x35xf32>
    %257 = arith.subf %251, %256 : vector<4x1x35xf32>
    %258 = math.exp %257 : vector<4x1x35xf32>
    %cst_88 = arith.constant dense<0.000000e+00> : vector<4x1xf32>
    %259 = vector.multi_reduction <add>, %258, %cst_88 [2] : vector<4x1x35xf32> to vector<4x1xf32>
    %260 = vector.shape_cast %259 : vector<4x1xf32> to vector<4x1x1xf32>
    %261 = vector.broadcast %260 : vector<4x1x1xf32> to vector<4x1x35xf32>
    %262 = arith.divf %258, %261 : vector<4x1x35xf32>
    "tpu.trace_start"() <{level = 10 : i32, message = "wqj,wjc->wqc"}> : () -> ()
    %cst_89 = arith.constant dense<0.000000e+00> : vector<4x1x64xf32>
    %263 = tpu.matmul %262, %219, %cst_89 {dimension_numbers = #tpu.dot_dimension_numbers<[2], [1], [1], [2], [0, 0, 0, 1, 1, 2], [0], [0]>} : vector<4x1x35xf32>, vector<4x35x64xf32>, vector<4x1x64xf32> -> vector<4x1x64xf32>
    "tpu.trace_stop"() : () -> ()
    %c0_90 = arith.constant 0 : index
    %c0_91 = arith.constant 0 : index
    %264 = vector.load %arg13[%c0_90, %c0_91] : memref<64x16xf32, #tpu.memory_space<vmem>>, vector<64x16xf32>
    %265 = vector.shape_cast %264 : vector<64x16xf32> to vector<1x64x16xf32>
    %266 = vector.broadcast %265 : vector<1x64x16xf32> to vector<4x64x16xf32>
    "tpu.trace_start"() <{level = 10 : i32, message = "wqc,wck->wqk"}> : () -> ()
    %cst_92 = arith.constant dense<0.000000e+00> : vector<4x1x16xf32>
    %267 = tpu.matmul %263, %266, %cst_92 {dimension_numbers = #tpu.dot_dimension_numbers<[2], [1], [1], [2], [0, 0, 0, 1, 1, 2], [0], [0]>} : vector<4x1x64xf32>, vector<4x64x16xf32>, vector<4x1x16xf32> -> vector<4x1x16xf32>
    "tpu.trace_stop"() : () -> ()
    %c0_93 = arith.constant 0 : index
    %c0_94 = arith.constant 0 : index
    %c0_95 = arith.constant 0 : index
    %268 = vector.load %arg17[%c0_93, %c0_94, %c0_95] : memref<4x1x16xf32, #tpu.memory_space<vmem>>, vector<4x1x16xf32>
    tpu.vector_store %arg17[%c0_93, %c0_94, %c0_95], %267 {strides = array<i32>} : memref<4x1x16xf32, #tpu.memory_space<vmem>>, vector<4x1x16xf32>,
    %c0_96 = arith.constant 0 : index
    %c0_97 = arith.constant 0 : index
    %269 = vector.load %arg15[%c0_96, %c0_97] : memref<64x64xf32, #tpu.memory_space<vmem>>, vector<64x64xf32>
    %270 = vector.shape_cast %269 : vector<64x64xf32> to vector<1x64x64xf32>
    %271 = vector.broadcast %270 : vector<1x64x64xf32> to vector<4x64x64xf32>
    "tpu.trace_start"() <{level = 10 : i32, message = "wqc,wck->wqk"}> : () -> ()
    %cst_98 = arith.constant dense<0.000000e+00> : vector<4x35x64xf32>
    %272 = tpu.matmul %219, %271, %cst_98 {dimension_numbers = #tpu.dot_dimension_numbers<[2], [1], [1], [2], [0, 0, 0, 1, 1, 2], [0], [0]>} : vector<4x35x64xf32>, vector<4x64x64xf32>, vector<4x35x64xf32> -> vector<4x35x64xf32>
    "tpu.trace_stop"() : () -> ()
    %c0_99 = arith.constant 0 : index
    %c0_100 = arith.constant 0 : index
    %c0_101 = arith.constant 0 : index
    %273 = vector.load %arg16[%c0_99, %c0_100, %c0_101] : memref<4x35x64xf32, #tpu.memory_space<vmem>>, vector<4x35x64xf32>
    tpu.vector_store %arg16[%c0_99, %c0_100, %c0_101], %272 {strides = array<i32>} : memref<4x35x64xf32, #tpu.memory_space<vmem>>, vector<4x35x64xf32>,
    return
  }
  func.func @transform_0(%arg0: i32) -> (i32, i32, i32) {
    %c0_i32 = arith.constant 0 : i32
    %c0_i32_0 = arith.constant 0 : i32
    %c0_i32_1 = arith.constant 0 : i32
    return %arg0, %c0_i32, %c0_i32_0 : i32, i32, i32
  }
  func.func @transform_1(%arg0: i32) -> (i32, i32) {
    %c0_i32 = arith.constant 0 : i32
    %c0_i32_0 = arith.constant 0 : i32
    return %arg0, %c0_i32 : i32, i32
  }
  func.func @transform_2(%arg0: i32) -> i32 {
    %c0_i32 = arith.constant 0 : i32
    %c0_i32_0 = arith.constant 0 : i32
    return %c0_i32 : i32
  }
  func.func @transform_3(%arg0: i32) -> (i32, i32) {
    %c0_i32 = arith.constant 0 : i32
    %c0_i32_0 = arith.constant 0 : i32
    %c0_i32_1 = arith.constant 0 : i32
    return %c0_i32, %c0_i32_0 : i32, i32
  }
  func.func @transform_4(%arg0: i32) -> (i32, i32) {
    %c0_i32 = arith.constant 0 : i32
    %c0_i32_0 = arith.constant 0 : i32
    %c0_i32_1 = arith.constant 0 : i32
    return %c0_i32, %c0_i32_0 : i32, i32
  }
  func.func @transform_5(%arg0: i32) -> (i32, i32) {
    %c0_i32 = arith.constant 0 : i32
    %c0_i32_0 = arith.constant 0 : i32
    %c0_i32_1 = arith.constant 0 : i32
    return %c0_i32, %c0_i32_0 : i32, i32
  }
  func.func @transform_6(%arg0: i32) -> (i32, i32) {
    %c0_i32 = arith.constant 0 : i32
    %c0_i32_0 = arith.constant 0 : i32
    %c0_i32_1 = arith.constant 0 : i32
    return %c0_i32, %c0_i32_0 : i32, i32
  }
  func.func @transform_7(%arg0: i32) -> (i32, i32) {
    %c0_i32 = arith.constant 0 : i32
    %c0_i32_0 = arith.constant 0 : i32
    %c0_i32_1 = arith.constant 0 : i32
    return %c0_i32, %c0_i32_0 : i32, i32
  }
  func.func @transform_8(%arg0: i32) -> (i32, i32, i32) {
    %c0_i32 = arith.constant 0 : i32
    %c0_i32_0 = arith.constant 0 : i32
    %c0_i32_1 = arith.constant 0 : i32
    %c0_i32_2 = arith.constant 0 : i32
    return %c0_i32, %c0_i32_0, %c0_i32_1 : i32, i32, i32
  }
  func.func @transform_9(%arg0: i32) -> (i32, i32) {
    %c0_i32 = arith.constant 0 : i32
    %c0_i32_0 = arith.constant 0 : i32
    %c0_i32_1 = arith.constant 0 : i32
    return %c0_i32, %c0_i32_0 : i32, i32
  }
  func.func @transform_10(%arg0: i32) -> (i32, i32) {
    %c0_i32 = arith.constant 0 : i32
    %c0_i32_0 = arith.constant 0 : i32
    %c0_i32_1 = arith.constant 0 : i32
    return %c0_i32, %c0_i32_0 : i32, i32
  }
  func.func @transform_11(%arg0: i32) -> (i32, i32) {
    %c0_i32 = arith.constant 0 : i32
    %c0_i32_0 = arith.constant 0 : i32
    %c0_i32_1 = arith.constant 0 : i32
    return %c0_i32, %c0_i32_0 : i32, i32
  }
  func.func @transform_12(%arg0: i32) -> (i32, i32) {
    %c0_i32 = arith.constant 0 : i32
    %c0_i32_0 = arith.constant 0 : i32
    %c0_i32_1 = arith.constant 0 : i32
    return %c0_i32, %c0_i32_0 : i32, i32
  }
  func.func @transform_13(%arg0: i32) -> (i32, i32) {
    %c0_i32 = arith.constant 0 : i32
    %c0_i32_0 = arith.constant 0 : i32
    %c0_i32_1 = arith.constant 0 : i32
    return %c0_i32, %c0_i32_0 : i32, i32
  }
  func.func @transform_14(%arg0: i32) -> (i32, i32) {
    %c0_i32 = arith.constant 0 : i32
    %c0_i32_0 = arith.constant 0 : i32
    %c0_i32_1 = arith.constant 0 : i32
    return %c0_i32, %c0_i32_0 : i32, i32
  }
  func.func @transform_15(%arg0: i32) -> (i32, i32, i32) {
    %c0_i32 = arith.constant 0 : i32
    %c0_i32_0 = arith.constant 0 : i32
    %c0_i32_1 = arith.constant 0 : i32
    return %arg0, %c0_i32, %c0_i32_0 : i32, i32, i32
  }
  func.func @transform_16(%arg0: i32) -> (i32, i32, i32) {
    %c0_i32 = arith.constant 0 : i32
    %c0_i32_0 = arith.constant 0 : i32
    %c0_i32_1 = arith.constant 0 : i32
    return %arg0, %c0_i32, %c0_i32_0 : i32, i32, i32
  }
}

module attributes {stable_mosaic.version = 11 : i64} {
  func.func @_glu_ff_kernel(%arg0: i32, %arg1: memref<104x64xf32, #tpu.memory_space<vmem>>, %arg2: memref<1x64xf32, #tpu.memory_space<vmem>>, %arg3: memref<1x64xf32, #tpu.memory_space<vmem>>, %arg4: memref<64x256xf32, #tpu.memory_space<vmem>>, %arg5: memref<1x256xf32, #tpu.memory_space<vmem>>, %arg6: memref<64x256xf32, #tpu.memory_space<vmem>>, %arg7: memref<1x256xf32, #tpu.memory_space<vmem>>, %arg8: memref<256x64xf32, #tpu.memory_space<vmem>>, %arg9: memref<1x64xf32, #tpu.memory_space<vmem>>, %arg10: memref<104x64xf32, #tpu.memory_space<vmem>>) attributes {dimension_semantics = [#tpu.dimension_semantics<parallel>], iteration_bounds = array<i64: 1>, scalar_prefetch = 0 : i64, scratch_operands = 0 : i64, tpu.core_type = #tpu.core_type<tc>, window_params = [{transform_indices = @transform_0, window_bounds = array<i64: 104, 64>}, {pipeline_mode = #tpu.pipeline_mode<synchronous>, transform_indices = @transform_1, window_bounds = array<i64: 1, 64>}, {pipeline_mode = #tpu.pipeline_mode<synchronous>, transform_indices = @transform_2, window_bounds = array<i64: 1, 64>}, {pipeline_mode = #tpu.pipeline_mode<synchronous>, transform_indices = @transform_3, window_bounds = array<i64: 64, 256>}, {pipeline_mode = #tpu.pipeline_mode<synchronous>, transform_indices = @transform_4, window_bounds = array<i64: 1, 256>}, {pipeline_mode = #tpu.pipeline_mode<synchronous>, transform_indices = @transform_5, window_bounds = array<i64: 64, 256>}, {pipeline_mode = #tpu.pipeline_mode<synchronous>, transform_indices = @transform_6, window_bounds = array<i64: 1, 256>}, {pipeline_mode = #tpu.pipeline_mode<synchronous>, transform_indices = @transform_7, window_bounds = array<i64: 256, 64>}, {pipeline_mode = #tpu.pipeline_mode<synchronous>, transform_indices = @transform_8, window_bounds = array<i64: 1, 64>}, {transform_indices = @transform_9, window_bounds = array<i64: 104, 64>}]} {
    %c0 = arith.constant 0 : index
    %c0_0 = arith.constant 0 : index
    %0 = vector.load %arg1[%c0, %c0_0] : memref<104x64xf32, #tpu.memory_space<vmem>>, vector<104x64xf32>
    %c0_1 = arith.constant 0 : index
    %c0_2 = arith.constant 0 : index
    %1 = vector.load %arg2[%c0_1, %c0_2] : memref<1x64xf32, #tpu.memory_space<vmem>>, vector<1x64xf32>
    %c0_3 = arith.constant 0 : index
    %c0_4 = arith.constant 0 : index
    %2 = vector.load %arg3[%c0_3, %c0_4] : memref<1x64xf32, #tpu.memory_space<vmem>>, vector<1x64xf32>
    %cst = arith.constant dense<0.000000e+00> : vector<104xf32>
    %3 = vector.multi_reduction <add>, %0, %cst [1] : vector<104x64xf32> to vector<104xf32>
    %4 = vector.shape_cast %3 : vector<104xf32> to vector<104x1xf32>
    %cst_5 = arith.constant 6.400000e+01 : f32
    %5 = vector.broadcast %cst_5 : f32 to vector<104x1xf32>
    %6 = arith.divf %4, %5 : vector<104x1xf32>
    %7 = vector.broadcast %6 : vector<104x1xf32> to vector<104x64xf32>
    %8 = arith.subf %0, %7 : vector<104x64xf32>
    %9 = arith.mulf %8, %8 : vector<104x64xf32>
    %cst_6 = arith.constant dense<0.000000e+00> : vector<104xf32>
    %10 = vector.multi_reduction <add>, %9, %cst_6 [1] : vector<104x64xf32> to vector<104xf32>
    %11 = vector.shape_cast %10 : vector<104xf32> to vector<104x1xf32>
    %cst_7 = arith.constant 6.400000e+01 : f32
    %12 = vector.broadcast %cst_7 : f32 to vector<104x1xf32>
    %13 = arith.divf %11, %12 : vector<104x1xf32>
    %cst_8 = arith.constant 9.99999974E-6 : f32
    %14 = vector.broadcast %cst_8 : f32 to vector<104x1xf32>
    %15 = arith.addf %13, %14 : vector<104x1xf32>
    %16 = math.rsqrt %15 : vector<104x1xf32>
    %17 = vector.broadcast %16 : vector<104x1xf32> to vector<104x64xf32>
    %18 = arith.mulf %8, %17 : vector<104x64xf32>
    %19 = vector.broadcast %1 : vector<1x64xf32> to vector<104x64xf32>
    %20 = arith.mulf %18, %19 : vector<104x64xf32>
    %21 = vector.broadcast %2 : vector<1x64xf32> to vector<104x64xf32>
    %22 = arith.addf %20, %21 : vector<104x64xf32>
    %c0_9 = arith.constant 0 : index
    %c0_10 = arith.constant 0 : index
    %23 = vector.load %arg4[%c0_9, %c0_10] : memref<64x256xf32, #tpu.memory_space<vmem>>, vector<64x256xf32>
    %cst_11 = arith.constant dense<0.000000e+00> : vector<104x256xf32>
    %24 = tpu.matmul %22, %23, %cst_11 {dimension_numbers = #tpu.dot_dimension_numbers<[1], [0], [0], [1], [0, 0, 1, 1], [], []>} : vector<104x64xf32>, vector<64x256xf32>, vector<104x256xf32> -> vector<104x256xf32>
    %c0_12 = arith.constant 0 : index
    %c0_13 = arith.constant 0 : index
    %25 = vector.load %arg5[%c0_12, %c0_13] : memref<1x256xf32, #tpu.memory_space<vmem>>, vector<1x256xf32>
    %26 = vector.broadcast %25 : vector<1x256xf32> to vector<104x256xf32>
    %27 = arith.addf %24, %26 : vector<104x256xf32>
    %c0_14 = arith.constant 0 : index
    %c0_15 = arith.constant 0 : index
    %28 = vector.load %arg6[%c0_14, %c0_15] : memref<64x256xf32, #tpu.memory_space<vmem>>, vector<64x256xf32>
    %cst_16 = arith.constant dense<0.000000e+00> : vector<104x256xf32>
    %29 = tpu.matmul %22, %28, %cst_16 {dimension_numbers = #tpu.dot_dimension_numbers<[1], [0], [0], [1], [0, 0, 1, 1], [], []>} : vector<104x64xf32>, vector<64x256xf32>, vector<104x256xf32> -> vector<104x256xf32>
    %c0_17 = arith.constant 0 : index
    %c0_18 = arith.constant 0 : index
    %30 = vector.load %arg7[%c0_17, %c0_18] : memref<1x256xf32, #tpu.memory_space<vmem>>, vector<1x256xf32>
    %31 = vector.broadcast %30 : vector<1x256xf32> to vector<104x256xf32>
    %32 = arith.addf %29, %31 : vector<104x256xf32>
    %33 = arith.negf %32 : vector<104x256xf32>
    %34 = math.exp %33 : vector<104x256xf32>
    %cst_19 = arith.constant 1.000000e+00 : f32
    %35 = vector.broadcast %cst_19 : f32 to vector<104x256xf32>
    %36 = arith.addf %35, %34 : vector<104x256xf32>
    %37 = arith.divf %35, %36 : vector<104x256xf32>
    %38 = arith.mulf %32, %37 : vector<104x256xf32>
    %39 = arith.mulf %27, %38 : vector<104x256xf32>
    %c0_20 = arith.constant 0 : index
    %c0_21 = arith.constant 0 : index
    %40 = vector.load %arg8[%c0_20, %c0_21] : memref<256x64xf32, #tpu.memory_space<vmem>>, vector<256x64xf32>
    %cst_22 = arith.constant dense<0.000000e+00> : vector<104x64xf32>
    %41 = tpu.matmul %39, %40, %cst_22 {dimension_numbers = #tpu.dot_dimension_numbers<[1], [0], [0], [1], [0, 0, 1, 1], [], []>} : vector<104x256xf32>, vector<256x64xf32>, vector<104x64xf32> -> vector<104x64xf32>
    %c0_23 = arith.constant 0 : index
    %c0_24 = arith.constant 0 : index
    %42 = vector.load %arg9[%c0_23, %c0_24] : memref<1x64xf32, #tpu.memory_space<vmem>>, vector<1x64xf32>
    %43 = vector.broadcast %42 : vector<1x64xf32> to vector<104x64xf32>
    %44 = arith.addf %41, %43 : vector<104x64xf32>
    %c0_25 = arith.constant 0 : index
    %c0_26 = arith.constant 0 : index
    %45 = vector.load %arg10[%c0_25, %c0_26] : memref<104x64xf32, #tpu.memory_space<vmem>>, vector<104x64xf32>
    tpu.vector_store %arg10[%c0_25, %c0_26], %44 {strides = array<i32>} : memref<104x64xf32, #tpu.memory_space<vmem>>, vector<104x64xf32>,
    return
  }
  func.func @transform_0(%arg0: i32) -> (i32, i32) {
    %c0_i32 = arith.constant 0 : i32
    %c0_i32_0 = arith.constant 0 : i32
    return %arg0, %c0_i32 : i32, i32
  }
  func.func @transform_1(%arg0: i32) -> (i32, i32) {
    %c0_i32 = arith.constant 0 : i32
    %c0_i32_0 = arith.constant 0 : i32
    %c0_i32_1 = arith.constant 0 : i32
    return %c0_i32, %c0_i32_0 : i32, i32
  }
  func.func @transform_2(%arg0: i32) -> (i32, i32) {
    %c0_i32 = arith.constant 0 : i32
    %c0_i32_0 = arith.constant 0 : i32
    %c0_i32_1 = arith.constant 0 : i32
    return %c0_i32, %c0_i32_0 : i32, i32
  }
  func.func @transform_3(%arg0: i32) -> (i32, i32) {
    %c0_i32 = arith.constant 0 : i32
    %c0_i32_0 = arith.constant 0 : i32
    %c0_i32_1 = arith.constant 0 : i32
    return %c0_i32, %c0_i32_0 : i32, i32
  }
  func.func @transform_4(%arg0: i32) -> (i32, i32) {
    %c0_i32 = arith.constant 0 : i32
    %c0_i32_0 = arith.constant 0 : i32
    %c0_i32_1 = arith.constant 0 : i32
    return %c0_i32, %c0_i32_0 : i32, i32
  }
  func.func @transform_5(%arg0: i32) -> (i32, i32) {
    %c0_i32 = arith.constant 0 : i32
    %c0_i32_0 = arith.constant 0 : i32
    %c0_i32_1 = arith.constant 0 : i32
    return %c0_i32, %c0_i32_0 : i32, i32
  }
  func.func @transform_6(%arg0: i32) -> (i32, i32) {
    %c0_i32 = arith.constant 0 : i32
    %c0_i32_0 = arith.constant 0 : i32
    %c0_i32_1 = arith.constant 0 : i32
    return %c0_i32, %c0_i32_0 : i32, i32
  }
  func.func @transform_7(%arg0: i32) -> (i32, i32) {
    %c0_i32 = arith.constant 0 : i32
    %c0_i32_0 = arith.constant 0 : i32
    %c0_i32_1 = arith.constant 0 : i32
    return %c0_i32, %c0_i32_0 : i32, i32
  }
  func.func @transform_8(%arg0: i32) -> (i32, i32) {
    %c0_i32 = arith.constant 0 : i32
    %c0_i32_0 = arith.constant 0 : i32
    %c0_i32_1 = arith.constant 0 : i32
    return %c0_i32, %c0_i32_0 : i32, i32
  }
  func.func @transform_9(%arg0: i32) -> (i32, i32) {
    %c0_i32 = arith.constant 0 : i32
    %c0_i32_0 = arith.constant 0 : i32
    return %arg0, %c0_i32 : i32, i32
  }
}

</mosaic_0001>

<llo_original>
// kernel: _transformer_forward.5
$region0: #{_transformer_forward.5}
  #allocation0 [shape = 'u32[]', space=smem, size = 0x4, offset = 0x4, fixed_abs, tag = 'smem constant byte address 0x4 - core index']
  #allocation1 [shape = 'u32[144,128]{1,0:T(1,128)}', space=vmem, size = 0x12000, scoped, tag = 'internal scratch']
  %s0 = inlined_call_operand.vmem [shape: f32[100,64], index: 0, kind: input, shape index: {}]
  %s1 = inlined_call_operand.vmem [shape: f32[1,64], index: 1, kind: input, shape index: {}]
  %s2 = inlined_call_operand.vmem [shape: f32[1,64], index: 2, kind: input, shape index: {}]
  %s3 = inlined_call_operand.vmem [shape: f32[64,256], index: 3, kind: input, shape index: {}]
  %s4 = inlined_call_operand.vmem [shape: f32[1,256], index: 4, kind: input, shape index: {}]
  %s5 = inlined_call_operand.vmem [shape: f32[64,256], index: 5, kind: input, shape index: {}]
  %s6 = inlined_call_operand.vmem [shape: f32[1,256], index: 6, kind: input, shape index: {}]
  %s7 = inlined_call_operand.vmem [shape: f32[256,64], index: 7, kind: input, shape index: {}]
  %s8 = inlined_call_operand.vmem [shape: f32[1,64], index: 8, kind: input, shape index: {}]
  %s9 = inlined_call_operand.vmem [shape: f32[100,64], index: 9, kind: output, shape index: {}]
  %s10 = sld [smem:[#allocation0]]
  $region46: #{_transformer_forward.5} parent=0
    _
  %s12 = ssub.s32 1, %s10
  %s13 = scalar_select 0, %s12, %s10
  // Predicated region
  $region2: #{_transformer_forward.5} parent=0 // pred_check
    _
  $region3: #{_transformer_forward.5} parent=0 // pred_check_branch
    %15 = sbr.rel (0) target = $region5
  $region4: #{_transformer_forward.5} parent=0 // pred_region
    _
  $region5: #{_transformer_forward.5} parent=0 // pred_fallthru
    _
  // Predicated region
  $region6: #{_transformer_forward.5} parent=0 // pred_check
    _
  $region7: #{_transformer_forward.5} parent=0 // pred_check_branch
    %17 = sbr.rel (0) target = $region9
  $region8: #{_transformer_forward.5} parent=0 // pred_region
    _
  $region9: #{_transformer_forward.5} parent=0 // pred_fallthru
    _
  // Predicated region
  $region10: #{_transformer_forward.5} parent=0 // pred_check
    _
  $region11: #{_transformer_forward.5} parent=0 // pred_check_branch
    %19 = sbr.rel (0) target = $region13
  $region12: #{_transformer_forward.5} parent=0 // pred_region
    _
  $region13: #{_transformer_forward.5} parent=0 // pred_fallthru
    _
  // Predicated region
  $region14: #{_transformer_forward.5} parent=0 // pred_check
    _
  $region15: #{_transformer_forward.5} parent=0 // pred_check_branch
    %21 = sbr.rel (0) target = $region17
  $region16: #{_transformer_forward.5} parent=0 // pred_region
    _
  $region17: #{_transformer_forward.5} parent=0 // pred_fallthru
    _
  // Predicated region
  $region18: #{_transformer_forward.5} parent=0 // pred_check
    _
  $region19: #{_transformer_forward.5} parent=0 // pred_check_branch
    %23 = sbr.rel (0) target = $region21
  $region20: #{_transformer_forward.5} parent=0 // pred_region
    _
  $region21: #{_transformer_forward.5} parent=0 // pred_fallthru
    _
  // Predicated region
  $region22: #{_transformer_forward.5} parent=0 // pred_check
    _
  $region23: #{_transformer_forward.5} parent=0 // pred_check_branch
    %25 = sbr.rel (0) target = $region25
  $region24: #{_transformer_forward.5} parent=0 // pred_region
    _
  $region25: #{_transformer_forward.5} parent=0 // pred_fallthru
    _
  // Predicated region
  $region26: #{_transformer_forward.5} parent=0 // pred_check
    _
  $region27: #{_transformer_forward.5} parent=0 // pred_check_branch
    %27 = sbr.rel (0) target = $region29
  $region28: #{_transformer_forward.5} parent=0 // pred_region
    _
  $region29: #{_transformer_forward.5} parent=0 // pred_fallthru
    _
  // Predicated region
  $region30: #{_transformer_forward.5} parent=0 // pred_check
    _
  $region31: #{_transformer_forward.5} parent=0 // pred_check_branch
    %29 = sbr.rel (0) target = $region33
  $region32: #{_transformer_forward.5} parent=0 // pred_region
    _
  $region33: #{_transformer_forward.5} parent=0 // pred_fallthru
    _
  // Predicated region
  $region34: #{_transformer_forward.5} parent=0 // pred_check
    _
  $region35: #{_transformer_forward.5} parent=0 // pred_check_branch
    %31 = sbr.rel (0) target = $region37
  $region36: #{_transformer_forward.5} parent=0 // pred_region
    _
  $region37: #{_transformer_forward.5} parent=0 // pred_fallthru
    _
  %v32 = vld [vmem:[%s0] sm:$0xff]
  %v33 = vld [vmem:[%s0 + $0x8] sm:$0xff]
  %v34 = vld [vmem:[%s0 + $0x10] sm:$0xff]
  %v35 = vld [vmem:[%s0 + $0x18] sm:$0xff]
  %v36 = vld [vmem:[%s0 + $0x20] sm:$0xff]
  %v37 = vld [vmem:[%s0 + $0x28] sm:$0xff]
  %v38 = vld [vmem:[%s0 + $0x30] sm:$0xff]
  %v39 = vld [vmem:[%s0 + $0x38] sm:$0xff]
  %v40 = vld [vmem:[%s0 + $0x40] sm:$0xff]
  %v41 = vld [vmem:[%s0 + $0x48] sm:$0xff]
  %v42 = vld [vmem:[%s0 + $0x50] sm:$0xff]
  %v43 = vld [vmem:[%s0 + $0x58] sm:$0xff]
  %v44 = vld [vmem:[%s0 + $0x60] sm:$0xff]
  %v45 = vld [vmem:[%s1] sm:$0x1]
  %v46 = vld [vmem:[%s2] sm:$0x1]
  %vm47 = vcmask 523264
  %v48 = vsel %vm47, %v32, 0.0
  %49 = vadd.xlane.f32.xlu0 %v48
  %v50 = vpop.xlane.xlu0 %49
  %v51 = vsel %vm47, %v33, 0.0
  %52 = vadd.xlane.f32.xlu0 %v51
  %v53 = vpop.xlane.xlu0 %52
  %v54 = vsel %vm47, %v34, 0.0
  %55 = vadd.xlane.f32.xlu0 %v54
  %v56 = vpop.xlane.xlu0 %55
  %v57 = vsel %vm47, %v35, 0.0
  %58 = vadd.xlane.f32.xlu0 %v57
  %v59 = vpop.xlane.xlu0 %58
  %v60 = vsel %vm47, %v36, 0.0
  %61 = vadd.xlane.f32.xlu0 %v60
  %v62 = vpop.xlane.xlu0 %61
  %v63 = vsel %vm47, %v37, 0.0
  %64 = vadd.xlane.f32.xlu0 %v63
  %v65 = vpop.xlane.xlu0 %64
  %v66 = vsel %vm47, %v38, 0.0
  %67 = vadd.xlane.f32.xlu0 %v66
  %v68 = vpop.xlane.xlu0 %67
  %v69 = vsel %vm47, %v39, 0.0
  %70 = vadd.xlane.f32.xlu0 %v69
  %v71 = vpop.xlane.xlu0 %70
  %v72 = vsel %vm47, %v40, 0.0
  %73 = vadd.xlane.f32.xlu0 %v72
  %v74 = vpop.xlane.xlu0 %73
  %v75 = vsel %vm47, %v41, 0.0
  %76 = vadd.xlane.f32.xlu0 %v75
  %v77 = vpop.xlane.xlu0 %76
  %v78 = vsel %vm47, %v42, 0.0
  %79 = vadd.xlane.f32.xlu0 %v78
  %v80 = vpop.xlane.xlu0 %79
  %v81 = vsel %vm47, %v43, 0.0
  %82 = vadd.xlane.f32.xlu0 %v81
  %v83 = vpop.xlane.xlu0 %82
  %v84 = vsel %vm47, %v44, 0.0
  %85 = vadd.xlane.f32.xlu0 %v84
  %v86 = vpop.xlane.xlu0 %85
  %v87 = vrcp.pop 64.0
  %v88 = vmul.f32 %v50, %v87
  %v89 = vmul.f32 %v53, %v87
  %v90 = vmul.f32 %v56, %v87
  %v91 = vmul.f32 %v59, %v87
  %v92 = vmul.f32 %v62, %v87
  %v93 = vmul.f32 %v65, %v87
  %v94 = vmul.f32 %v68, %v87
  %v95 = vmul.f32 %v71, %v87
  %v96 = vmul.f32 %v74, %v87
  %v97 = vmul.f32 %v77, %v87
  %v98 = vmul.f32 %v80, %v87
  %v99 = vmul.f32 %v83, %v87
  %v100 = vmul.f32 %v86, %v87
  %v101 = vsub.f32 %v32, %v88
  %v102 = vsub.f32 %v33, %v89
  %v103 = vsub.f32 %v34, %v90
  %v104 = vsub.f32 %v35, %v91
  %v105 = vsub.f32 %v36, %v92
  %v106 = vsub.f32 %v37, %v93
  %v107 = vsub.f32 %v38, %v94
  %v108 = vsub.f32 %v39, %v95
  %v109 = vsub.f32 %v40, %v96
  %v110 = vsub.f32 %v41, %v97
  %v111 = vsub.f32 %v42, %v98
  %v112 = vsub.f32 %v43, %v99
  %v113 = vsub.f32 %v44, %v100
  %v114 = vmul.f32 %v101, %v101
  %v115 = vmul.f32 %v102, %v102
  %v116 = vmul.f32 %v103, %v103
  %v117 = vmul.f32 %v104, %v104
  %v118 = vmul.f32 %v105, %v105
  %v119 = vmul.f32 %v106, %v106
  %v120 = vmul.f32 %v107, %v107
  %v121 = vmul.f32 %v108, %v108
  %v122 = vmul.f32 %v109, %v109
  %v123 = vmul.f32 %v110, %v110
  %v124 = vmul.f32 %v111, %v111
  %v125 = vmul.f32 %v112, %v112
  %v126 = vmul.f32 %v113, %v113
  %v127 = vsel %vm47, %v114, 0.0
  %128 = vadd.xlane.f32.xlu0 %v127
  %v129 = vpop.xlane.xlu0 %128
  %v130 = vsel %vm47, %v115, 0.0
  %131 = vadd.xlane.f32.xlu0 %v130
  %v132 = vpop.xlane.xlu0 %131
  %v133 = vsel %vm47, %v116, 0.0
  %134 = vadd.xlane.f32.xlu0 %v133
  %v135 = vpop.xlane.xlu0 %134
  %v136 = vsel %vm47, %v117, 0.0
  %137 = vadd.xlane.f32.xlu0 %v136
  %v138 = vpop.xlane.xlu0 %137
  %v139 = vsel %vm47, %v118, 0.0
  %140 = vadd.xlane.f32.xlu0 %v139
  %v141 = vpop.xlane.xlu0 %140
  %v142 = vsel %vm47, %v119, 0.0
  %143 = vadd.xlane.f32.xlu0 %v142
  %v144 = vpop.xlane.xlu0 %143
  %v145 = vsel %vm47, %v120, 0.0
  %146 = vadd.xlane.f32.xlu0 %v145
  %v147 = vpop.xlane.xlu0 %146
  %v148 = vsel %vm47, %v121, 0.0
  %149 = vadd.xlane.f32.xlu0 %v148
  %v150 = vpop.xlane.xlu0 %149
  %v151 = vsel %vm47, %v122, 0.0
  %152 = vadd.xlane.f32.xlu0 %v151
  %v153 = vpop.xlane.xlu0 %152
  %v154 = vsel %vm47, %v123, 0.0
  %155 = vadd.xlane.f32.xlu0 %v154
  %v156 = vpop.xlane.xlu0 %155
  %v157 = vsel %vm47, %v124, 0.0
  %158 = vadd.xlane.f32.xlu0 %v157
  %v159 = vpop.xlane.xlu0 %158
  %v160 = vsel %vm47, %v125, 0.0
  %161 = vadd.xlane.f32.xlu0 %v160
  %v162 = vpop.xlane.xlu0 %161
  %v163 = vsel %vm47, %v126, 0.0
  %164 = vadd.xlane.f32.xlu0 %v163
  %v165 = vpop.xlane.xlu0 %164
  %v166 = vmul.f32 %v129, %v87
  %v167 = vmul.f32 %v132, %v87
  %v168 = vmul.f32 %v135, %v87
  %v169 = vmul.f32 %v138, %v87
  %v170 = vmul.f32 %v141, %v87
  %v171 = vmul.f32 %v144, %v87
  %v172 = vmul.f32 %v147, %v87
  %v173 = vmul.f32 %v150, %v87
  %v174 = vmul.f32 %v153, %v87
  %v175 = vmul.f32 %v156, %v87
  %v176 = vmul.f32 %v159, %v87
  %v177 = vmul.f32 %v162, %v87
  %v178 = vmul.f32 %v165, %v87
  %v179 = vadd.f32 %v166, 1e-05
  %v180 = vadd.f32 %v167, 1e-05
  %v181 = vadd.f32 %v168, 1e-05
  %v182 = vadd.f32 %v169, 1e-05
  %v183 = vadd.f32 %v170, 1e-05
  %v184 = vadd.f32 %v171, 1e-05
  %v185 = vadd.f32 %v172, 1e-05
  %v186 = vadd.f32 %v173, 1e-05
  %v187 = vadd.f32 %v174, 1e-05
  %v188 = vadd.f32 %v175, 1e-05
  %v189 = vadd.f32 %v176, 1e-05
  %v190 = vadd.f32 %v177, 1e-05
  %v191 = vadd.f32 %v178, 1e-05
  %v192 = vrsqrt.pop %v179
  %v193 = vrsqrt.pop %v180
  %v194 = vrsqrt.pop %v181
  %v195 = vrsqrt.pop %v182
  %v196 = vrsqrt.pop %v183
  %v197 = vrsqrt.pop %v184
  %v198 = vrsqrt.pop %v185
  %v199 = vrsqrt.pop %v186
  %v200 = vrsqrt.pop %v187
  %v201 = vrsqrt.pop %v188
  %v202 = vrsqrt.pop %v189
  %v203 = vrsqrt.pop %v190
  %v204 = vrsqrt.pop %v191
  %v205 = vmul.f32 %v101, %v192
  %v206 = vmul.f32 %v102, %v193
  %v207 = vmul.f32 %v103, %v194
  %v208 = vmul.f32 %v104, %v195
  %v209 = vmul.f32 %v105, %v196
  %v210 = vmul.f32 %v106, %v197
  %v211 = vmul.f32 %v107, %v198
  %v212 = vmul.f32 %v108, %v199
  %v213 = vmul.f32 %v109, %v200
  %v214 = vmul.f32 %v110, %v201
  %v215 = vmul.f32 %v111, %v202
  %v216 = vmul.f32 %v112, %v203
  %v217 = vmul.f32 %v113, %v204
  %v219 = vlaneseq
  %v220 = vshrl.u32 %v219, 7
  %v221 = vsub.s32 0, %v220
  %v222 = vrot.slane %v45, %v221
  %v224 = vmul.f32 %v205, %v222
  %v225 = vmul.f32 %v206, %v222
  %v226 = vmul.f32 %v207, %v222
  %v227 = vmul.f32 %v208, %v222
  %v228 = vmul.f32 %v209, %v222
  %v229 = vmul.f32 %v210, %v222
  %v230 = vmul.f32 %v211, %v222
  %v231 = vmul.f32 %v212, %v222
  %v232 = vmul.f32 %v213, %v222
  %v233 = vmul.f32 %v214, %v222
  %v234 = vmul.f32 %v215, %v222
  %v235 = vmul.f32 %v216, %v222
  %v236 = vmul.f32 %v217, %v222
  %v238 = vlaneseq
  %v239 = vshrl.u32 %v238, 7
  %v240 = vsub.s32 0, %v239
  %v241 = vrot.slane %v46, %v240
  %v243 = vadd.f32 %v224, %v241
  %v244 = vadd.f32 %v225, %v241
  %v245 = vadd.f32 %v226, %v241
  %v246 = vadd.f32 %v227, %v241
  %v247 = vadd.f32 %v228, %v241
  %v248 = vadd.f32 %v229, %v241
  %v249 = vadd.f32 %v230, %v241
  %v250 = vadd.f32 %v231, %v241
  %v251 = vadd.f32 %v232, %v241
  %v252 = vadd.f32 %v233, %v241
  %v253 = vadd.f32 %v234, %v241
  %v254 = vadd.f32 %v235, %v241
  %v255 = vadd.f32 %v236, %v241
  %v256 = vld [vmem:[%s3] sm:$0xff]
  %v257 = vld [vmem:[%s3 + $0x8] sm:$0xff]
  %v258 = vld [vmem:[%s3 + $0x10] sm:$0xff]
  %v259 = vld [vmem:[%s3 + $0x18] sm:$0xff]
  %v260 = vld [vmem:[%s3 + $0x20] sm:$0xff]
  %v261 = vld [vmem:[%s3 + $0x28] sm:$0xff]
  %v262 = vld [vmem:[%s3 + $0x30] sm:$0xff]
  %v263 = vld [vmem:[%s3 + $0x38] sm:$0xff]
  %v264 = vld [vmem:[%s3 + $0x40] sm:$0xff]
  %v265 = vld [vmem:[%s3 + $0x48] sm:$0xff]
  %v266 = vld [vmem:[%s3 + $0x50] sm:$0xff]
  %v267 = vld [vmem:[%s3 + $0x58] sm:$0xff]
  %v268 = vld [vmem:[%s3 + $0x60] sm:$0xff]
  %v269 = vld [vmem:[%s3 + $0x68] sm:$0xff]
  %v270 = vld [vmem:[%s3 + $0x70] sm:$0xff]
  %v271 = vld [vmem:[%s3 + $0x78] sm:$0xff]
  %v272 = vld [vmem:[%s4] sm:$0x3]
  %v274 = vlaneseq
  %v275 = vshrl.u32 %v274, 7
  %v276 = vsub.s32 0, %v275
  %v277 = vrot.slane %v272, %v276
  %v278 = vlaneseq
  %v279 = vshrl.u32 %v278, 7
  %v280 = vsub.s32 1, %v279
  %v281 = vrot.slane %v272, %v280
  %v285 = vsel %vm47, %v243, 0
  %v288 = vsel %vm47, %v244, 0
  %v291 = vsel %vm47, %v245, 0
  %v294 = vsel %vm47, %v246, 0
  %v297 = vsel %vm47, %v247, 0
  %v300 = vsel %vm47, %v248, 0
  %v303 = vsel %vm47, %v249, 0
  %v306 = vsel %vm47, %v250, 0
  %v309 = vsel %vm47, %v251, 0
  %v312 = vsel %vm47, %v252, 0
  %v315 = vsel %vm47, %v253, 0
  %v318 = vsel %vm47, %v254, 0
  %v321 = vsel %vm47, %v255, 0
  %323 = vmatprep.subr.mxu0 %v257
  %324 = vmatpush1.msra.mxu0 %v256
  %325 = vmatprep.subr.mxu0 %v259
  %326 = vmatpush1.msra.mxu0 %v258
  %327 = vmatprep.subr.mxu0 %v261
  %328 = vmatpush1.msra.mxu0 %v260
  %329 = vmatprep.subr.mxu0 %v263
  %330 = vmatpush1.msra.mxu0 %v262
  %331 = vmatprep.subr.mxu0 %v265
  %332 = vmatpush1.msra.mxu0 %v264
  %333 = vmatprep.subr.mxu0 %v267
  %334 = vmatpush1.msra.mxu0 %v266
  %335 = vmatprep.subr.mxu0 %v269
  %336 = vmatpush1.msra.mxu0 %v268
  %337 = vmatprep.subr.mxu0 %v271
  %338 = vmatpush1.msra.mxu0 %v270
  %339 = vmatprep.subr.mxu0 0.0
  %340 = vmatpush1.msra.mxu0 0.0
  %341 = vmatprep.subr.mxu0 0.0
  %342 = vmatpush1.msra.mxu0 0.0
  %343 = vmatprep.subr.mxu0 0.0
  %344 = vmatpush1.msra.mxu0 0.0
  %345 = vmatprep.subr.mxu0 0.0
  %346 = vmatpush1.msra.mxu0 0.0
  %347 = vmatprep.subr.mxu0 0.0
  %348 = vmatpush1.msra.mxu0 0.0
  %349 = vmatprep.subr.mxu0 0.0
  %350 = vmatpush1.msra.mxu0 0.0
  %351 = vmatprep.subr.mxu0 0.0
  %352 = vmatpush1.msra.mxu0 0.0
  %353 = vmatprep.subr.mxu0 0.0
  %354 = vmatpush1.msra.mxu0 0.0
  %355 = vmatprep.subr.mxu0 0.0
  %356 = vmatpush1.msra.mxu0 0.0
  %357 = vmatprep.subr.mxu0 0.0
  %358 = vmatpush1.msra.mxu0 0.0
  %359 = vmatprep.subr.mxu0 0.0
  %360 = vmatpush1.msra.mxu0 0.0
  %361 = vmatprep.subr.mxu0 0.0
  %362 = vmatpush1.msra.mxu0 0.0
  %363 = vmatprep.subr.mxu0 0.0
  %364 = vmatpush1.msra.mxu0 0.0
  %365 = vmatprep.subr.mxu0 0.0
  %366 = vmatpush1.msra.mxu0 0.0
  %367 = vmatprep.subr.mxu0 0.0
  %368 = vmatpush1.msra.mxu0 0.0
  %369 = vmatprep.subr.mxu0 0.0
  %370 = vmatpush1.msra.mxu0 0.0
  %371 = vmatprep.subr.mxu0 0.0
  %372 = vmatpush1.msra.mxu0 0.0
  %373 = vmatprep.subr.mxu0 0.0
  %374 = vmatpush1.msra.mxu0 0.0
  %375 = vmatprep.subr.mxu0 0.0
  %376 = vmatpush1.msra.mxu0 0.0
  %377 = vmatprep.subr.mxu0 0.0
  %378 = vmatpush1.msra.mxu0 0.0
  %379 = vmatprep.subr.mxu0 0.0
  %380 = vmatpush1.msra.mxu0 0.0
  %381 = vmatprep.subr.mxu0 0.0
  %382 = vmatpush1.msra.mxu0 0.0
  %383 = vmatprep.subr.mxu0 0.0
  %384 = vmatpush1.msra.mxu0 0.0
  %385 = vmatprep.subr.mxu0 0.0
  %386 = vmatpush1.msra.mxu0 0.0
  %387 = vmatprep.mubr.f32.mxu0 0.0
  %388 = vmatmul.mubr.f32.gmra.mrb[0].mxu0 %v285
  %v389 = vpop.f32.mrb[0].mxu0
  %v390 = vadd.f32 %v277, %v389
  %v391 = vpop.f32.mrb[0].mxu0
  %v392 = vadd.f32 %v281, %v391
  %393 = vmatprep.mubr.f32.mxu0 0.0
  %394 = vmatmul.mubr.f32.gmra.mrb[0].mxu0 %v288
  %v395 = vpop.f32.mrb[0].mxu0
  %v396 = vadd.f32 %v277, %v395
  %v397 = vpop.f32.mrb[0].mxu0
  %v398 = vadd.f32 %v281, %v397
  %399 = vmatprep.mubr.f32.mxu0 0.0
  %400 = vmatmul.mubr.f32.gmra.mrb[0].mxu0 %v291
  %v401 = vpop.f32.mrb[0].mxu0
  %v402 = vadd.f32 %v277, %v401
  %v403 = vpop.f32.mrb[0].mxu0
  %v404 = vadd.f32 %v281, %v403
  %405 = vmatprep.mubr.f32.mxu0 0.0
  %406 = vmatmul.mubr.f32.gmra.mrb[0].mxu0 %v294
  %v407 = vpop.f32.mrb[0].mxu0
  %v408 = vadd.f32 %v277, %v407
  %v409 = vpop.f32.mrb[0].mxu0
  %v410 = vadd.f32 %v281, %v409
  %411 = vmatprep.mubr.f32.mxu0 0.0
  %412 = vmatmul.mubr.f32.gmra.mrb[0].mxu0 %v297
  %v413 = vpop.f32.mrb[0].mxu0
  %v414 = vadd.f32 %v277, %v413
  %v415 = vpop.f32.mrb[0].mxu0
  %v416 = vadd.f32 %v281, %v415
  %417 = vmatprep.mubr.f32.mxu0 0.0
  %418 = vmatmul.mubr.f32.gmra.mrb[0].mxu0 %v300
  %v419 = vpop.f32.mrb[0].mxu0
  %v420 = vadd.f32 %v277, %v419
  %v421 = vpop.f32.mrb[0].mxu0
  %v422 = vadd.f32 %v281, %v421
  %423 = vmatprep.mubr.f32.mxu0 0.0
  %424 = vmatmul.mubr.f32.gmra.mrb[0].mxu0 %v303
  %v425 = vpop.f32.mrb[0].mxu0
  %v426 = vadd.f32 %v277, %v425
  %v427 = vpop.f32.mrb[0].mxu0
  %v428 = vadd.f32 %v281, %v427
  %429 = vmatprep.mubr.f32.mxu0 0.0
  %430 = vmatmul.mubr.f32.gmra.mrb[0].mxu0 %v306
  %v431 = vpop.f32.mrb[0].mxu0
  %v432 = vadd.f32 %v277, %v431
  %v433 = vpop.f32.mrb[0].mxu0
  %v434 = vadd.f32 %v281, %v433
  %435 = vmatprep.mubr.f32.mxu0 0.0
  %436 = vmatmul.mubr.f32.gmra.mrb[0].mxu0 %v309
  %v437 = vpop.f32.mrb[0].mxu0
  %v438 = vadd.f32 %v277, %v437
  %v439 = vpop.f32.mrb[0].mxu0
  %v440 = vadd.f32 %v281, %v439
  %441 = vmatprep.mubr.f32.mxu0 0.0
  %442 = vmatmul.mubr.f32.gmra.mrb[0].mxu0 %v312
  %v443 = vpop.f32.mrb[0].mxu0
  %v444 = vadd.f32 %v277, %v443
  %v445 = vpop.f32.mrb[0].mxu0
  %v446 = vadd.f32 %v281, %v445
  %447 = vmatprep.mubr.f32.mxu0 0.0
  %448 = vmatmul.mubr.f32.gmra.mrb[0].mxu0 %v315
  %v449 = vpop.f32.mrb[0].mxu0
  %v450 = vadd.f32 %v277, %v449
  %v451 = vpop.f32.mrb[0].mxu0
  %v452 = vadd.f32 %v281, %v451
  %453 = vmatprep.mubr.f32.mxu0 0.0
  %454 = vmatmul.mubr.f32.gmra.mrb[0].mxu0 %v318
  %v455 = vpop.f32.mrb[0].mxu0
  %v456 = vadd.f32 %v277, %v455
  %v457 = vpop.f32.mrb[0].mxu0
  %v458 = vadd.f32 %v281, %v457
  %459 = vmatprep.mubr.f32.mxu0 0.0
  %460 = vmatmul.mubr.f32.gmra.mrb[0].mxu0 %v321
  %v461 = vpop.f32.mrb[0].mxu0
  %v462 = vadd.f32 %v277, %v461
  %v463 = vpop.f32.mrb[0].mxu0
  %v464 = vadd.f32 %v281, %v463
  %465 = vdwg.mxu0
  %v466 = vld [vmem:[%s5] sm:$0xff]
  %v467 = vld [vmem:[%s5 + $0x8] sm:$0xff]
  %v468 = vld [vmem:[%s5 + $0x10] sm:$0xff]
  %v469 = vld [vmem:[%s5 + $0x18] sm:$0xff]
  %v470 = vld [vmem:[%s5 + $0x20] sm:$0xff]
  %v471 = vld [vmem:[%s5 + $0x28] sm:$0xff]
  %v472 = vld [vmem:[%s5 + $0x30] sm:$0xff]
  %v473 = vld [vmem:[%s5 + $0x38] sm:$0xff]
  %v474 = vld [vmem:[%s5 + $0x40] sm:$0xff]
  %v475 = vld [vmem:[%s5 + $0x48] sm:$0xff]
  %v476 = vld [vmem:[%s5 + $0x50] sm:$0xff]
  %v477 = vld [vmem:[%s5 + $0x58] sm:$0xff]
  %v478 = vld [vmem:[%s5 + $0x60] sm:$0xff]
  %v479 = vld [vmem:[%s5 + $0x68] sm:$0xff]
  %v480 = vld [vmem:[%s5 + $0x70] sm:$0xff]
  %v481 = vld [vmem:[%s5 + $0x78] sm:$0xff]
  %v482 = vld [vmem:[%s6] sm:$0x3]
  %v484 = vlaneseq
  %v485 = vshrl.u32 %v484, 7
  %v486 = vsub.s32 0, %v485
  %v487 = vrot.slane %v482, %v486
  %v488 = vlaneseq
  %v489 = vshrl.u32 %v488, 7
  %v490 = vsub.s32 1, %v489
  %v491 = vrot.slane %v482, %v490
  %494 = vmatprep.subr.mxu0 %v467
  %495 = vmatpush1.msra.mxu0 %v466
  %496 = vmatprep.subr.mxu0 %v469
  %497 = vmatpush1.msra.mxu0 %v468
  %498 = vmatprep.subr.mxu0 %v471
  %499 = vmatpush1.msra.mxu0 %v470
  %500 = vmatprep.subr.mxu0 %v473
  %501 = vmatpush1.msra.mxu0 %v472
  %502 = vmatprep.subr.mxu0 %v475
  %503 = vmatpush1.msra.mxu0 %v474
  %504 = vmatprep.subr.mxu0 %v477
  %505 = vmatpush1.msra.mxu0 %v476
  %506 = vmatprep.subr.mxu0 %v479
  %507 = vmatpush1.msra.mxu0 %v478
  %508 = vmatprep.subr.mxu0 %v481
  %509 = vmatpush1.msra.mxu0 %v480
  %510 = vmatprep.subr.mxu0 0.0
  %511 = vmatpush1.msra.mxu0 0.0
  %512 = vmatprep.subr.mxu0 0.0
  %513 = vmatpush1.msra.mxu0 0.0
  %514 = vmatprep.subr.mxu0 0.0
  %515 = vmatpush1.msra.mxu0 0.0
  %516 = vmatprep.subr.mxu0 0.0
  %517 = vmatpush1.msra.mxu0 0.0
  %518 = vmatprep.subr.mxu0 0.0
  %519 = vmatpush1.msra.mxu0 0.0
  %520 = vmatprep.subr.mxu0 0.0
  %521 = vmatpush1.msra.mxu0 0.0
  %522 = vmatprep.subr.mxu0 0.0
  %523 = vmatpush1.msra.mxu0 0.0
  %524 = vmatprep.subr.mxu0 0.0
  %525 = vmatpush1.msra.mxu0 0.0
  %526 = vmatprep.subr.mxu0 0.0
  %527 = vmatpush1.msra.mxu0 0.0
  %528 = vmatprep.subr.mxu0 0.0
  %529 = vmatpush1.msra.mxu0 0.0
  %530 = vmatprep.subr.mxu0 0.0
  %531 = vmatpush1.msra.mxu0 0.0
  %532 = vmatprep.subr.mxu0 0.0
  %533 = vmatpush1.msra.mxu0 0.0
  %534 = vmatprep.subr.mxu0 0.0
  %535 = vmatpush1.msra.mxu0 0.0
  %536 = vmatprep.subr.mxu0 0.0
  %537 = vmatpush1.msra.mxu0 0.0
  %538 = vmatprep.subr.mxu0 0.0
  %539 = vmatpush1.msra.mxu0 0.0
  %540 = vmatprep.subr.mxu0 0.0
  %541 = vmatpush1.msra.mxu0 0.0
  %542 = vmatprep.subr.mxu0 0.0
  %543 = vmatpush1.msra.mxu0 0.0
  %544 = vmatprep.subr.mxu0 0.0
  %545 = vmatpush1.msra.mxu0 0.0
  %546 = vmatprep.subr.mxu0 0.0
  %547 = vmatpush1.msra.mxu0 0.0
  %548 = vmatprep.subr.mxu0 0.0
  %549 = vmatpush1.msra.mxu0 0.0
  %550 = vmatprep.subr.mxu0 0.0
  %551 = vmatpush1.msra.mxu0 0.0
  %552 = vmatprep.subr.mxu0 0.0
  %553 = vmatpush1.msra.mxu0 0.0
  %554 = vmatprep.subr.mxu0 0.0
  %555 = vmatpush1.msra.mxu0 0.0
  %556 = vmatprep.subr.mxu0 0.0
  %557 = vmatpush1.msra.mxu0 0.0
  %558 = vmatprep.mubr.f32.mxu0 0.0
  %559 = vmatmul.mubr.f32.gmra.mrb[0].mxu0 %v285
  %v560 = vpop.f32.mrb[0].mxu0
  %v561 = vadd.f32 %v487, %v560
  %v562 = vpop.f32.mrb[0].mxu0
  %v563 = vadd.f32 %v491, %v562
  %564 = vmatprep.mubr.f32.mxu0 0.0
  %565 = vmatmul.mubr.f32.gmra.mrb[0].mxu0 %v288
  %v566 = vpop.f32.mrb[0].mxu0
  %v567 = vadd.f32 %v487, %v566
  %v568 = vpop.f32.mrb[0].mxu0
  %v569 = vadd.f32 %v491, %v568
  %570 = vmatprep.mubr.f32.mxu0 0.0
  %571 = vmatmul.mubr.f32.gmra.mrb[0].mxu0 %v291
  %v572 = vpop.f32.mrb[0].mxu0
  %v573 = vadd.f32 %v487, %v572
  %v574 = vpop.f32.mrb[0].mxu0
  %v575 = vadd.f32 %v491, %v574
  %576 = vmatprep.mubr.f32.mxu0 0.0
  %577 = vmatmul.mubr.f32.gmra.mrb[0].mxu0 %v294
  %v578 = vpop.f32.mrb[0].mxu0
  %v579 = vadd.f32 %v487, %v578
  %v580 = vpop.f32.mrb[0].mxu0
  %v581 = vadd.f32 %v491, %v580
  %582 = vmatprep.mubr.f32.mxu0 0.0
  %583 = vmatmul.mubr.f32.gmra.mrb[0].mxu0 %v297
  %v584 = vpop.f32.mrb[0].mxu0
  %v585 = vadd.f32 %v487, %v584
  %v586 = vpop.f32.mrb[0].mxu0
  %v587 = vadd.f32 %v491, %v586
  %588 = vmatprep.mubr.f32.mxu0 0.0
  %589 = vmatmul.mubr.f32.gmra.mrb[0].mxu0 %v300
  %v590 = vpop.f32.mrb[0].mxu0
  %v591 = vadd.f32 %v487, %v590
  %v592 = vpop.f32.mrb[0].mxu0
  %v593 = vadd.f32 %v491, %v592
  %594 = vmatprep.mubr.f32.mxu0 0.0
  %595 = vmatmul.mubr.f32.gmra.mrb[0].mxu0 %v303
  %v596 = vpop.f32.mrb[0].mxu0
  %v597 = vadd.f32 %v487, %v596
  %v598 = vpop.f32.mrb[0].mxu0
  %v599 = vadd.f32 %v491, %v598
  %600 = vmatprep.mubr.f32.mxu0 0.0
  %601 = vmatmul.mubr.f32.gmra.mrb[0].mxu0 %v306
  %v602 = vpop.f32.mrb[0].mxu0
  %v603 = vadd.f32 %v487, %v602
  %v604 = vpop.f32.mrb[0].mxu0
  %v605 = vadd.f32 %v491, %v604
  %606 = vmatprep.mubr.f32.mxu0 0.0
  %607 = vmatmul.mubr.f32.gmra.mrb[0].mxu0 %v309
  %v608 = vpop.f32.mrb[0].mxu0
  %v609 = vadd.f32 %v487, %v608
  %v610 = vpop.f32.mrb[0].mxu0
  %v611 = vadd.f32 %v491, %v610
  %612 = vmatprep.mubr.f32.mxu0 0.0
  %613 = vmatmul.mubr.f32.gmra.mrb[0].mxu0 %v312
  %v614 = vpop.f32.mrb[0].mxu0
  %v615 = vadd.f32 %v487, %v614
  %v616 = vpop.f32.mrb[0].mxu0
  %v617 = vadd.f32 %v491, %v616
  %618 = vmatprep.mubr.f32.mxu0 0.0
  %619 = vmatmul.mubr.f32.gmra.mrb[0].mxu0 %v315
  %v620 = vpop.f32.mrb[0].mxu0
  %v621 = vadd.f32 %v487, %v620
  %v622 = vpop.f32.mrb[0].mxu0
  %v623 = vadd.f32 %v491, %v622
  %624 = vmatprep.mubr.f32.mxu0 0.0
  %625 = vmatmul.mubr.f32.gmra.mrb[0].mxu0 %v318
  %v626 = vpop.f32.mrb[0].mxu0
  %v627 = vadd.f32 %v487, %v626
  %v628 = vpop.f32.mrb[0].mxu0
  %v629 = vadd.f32 %v491, %v628
  %630 = vmatprep.mubr.f32.mxu0 0.0
  %631 = vmatmul.mubr.f32.gmra.mrb[0].mxu0 %v321
  %v632 = vpop.f32.mrb[0].mxu0
  %v633 = vadd.f32 %v487, %v632
  %v634 = vpop.f32.mrb[0].mxu0
  %v635 = vadd.f32 %v491, %v634
  %636 = vdwg.mxu0
  %v637 = vxor.u32 %v561, 2147483648
  %v638 = vxor.u32 %v563, 2147483648
  %v639 = vxor.u32 %v567, 2147483648
  %v640 = vxor.u32 %v569, 2147483648
  %v641 = vxor.u32 %v573, 2147483648
  %v642 = vxor.u32 %v575, 2147483648
  %v643 = vxor.u32 %v579, 2147483648
  %v644 = vxor.u32 %v581, 2147483648
  %v645 = vxor.u32 %v585, 2147483648
  %v646 = vxor.u32 %v587, 2147483648
  %v647 = vxor.u32 %v591, 2147483648
  %v648 = vxor.u32 %v593, 2147483648
  %v649 = vxor.u32 %v597, 2147483648
  %v650 = vxor.u32 %v599, 2147483648
  %v651 = vxor.u32 %v603, 2147483648
  %v652 = vxor.u32 %v605, 2147483648
  %v653 = vxor.u32 %v609, 2147483648
  %v654 = vxor.u32 %v611, 2147483648
  %v655 = vxor.u32 %v615, 2147483648
  %v656 = vxor.u32 %v617, 2147483648
  %v657 = vxor.u32 %v621, 2147483648
  %v658 = vxor.u32 %v623, 2147483648
  %v659 = vxor.u32 %v627, 2147483648
  %v660 = vxor.u32 %v629, 2147483648
  %v661 = vxor.u32 %v633, 2147483648
  %v662 = vxor.u32 %v635, 2147483648
  %v663 = vmul.f32 %v637, 1.442695
  %v664 = vpow.pop %v663
  %v665 = vmul.f32 %v638, 1.442695
  %v666 = vpow.pop %v665
  %v667 = vmul.f32 %v639, 1.442695
  %v668 = vpow.pop %v667
  %v669 = vmul.f32 %v640, 1.442695
  %v670 = vpow.pop %v669
  %v671 = vmul.f32 %v641, 1.442695
  %v672 = vpow.pop %v671
  %v673 = vmul.f32 %v642, 1.442695
  %v674 = vpow.pop %v673
  %v675 = vmul.f32 %v643, 1.442695
  %v676 = vpow.pop %v675
  %v677 = vmul.f32 %v644, 1.442695
  %v678 = vpow.pop %v677
  %v679 = vmul.f32 %v645, 1.442695
  %v680 = vpow.pop %v679
  %v681 = vmul.f32 %v646, 1.442695
  %v682 = vpow.pop %v681
  %v683 = vmul.f32 %v647, 1.442695
  %v684 = vpow.pop %v683
  %v685 = vmul.f32 %v648, 1.442695
  %v686 = vpow.pop %v685
  %v687 = vmul.f32 %v649, 1.442695
  %v688 = vpow.pop %v687
  %v689 = vmul.f32 %v650, 1.442695
  %v690 = vpow.pop %v689
  %v691 = vmul.f32 %v651, 1.442695
  %v692 = vpow.pop %v691
  %v693 = vmul.f32 %v652, 1.442695
  %v694 = vpow.pop %v693
  %v695 = vmul.f32 %v653, 1.442695
  %v696 = vpow.pop %v695
  %v697 = vmul.f32 %v654, 1.442695
  %v698 = vpow.pop %v697
  %v699 = vmul.f32 %v655, 1.442695
  %v700 = vpow.pop %v699
  %v701 = vmul.f32 %v656, 1.442695
  %v702 = vpow.pop %v701
  %v703 = vmul.f32 %v657, 1.442695
  %v704 = vpow.pop %v703
  %v705 = vmul.f32 %v658, 1.442695
  %v706 = vpow.pop %v705
  %v707 = vmul.f32 %v659, 1.442695
  %v708 = vpow.pop %v707
  %v709 = vmul.f32 %v660, 1.442695
  %v710 = vpow.pop %v709
  %v711 = vmul.f32 %v661, 1.442695
  %v712 = vpow.pop %v711
  %v713 = vmul.f32 %v662, 1.442695
  %v714 = vpow.pop %v713
  %v715 = vadd.f32 %v664, 1.0
  %v716 = vadd.f32 %v666, 1.0
  %v717 = vadd.f32 %v668, 1.0
  %v718 = vadd.f32 %v670, 1.0
  %v719 = vadd.f32 %v672, 1.0
  %v720 = vadd.f32 %v674, 1.0
  %v721 = vadd.f32 %v676, 1.0
  %v722 = vadd.f32 %v678, 1.0
  %v723 = vadd.f32 %v680, 1.0
  %v724 = vadd.f32 %v682, 1.0
  %v725 = vadd.f32 %v684, 1.0
  %v726 = vadd.f32 %v686, 1.0
  %v727 = vadd.f32 %v688, 1.0
  %v728 = vadd.f32 %v690, 1.0
  %v729 = vadd.f32 %v692, 1.0
  %v730 = vadd.f32 %v694, 1.0
  %v731 = vadd.f32 %v696, 1.0
  %v732 = vadd.f32 %v698, 1.0
  %v733 = vadd.f32 %v700, 1.0
  %v734 = vadd.f32 %v702, 1.0
  %v735 = vadd.f32 %v704, 1.0
  %v736 = vadd.f32 %v706, 1.0
  %v737 = vadd.f32 %v708, 1.0
  %v738 = vadd.f32 %v710, 1.0
  %v739 = vadd.f32 %v712, 1.0
  %v740 = vadd.f32 %v714, 1.0
  %v741 = vrcp.pop %v715
  %v742 = vmul.f32 1.0, %v741
  %v743 = vrcp.pop %v716
  %v744 = vmul.f32 1.0, %v743
  %v745 = vrcp.pop %v717
  %v746 = vmul.f32 1.0, %v745
  %v747 = vrcp.pop %v718
  %v748 = vmul.f32 1.0, %v747
  %v749 = vrcp.pop %v719
  %v750 = vmul.f32 1.0, %v749
  %v751 = vrcp.pop %v720
  %v752 = vmul.f32 1.0, %v751
  %v753 = vrcp.pop %v721
  %v754 = vmul.f32 1.0, %v753
  %v755 = vrcp.pop %v722
  %v756 = vmul.f32 1.0, %v755
  %v757 = vrcp.pop %v723
  %v758 = vmul.f32 1.0, %v757
  %v759 = vrcp.pop %v724
  %v760 = vmul.f32 1.0, %v759
  %v761 = vrcp.pop %v725
  %v762 = vmul.f32 1.0, %v761
  %v763 = vrcp.pop %v726
  %v764 = vmul.f32 1.0, %v763
  %v765 = vrcp.pop %v727
  %v766 = vmul.f32 1.0, %v765
  %v767 = vrcp.pop %v728
  %v768 = vmul.f32 1.0, %v767
  %v769 = vrcp.pop %v729
  %v770 = vmul.f32 1.0, %v769
  %v771 = vrcp.pop %v730
  %v772 = vmul.f32 1.0, %v771
  %v773 = vrcp.pop %v731
  %v774 = vmul.f32 1.0, %v773
  %v775 = vrcp.pop %v732
  %v776 = vmul.f32 1.0, %v775
  %v777 = vrcp.pop %v733
  %v778 = vmul.f32 1.0, %v777
  %v779 = vrcp.pop %v734
  %v780 = vmul.f32 1.0, %v779
  %v781 = vrcp.pop %v735
  %v782 = vmul.f32 1.0, %v781
  %v783 = vrcp.pop %v736
  %v784 = vmul.f32 1.0, %v783
  %v785 = vrcp.pop %v737
  %v786 = vmul.f32 1.0, %v785
  %v787 = vrcp.pop %v738
  %v788 = vmul.f32 1.0, %v787
  %v789 = vrcp.pop %v739
  %v790 = vmul.f32 1.0, %v789
  %v791 = vrcp.pop %v740
  %v792 = vmul.f32 1.0, %v791
  %v793 = vmul.f32 %v561, %v742
  %v794 = vmul.f32 %v563, %v744
  %v795 = vmul.f32 %v567, %v746
  %v796 = vmul.f32 %v569, %v748
  %v797 = vmul.f32 %v573, %v750
  %v798 = vmul.f32 %v575, %v752
  %v799 = vmul.f32 %v579, %v754
  %v800 = vmul.f32 %v581, %v756
  %v801 = vmul.f32 %v585, %v758
  %v802 = vmul.f32 %v587, %v760
  %v803 = vmul.f32 %v591, %v762
  %v804 = vmul.f32 %v593, %v764
  %v805 = vmul.f32 %v597, %v766
  %v806 = vmul.f32 %v599, %v768
  %v807 = vmul.f32 %v603, %v770
  %v808 = vmul.f32 %v605, %v772
  %v809 = vmul.f32 %v609, %v774
  %v810 = vmul.f32 %v611, %v776
  %v811 = vmul.f32 %v615, %v778
  %v812 = vmul.f32 %v617, %v780
  %v813 = vmul.f32 %v621, %v782
  %v814 = vmul.f32 %v623, %v784
  %v815 = vmul.f32 %v627, %v786
  %v816 = vmul.f32 %v629, %v788
  %v817 = vmul.f32 %v633, %v790
  %v818 = vmul.f32 %v635, %v792
  %v819 = vmul.f32 %v390, %v793
  %v820 = vmul.f32 %v392, %v794
  %v821 = vmul.f32 %v396, %v795
  %v822 = vmul.f32 %v398, %v796
  %v823 = vmul.f32 %v402, %v797
  %v824 = vmul.f32 %v404, %v798
  %v825 = vmul.f32 %v408, %v799
  %v826 = vmul.f32 %v410, %v800
  %v827 = vmul.f32 %v414, %v801
  %v828 = vmul.f32 %v416, %v802
  %v829 = vmul.f32 %v420, %v803
  %v830 = vmul.f32 %v422, %v804
  %v831 = vmul.f32 %v426, %v805
  %v832 = vmul.f32 %v428, %v806
  %v833 = vmul.f32 %v432, %v807
  %v834 = vmul.f32 %v434, %v808
  %v835 = vmul.f32 %v438, %v809
  %v836 = vmul.f32 %v440, %v810
  %v837 = vmul.f32 %v444, %v811
  %v838 = vmul.f32 %v446, %v812
  %v839 = vmul.f32 %v450, %v813
  %v840 = vmul.f32 %v452, %v814
  %v841 = vmul.f32 %v456, %v815
  %v842 = vmul.f32 %v458, %v816
  %v843 = vmul.f32 %v462, %v817
  %v844 = vmul.f32 %v464, %v818
  %v845 = vld [vmem:[%s7] sm:$0xff]
  %v846 = vld [vmem:[%s7 + $0x8] sm:$0xff]
  %v847 = vld [vmem:[%s7 + $0x10] sm:$0xff]
  %v848 = vld [vmem:[%s7 + $0x18] sm:$0xff]
  %v849 = vld [vmem:[%s7 + $0x20] sm:$0xff]
  %v850 = vld [vmem:[%s7 + $0x28] sm:$0xff]
  %v851 = vld [vmem:[%s7 + $0x30] sm:$0xff]
  %v852 = vld [vmem:[%s7 + $0x38] sm:$0xff]
  %v853 = vld [vmem:[%s7 + $0x40] sm:$0xff]
  %v854 = vld [vmem:[%s7 + $0x48] sm:$0xff]
  %v855 = vld [vmem:[%s7 + $0x50] sm:$0xff]
  %v856 = vld [vmem:[%s7 + $0x58] sm:$0xff]
  %v857 = vld [vmem:[%s7 + $0x60] sm:$0xff]
  %v858 = vld [vmem:[%s7 + $0x68] sm:$0xff]
  %v859 = vld [vmem:[%s7 + $0x70] sm:$0xff]
  %v860 = vld [vmem:[%s7 + $0x78] sm:$0xff]
  %v861 = vld [vmem:[%s7 + $0x80] sm:$0xff]
  %v862 = vld [vmem:[%s7 + $0x88] sm:$0xff]
  %v863 = vld [vmem:[%s7 + $0x90] sm:$0xff]
  %v864 = vld [vmem:[%s7 + $0x98] sm:$0xff]
  %v865 = vld [vmem:[%s7 + $0xa0] sm:$0xff]
  %v866 = vld [vmem:[%s7 + $0xa8] sm:$0xff]
  %v867 = vld [vmem:[%s7 + $0xb0] sm:$0xff]
  %v868 = vld [vmem:[%s7 + $0xb8] sm:$0xff]
  %v869 = vld [vmem:[%s7 + $0xc0] sm:$0xff]
  %v870 = vld [vmem:[%s7 + $0xc8] sm:$0xff]
  %v871 = vld [vmem:[%s7 + $0xd0] sm:$0xff]
  %v872 = vld [vmem:[%s7 + $0xd8] sm:$0xff]
  %v873 = vld [vmem:[%s7 + $0xe0] sm:$0xff]
  %v874 = vld [vmem:[%s7 + $0xe8] sm:$0xff]
  %v875 = vld [vmem:[%s7 + $0xf0] sm:$0xff]
  %v876 = vld [vmem:[%s7 + $0xf8] sm:$0xff]
  %v877 = vld [vmem:[%s8] sm:$0x1]
  %v879 = vlaneseq
  %v880 = vshrl.u32 %v879, 7
  %v881 = vsub.s32 0, %v880
  %v882 = vrot.slane %v877, %v881
  %884 = vmatprep.subr.mxu0 0.0
  %885 = vmatpush1.msra.mxu0 %v845
  %886 = vmatprep.subr.mxu0 0.0
  %887 = vmatpush1.msra.mxu0 %v846
  %888 = vmatprep.subr.mxu0 0.0
  %889 = vmatpush1.msra.mxu0 %v847
  %890 = vmatprep.subr.mxu0 0.0
  %891 = vmatpush1.msra.mxu0 %v848
  %892 = vmatprep.subr.mxu0 0.0
  %893 = vmatpush1.msra.mxu0 %v849
  %894 = vmatprep.subr.mxu0 0.0
  %895 = vmatpush1.msra.mxu0 %v850
  %896 = vmatprep.subr.mxu0 0.0
  %897 = vmatpush1.msra.mxu0 %v851
  %898 = vmatprep.subr.mxu0 0.0
  %899 = vmatpush1.msra.mxu0 %v852
  %900 = vmatprep.subr.mxu0 0.0
  %901 = vmatpush1.msra.mxu0 %v853
  %902 = vmatprep.subr.mxu0 0.0
  %903 = vmatpush1.msra.mxu0 %v854
  %904 = vmatprep.subr.mxu0 0.0
  %905 = vmatpush1.msra.mxu0 %v855
  %906 = vmatprep.subr.mxu0 0.0
  %907 = vmatpush1.msra.mxu0 %v856
  %908 = vmatprep.subr.mxu0 0.0
  %909 = vmatpush1.msra.mxu0 %v857
  %910 = vmatprep.subr.mxu0 0.0
  %911 = vmatpush1.msra.mxu0 %v858
  %912 = vmatprep.subr.mxu0 0.0
  %913 = vmatpush1.msra.mxu0 %v859
  %914 = vmatprep.subr.mxu0 0.0
  %915 = vmatpush1.msra.mxu0 %v860
  %916 = vmatprep.subr.mxu0 0.0
  %917 = vmatpush1.msra.mxu0 %v861
  %918 = vmatprep.subr.mxu0 0.0
  %919 = vmatpush1.msra.mxu0 %v862
  %920 = vmatprep.subr.mxu0 0.0
  %921 = vmatpush1.msra.mxu0 %v863
  %922 = vmatprep.subr.mxu0 0.0
  %923 = vmatpush1.msra.mxu0 %v864
  %924 = vmatprep.subr.mxu0 0.0
  %925 = vmatpush1.msra.mxu0 %v865
  %926 = vmatprep.subr.mxu0 0.0
  %927 = vmatpush1.msra.mxu0 %v866
  %928 = vmatprep.subr.mxu0 0.0
  %929 = vmatpush1.msra.mxu0 %v867
  %930 = vmatprep.subr.mxu0 0.0
  %931 = vmatpush1.msra.mxu0 %v868
  %932 = vmatprep.subr.mxu0 0.0
  %933 = vmatpush1.msra.mxu0 %v869
  %934 = vmatprep.subr.mxu0 0.0
  %935 = vmatpush1.msra.mxu0 %v870
  %936 = vmatprep.subr.mxu0 0.0
  %937 = vmatpush1.msra.mxu0 %v871
  %938 = vmatprep.subr.mxu0 0.0
  %939 = vmatpush1.msra.mxu0 %v872
  %940 = vmatprep.subr.mxu0 0.0
  %941 = vmatpush1.msra.mxu0 %v873
  %942 = vmatprep.subr.mxu0 0.0
  %943 = vmatpush1.msra.mxu0 %v874
  %944 = vmatprep.subr.mxu0 0.0
  %945 = vmatpush1.msra.mxu0 %v875
  %946 = vmatprep.subr.mxu0 0.0
  %947 = vmatpush1.msra.mxu0 %v876
  %948 = vmatprep.mubr.f32.mxu0 %v820
  %949 = vmatmul.mubr.f32.gmra.mrb[0].mxu0 %v819
  %v950 = vpop.f32.mrb[0].mxu0
  %v951 = vadd.f32 %v882, %v950
  %v952 = vpop.f32.mrb[0].mxu0
  %953 = vmatprep.mubr.f32.mxu0 %v822
  %954 = vmatmul.mubr.f32.gmra.mrb[0].mxu0 %v821
  %v955 = vpop.f32.mrb[0].mxu0
  %v956 = vadd.f32 %v882, %v955
  %v957 = vpop.f32.mrb[0].mxu0
  %958 = vmatprep.mubr.f32.mxu0 %v824
  %959 = vmatmul.mubr.f32.gmra.mrb[0].mxu0 %v823
  %v960 = vpop.f32.mrb[0].mxu0
  %v961 = vadd.f32 %v882, %v960
  %v962 = vpop.f32.mrb[0].mxu0
  %963 = vmatprep.mubr.f32.mxu0 %v826
  %964 = vmatmul.mubr.f32.gmra.mrb[0].mxu0 %v825
  %v965 = vpop.f32.mrb[0].mxu0
  %v966 = vadd.f32 %v882, %v965
  %v967 = vpop.f32.mrb[0].mxu0
  %968 = vmatprep.mubr.f32.mxu0 %v828
  %969 = vmatmul.mubr.f32.gmra.mrb[0].mxu0 %v827
  %v970 = vpop.f32.mrb[0].mxu0
  %v971 = vadd.f32 %v882, %v970
  %v972 = vpop.f32.mrb[0].mxu0
  %973 = vmatprep.mubr.f32.mxu0 %v830
  %974 = vmatmul.mubr.f32.gmra.mrb[0].mxu0 %v829
  %v975 = vpop.f32.mrb[0].mxu0
  %v976 = vadd.f32 %v882, %v975
  %v977 = vpop.f32.mrb[0].mxu0
  %978 = vmatprep.mubr.f32.mxu0 %v832
  %979 = vmatmul.mubr.f32.gmra.mrb[0].mxu0 %v831
  %v980 = vpop.f32.mrb[0].mxu0
  %v981 = vadd.f32 %v882, %v980
  %v982 = vpop.f32.mrb[0].mxu0
  %983 = vmatprep.mubr.f32.mxu0 %v834
  %984 = vmatmul.mubr.f32.gmra.mrb[0].mxu0 %v833
  %v985 = vpop.f32.mrb[0].mxu0
  %v986 = vadd.f32 %v882, %v985
  %v987 = vpop.f32.mrb[0].mxu0
  %988 = vmatprep.mubr.f32.mxu0 %v836
  %989 = vmatmul.mubr.f32.gmra.mrb[0].mxu0 %v835
  %v990 = vpop.f32.mrb[0].mxu0
  %v991 = vadd.f32 %v882, %v990
  %v992 = vpop.f32.mrb[0].mxu0
  %993 = vmatprep.mubr.f32.mxu0 %v838
  %994 = vmatmul.mubr.f32.gmra.mrb[0].mxu0 %v837
  %v995 = vpop.f32.mrb[0].mxu0
  %v996 = vadd.f32 %v882, %v995
  %v997 = vpop.f32.mrb[0].mxu0
  %998 = vmatprep.mubr.f32.mxu0 %v840
  %999 = vmatmul.mubr.f32.gmra.mrb[0].mxu0 %v839
  %v1000 = vpop.f32.mrb[0].mxu0
  %v1001 = vadd.f32 %v882, %v1000
  %v1002 = vpop.f32.mrb[0].mxu0
  %1003 = vmatprep.mubr.f32.mxu0 %v842
  %1004 = vmatmul.mubr.f32.gmra.mrb[0].mxu0 %v841
  %v1005 = vpop.f32.mrb[0].mxu0
  %v1006 = vadd.f32 %v882, %v1005
  %v1007 = vpop.f32.mrb[0].mxu0
  %1008 = vmatprep.mubr.f32.mxu0 %v844
  %1009 = vmatmul.mubr.f32.gmra.mrb[0].mxu0 %v843
  %v1010 = vpop.f32.mrb[0].mxu0
  %v1011 = vadd.f32 %v882, %v1010
  %v1012 = vpop.f32.mrb[0].mxu0
  %1013 = vdwg.mxu0
  %1014 = vst.msk [vmem:[%s9] sm:$0xff] %vm47, %v951
  %1015 = vst.msk [vmem:[%s9 + $0x8] sm:$0xff] %vm47, %v956
  %1016 = vst.msk [vmem:[%s9 + $0x10] sm:$0xff] %vm47, %v961
  %1017 = vst.msk [vmem:[%s9 + $0x18] sm:$0xff] %vm47, %v966
  %1018 = vst.msk [vmem:[%s9 + $0x20] sm:$0xff] %vm47, %v971
  %1019 = vst.msk [vmem:[%s9 + $0x28] sm:$0xff] %vm47, %v976
  %1020 = vst.msk [vmem:[%s9 + $0x30] sm:$0xff] %vm47, %v981
  %1021 = vst.msk [vmem:[%s9 + $0x38] sm:$0xff] %vm47, %v986
  %1022 = vst.msk [vmem:[%s9 + $0x40] sm:$0xff] %vm47, %v991
  %1023 = vst.msk [vmem:[%s9 + $0x48] sm:$0xff] %vm47, %v996
  %1024 = vst.msk [vmem:[%s9 + $0x50] sm:$0xff] %vm47, %v1001
  %1025 = vst.msk [vmem:[%s9 + $0x58] sm:$0xff] %vm47, %v1006
  %1026 = vst.msk [vmem:[%s9 + $0x60] sm:$0xff] %vm47, %v1011
  // Predicated region
  $region38: #{_transformer_forward.5} parent=0 // pred_check
    _
  $region39: #{_transformer_forward.5} parent=0 // pred_check_branch
    %1028 = sbr.rel (0) target = $region41
  $region40: #{_transformer_forward.5} parent=0 // pred_region
    _
  $region41: #{_transformer_forward.5} parent=0 // pred_fallthru
    _
  // Predicated region
  $region42: #{_transformer_forward.5} parent=0 // pred_check
    _
  $region43: #{_transformer_forward.5} parent=0 // pred_check_branch
    %1030 = sbr.rel (0) target = $region45
  $region44: #{_transformer_forward.5} parent=0 // pred_region
    _
  $region45: #{_transformer_forward.5} parent=0 // pred_fallthru
    _

// kernel: _transformer_forward.4
$region0: #{_transformer_forward.4}
  #allocation0 [shape = 'u32[]', space=smem, size = 0x4, offset = 0x4, fixed_abs, tag = 'smem constant byte address 0x4 - core index']
  #allocation1 [shape = 'u32[144,128]{1,0:T(1,128)}', space=vmem, size = 0x12000, scoped, tag = 'internal scratch']
  #allocation2 [shape = 'f32[1]{0:T(128)S(6)}', space=smem, size = 0x200, scoped, tag = 'scoped memory for _transformer_forward.4']
  %s0 = inlined_call_operand.vmem [shape: f32[4,35,64], index: 0, kind: input, shape index: {}]
  %s1 = inlined_call_operand.vmem [shape: f32[4,35], index: 1, kind: input, shape index: {}]
  %s2 = inlined_call_operand.<no memory space> [shape: f32[1], index: 2, kind: input, shape index: {}]
  %s3 = inlined_call_operand.vmem [shape: f32[1,64], index: 3, kind: input, shape index: {}]
  %s4 = inlined_call_operand.vmem [shape: f32[1,64], index: 4, kind: input, shape index: {}]
  %s5 = inlined_call_operand.vmem [shape: f32[64,64], index: 5, kind: input, shape index: {}]
  %s6 = inlined_call_operand.vmem [shape: f32[64,64], index: 6, kind: input, shape index: {}]
  %s7 = inlined_call_operand.vmem [shape: f32[64,64], index: 7, kind: input, shape index: {}]
  %s8 = inlined_call_operand.vmem [shape: f32[4,35,35], index: 8, kind: input, shape index: {}]
  %s9 = inlined_call_operand.vmem [shape: f32[64,32], index: 9, kind: input, shape index: {}]
  %s10 = inlined_call_operand.vmem [shape: f32[32,32], index: 10, kind: input, shape index: {}]
  %s11 = inlined_call_operand.vmem [shape: f32[32,64], index: 11, kind: input, shape index: {}]
  %s12 = inlined_call_operand.vmem [shape: f32[64,16], index: 12, kind: input, shape index: {}]
  %s13 = inlined_call_operand.vmem [shape: f32[32,35], index: 13, kind: input, shape index: {}]
  %s14 = inlined_call_operand.vmem [shape: f32[64,64], index: 14, kind: input, shape index: {}]
  %s15 = inlined_call_operand.vmem [shape: f32[4,35,64], index: 15, kind: output, shape index: {0}]
  %s16 = inlined_call_operand.vmem [shape: f32[4,1,16], index: 16, kind: output, shape index: {1}]
  %17 = xla_tuple %s15, %s16
  %s18 = sld [smem:[#allocation0]]
  $region78: #{_transformer_forward.4} parent=0
    _
  %s20 = ssub.s32 1, %s18
  %s21 = scalar_select 0, %s20, %s18
  %22 = sst [smem:[#allocation2]] %s2
  // Predicated region
  $region2: #{_transformer_forward.4} parent=0 // pred_check
    _
  $region3: #{_transformer_forward.4} parent=0 // pred_check_branch
    %24 = sbr.rel (0) target = $region5
  $region4: #{_transformer_forward.4} parent=0 // pred_region
    _
  $region5: #{_transformer_forward.4} parent=0 // pred_fallthru
    _
  // Predicated region
  $region6: #{_transformer_forward.4} parent=0 // pred_check
    _
  $region7: #{_transformer_forward.4} parent=0 // pred_check_branch
    %26 = sbr.rel (0) target = $region9
  $region8: #{_transformer_forward.4} parent=0 // pred_region
    _
  $region9: #{_transformer_forward.4} parent=0 // pred_fallthru
    _
  // Predicated region
  $region10: #{_transformer_forward.4} parent=0 // pred_check
    _
  $region11: #{_transformer_forward.4} parent=0 // pred_check_branch
    %28 = sbr.rel (0) target = $region13
  $region12: #{_transformer_forward.4} parent=0 // pred_region
    _
  $region13: #{_transformer_forward.4} parent=0 // pred_fallthru
    _
  // Predicated region
  $region14: #{_transformer_forward.4} parent=0 // pred_check
    _
  $region15: #{_transformer_forward.4} parent=0 // pred_check_branch
    %30 = sbr.rel (0) target = $region17
  $region16: #{_transformer_forward.4} parent=0 // pred_region
    _
  $region17: #{_transformer_forward.4} parent=0 // pred_fallthru
    _
  // Predicated region
  $region18: #{_transformer_forward.4} parent=0 // pred_check
    _
  $region19: #{_transformer_forward.4} parent=0 // pred_check_branch
    %32 = sbr.rel (0) target = $region21
  $region20: #{_transformer_forward.4} parent=0 // pred_region
    _
  $region21: #{_transformer_forward.4} parent=0 // pred_fallthru
    _
  // Predicated region
  $region22: #{_transformer_forward.4} parent=0 // pred_check
    _
  $region23: #{_transformer_forward.4} parent=0 // pred_check_branch
    %34 = sbr.rel (0) target = $region25
  $region24: #{_transformer_forward.4} parent=0 // pred_region
    _
  $region25: #{_transformer_forward.4} parent=0 // pred_fallthru
    _
  // Predicated region
  $region26: #{_transformer_forward.4} parent=0 // pred_check
    _
  $region27: #{_transformer_forward.4} parent=0 // pred_check_branch
    %36 = sbr.rel (0) target = $region29
  $region28: #{_transformer_forward.4} parent=0 // pred_region
    _
  $region29: #{_transformer_forward.4} parent=0 // pred_fallthru
    _
  // Predicated region
  $region30: #{_transformer_forward.4} parent=0 // pred_check
    _
  $region31: #{_transformer_forward.4} parent=0 // pred_check_branch
    %38 = sbr.rel (0) target = $region33
  $region32: #{_transformer_forward.4} parent=0 // pred_region
    _
  $region33: #{_transformer_forward.4} parent=0 // pred_fallthru
    _
  // Predicated region
  $region34: #{_transformer_forward.4} parent=0 // pred_check
    _
  $region35: #{_transformer_forward.4} parent=0 // pred_check_branch
    %40 = sbr.rel (0) target = $region37
  $region36: #{_transformer_forward.4} parent=0 // pred_region
    _
  $region37: #{_transformer_forward.4} parent=0 // pred_fallthru
    _
  // Predicated region
  $region38: #{_transformer_forward.4} parent=0 // pred_check
    _
  $region39: #{_transformer_forward.4} parent=0 // pred_check_branch
    %42 = sbr.rel (0) target = $region41
  $region40: #{_transformer_forward.4} parent=0 // pred_region
    _
  $region41: #{_transformer_forward.4} parent=0 // pred_fallthru
    _
  // Predicated region
  $region42: #{_transformer_forward.4} parent=0 // pred_check
    _
  $region43: #{_transformer_forward.4} parent=0 // pred_check_branch
    %44 = sbr.rel (0) target = $region45
  $region44: #{_transformer_forward.4} parent=0 // pred_region
    _
  $region45: #{_transformer_forward.4} parent=0 // pred_fallthru
    _
  // Predicated region
  $region46: #{_transformer_forward.4} parent=0 // pred_check
    _
  $region47: #{_transformer_forward.4} parent=0 // pred_check_branch
    %46 = sbr.rel (0) target = $region49
  $region48: #{_transformer_forward.4} parent=0 // pred_region
    _
  $region49: #{_transformer_forward.4} parent=0 // pred_fallthru
    _
  // Predicated region
  $region50: #{_transformer_forward.4} parent=0 // pred_check
    _
  $region51: #{_transformer_forward.4} parent=0 // pred_check_branch
    %48 = sbr.rel (0) target = $region53
  $region52: #{_transformer_forward.4} parent=0 // pred_region
    _
  $region53: #{_transformer_forward.4} parent=0 // pred_fallthru
    _
  // Predicated region
  $region54: #{_transformer_forward.4} parent=0 // pred_check
    _
  $region55: #{_transformer_forward.4} parent=0 // pred_check_branch
    %50 = sbr.rel (0) target = $region57
  $region56: #{_transformer_forward.4} parent=0 // pred_region
    _
  $region57: #{_transformer_forward.4} parent=0 // pred_fallthru
    _
  // Predicated region
  $region58: #{_transformer_forward.4} parent=0 // pred_check
    _
  $region59: #{_transformer_forward.4} parent=0 // pred_check_branch
    %52 = sbr.rel (0) target = $region61
  $region60: #{_transformer_forward.4} parent=0 // pred_region
    _
  $region61: #{_transformer_forward.4} parent=0 // pred_fallthru
    _
  %v53 = vld [vmem:[%s0] sm:$0xff]
  %v54 = vld [vmem:[%s0 + $0x8] sm:$0xff]
  %v55 = vld [vmem:[%s0 + $0x10] sm:$0xff]
  %v56 = vld [vmem:[%s0 + $0x18] sm:$0xff]
  %v57 = vld [vmem:[%s0 + $0x20] sm:$0x7]
  %v58 = vld [vmem:[%s0 + $0x28] sm:$0xff]
  %v59 = vld [vmem:[%s0 + $0x30] sm:$0xff]
  %v60 = vld [vmem:[%s0 + $0x38] sm:$0xff]
  %v61 = vld [vmem:[%s0 + $0x40] sm:$0xff]
  %v62 = vld [vmem:[%s0 + $0x48] sm:$0x7]
  %v63 = vld [vmem:[%s0 + $0x50] sm:$0xff]
  %v64 = vld [vmem:[%s0 + $0x58] sm:$0xff]
  %v65 = vld [vmem:[%s0 + $0x60] sm:$0xff]
  %v66 = vld [vmem:[%s0 + $0x68] sm:$0xff]
  %v67 = vld [vmem:[%s0 + $0x70] sm:$0x7]
  %v68 = vld [vmem:[%s0 + $0x78] sm:$0xff]
  %v69 = vld [vmem:[%s0 + $0x80] sm:$0xff]
  %v70 = vld [vmem:[%s0 + $0x88] sm:$0xff]
  %v71 = vld [vmem:[%s0 + $0x90] sm:$0xff]
  %v72 = vld [vmem:[%s0 + $0x98] sm:$0x7]
  %v73 = vld [vmem:[%s1] sm:$0xf]
  %s74 = sld [smem:[#allocation2]]
  %v75 = vld [vmem:[%s3] sm:$0x1]
  %v76 = vld [vmem:[%s4] sm:$0x1]
  %vm77 = vcmask 523264
  %v78 = vsel %vm77, %v53, 0.0
  %79 = vadd.xlane.f32.xlu0 %v78
  %v80 = vpop.xlane.xlu0 %79
  %v81 = vsel %vm77, %v54, 0.0
  %82 = vadd.xlane.f32.xlu0 %v81
  %v83 = vpop.xlane.xlu0 %82
  %v84 = vsel %vm77, %v55, 0.0
  %85 = vadd.xlane.f32.xlu0 %v84
  %v86 = vpop.xlane.xlu0 %85
  %v87 = vsel %vm77, %v56, 0.0
  %88 = vadd.xlane.f32.xlu0 %v87
  %v89 = vpop.xlane.xlu0 %88
  %vm90 = vcmask 518144
  %v91 = vsel %vm90, %v57, 0.0
  %92 = vadd.xlane.f32.xlu0 %v91
  %v93 = vpop.xlane.xlu0 %92
  %v94 = vsel %vm77, %v58, 0.0
  %95 = vadd.xlane.f32.xlu0 %v94
  %v96 = vpop.xlane.xlu0 %95
  %v97 = vsel %vm77, %v59, 0.0
  %98 = vadd.xlane.f32.xlu0 %v97
  %v99 = vpop.xlane.xlu0 %98
  %v100 = vsel %vm77, %v60, 0.0
  %101 = vadd.xlane.f32.xlu0 %v100
  %v102 = vpop.xlane.xlu0 %101
  %v103 = vsel %vm77, %v61, 0.0
  %104 = vadd.xlane.f32.xlu0 %v103
  %v105 = vpop.xlane.xlu0 %104
  %v106 = vsel %vm90, %v62, 0.0
  %107 = vadd.xlane.f32.xlu0 %v106
  %v108 = vpop.xlane.xlu0 %107
  %v109 = vsel %vm77, %v63, 0.0
  %110 = vadd.xlane.f32.xlu0 %v109
  %v111 = vpop.xlane.xlu0 %110
  %v112 = vsel %vm77, %v64, 0.0
  %113 = vadd.xlane.f32.xlu0 %v112
  %v114 = vpop.xlane.xlu0 %113
  %v115 = vsel %vm77, %v65, 0.0
  %116 = vadd.xlane.f32.xlu0 %v115
  %v117 = vpop.xlane.xlu0 %116
  %v118 = vsel %vm77, %v66, 0.0
  %119 = vadd.xlane.f32.xlu0 %v118
  %v120 = vpop.xlane.xlu0 %119
  %v121 = vsel %vm90, %v67, 0.0
  %122 = vadd.xlane.f32.xlu0 %v121
  %v123 = vpop.xlane.xlu0 %122
  %v124 = vsel %vm77, %v68, 0.0
  %125 = vadd.xlane.f32.xlu0 %v124
  %v126 = vpop.xlane.xlu0 %125
  %v127 = vsel %vm77, %v69, 0.0
  %128 = vadd.xlane.f32.xlu0 %v127
  %v129 = vpop.xlane.xlu0 %128
  %v130 = vsel %vm77, %v70, 0.0
  %131 = vadd.xlane.f32.xlu0 %v130
  %v132 = vpop.xlane.xlu0 %131
  %v133 = vsel %vm77, %v71, 0.0
  %134 = vadd.xlane.f32.xlu0 %v133
  %v135 = vpop.xlane.xlu0 %134
  %v136 = vsel %vm90, %v72, 0.0
  %137 = vadd.xlane.f32.xlu0 %v136
  %v138 = vpop.xlane.xlu0 %137
  %v139 = vrcp.pop 64.0
  %v140 = vmul.f32 %v80, %v139
  %v141 = vmul.f32 %v83, %v139
  %v142 = vmul.f32 %v86, %v139
  %v143 = vmul.f32 %v89, %v139
  %v144 = vmul.f32 %v93, %v139
  %v145 = vmul.f32 %v96, %v139
  %v146 = vmul.f32 %v99, %v139
  %v147 = vmul.f32 %v102, %v139
  %v148 = vmul.f32 %v105, %v139
  %v149 = vmul.f32 %v108, %v139
  %v150 = vmul.f32 %v111, %v139
  %v151 = vmul.f32 %v114, %v139
  %v152 = vmul.f32 %v117, %v139
  %v153 = vmul.f32 %v120, %v139
  %v154 = vmul.f32 %v123, %v139
  %v155 = vmul.f32 %v126, %v139
  %v156 = vmul.f32 %v129, %v139
  %v157 = vmul.f32 %v132, %v139
  %v158 = vmul.f32 %v135, %v139
  %v159 = vmul.f32 %v138, %v139
  %v160 = vsub.f32 %v53, %v140
  %v161 = vsub.f32 %v54, %v141
  %v162 = vsub.f32 %v55, %v142
  %v163 = vsub.f32 %v56, %v143
  %v164 = vsub.f32 %v57, %v144
  %v165 = vsub.f32 %v58, %v145
  %v166 = vsub.f32 %v59, %v146
  %v167 = vsub.f32 %v60, %v147
  %v168 = vsub.f32 %v61, %v148
  %v169 = vsub.f32 %v62, %v149
  %v170 = vsub.f32 %v63, %v150
  %v171 = vsub.f32 %v64, %v151
  %v172 = vsub.f32 %v65, %v152
  %v173 = vsub.f32 %v66, %v153
  %v174 = vsub.f32 %v67, %v154
  %v175 = vsub.f32 %v68, %v155
  %v176 = vsub.f32 %v69, %v156
  %v177 = vsub.f32 %v70, %v157
  %v178 = vsub.f32 %v71, %v158
  %v179 = vsub.f32 %v72, %v159
  %v180 = vmul.f32 %v160, %v160
  %v181 = vmul.f32 %v161, %v161
  %v182 = vmul.f32 %v162, %v162
  %v183 = vmul.f32 %v163, %v163
  %v184 = vmul.f32 %v164, %v164
  %v185 = vmul.f32 %v165, %v165
  %v186 = vmul.f32 %v166, %v166
  %v187 = vmul.f32 %v167, %v167
  %v188 = vmul.f32 %v168, %v168
  %v189 = vmul.f32 %v169, %v169
  %v190 = vmul.f32 %v170, %v170
  %v191 = vmul.f32 %v171, %v171
  %v192 = vmul.f32 %v172, %v172
  %v193 = vmul.f32 %v173, %v173
  %v194 = vmul.f32 %v174, %v174
  %v195 = vmul.f32 %v175, %v175
  %v196 = vmul.f32 %v176, %v176
  %v197 = vmul.f32 %v177, %v177
  %v198 = vmul.f32 %v178, %v178
  %v199 = vmul.f32 %v179, %v179
  %v200 = vsel %vm77, %v180, 0.0
  %201 = vadd.xlane.f32.xlu0 %v200
  %v202 = vpop.xlane.xlu0 %201
  %v203 = vsel %vm77, %v181, 0.0
  %204 = vadd.xlane.f32.xlu0 %v203
  %v205 = vpop.xlane.xlu0 %204
  %v206 = vsel %vm77, %v182, 0.0
  %207 = vadd.xlane.f32.xlu0 %v206
  %v208 = vpop.xlane.xlu0 %207
  %v209 = vsel %vm77, %v183, 0.0
  %210 = vadd.xlane.f32.xlu0 %v209
  %v211 = vpop.xlane.xlu0 %210
  %v212 = vsel %vm90, %v184, 0.0
  %213 = vadd.xlane.f32.xlu0 %v212
  %v214 = vpop.xlane.xlu0 %213
  %v215 = vsel %vm77, %v185, 0.0
  %216 = vadd.xlane.f32.xlu0 %v215
  %v217 = vpop.xlane.xlu0 %216
  %v218 = vsel %vm77, %v186, 0.0
  %219 = vadd.xlane.f32.xlu0 %v218
  %v220 = vpop.xlane.xlu0 %219
  %v221 = vsel %vm77, %v187, 0.0
  %222 = vadd.xlane.f32.xlu0 %v221
  %v223 = vpop.xlane.xlu0 %222
  %v224 = vsel %vm77, %v188, 0.0
  %225 = vadd.xlane.f32.xlu0 %v224
  %v226 = vpop.xlane.xlu0 %225
  %v227 = vsel %vm90, %v189, 0.0
  %228 = vadd.xlane.f32.xlu0 %v227
  %v229 = vpop.xlane.xlu0 %228
  %v230 = vsel %vm77, %v190, 0.0
  %231 = vadd.xlane.f32.xlu0 %v230
  %v232 = vpop.xlane.xlu0 %231
  %v233 = vsel %vm77, %v191, 0.0
  %234 = vadd.xlane.f32.xlu0 %v233
  %v235 = vpop.xlane.xlu0 %234
  %v236 = vsel %vm77, %v192, 0.0
  %237 = vadd.xlane.f32.xlu0 %v236
  %v238 = vpop.xlane.xlu0 %237
  %v239 = vsel %vm77, %v193, 0.0
  %240 = vadd.xlane.f32.xlu0 %v239
  %v241 = vpop.xlane.xlu0 %240
  %v242 = vsel %vm90, %v194, 0.0
  %243 = vadd.xlane.f32.xlu0 %v242
  %v244 = vpop.xlane.xlu0 %243
  %v245 = vsel %vm77, %v195, 0.0
  %246 = vadd.xlane.f32.xlu0 %v245
  %v247 = vpop.xlane.xlu0 %246
  %v248 = vsel %vm77, %v196, 0.0
  %249 = vadd.xlane.f32.xlu0 %v248
  %v250 = vpop.xlane.xlu0 %249
  %v251 = vsel %vm77, %v197, 0.0
  %252 = vadd.xlane.f32.xlu0 %v251
  %v253 = vpop.xlane.xlu0 %252
  %v254 = vsel %vm77, %v198, 0.0
  %255 = vadd.xlane.f32.xlu0 %v254
  %v256 = vpop.xlane.xlu0 %255
  %v257 = vsel %vm90, %v199, 0.0
  %258 = vadd.xlane.f32.xlu0 %v257
  %v259 = vpop.xlane.xlu0 %258
  %v260 = vmul.f32 %v202, %v139
  %v261 = vmul.f32 %v205, %v139
  %v262 = vmul.f32 %v208, %v139
  %v263 = vmul.f32 %v211, %v139
  %v264 = vmul.f32 %v214, %v139
  %v265 = vmul.f32 %v217, %v139
  %v266 = vmul.f32 %v220, %v139
  %v267 = vmul.f32 %v223, %v139
  %v268 = vmul.f32 %v226, %v139
  %v269 = vmul.f32 %v229, %v139
  %v270 = vmul.f32 %v232, %v139
  %v271 = vmul.f32 %v235, %v139
  %v272 = vmul.f32 %v238, %v139
  %v273 = vmul.f32 %v241, %v139
  %v274 = vmul.f32 %v244, %v139
  %v275 = vmul.f32 %v247, %v139
  %v276 = vmul.f32 %v250, %v139
  %v277 = vmul.f32 %v253, %v139
  %v278 = vmul.f32 %v256, %v139
  %v279 = vmul.f32 %v259, %v139
  %v280 = vadd.f32 %v260, 1e-05
  %v281 = vadd.f32 %v261, 1e-05
  %v282 = vadd.f32 %v262, 1e-05
  %v283 = vadd.f32 %v263, 1e-05
  %v284 = vadd.f32 %v264, 1e-05
  %v285 = vadd.f32 %v265, 1e-05
  %v286 = vadd.f32 %v266, 1e-05
  %v287 = vadd.f32 %v267, 1e-05
  %v288 = vadd.f32 %v268, 1e-05
  %v289 = vadd.f32 %v269, 1e-05
  %v290 = vadd.f32 %v270, 1e-05
  %v291 = vadd.f32 %v271, 1e-05
  %v292 = vadd.f32 %v272, 1e-05
  %v293 = vadd.f32 %v273, 1e-05
  %v294 = vadd.f32 %v274, 1e-05
  %v295 = vadd.f32 %v275, 1e-05
  %v296 = vadd.f32 %v276, 1e-05
  %v297 = vadd.f32 %v277, 1e-05
  %v298 = vadd.f32 %v278, 1e-05
  %v299 = vadd.f32 %v279, 1e-05
  %v300 = vrsqrt.pop %v280
  %v301 = vrsqrt.pop %v281
  %v302 = vrsqrt.pop %v282
  %v303 = vrsqrt.pop %v283
  %v304 = vrsqrt.pop %v284
  %v305 = vrsqrt.pop %v285
  %v306 = vrsqrt.pop %v286
  %v307 = vrsqrt.pop %v287
  %v308 = vrsqrt.pop %v288
  %v309 = vrsqrt.pop %v289
  %v310 = vrsqrt.pop %v290
  %v311 = vrsqrt.pop %v291
  %v312 = vrsqrt.pop %v292
  %v313 = vrsqrt.pop %v293
  %v314 = vrsqrt.pop %v294
  %v315 = vrsqrt.pop %v295
  %v316 = vrsqrt.pop %v296
  %v317 = vrsqrt.pop %v297
  %v318 = vrsqrt.pop %v298
  %v319 = vrsqrt.pop %v299
  %v320 = vmul.f32 %v160, %v300
  %v321 = vmul.f32 %v161, %v301
  %v322 = vmul.f32 %v162, %v302
  %v323 = vmul.f32 %v163, %v303
  %v324 = vmul.f32 %v164, %v304
  %v325 = vmul.f32 %v165, %v305
  %v326 = vmul.f32 %v166, %v306
  %v327 = vmul.f32 %v167, %v307
  %v328 = vmul.f32 %v168, %v308
  %v329 = vmul.f32 %v169, %v309
  %v330 = vmul.f32 %v170, %v310
  %v331 = vmul.f32 %v171, %v311
  %v332 = vmul.f32 %v172, %v312
  %v333 = vmul.f32 %v173, %v313
  %v334 = vmul.f32 %v174, %v314
  %v335 = vmul.f32 %v175, %v315
  %v336 = vmul.f32 %v176, %v316
  %v337 = vmul.f32 %v177, %v317
  %v338 = vmul.f32 %v178, %v318
  %v339 = vmul.f32 %v179, %v319
  %v341 = vlaneseq
  %v342 = vshrl.u32 %v341, 7
  %v343 = vsub.s32 0, %v342
  %v344 = vrot.slane %v75, %v343
  %v346 = vmul.f32 %v320, %v344
  %v347 = vmul.f32 %v321, %v344
  %v348 = vmul.f32 %v322, %v344
  %v349 = vmul.f32 %v323, %v344
  %v350 = vmul.f32 %v324, %v344
  %v351 = vmul.f32 %v325, %v344
  %v352 = vmul.f32 %v326, %v344
  %v353 = vmul.f32 %v327, %v344
  %v354 = vmul.f32 %v328, %v344
  %v355 = vmul.f32 %v329, %v344
  %v356 = vmul.f32 %v330, %v344
  %v357 = vmul.f32 %v331, %v344
  %v358 = vmul.f32 %v332, %v344
  %v359 = vmul.f32 %v333, %v344
  %v360 = vmul.f32 %v334, %v344
  %v361 = vmul.f32 %v335, %v344
  %v362 = vmul.f32 %v336, %v344
  %v363 = vmul.f32 %v337, %v344
  %v364 = vmul.f32 %v338, %v344
  %v365 = vmul.f32 %v339, %v344
  %v367 = vlaneseq
  %v368 = vshrl.u32 %v367, 7
  %v369 = vsub.s32 0, %v368
  %v370 = vrot.slane %v76, %v369
  %v372 = vadd.f32 %v346, %v370
  %v373 = vadd.f32 %v347, %v370
  %v374 = vadd.f32 %v348, %v370
  %v375 = vadd.f32 %v349, %v370
  %v376 = vadd.f32 %v350, %v370
  %v377 = vadd.f32 %v351, %v370
  %v378 = vadd.f32 %v352, %v370
  %v379 = vadd.f32 %v353, %v370
  %v380 = vadd.f32 %v354, %v370
  %v381 = vadd.f32 %v355, %v370
  %v382 = vadd.f32 %v356, %v370
  %v383 = vadd.f32 %v357, %v370
  %v384 = vadd.f32 %v358, %v370
  %v385 = vadd.f32 %v359, %v370
  %v386 = vadd.f32 %v360, %v370
  %v387 = vadd.f32 %v361, %v370
  %v388 = vadd.f32 %v362, %v370
  %v389 = vadd.f32 %v363, %v370
  %v390 = vadd.f32 %v364, %v370
  %v391 = vadd.f32 %v365, %v370
  %v392 = vld [vmem:[%s5] sm:$0xff]
  %v393 = vld [vmem:[%s5 + $0x8] sm:$0xff]
  %v394 = vld [vmem:[%s5 + $0x10] sm:$0xff]
  %v395 = vld [vmem:[%s5 + $0x18] sm:$0xff]
  %v396 = vld [vmem:[%s5 + $0x20] sm:$0xff]
  %v397 = vld [vmem:[%s5 + $0x28] sm:$0xff]
  %v398 = vld [vmem:[%s5 + $0x30] sm:$0xff]
  %v399 = vld [vmem:[%s5 + $0x38] sm:$0xff]
  %v401 = vsel %vm77, %v372, 0
  %v404 = vsel %vm77, %v373, 0
  %v407 = vsel %vm77, %v374, 0
  %v410 = vsel %vm77, %v375, 0
  %v413 = vsel %vm77, %v376, 0
  %415 = vmatprep.subr.mxu0 0.0
  %416 = vmatpush1.msra.mxu0 %v392
  %417 = vmatprep.subr.mxu0 0.0
  %418 = vmatpush1.msra.mxu0 %v393
  %419 = vmatprep.subr.mxu0 0.0
  %420 = vmatpush1.msra.mxu0 %v394
  %421 = vmatprep.subr.mxu0 0.0
  %422 = vmatpush1.msra.mxu0 %v395
  %423 = vmatprep.subr.mxu0 0.0
  %424 = vmatpush1.msra.mxu0 %v396
  %425 = vmatprep.subr.mxu0 0.0
  %426 = vmatpush1.msra.mxu0 %v397
  %427 = vmatprep.subr.mxu0 0.0
  %428 = vmatpush1.msra.mxu0 %v398
  %429 = vmatprep.subr.mxu0 0.0
  %430 = vmatpush1.msra.mxu0 %v399
  %431 = vmatprep.subr.mxu0 0.0
  %432 = vmatpush1.msra.mxu0 0.0
  %433 = vmatprep.subr.mxu0 0.0
  %434 = vmatpush1.msra.mxu0 0.0
  %435 = vmatprep.subr.mxu0 0.0
  %436 = vmatpush1.msra.mxu0 0.0
  %437 = vmatprep.subr.mxu0 0.0
  %438 = vmatpush1.msra.mxu0 0.0
  %439 = vmatprep.subr.mxu0 0.0
  %440 = vmatpush1.msra.mxu0 0.0
  %441 = vmatprep.subr.mxu0 0.0
  %442 = vmatpush1.msra.mxu0 0.0
  %443 = vmatprep.subr.mxu0 0.0
  %444 = vmatpush1.msra.mxu0 0.0
  %445 = vmatprep.subr.mxu0 0.0
  %446 = vmatpush1.msra.mxu0 0.0
  %447 = vmatprep.subr.mxu0 0.0
  %448 = vmatpush1.msra.mxu0 0.0
  %449 = vmatprep.subr.mxu0 0.0
  %450 = vmatpush1.msra.mxu0 0.0
  %451 = vmatprep.subr.mxu0 0.0
  %452 = vmatpush1.msra.mxu0 0.0
  %453 = vmatprep.subr.mxu0 0.0
  %454 = vmatpush1.msra.mxu0 0.0
  %455 = vmatprep.subr.mxu0 0.0
  %456 = vmatpush1.msra.mxu0 0.0
  %457 = vmatprep.subr.mxu0 0.0
  %458 = vmatpush1.msra.mxu0 0.0
  %459 = vmatprep.subr.mxu0 0.0
  %460 = vmatpush1.msra.mxu0 0.0
  %461 = vmatprep.subr.mxu0 0.0
  %462 = vmatpush1.msra.mxu0 0.0
  %463 = vmatprep.subr.mxu0 0.0
  %464 = vmatpush1.msra.mxu0 0.0
  %465 = vmatprep.subr.mxu0 0.0
  %466 = vmatpush1.msra.mxu0 0.0
  %467 = vmatprep.subr.mxu0 0.0
  %468 = vmatpush1.msra.mxu0 0.0
  %469 = vmatprep.subr.mxu0 0.0
  %470 = vmatpush1.msra.mxu0 0.0
  %471 = vmatprep.subr.mxu0 0.0
  %472 = vmatpush1.msra.mxu0 0.0
  %473 = vmatprep.subr.mxu0 0.0
  %474 = vmatpush1.msra.mxu0 0.0
  %475 = vmatprep.subr.mxu0 0.0
  %476 = vmatpush1.msra.mxu0 0.0
  %477 = vmatprep.subr.mxu0 0.0
  %478 = vmatpush1.msra.mxu0 0.0
  %479 = vmatprep.mubr.f32.mxu0 0.0
  %480 = vmatmul.mubr.f32.gmra.mrb[0].mxu0 %v401
  %v481 = vpop.f32.mrb[0].mxu0
  %v482 = vadd.f32 0.0, %v481
  %v483 = vpop.f32.mrb[0].mxu0
  %484 = vmatprep.mubr.f32.mxu0 0.0
  %485 = vmatmul.mubr.f32.gmra.mrb[0].mxu0 %v404
  %v486 = vpop.f32.mrb[0].mxu0
  %v487 = vadd.f32 0.0, %v486
  %v488 = vpop.f32.mrb[0].mxu0
  %489 = vmatprep.mubr.f32.mxu0 0.0
  %490 = vmatmul.mubr.f32.gmra.mrb[0].mxu0 %v407
  %v491 = vpop.f32.mrb[0].mxu0
  %v492 = vadd.f32 0.0, %v491
  %v493 = vpop.f32.mrb[0].mxu0
  %494 = vmatprep.mubr.f32.mxu0 0.0
  %495 = vmatmul.mubr.f32.gmra.mrb[0].mxu0 %v410
  %v496 = vpop.f32.mrb[0].mxu0
  %v497 = vadd.f32 0.0, %v496
  %v498 = vpop.f32.mrb[0].mxu0
  %499 = vmatprep.mubr.f32.mxu0 0.0
  %500 = vmatmul.mubr.f32.gmra.mrb[0].mxu0 %v413
  %v501 = vpop.f32.mrb[0].mxu0
  %v502 = vadd.f32 0.0, %v501
  %v503 = vpop.f32.mrb[0].mxu0
  %504 = vdwg.mxu0
  %v506 = vsel %vm77, %v377, 0
  %v509 = vsel %vm77, %v378, 0
  %v512 = vsel %vm77, %v379, 0
  %v515 = vsel %vm77, %v380, 0
  %v518 = vsel %vm77, %v381, 0
  %520 = vmatprep.subr.mxu0 0.0
  %521 = vmatpush1.msra.mxu0 %v392
  %522 = vmatprep.subr.mxu0 0.0
  %523 = vmatpush1.msra.mxu0 %v393
  %524 = vmatprep.subr.mxu0 0.0
  %525 = vmatpush1.msra.mxu0 %v394
  %526 = vmatprep.subr.mxu0 0.0
  %527 = vmatpush1.msra.mxu0 %v395
  %528 = vmatprep.subr.mxu0 0.0
  %529 = vmatpush1.msra.mxu0 %v396
  %530 = vmatprep.subr.mxu0 0.0
  %531 = vmatpush1.msra.mxu0 %v397
  %532 = vmatprep.subr.mxu0 0.0
  %533 = vmatpush1.msra.mxu0 %v398
  %534 = vmatprep.subr.mxu0 0.0
  %535 = vmatpush1.msra.mxu0 %v399
  %536 = vmatprep.subr.mxu0 0.0
  %537 = vmatpush1.msra.mxu0 0.0
  %538 = vmatprep.subr.mxu0 0.0
  %539 = vmatpush1.msra.mxu0 0.0
  %540 = vmatprep.subr.mxu0 0.0
  %541 = vmatpush1.msra.mxu0 0.0
  %542 = vmatprep.subr.mxu0 0.0
  %543 = vmatpush1.msra.mxu0 0.0
  %544 = vmatprep.subr.mxu0 0.0
  %545 = vmatpush1.msra.mxu0 0.0
  %546 = vmatprep.subr.mxu0 0.0
  %547 = vmatpush1.msra.mxu0 0.0
  %548 = vmatprep.subr.mxu0 0.0
  %549 = vmatpush1.msra.mxu0 0.0
  %550 = vmatprep.subr.mxu0 0.0
  %551 = vmatpush1.msra.mxu0 0.0
  %552 = vmatprep.subr.mxu0 0.0
  %553 = vmatpush1.msra.mxu0 0.0
  %554 = vmatprep.subr.mxu0 0.0
  %555 = vmatpush1.msra.mxu0 0.0
  %556 = vmatprep.subr.mxu0 0.0
  %557 = vmatpush1.msra.mxu0 0.0
  %558 = vmatprep.subr.mxu0 0.0
  %559 = vmatpush1.msra.mxu0 0.0
  %560 = vmatprep.subr.mxu0 0.0
  %561 = vmatpush1.msra.mxu0 0.0
  %562 = vmatprep.subr.mxu0 0.0
  %563 = vmatpush1.msra.mxu0 0.0
  %564 = vmatprep.subr.mxu0 0.0
  %565 = vmatpush1.msra.mxu0 0.0
  %566 = vmatprep.subr.mxu0 0.0
  %567 = vmatpush1.msra.mxu0 0.0
  %568 = vmatprep.subr.mxu0 0.0
  %569 = vmatpush1.msra.mxu0 0.0
  %570 = vmatprep.subr.mxu0 0.0
  %571 = vmatpush1.msra.mxu0 0.0
  %572 = vmatprep.subr.mxu0 0.0
  %573 = vmatpush1.msra.mxu0 0.0
  %574 = vmatprep.subr.mxu0 0.0
  %575 = vmatpush1.msra.mxu0 0.0
  %576 = vmatprep.subr.mxu0 0.0
  %577 = vmatpush1.msra.mxu0 0.0
  %578 = vmatprep.subr.mxu0 0.0
  %579 = vmatpush1.msra.mxu0 0.0
  %580 = vmatprep.subr.mxu0 0.0
  %581 = vmatpush1.msra.mxu0 0.0
  %582 = vmatprep.subr.mxu0 0.0
  %583 = vmatpush1.msra.mxu0 0.0
  %584 = vmatprep.mubr.f32.mxu0 0.0
  %585 = vmatmul.mubr.f32.gmra.mrb[0].mxu0 %v506
  %v586 = vpop.f32.mrb[0].mxu0
  %v587 = vadd.f32 0.0, %v586
  %v588 = vpop.f32.mrb[0].mxu0
  %589 = vmatprep.mubr.f32.mxu0 0.0
  %590 = vmatmul.mubr.f32.gmra.mrb[0].mxu0 %v509
  %v591 = vpop.f32.mrb[0].mxu0
  %v592 = vadd.f32 0.0, %v591
  %v593 = vpop.f32.mrb[0].mxu0
  %594 = vmatprep.mubr.f32.mxu0 0.0
  %595 = vmatmul.mubr.f32.gmra.mrb[0].mxu0 %v512
  %v596 = vpop.f32.mrb[0].mxu0
  %v597 = vadd.f32 0.0, %v596
  %v598 = vpop.f32.mrb[0].mxu0
  %599 = vmatprep.mubr.f32.mxu0 0.0
  %600 = vmatmul.mubr.f32.gmra.mrb[0].mxu0 %v515
  %v601 = vpop.f32.mrb[0].mxu0
  %v602 = vadd.f32 0.0, %v601
  %v603 = vpop.f32.mrb[0].mxu0
  %604 = vmatprep.mubr.f32.mxu0 0.0
  %605 = vmatmul.mubr.f32.gmra.mrb[0].mxu0 %v518
  %v606 = vpop.f32.mrb[0].mxu0
  %v607 = vadd.f32 0.0, %v606
  %v608 = vpop.f32.mrb[0].mxu0
  %609 = vdwg.mxu0
  %v611 = vsel %vm77, %v382, 0
  %v614 = vsel %vm77, %v383, 0
  %v617 = vsel %vm77, %v384, 0
  %v620 = vsel %vm77, %v385, 0
  %v623 = vsel %vm77, %v386, 0
  %625 = vmatprep.subr.mxu0 0.0
  %626 = vmatpush1.msra.mxu0 %v392
  %627 = vmatprep.subr.mxu0 0.0
  %628 = vmatpush1.msra.mxu0 %v393
  %629 = vmatprep.subr.mxu0 0.0
  %630 = vmatpush1.msra.mxu0 %v394
  %631 = vmatprep.subr.mxu0 0.0
  %632 = vmatpush1.msra.mxu0 %v395
  %633 = vmatprep.subr.mxu0 0.0
  %634 = vmatpush1.msra.mxu0 %v396
  %635 = vmatprep.subr.mxu0 0.0
  %636 = vmatpush1.msra.mxu0 %v397
  %637 = vmatprep.subr.mxu0 0.0
  %638 = vmatpush1.msra.mxu0 %v398
  %639 = vmatprep.subr.mxu0 0.0
  %640 = vmatpush1.msra.mxu0 %v399
  %641 = vmatprep.subr.mxu0 0.0
  %642 = vmatpush1.msra.mxu0 0.0
  %643 = vmatprep.subr.mxu0 0.0
  %644 = vmatpush1.msra.mxu0 0.0
  %645 = vmatprep.subr.mxu0 0.0
  %646 = vmatpush1.msra.mxu0 0.0
  %647 = vmatprep.subr.mxu0 0.0
  %648 = vmatpush1.msra.mxu0 0.0
  %649 = vmatprep.subr.mxu0 0.0
  %650 = vmatpush1.msra.mxu0 0.0
  %651 = vmatprep.subr.mxu0 0.0
  %652 = vmatpush1.msra.mxu0 0.0
  %653 = vmatprep.subr.mxu0 0.0
  %654 = vmatpush1.msra.mxu0 0.0
  %655 = vmatprep.subr.mxu0 0.0
  %656 = vmatpush1.msra.mxu0 0.0
  %657 = vmatprep.subr.mxu0 0.0
  %658 = vmatpush1.msra.mxu0 0.0
  %659 = vmatprep.subr.mxu0 0.0
  %660 = vmatpush1.msra.mxu0 0.0
  %661 = vmatprep.subr.mxu0 0.0
  %662 = vmatpush1.msra.mxu0 0.0
  %663 = vmatprep.subr.mxu0 0.0
  %664 = vmatpush1.msra.mxu0 0.0
  %665 = vmatprep.subr.mxu0 0.0
  %666 = vmatpush1.msra.mxu0 0.0
  %667 = vmatprep.subr.mxu0 0.0
  %668 = vmatpush1.msra.mxu0 0.0
  %669 = vmatprep.subr.mxu0 0.0
  %670 = vmatpush1.msra.mxu0 0.0
  %671 = vmatprep.subr.mxu0 0.0
  %672 = vmatpush1.msra.mxu0 0.0
  %673 = vmatprep.subr.mxu0 0.0
  %674 = vmatpush1.msra.mxu0 0.0
  %675 = vmatprep.subr.mxu0 0.0
  %676 = vmatpush1.msra.mxu0 0.0
  %677 = vmatprep.subr.mxu0 0.0
  %678 = vmatpush1.msra.mxu0 0.0
  %679 = vmatprep.subr.mxu0 0.0
  %680 = vmatpush1.msra.mxu0 0.0
  %681 = vmatprep.subr.mxu0 0.0
  %682 = vmatpush1.msra.mxu0 0.0
  %683 = vmatprep.subr.mxu0 0.0
  %684 = vmatpush1.msra.mxu0 0.0
  %685 = vmatprep.subr.mxu0 0.0
  %686 = vmatpush1.msra.mxu0 0.0
  %687 = vmatprep.subr.mxu0 0.0
  %688 = vmatpush1.msra.mxu0 0.0
  %689 = vmatprep.mubr.f32.mxu0 0.0
  %690 = vmatmul.mubr.f32.gmra.mrb[0].mxu0 %v611
  %v691 = vpop.f32.mrb[0].mxu0
  %v692 = vadd.f32 0.0, %v691
  %v693 = vpop.f32.mrb[0].mxu0
  %694 = vmatprep.mubr.f32.mxu0 0.0
  %695 = vmatmul.mubr.f32.gmra.mrb[0].mxu0 %v614
  %v696 = vpop.f32.mrb[0].mxu0
  %v697 = vadd.f32 0.0, %v696
  %v698 = vpop.f32.mrb[0].mxu0
  %699 = vmatprep.mubr.f32.mxu0 0.0
  %700 = vmatmul.mubr.f32.gmra.mrb[0].mxu0 %v617
  %v701 = vpop.f32.mrb[0].mxu0
  %v702 = vadd.f32 0.0, %v701
  %v703 = vpop.f32.mrb[0].mxu0
  %704 = vmatprep.mubr.f32.mxu0 0.0
  %705 = vmatmul.mubr.f32.gmra.mrb[0].mxu0 %v620
  %v706 = vpop.f32.mrb[0].mxu0
  %v707 = vadd.f32 0.0, %v706
  %v708 = vpop.f32.mrb[0].mxu0
  %709 = vmatprep.mubr.f32.mxu0 0.0
  %710 = vmatmul.mubr.f32.gmra.mrb[0].mxu0 %v623
  %v711 = vpop.f32.mrb[0].mxu0
  %v712 = vadd.f32 0.0, %v711
  %v713 = vpop.f32.mrb[0].mxu0
  %714 = vdwg.mxu0
  %v716 = vsel %vm77, %v387, 0
  %v719 = vsel %vm77, %v388, 0
  %v722 = vsel %vm77, %v389, 0
  %v725 = vsel %vm77, %v390, 0
  %v728 = vsel %vm77, %v391, 0
  %730 = vmatprep.subr.mxu0 0.0
  %731 = vmatpush1.msra.mxu0 %v392
  %732 = vmatprep.subr.mxu0 0.0
  %733 = vmatpush1.msra.mxu0 %v393
  %734 = vmatprep.subr.mxu0 0.0
  %735 = vmatpush1.msra.mxu0 %v394
  %736 = vmatprep.subr.mxu0 0.0
  %737 = vmatpush1.msra.mxu0 %v395
  %738 = vmatprep.subr.mxu0 0.0
  %739 = vmatpush1.msra.mxu0 %v396
  %740 = vmatprep.subr.mxu0 0.0
  %741 = vmatpush1.msra.mxu0 %v397
  %742 = vmatprep.subr.mxu0 0.0
  %743 = vmatpush1.msra.mxu0 %v398
  %744 = vmatprep.subr.mxu0 0.0
  %745 = vmatpush1.msra.mxu0 %v399
  %746 = vmatprep.subr.mxu0 0.0
  %747 = vmatpush1.msra.mxu0 0.0
  %748 = vmatprep.subr.mxu0 0.0
  %749 = vmatpush1.msra.mxu0 0.0
  %750 = vmatprep.subr.mxu0 0.0
  %751 = vmatpush1.msra.mxu0 0.0
  %752 = vmatprep.subr.mxu0 0.0
  %753 = vmatpush1.msra.mxu0 0.0
  %754 = vmatprep.subr.mxu0 0.0
  %755 = vmatpush1.msra.mxu0 0.0
  %756 = vmatprep.subr.mxu0 0.0
  %757 = vmatpush1.msra.mxu0 0.0
  %758 = vmatprep.subr.mxu0 0.0
  %759 = vmatpush1.msra.mxu0 0.0
  %760 = vmatprep.subr.mxu0 0.0
  %761 = vmatpush1.msra.mxu0 0.0
  %762 = vmatprep.subr.mxu0 0.0
  %763 = vmatpush1.msra.mxu0 0.0
  %764 = vmatprep.subr.mxu0 0.0
  %765 = vmatpush1.msra.mxu0 0.0
  %766 = vmatprep.subr.mxu0 0.0
  %767 = vmatpush1.msra.mxu0 0.0
  %768 = vmatprep.subr.mxu0 0.0
  %769 = vmatpush1.msra.mxu0 0.0
  %770 = vmatprep.subr.mxu0 0.0
  %771 = vmatpush1.msra.mxu0 0.0
  %772 = vmatprep.subr.mxu0 0.0
  %773 = vmatpush1.msra.mxu0 0.0
  %774 = vmatprep.subr.mxu0 0.0
  %775 = vmatpush1.msra.mxu0 0.0
  %776 = vmatprep.subr.mxu0 0.0
  %777 = vmatpush1.msra.mxu0 0.0
  %778 = vmatprep.subr.mxu0 0.0
  %779 = vmatpush1.msra.mxu0 0.0
  %780 = vmatprep.subr.mxu0 0.0
  %781 = vmatpush1.msra.mxu0 0.0
  %782 = vmatprep.subr.mxu0 0.0
  %783 = vmatpush1.msra.mxu0 0.0
  %784 = vmatprep.subr.mxu0 0.0
  %785 = vmatpush1.msra.mxu0 0.0
  %786 = vmatprep.subr.mxu0 0.0
  %787 = vmatpush1.msra.mxu0 0.0
  %788 = vmatprep.subr.mxu0 0.0
  %789 = vmatpush1.msra.mxu0 0.0
  %790 = vmatprep.subr.mxu0 0.0
  %791 = vmatpush1.msra.mxu0 0.0
  %792 = vmatprep.subr.mxu0 0.0
  %793 = vmatpush1.msra.mxu0 0.0
  %794 = vmatprep.mubr.f32.mxu0 0.0
  %795 = vmatmul.mubr.f32.gmra.mrb[0].mxu0 %v716
  %v796 = vpop.f32.mrb[0].mxu0
  %v797 = vadd.f32 0.0, %v796
  %v798 = vpop.f32.mrb[0].mxu0
  %799 = vmatprep.mubr.f32.mxu0 0.0
  %800 = vmatmul.mubr.f32.gmra.mrb[0].mxu0 %v719
  %v801 = vpop.f32.mrb[0].mxu0
  %v802 = vadd.f32 0.0, %v801
  %v803 = vpop.f32.mrb[0].mxu0
  %804 = vmatprep.mubr.f32.mxu0 0.0
  %805 = vmatmul.mubr.f32.gmra.mrb[0].mxu0 %v722
  %v806 = vpop.f32.mrb[0].mxu0
  %v807 = vadd.f32 0.0, %v806
  %v808 = vpop.f32.mrb[0].mxu0
  %809 = vmatprep.mubr.f32.mxu0 0.0
  %810 = vmatmul.mubr.f32.gmra.mrb[0].mxu0 %v725
  %v811 = vpop.f32.mrb[0].mxu0
  %v812 = vadd.f32 0.0, %v811
  %v813 = vpop.f32.mrb[0].mxu0
  %814 = vmatprep.mubr.f32.mxu0 0.0
  %815 = vmatmul.mubr.f32.gmra.mrb[0].mxu0 %v728
  %v816 = vpop.f32.mrb[0].mxu0
  %v817 = vadd.f32 0.0, %v816
  %v818 = vpop.f32.mrb[0].mxu0
  %819 = vdwg.mxu0
  %v820 = vld [vmem:[%s6] sm:$0xff]
  %v821 = vld [vmem:[%s6 + $0x8] sm:$0xff]
  %v822 = vld [vmem:[%s6 + $0x10] sm:$0xff]
  %v823 = vld [vmem:[%s6 + $0x18] sm:$0xff]
  %v824 = vld [vmem:[%s6 + $0x20] sm:$0xff]
  %v825 = vld [vmem:[%s6 + $0x28] sm:$0xff]
  %v826 = vld [vmem:[%s6 + $0x30] sm:$0xff]
  %v827 = vld [vmem:[%s6 + $0x38] sm:$0xff]
  %828 = vmatprep.subr.mxu0 0.0
  %829 = vmatpush1.msra.mxu0 %v820
  %830 = vmatprep.subr.mxu0 0.0
  %831 = vmatpush1.msra.mxu0 %v821
  %832 = vmatprep.subr.mxu0 0.0
  %833 = vmatpush1.msra.mxu0 %v822
  %834 = vmatprep.subr.mxu0 0.0
  %835 = vmatpush1.msra.mxu0 %v823
  %836 = vmatprep.subr.mxu0 0.0
  %837 = vmatpush1.msra.mxu0 %v824
  %838 = vmatprep.subr.mxu0 0.0
  %839 = vmatpush1.msra.mxu0 %v825
  %840 = vmatprep.subr.mxu0 0.0
  %841 = vmatpush1.msra.mxu0 %v826
  %842 = vmatprep.subr.mxu0 0.0
  %843 = vmatpush1.msra.mxu0 %v827
  %844 = vmatprep.subr.mxu0 0.0
  %845 = vmatpush1.msra.mxu0 0.0
  %846 = vmatprep.subr.mxu0 0.0
  %847 = vmatpush1.msra.mxu0 0.0
  %848 = vmatprep.subr.mxu0 0.0
  %849 = vmatpush1.msra.mxu0 0.0
  %850 = vmatprep.subr.mxu0 0.0
  %851 = vmatpush1.msra.mxu0 0.0
  %852 = vmatprep.subr.mxu0 0.0
  %853 = vmatpush1.msra.mxu0 0.0
  %854 = vmatprep.subr.mxu0 0.0
  %855 = vmatpush1.msra.mxu0 0.0
  %856 = vmatprep.subr.mxu0 0.0
  %857 = vmatpush1.msra.mxu0 0.0
  %858 = vmatprep.subr.mxu0 0.0
  %859 = vmatpush1.msra.mxu0 0.0
  %860 = vmatprep.subr.mxu0 0.0
  %861 = vmatpush1.msra.mxu0 0.0
  %862 = vmatprep.subr.mxu0 0.0
  %863 = vmatpush1.msra.mxu0 0.0
  %864 = vmatprep.subr.mxu0 0.0
  %865 = vmatpush1.msra.mxu0 0.0
  %866 = vmatprep.subr.mxu0 0.0
  %867 = vmatpush1.msra.mxu0 0.0
  %868 = vmatprep.subr.mxu0 0.0
  %869 = vmatpush1.msra.mxu0 0.0
  %870 = vmatprep.subr.mxu0 0.0
  %871 = vmatpush1.msra.mxu0 0.0
  %872 = vmatprep.subr.mxu0 0.0
  %873 = vmatpush1.msra.mxu0 0.0
  %874 = vmatprep.subr.mxu0 0.0
  %875 = vmatpush1.msra.mxu0 0.0
  %876 = vmatprep.subr.mxu0 0.0
  %877 = vmatpush1.msra.mxu0 0.0
  %878 = vmatprep.subr.mxu0 0.0
  %879 = vmatpush1.msra.mxu0 0.0
  %880 = vmatprep.subr.mxu0 0.0
  %881 = vmatpush1.msra.mxu0 0.0
  %882 = vmatprep.subr.mxu0 0.0
  %883 = vmatpush1.msra.mxu0 0.0
  %884 = vmatprep.subr.mxu0 0.0
  %885 = vmatpush1.msra.mxu0 0.0
  %886 = vmatprep.subr.mxu0 0.0
  %887 = vmatpush1.msra.mxu0 0.0
  %888 = vmatprep.subr.mxu0 0.0
  %889 = vmatpush1.msra.mxu0 0.0
  %890 = vmatprep.subr.mxu0 0.0
  %891 = vmatpush1.msra.mxu0 0.0
  %892 = vmatprep.mubr.f32.mxu0 0.0
  %893 = vmatmul.mubr.f32.gmra.mrb[0].mxu0 %v401
  %v894 = vpop.f32.mrb[0].mxu0
  %v895 = vadd.f32 0.0, %v894
  %v896 = vpop.f32.mrb[0].mxu0
  %897 = vmatprep.mubr.f32.mxu0 0.0
  %898 = vmatmul.mubr.f32.gmra.mrb[0].mxu0 %v404
  %v899 = vpop.f32.mrb[0].mxu0
  %v900 = vadd.f32 0.0, %v899
  %v901 = vpop.f32.mrb[0].mxu0
  %902 = vmatprep.mubr.f32.mxu0 0.0
  %903 = vmatmul.mubr.f32.gmra.mrb[0].mxu0 %v407
  %v904 = vpop.f32.mrb[0].mxu0
  %v905 = vadd.f32 0.0, %v904
  %v906 = vpop.f32.mrb[0].mxu0
  %907 = vmatprep.mubr.f32.mxu0 0.0
  %908 = vmatmul.mubr.f32.gmra.mrb[0].mxu0 %v410
  %v909 = vpop.f32.mrb[0].mxu0
  %v910 = vadd.f32 0.0, %v909
  %v911 = vpop.f32.mrb[0].mxu0
  %912 = vmatprep.mubr.f32.mxu0 0.0
  %913 = vmatmul.mubr.f32.gmra.mrb[0].mxu0 %v413
  %v914 = vpop.f32.mrb[0].mxu0
  %v915 = vadd.f32 0.0, %v914
  %v916 = vpop.f32.mrb[0].mxu0
  %917 = vdwg.mxu0
  %918 = vmatprep.subr.mxu0 0.0
  %919 = vmatpush1.msra.mxu0 %v820
  %920 = vmatprep.subr.mxu0 0.0
  %921 = vmatpush1.msra.mxu0 %v821
  %922 = vmatprep.subr.mxu0 0.0
  %923 = vmatpush1.msra.mxu0 %v822
  %924 = vmatprep.subr.mxu0 0.0
  %925 = vmatpush1.msra.mxu0 %v823
  %926 = vmatprep.subr.mxu0 0.0
  %927 = vmatpush1.msra.mxu0 %v824
  %928 = vmatprep.subr.mxu0 0.0
  %929 = vmatpush1.msra.mxu0 %v825
  %930 = vmatprep.subr.mxu0 0.0
  %931 = vmatpush1.msra.mxu0 %v826
  %932 = vmatprep.subr.mxu0 0.0
  %933 = vmatpush1.msra.mxu0 %v827
  %934 = vmatprep.subr.mxu0 0.0
  %935 = vmatpush1.msra.mxu0 0.0
  %936 = vmatprep.subr.mxu0 0.0
  %937 = vmatpush1.msra.mxu0 0.0
  %938 = vmatprep.subr.mxu0 0.0
  %939 = vmatpush1.msra.mxu0 0.0
  %940 = vmatprep.subr.mxu0 0.0
  %941 = vmatpush1.msra.mxu0 0.0
  %942 = vmatprep.subr.mxu0 0.0
  %943 = vmatpush1.msra.mxu0 0.0
  %944 = vmatprep.subr.mxu0 0.0
  %945 = vmatpush1.msra.mxu0 0.0
  %946 = vmatprep.subr.mxu0 0.0
  %947 = vmatpush1.msra.mxu0 0.0
  %948 = vmatprep.subr.mxu0 0.0
  %949 = vmatpush1.msra.mxu0 0.0
  %950 = vmatprep.subr.mxu0 0.0
  %951 = vmatpush1.msra.mxu0 0.0
  %952 = vmatprep.subr.mxu0 0.0
  %953 = vmatpush1.msra.mxu0 0.0
  %954 = vmatprep.subr.mxu0 0.0
  %955 = vmatpush1.msra.mxu0 0.0
  %956 = vmatprep.subr.mxu0 0.0
  %957 = vmatpush1.msra.mxu0 0.0
  %958 = vmatprep.subr.mxu0 0.0
  %959 = vmatpush1.msra.mxu0 0.0
  %960 = vmatprep.subr.mxu0 0.0
  %961 = vmatpush1.msra.mxu0 0.0
  %962 = vmatprep.subr.mxu0 0.0
  %963 = vmatpush1.msra.mxu0 0.0
  %964 = vmatprep.subr.mxu0 0.0
  %965 = vmatpush1.msra.mxu0 0.0
  %966 = vmatprep.subr.mxu0 0.0
  %967 = vmatpush1.msra.mxu0 0.0
  %968 = vmatprep.subr.mxu0 0.0
  %969 = vmatpush1.msra.mxu0 0.0
  %970 = vmatprep.subr.mxu0 0.0
  %971 = vmatpush1.msra.mxu0 0.0
  %972 = vmatprep.subr.mxu0 0.0
  %973 = vmatpush1.msra.mxu0 0.0
  %974 = vmatprep.subr.mxu0 0.0
  %975 = vmatpush1.msra.mxu0 0.0
  %976 = vmatprep.subr.mxu0 0.0
  %977 = vmatpush1.msra.mxu0 0.0
  %978 = vmatprep.subr.mxu0 0.0
  %979 = vmatpush1.msra.mxu0 0.0
  %980 = vmatprep.subr.mxu0 0.0
  %981 = vmatpush1.msra.mxu0 0.0
  %982 = vmatprep.mubr.f32.mxu0 0.0
  %983 = vmatmul.mubr.f32.gmra.mrb[0].mxu0 %v506
  %v984 = vpop.f32.mrb[0].mxu0
  %v985 = vadd.f32 0.0, %v984
  %v986 = vpop.f32.mrb[0].mxu0
  %987 = vmatprep.mubr.f32.mxu0 0.0
  %988 = vmatmul.mubr.f32.gmra.mrb[0].mxu0 %v509
  %v989 = vpop.f32.mrb[0].mxu0
  %v990 = vadd.f32 0.0, %v989
  %v991 = vpop.f32.mrb[0].mxu0
  %992 = vmatprep.mubr.f32.mxu0 0.0
  %993 = vmatmul.mubr.f32.gmra.mrb[0].mxu0 %v512
  %v994 = vpop.f32.mrb[0].mxu0
  %v995 = vadd.f32 0.0, %v994
  %v996 = vpop.f32.mrb[0].mxu0
  %997 = vmatprep.mubr.f32.mxu0 0.0
  %998 = vmatmul.mubr.f32.gmra.mrb[0].mxu0 %v515
  %v999 = vpop.f32.mrb[0].mxu0
  %v1000 = vadd.f32 0.0, %v999
  %v1001 = vpop.f32.mrb[0].mxu0
  %1002 = vmatprep.mubr.f32.mxu0 0.0
  %1003 = vmatmul.mubr.f32.gmra.mrb[0].mxu0 %v518
  %v1004 = vpop.f32.mrb[0].mxu0
  %v1005 = vadd.f32 0.0, %v1004
  %v1006 = vpop.f32.mrb[0].mxu0
  %1007 = vdwg.mxu0
  %1008 = vmatprep.subr.mxu0 0.0
  %1009 = vmatpush1.msra.mxu0 %v820
  %1010 = vmatprep.subr.mxu0 0.0
  %1011 = vmatpush1.msra.mxu0 %v821
  %1012 = vmatprep.subr.mxu0 0.0
  %1013 = vmatpush1.msra.mxu0 %v822
  %1014 = vmatprep.subr.mxu0 0.0
  %1015 = vmatpush1.msra.mxu0 %v823
  %1016 = vmatprep.subr.mxu0 0.0
  %1017 = vmatpush1.msra.mxu0 %v824
  %1018 = vmatprep.subr.mxu0 0.0
  %1019 = vmatpush1.msra.mxu0 %v825
  %1020 = vmatprep.subr.mxu0 0.0
  %1021 = vmatpush1.msra.mxu0 %v826
  %1022 = vmatprep.subr.mxu0 0.0
  %1023 = vmatpush1.msra.mxu0 %v827
  %1024 = vmatprep.subr.mxu0 0.0
  %1025 = vmatpush1.msra.mxu0 0.0
  %1026 = vmatprep.subr.mxu0 0.0
  %1027 = vmatpush1.msra.mxu0 0.0
  %1028 = vmatprep.subr.mxu0 0.0
  %1029 = vmatpush1.msra.mxu0 0.0
  %1030 = vmatprep.subr.mxu0 0.0
  %1031 = vmatpush1.msra.mxu0 0.0
  %1032 = vmatprep.subr.mxu0 0.0
  %1033 = vmatpush1.msra.mxu0 0.0
  %1034 = vmatprep.subr.mxu0 0.0
  %1035 = vmatpush1.msra.mxu0 0.0
  %1036 = vmatprep.subr.mxu0 0.0
  %1037 = vmatpush1.msra.mxu0 0.0
  %1038 = vmatprep.subr.mxu0 0.0
  %1039 = vmatpush1.msra.mxu0 0.0
  %1040 = vmatprep.subr.mxu0 0.0
  %1041 = vmatpush1.msra.mxu0 0.0
  %1042 = vmatprep.subr.mxu0 0.0
  %1043 = vmatpush1.msra.mxu0 0.0
  %1044 = vmatprep.subr.mxu0 0.0
  %1045 = vmatpush1.msra.mxu0 0.0
  %1046 = vmatprep.subr.mxu0 0.0
  %1047 = vmatpush1.msra.mxu0 0.0
  %1048 = vmatprep.subr.mxu0 0.0
  %1049 = vmatpush1.msra.mxu0 0.0
  %1050 = vmatprep.subr.mxu0 0.0
  %1051 = vmatpush1.msra.mxu0 0.0
  %1052 = vmatprep.subr.mxu0 0.0
  %1053 = vmatpush1.msra.mxu0 0.0
  %1054 = vmatprep.subr.mxu0 0.0
  %1055 = vmatpush1.msra.mxu0 0.0
  %1056 = vmatprep.subr.mxu0 0.0
  %1057 = vmatpush1.msra.mxu0 0.0
  %1058 = vmatprep.subr.mxu0 0.0
  %1059 = vmatpush1.msra.mxu0 0.0
  %1060 = vmatprep.subr.mxu0 0.0
  %1061 = vmatpush1.msra.mxu0 0.0
  %1062 = vmatprep.subr.mxu0 0.0
  %1063 = vmatpush1.msra.mxu0 0.0
  %1064 = vmatprep.subr.mxu0 0.0
  %1065 = vmatpush1.msra.mxu0 0.0
  %1066 = vmatprep.subr.mxu0 0.0
  %1067 = vmatpush1.msra.mxu0 0.0
  %1068 = vmatprep.subr.mxu0 0.0
  %1069 = vmatpush1.msra.mxu0 0.0
  %1070 = vmatprep.subr.mxu0 0.0
  %1071 = vmatpush1.msra.mxu0 0.0
  %1072 = vmatprep.mubr.f32.mxu0 0.0
  %1073 = vmatmul.mubr.f32.gmra.mrb[0].mxu0 %v611
  %v1074 = vpop.f32.mrb[0].mxu0
  %v1075 = vadd.f32 0.0, %v1074
  %v1076 = vpop.f32.mrb[0].mxu0
  %1077 = vmatprep.mubr.f32.mxu0 0.0
  %1078 = vmatmul.mubr.f32.gmra.mrb[0].mxu0 %v614
  %v1079 = vpop.f32.mrb[0].mxu0
  %v1080 = vadd.f32 0.0, %v1079
  %v1081 = vpop.f32.mrb[0].mxu0
  %1082 = vmatprep.mubr.f32.mxu0 0.0
  %1083 = vmatmul.mubr.f32.gmra.mrb[0].mxu0 %v617
  %v1084 = vpop.f32.mrb[0].mxu0
  %v1085 = vadd.f32 0.0, %v1084
  %v1086 = vpop.f32.mrb[0].mxu0
  %1087 = vmatprep.mubr.f32.mxu0 0.0
  %1088 = vmatmul.mubr.f32.gmra.mrb[0].mxu0 %v620
  %v1089 = vpop.f32.mrb[0].mxu0
  %v1090 = vadd.f32 0.0, %v1089
  %v1091 = vpop.f32.mrb[0].mxu0
  %1092 = vmatprep.mubr.f32.mxu0 0.0
  %1093 = vmatmul.mubr.f32.gmra.mrb[0].mxu0 %v623
  %v1094 = vpop.f32.mrb[0].mxu0
  %v1095 = vadd.f32 0.0, %v1094
  %v1096 = vpop.f32.mrb[0].mxu0
  %1097 = vdwg.mxu0
  %1098 = vmatprep.subr.mxu0 0.0
  %1099 = vmatpush1.msra.mxu0 %v820
  %1100 = vmatprep.subr.mxu0 0.0
  %1101 = vmatpush1.msra.mxu0 %v821
  %1102 = vmatprep.subr.mxu0 0.0
  %1103 = vmatpush1.msra.mxu0 %v822
  %1104 = vmatprep.subr.mxu0 0.0
  %1105 = vmatpush1.msra.mxu0 %v823
  %1106 = vmatprep.subr.mxu0 0.0
  %1107 = vmatpush1.msra.mxu0 %v824
  %1108 = vmatprep.subr.mxu0 0.0
  %1109 = vmatpush1.msra.mxu0 %v825
  %1110 = vmatprep.subr.mxu0 0.0
  %1111 = vmatpush1.msra.mxu0 %v826
  %1112 = vmatprep.subr.mxu0 0.0
  %1113 = vmatpush1.msra.mxu0 %v827
  %1114 = vmatprep.subr.mxu0 0.0
  %1115 = vmatpush1.msra.mxu0 0.0
  %1116 = vmatprep.subr.mxu0 0.0
  %1117 = vmatpush1.msra.mxu0 0.0
  %1118 = vmatprep.subr.mxu0 0.0
  %1119 = vmatpush1.msra.mxu0 0.0
  %1120 = vmatprep.subr.mxu0 0.0
  %1121 = vmatpush1.msra.mxu0 0.0
  %1122 = vmatprep.subr.mxu0 0.0
  %1123 = vmatpush1.msra.mxu0 0.0
  %1124 = vmatprep.subr.mxu0 0.0
  %1125 = vmatpush1.msra.mxu0 0.0
  %1126 = vmatprep.subr.mxu0 0.0
  %1127 = vmatpush1.msra.mxu0 0.0
  %1128 = vmatprep.subr.mxu0 0.0
  %1129 = vmatpush1.msra.mxu0 0.0
  %1130 = vmatprep.subr.mxu0 0.0
  %1131 = vmatpush1.msra.mxu0 0.0
  %1132 = vmatprep.subr.mxu0 0.0
  %1133 = vmatpush1.msra.mxu0 0.0
  %1134 = vmatprep.subr.mxu0 0.0
  %1135 = vmatpush1.msra.mxu0 0.0
  %1136 = vmatprep.subr.mxu0 0.0
  %1137 = vmatpush1.msra.mxu0 0.0
  %1138 = vmatprep.subr.mxu0 0.0
  %1139 = vmatpush1.msra.mxu0 0.0
  %1140 = vmatprep.subr.mxu0 0.0
  %1141 = vmatpush1.msra.mxu0 0.0
  %1142 = vmatprep.subr.mxu0 0.0
  %1143 = vmatpush1.msra.mxu0 0.0
  %1144 = vmatprep.subr.mxu0 0.0
  %1145 = vmatpush1.msra.mxu0 0.0
  %1146 = vmatprep.subr.mxu0 0.0
  %1147 = vmatpush1.msra.mxu0 0.0
  %1148 = vmatprep.subr.mxu0 0.0
  %1149 = vmatpush1.msra.mxu0 0.0
  %1150 = vmatprep.subr.mxu0 0.0
  %1151 = vmatpush1.msra.mxu0 0.0
  %1152 = vmatprep.subr.mxu0 0.0
  %1153 = vmatpush1.msra.mxu0 0.0
  %1154 = vmatprep.subr.mxu0 0.0
  %1155 = vmatpush1.msra.mxu0 0.0
  %1156 = vmatprep.subr.mxu0 0.0
  %1157 = vmatpush1.msra.mxu0 0.0
  %1158 = vmatprep.subr.mxu0 0.0
  %1159 = vmatpush1.msra.mxu0 0.0
  %1160 = vmatprep.subr.mxu0 0.0
  %1161 = vmatpush1.msra.mxu0 0.0
  %1162 = vmatprep.mubr.f32.mxu0 0.0
  %1163 = vmatmul.mubr.f32.gmra.mrb[0].mxu0 %v716
  %v1164 = vpop.f32.mrb[0].mxu0
  %v1165 = vadd.f32 0.0, %v1164
  %v1166 = vpop.f32.mrb[0].mxu0
  %1167 = vmatprep.mubr.f32.mxu0 0.0
  %1168 = vmatmul.mubr.f32.gmra.mrb[0].mxu0 %v719
  %v1169 = vpop.f32.mrb[0].mxu0
  %v1170 = vadd.f32 0.0, %v1169
  %v1171 = vpop.f32.mrb[0].mxu0
  %1172 = vmatprep.mubr.f32.mxu0 0.0
  %1173 = vmatmul.mubr.f32.gmra.mrb[0].mxu0 %v722
  %v1174 = vpop.f32.mrb[0].mxu0
  %v1175 = vadd.f32 0.0, %v1174
  %v1176 = vpop.f32.mrb[0].mxu0
  %1177 = vmatprep.mubr.f32.mxu0 0.0
  %1178 = vmatmul.mubr.f32.gmra.mrb[0].mxu0 %v725
  %v1179 = vpop.f32.mrb[0].mxu0
  %v1180 = vadd.f32 0.0, %v1179
  %v1181 = vpop.f32.mrb[0].mxu0
  %1182 = vmatprep.mubr.f32.mxu0 0.0
  %1183 = vmatmul.mubr.f32.gmra.mrb[0].mxu0 %v728
  %v1184 = vpop.f32.mrb[0].mxu0
  %v1185 = vadd.f32 0.0, %v1184
  %v1186 = vpop.f32.mrb[0].mxu0
  %1187 = vdwg.mxu0
  %v1188 = vld [vmem:[%s7] sm:$0xff]
  %v1189 = vld [vmem:[%s7 + $0x8] sm:$0xff]
  %v1190 = vld [vmem:[%s7 + $0x10] sm:$0xff]
  %v1191 = vld [vmem:[%s7 + $0x18] sm:$0xff]
  %v1192 = vld [vmem:[%s7 + $0x20] sm:$0xff]
  %v1193 = vld [vmem:[%s7 + $0x28] sm:$0xff]
  %v1194 = vld [vmem:[%s7 + $0x30] sm:$0xff]
  %v1195 = vld [vmem:[%s7 + $0x38] sm:$0xff]
  %1196 = vmatprep.subr.mxu0 0.0
  %1197 = vmatpush1.msra.mxu0 %v1188
  %1198 = vmatprep.subr.mxu0 0.0
  %1199 = vmatpush1.msra.mxu0 %v1189
  %1200 = vmatprep.subr.mxu0 0.0
  %1201 = vmatpush1.msra.mxu0 %v1190
  %1202 = vmatprep.subr.mxu0 0.0
  %1203 = vmatpush1.msra.mxu0 %v1191
  %1204 = vmatprep.subr.mxu0 0.0
  %1205 = vmatpush1.msra.mxu0 %v1192
  %1206 = vmatprep.subr.mxu0 0.0
  %1207 = vmatpush1.msra.mxu0 %v1193
  %1208 = vmatprep.subr.mxu0 0.0
  %1209 = vmatpush1.msra.mxu0 %v1194
  %1210 = vmatprep.subr.mxu0 0.0
  %1211 = vmatpush1.msra.mxu0 %v1195
  %1212 = vmatprep.subr.mxu0 0.0
  %1213 = vmatpush1.msra.mxu0 0.0
  %1214 = vmatprep.subr.mxu0 0.0
  %1215 = vmatpush1.msra.mxu0 0.0
  %1216 = vmatprep.subr.mxu0 0.0
  %1217 = vmatpush1.msra.mxu0 0.0
  %1218 = vmatprep.subr.mxu0 0.0
  %1219 = vmatpush1.msra.mxu0 0.0
  %1220 = vmatprep.subr.mxu0 0.0
  %1221 = vmatpush1.msra.mxu0 0.0
  %1222 = vmatprep.subr.mxu0 0.0
  %1223 = vmatpush1.msra.mxu0 0.0
  %1224 = vmatprep.subr.mxu0 0.0
  %1225 = vmatpush1.msra.mxu0 0.0
  %1226 = vmatprep.subr.mxu0 0.0
  %1227 = vmatpush1.msra.mxu0 0.0
  %1228 = vmatprep.subr.mxu0 0.0
  %1229 = vmatpush1.msra.mxu0 0.0
  %1230 = vmatprep.subr.mxu0 0.0
  %1231 = vmatpush1.msra.mxu0 0.0
  %1232 = vmatprep.subr.mxu0 0.0
  %1233 = vmatpush1.msra.mxu0 0.0
  %1234 = vmatprep.subr.mxu0 0.0
  %1235 = vmatpush1.msra.mxu0 0.0
  %1236 = vmatprep.subr.mxu0 0.0
  %1237 = vmatpush1.msra.mxu0 0.0
  %1238 = vmatprep.subr.mxu0 0.0
  %1239 = vmatpush1.msra.mxu0 0.0
  %1240 = vmatprep.subr.mxu0 0.0
  %1241 = vmatpush1.msra.mxu0 0.0
  %1242 = vmatprep.subr.mxu0 0.0
  %1243 = vmatpush1.msra.mxu0 0.0
  %1244 = vmatprep.subr.mxu0 0.0
  %1245 = vmatpush1.msra.mxu0 0.0
  %1246 = vmatprep.subr.mxu0 0.0
  %1247 = vmatpush1.msra.mxu0 0.0
  %1248 = vmatprep.subr.mxu0 0.0
  %1249 = vmatpush1.msra.mxu0 0.0
  %1250 = vmatprep.subr.mxu0 0.0
  %1251 = vmatpush1.msra.mxu0 0.0
  %1252 = vmatprep.subr.mxu0 0.0
  %1253 = vmatpush1.msra.mxu0 0.0
  %1254 = vmatprep.subr.mxu0 0.0
  %1255 = vmatpush1.msra.mxu0 0.0
  %1256 = vmatprep.subr.mxu0 0.0
  %1257 = vmatpush1.msra.mxu0 0.0
  %1258 = vmatprep.subr.mxu0 0.0
  %1259 = vmatpush1.msra.mxu0 0.0
  %1260 = vmatprep.mubr.f32.mxu0 0.0
  %1261 = vmatmul.mubr.f32.gmra.mrb[0].mxu0 %v401
  %v1262 = vpop.f32.mrb[0].mxu0
  %v1263 = vadd.f32 0.0, %v1262
  %v1264 = vpop.f32.mrb[0].mxu0
  %1265 = vmatprep.mubr.f32.mxu0 0.0
  %1266 = vmatmul.mubr.f32.gmra.mrb[0].mxu0 %v404
  %v1267 = vpop.f32.mrb[0].mxu0
  %v1268 = vadd.f32 0.0, %v1267
  %v1269 = vpop.f32.mrb[0].mxu0
  %1270 = vmatprep.mubr.f32.mxu0 0.0
  %1271 = vmatmul.mubr.f32.gmra.mrb[0].mxu0 %v407
  %v1272 = vpop.f32.mrb[0].mxu0
  %v1273 = vadd.f32 0.0, %v1272
  %v1274 = vpop.f32.mrb[0].mxu0
  %1275 = vmatprep.mubr.f32.mxu0 0.0
  %1276 = vmatmul.mubr.f32.gmra.mrb[0].mxu0 %v410
  %v1277 = vpop.f32.mrb[0].mxu0
  %v1278 = vadd.f32 0.0, %v1277
  %v1279 = vpop.f32.mrb[0].mxu0
  %1280 = vmatprep.mubr.f32.mxu0 0.0
  %1281 = vmatmul.mubr.f32.gmra.mrb[0].mxu0 %v413
  %v1282 = vpop.f32.mrb[0].mxu0
  %v1283 = vadd.f32 0.0, %v1282
  %v1284 = vpop.f32.mrb[0].mxu0
  %1285 = vdwg.mxu0
  %1286 = vmatprep.subr.mxu0 0.0
  %1287 = vmatpush1.msra.mxu0 %v1188
  %1288 = vmatprep.subr.mxu0 0.0
  %1289 = vmatpush1.msra.mxu0 %v1189
  %1290 = vmatprep.subr.mxu0 0.0
  %1291 = vmatpush1.msra.mxu0 %v1190
  %1292 = vmatprep.subr.mxu0 0.0
  %1293 = vmatpush1.msra.mxu0 %v1191
  %1294 = vmatprep.subr.mxu0 0.0
  %1295 = vmatpush1.msra.mxu0 %v1192
  %1296 = vmatprep.subr.mxu0 0.0
  %1297 = vmatpush1.msra.mxu0 %v1193
  %1298 = vmatprep.subr.mxu0 0.0
  %1299 = vmatpush1.msra.mxu0 %v1194
  %1300 = vmatprep.subr.mxu0 0.0
  %1301 = vmatpush1.msra.mxu0 %v1195
  %1302 = vmatprep.subr.mxu0 0.0
  %1303 = vmatpush1.msra.mxu0 0.0
  %1304 = vmatprep.subr.mxu0 0.0
  %1305 = vmatpush1.msra.mxu0 0.0
  %1306 = vmatprep.subr.mxu0 0.0
  %1307 = vmatpush1.msra.mxu0 0.0
  %1308 = vmatprep.subr.mxu0 0.0
  %1309 = vmatpush1.msra.mxu0 0.0
  %1310 = vmatprep.subr.mxu0 0.0
  %1311 = vmatpush1.msra.mxu0 0.0
  %1312 = vmatprep.subr.mxu0 0.0
  %1313 = vmatpush1.msra.mxu0 0.0
  %1314 = vmatprep.subr.mxu0 0.0
  %1315 = vmatpush1.msra.mxu0 0.0
  %1316 = vmatprep.subr.mxu0 0.0
  %1317 = vmatpush1.msra.mxu0 0.0
  %1318 = vmatprep.subr.mxu0 0.0
  %1319 = vmatpush1.msra.mxu0 0.0
  %1320 = vmatprep.subr.mxu0 0.0
  %1321 = vmatpush1.msra.mxu0 0.0
  %1322 = vmatprep.subr.mxu0 0.0
  %1323 = vmatpush1.msra.mxu0 0.0
  %1324 = vmatprep.subr.mxu0 0.0
  %1325 = vmatpush1.msra.mxu0 0.0
  %1326 = vmatprep.subr.mxu0 0.0
  %1327 = vmatpush1.msra.mxu0 0.0
  %1328 = vmatprep.subr.mxu0 0.0
  %1329 = vmatpush1.msra.mxu0 0.0
  %1330 = vmatprep.subr.mxu0 0.0
  %1331 = vmatpush1.msra.mxu0 0.0
  %1332 = vmatprep.subr.mxu0 0.0
  %1333 = vmatpush1.msra.mxu0 0.0
  %1334 = vmatprep.subr.mxu0 0.0
  %1335 = vmatpush1.msra.mxu0 0.0
  %1336 = vmatprep.subr.mxu0 0.0
  %1337 = vmatpush1.msra.mxu0 0.0
  %1338 = vmatprep.subr.mxu0 0.0
  %1339 = vmatpush1.msra.mxu0 0.0
  %1340 = vmatprep.subr.mxu0 0.0
  %1341 = vmatpush1.msra.mxu0 0.0
  %1342 = vmatprep.subr.mxu0 0.0
  %1343 = vmatpush1.msra.mxu0 0.0
  %1344 = vmatprep.subr.mxu0 0.0
  %1345 = vmatpush1.msra.mxu0 0.0
  %1346 = vmatprep.subr.mxu0 0.0
  %1347 = vmatpush1.msra.mxu0 0.0
  %1348 = vmatprep.subr.mxu0 0.0
  %1349 = vmatpush1.msra.mxu0 0.0
  %1350 = vmatprep.mubr.f32.mxu0 0.0
  %1351 = vmatmul.mubr.f32.gmra.mrb[0].mxu0 %v506
  %v1352 = vpop.f32.mrb[0].mxu0
  %v1353 = vadd.f32 0.0, %v1352
  %v1354 = vpop.f32.mrb[0].mxu0
  %1355 = vmatprep.mubr.f32.mxu0 0.0
  %1356 = vmatmul.mubr.f32.gmra.mrb[0].mxu0 %v509
  %v1357 = vpop.f32.mrb[0].mxu0
  %v1358 = vadd.f32 0.0, %v1357
  %v1359 = vpop.f32.mrb[0].mxu0
  %1360 = vmatprep.mubr.f32.mxu0 0.0
  %1361 = vmatmul.mubr.f32.gmra.mrb[0].mxu0 %v512
  %v1362 = vpop.f32.mrb[0].mxu0
  %v1363 = vadd.f32 0.0, %v1362
  %v1364 = vpop.f32.mrb[0].mxu0
  %1365 = vmatprep.mubr.f32.mxu0 0.0
  %1366 = vmatmul.mubr.f32.gmra.mrb[0].mxu0 %v515
  %v1367 = vpop.f32.mrb[0].mxu0
  %v1368 = vadd.f32 0.0, %v1367
  %v1369 = vpop.f32.mrb[0].mxu0
  %1370 = vmatprep.mubr.f32.mxu0 0.0
  %1371 = vmatmul.mubr.f32.gmra.mrb[0].mxu0 %v518
  %v1372 = vpop.f32.mrb[0].mxu0
  %v1373 = vadd.f32 0.0, %v1372
  %v1374 = vpop.f32.mrb[0].mxu0
  %1375 = vdwg.mxu0
  %1376 = vmatprep.subr.mxu0 0.0
  %1377 = vmatpush1.msra.mxu0 %v1188
  %1378 = vmatprep.subr.mxu0 0.0
  %1379 = vmatpush1.msra.mxu0 %v1189
  %1380 = vmatprep.subr.mxu0 0.0
  %1381 = vmatpush1.msra.mxu0 %v1190
  %1382 = vmatprep.subr.mxu0 0.0
  %1383 = vmatpush1.msra.mxu0 %v1191
  %1384 = vmatprep.subr.mxu0 0.0
  %1385 = vmatpush1.msra.mxu0 %v1192
  %1386 = vmatprep.subr.mxu0 0.0
  %1387 = vmatpush1.msra.mxu0 %v1193
  %1388 = vmatprep.subr.mxu0 0.0
  %1389 = vmatpush1.msra.mxu0 %v1194
  %1390 = vmatprep.subr.mxu0 0.0
  %1391 = vmatpush1.msra.mxu0 %v1195
  %1392 = vmatprep.subr.mxu0 0.0
  %1393 = vmatpush1.msra.mxu0 0.0
  %1394 = vmatprep.subr.mxu0 0.0
  %1395 = vmatpush1.msra.mxu0 0.0
  %1396 = vmatprep.subr.mxu0 0.0
  %1397 = vmatpush1.msra.mxu0 0.0
  %1398 = vmatprep.subr.mxu0 0.0
  %1399 = vmatpush1.msra.mxu0 0.0
  %1400 = vmatprep.subr.mxu0 0.0
  %1401 = vmatpush1.msra.mxu0 0.0
  %1402 = vmatprep.subr.mxu0 0.0
  %1403 = vmatpush1.msra.mxu0 0.0
  %1404 = vmatprep.subr.mxu0 0.0
  %1405 = vmatpush1.msra.mxu0 0.0
  %1406 = vmatprep.subr.mxu0 0.0
  %1407 = vmatpush1.msra.mxu0 0.0
  %1408 = vmatprep.subr.mxu0 0.0
  %1409 = vmatpush1.msra.mxu0 0.0
  %1410 = vmatprep.subr.mxu0 0.0
  %1411 = vmatpush1.msra.mxu0 0.0
  %1412 = vmatprep.subr.mxu0 0.0
  %1413 = vmatpush1.msra.mxu0 0.0
  %1414 = vmatprep.subr.mxu0 0.0
  %1415 = vmatpush1.msra.mxu0 0.0
  %1416 = vmatprep.subr.mxu0 0.0
  %1417 = vmatpush1.msra.mxu0 0.0
  %1418 = vmatprep.subr.mxu0 0.0
  %1419 = vmatpush1.msra.mxu0 0.0
  %1420 = vmatprep.subr.mxu0 0.0
  %1421 = vmatpush1.msra.mxu0 0.0
  %1422 = vmatprep.subr.mxu0 0.0
  %1423 = vmatpush1.msra.mxu0 0.0
  %1424 = vmatprep.subr.mxu0 0.0
  %1425 = vmatpush1.msra.mxu0 0.0
  %1426 = vmatprep.subr.mxu0 0.0
  %1427 = vmatpush1.msra.mxu0 0.0
  %1428 = vmatprep.subr.mxu0 0.0
  %1429 = vmatpush1.msra.mxu0 0.0
  %1430 = vmatprep.subr.mxu0 0.0
  %1431 = vmatpush1.msra.mxu0 0.0
  %1432 = vmatprep.subr.mxu0 0.0
  %1433 = vmatpush1.msra.mxu0 0.0
  %1434 = vmatprep.subr.mxu0 0.0
  %1435 = vmatpush1.msra.mxu0 0.0
  %1436 = vmatprep.subr.mxu0 0.0
  %1437 = vmatpush1.msra.mxu0 0.0
  %1438 = vmatprep.subr.mxu0 0.0
  %1439 = vmatpush1.msra.mxu0 0.0
  %1440 = vmatprep.mubr.f32.mxu0 0.0
  %1441 = vmatmul.mubr.f32.gmra.mrb[0].mxu0 %v611
  %v1442 = vpop.f32.mrb[0].mxu0
  %v1443 = vadd.f32 0.0, %v1442
  %v1444 = vpop.f32.mrb[0].mxu0
  %1445 = vmatprep.mubr.f32.mxu0 0.0
  %1446 = vmatmul.mubr.f32.gmra.mrb[0].mxu0 %v614
  %v1447 = vpop.f32.mrb[0].mxu0
  %v1448 = vadd.f32 0.0, %v1447
  %v1449 = vpop.f32.mrb[0].mxu0
  %1450 = vmatprep.mubr.f32.mxu0 0.0
  %1451 = vmatmul.mubr.f32.gmra.mrb[0].mxu0 %v617
  %v1452 = vpop.f32.mrb[0].mxu0
  %v1453 = vadd.f32 0.0, %v1452
  %v1454 = vpop.f32.mrb[0].mxu0
  %1455 = vmatprep.mubr.f32.mxu0 0.0
  %1456 = vmatmul.mubr.f32.gmra.mrb[0].mxu0 %v620
  %v1457 = vpop.f32.mrb[0].mxu0
  %v1458 = vadd.f32 0.0, %v1457
  %v1459 = vpop.f32.mrb[0].mxu0
  %1460 = vmatprep.mubr.f32.mxu0 0.0
  %1461 = vmatmul.mubr.f32.gmra.mrb[0].mxu0 %v623
  %v1462 = vpop.f32.mrb[0].mxu0
  %v1463 = vadd.f32 0.0, %v1462
  %v1464 = vpop.f32.mrb[0].mxu0
  %1465 = vdwg.mxu0
  %1466 = vmatprep.subr.mxu0 0.0
  %1467 = vmatpush1.msra.mxu0 %v1188
  %1468 = vmatprep.subr.mxu0 0.0
  %1469 = vmatpush1.msra.mxu0 %v1189
  %1470 = vmatprep.subr.mxu0 0.0
  %1471 = vmatpush1.msra.mxu0 %v1190
  %1472 = vmatprep.subr.mxu0 0.0
  %1473 = vmatpush1.msra.mxu0 %v1191
  %1474 = vmatprep.subr.mxu0 0.0
  %1475 = vmatpush1.msra.mxu0 %v1192
  %1476 = vmatprep.subr.mxu0 0.0
  %1477 = vmatpush1.msra.mxu0 %v1193
  %1478 = vmatprep.subr.mxu0 0.0
  %1479 = vmatpush1.msra.mxu0 %v1194
  %1480 = vmatprep.subr.mxu0 0.0
  %1481 = vmatpush1.msra.mxu0 %v1195
  %1482 = vmatprep.subr.mxu0 0.0
  %1483 = vmatpush1.msra.mxu0 0.0
  %1484 = vmatprep.subr.mxu0 0.0
  %1485 = vmatpush1.msra.mxu0 0.0
  %1486 = vmatprep.subr.mxu0 0.0
  %1487 = vmatpush1.msra.mxu0 0.0
  %1488 = vmatprep.subr.mxu0 0.0
  %1489 = vmatpush1.msra.mxu0 0.0
  %1490 = vmatprep.subr.mxu0 0.0
  %1491 = vmatpush1.msra.mxu0 0.0
  %1492 = vmatprep.subr.mxu0 0.0
  %1493 = vmatpush1.msra.mxu0 0.0
  %1494 = vmatprep.subr.mxu0 0.0
  %1495 = vmatpush1.msra.mxu0 0.0
  %1496 = vmatprep.subr.mxu0 0.0
  %1497 = vmatpush1.msra.mxu0 0.0
  %1498 = vmatprep.subr.mxu0 0.0
  %1499 = vmatpush1.msra.mxu0 0.0
  %1500 = vmatprep.subr.mxu0 0.0
  %1501 = vmatpush1.msra.mxu0 0.0
  %1502 = vmatprep.subr.mxu0 0.0
  %1503 = vmatpush1.msra.mxu0 0.0
  %1504 = vmatprep.subr.mxu0 0.0
  %1505 = vmatpush1.msra.mxu0 0.0
  %1506 = vmatprep.subr.mxu0 0.0
  %1507 = vmatpush1.msra.mxu0 0.0
  %1508 = vmatprep.subr.mxu0 0.0
  %1509 = vmatpush1.msra.mxu0 0.0
  %1510 = vmatprep.subr.mxu0 0.0
  %1511 = vmatpush1.msra.mxu0 0.0
  %1512 = vmatprep.subr.mxu0 0.0
  %1513 = vmatpush1.msra.mxu0 0.0
  %1514 = vmatprep.subr.mxu0 0.0
  %1515 = vmatpush1.msra.mxu0 0.0
  %1516 = vmatprep.subr.mxu0 0.0
  %1517 = vmatpush1.msra.mxu0 0.0
  %1518 = vmatprep.subr.mxu0 0.0
  %1519 = vmatpush1.msra.mxu0 0.0
  %1520 = vmatprep.subr.mxu0 0.0
  %1521 = vmatpush1.msra.mxu0 0.0
  %1522 = vmatprep.subr.mxu0 0.0
  %1523 = vmatpush1.msra.mxu0 0.0
  %1524 = vmatprep.subr.mxu0 0.0
  %1525 = vmatpush1.msra.mxu0 0.0
  %1526 = vmatprep.subr.mxu0 0.0
  %1527 = vmatpush1.msra.mxu0 0.0
  %1528 = vmatprep.subr.mxu0 0.0
  %1529 = vmatpush1.msra.mxu0 0.0
  %1530 = vmatprep.mubr.f32.mxu0 0.0
  %1531 = vmatmul.mubr.f32.gmra.mrb[0].mxu0 %v716
  %v1532 = vpop.f32.mrb[0].mxu0
  %v1533 = vadd.f32 0.0, %v1532
  %v1534 = vpop.f32.mrb[0].mxu0
  %1535 = vmatprep.mubr.f32.mxu0 0.0
  %1536 = vmatmul.mubr.f32.gmra.mrb[0].mxu0 %v719
  %v1537 = vpop.f32.mrb[0].mxu0
  %v1538 = vadd.f32 0.0, %v1537
  %v1539 = vpop.f32.mrb[0].mxu0
  %1540 = vmatprep.mubr.f32.mxu0 0.0
  %1541 = vmatmul.mubr.f32.gmra.mrb[0].mxu0 %v722
  %v1542 = vpop.f32.mrb[0].mxu0
  %v1543 = vadd.f32 0.0, %v1542
  %v1544 = vpop.f32.mrb[0].mxu0
  %1545 = vmatprep.mubr.f32.mxu0 0.0
  %1546 = vmatmul.mubr.f32.gmra.mrb[0].mxu0 %v725
  %v1547 = vpop.f32.mrb[0].mxu0
  %v1548 = vadd.f32 0.0, %v1547
  %v1549 = vpop.f32.mrb[0].mxu0
  %1550 = vmatprep.mubr.f32.mxu0 0.0
  %1551 = vmatmul.mubr.f32.gmra.mrb[0].mxu0 %v728
  %v1552 = vpop.f32.mrb[0].mxu0
  %v1553 = vadd.f32 0.0, %v1552
  %v1554 = vpop.f32.mrb[0].mxu0
  %1555 = vdwg.mxu0
  %v1556 = vlaneseq
  %v1557 = vshrl.u32 %v1556, 7
  %v1558 = vsub.s32 0, %v1557
  %v1559 = vrot.slane %v73, %v1558
  %1561 = vbcast.lane.b32.xlu0 %v1559, 256
  %v1562 = vpop.permute.xlu0 %1561
  %s1564 = sor.u32 256, 8
  %1565 = vbcast.lane.b32.xlu0 %v1559, %s1564
  %v1566 = vpop.permute.xlu0 %1565
  %s1568 = sor.u32 256, 16
  %1569 = vbcast.lane.b32.xlu0 %v1559, %s1568
  %v1570 = vpop.permute.xlu0 %1569
  %s1572 = sor.u32 256, 24
  %1573 = vbcast.lane.b32.xlu0 %v1559, %s1572
  %v1574 = vpop.permute.xlu0 %1573
  %s1576 = sor.u32 256, 32
  %1577 = vbcast.lane.b32.xlu0 %v1559, %s1576
  %v1578 = vpop.permute.xlu0 %1577
  %v1579 = vlaneseq
  %v1580 = vshrl.u32 %v1579, 7
  %v1581 = vsub.s32 1, %v1580
  %v1582 = vrot.slane %v73, %v1581
  %1584 = vbcast.lane.b32.xlu0 %v1582, 256
  %v1585 = vpop.permute.xlu0 %1584
  %s1587 = sor.u32 256, 8
  %1588 = vbcast.lane.b32.xlu0 %v1582, %s1587
  %v1589 = vpop.permute.xlu0 %1588
  %s1591 = sor.u32 256, 16
  %1592 = vbcast.lane.b32.xlu0 %v1582, %s1591
  %v1593 = vpop.permute.xlu0 %1592
  %s1595 = sor.u32 256, 24
  %1596 = vbcast.lane.b32.xlu0 %v1582, %s1595
  %v1597 = vpop.permute.xlu0 %1596
  %s1599 = sor.u32 256, 32
  %1600 = vbcast.lane.b32.xlu0 %v1582, %s1599
  %v1601 = vpop.permute.xlu0 %1600
  %v1602 = vlaneseq
  %v1603 = vshrl.u32 %v1602, 7
  %v1604 = vsub.s32 2, %v1603
  %v1605 = vrot.slane %v73, %v1604
  %1607 = vbcast.lane.b32.xlu0 %v1605, 256
  %v1608 = vpop.permute.xlu0 %1607
  %s1610 = sor.u32 256, 8
  %1611 = vbcast.lane.b32.xlu0 %v1605, %s1610
  %v1612 = vpop.permute.xlu0 %1611
  %s1614 = sor.u32 256, 16
  %1615 = vbcast.lane.b32.xlu0 %v1605, %s1614
  %v1616 = vpop.permute.xlu0 %1615
  %s1618 = sor.u32 256, 24
  %1619 = vbcast.lane.b32.xlu0 %v1605, %s1618
  %v1620 = vpop.permute.xlu0 %1619
  %s1622 = sor.u32 256, 32
  %1623 = vbcast.lane.b32.xlu0 %v1605, %s1622
  %v1624 = vpop.permute.xlu0 %1623
  %v1625 = vlaneseq
  %v1626 = vshrl.u32 %v1625, 7
  %v1627 = vsub.s32 3, %v1626
  %v1628 = vrot.slane %v73, %v1627
  %1630 = vbcast.lane.b32.xlu0 %v1628, 256
  %v1631 = vpop.permute.xlu0 %1630
  %s1633 = sor.u32 256, 8
  %1634 = vbcast.lane.b32.xlu0 %v1628, %s1633
  %v1635 = vpop.permute.xlu0 %1634
  %s1637 = sor.u32 256, 16
  %1638 = vbcast.lane.b32.xlu0 %v1628, %s1637
  %v1639 = vpop.permute.xlu0 %1638
  %s1641 = sor.u32 256, 24
  %1642 = vbcast.lane.b32.xlu0 %v1628, %s1641
  %v1643 = vpop.permute.xlu0 %1642
  %s1645 = sor.u32 256, 32
  %1646 = vbcast.lane.b32.xlu0 %v1628, %s1645
  %v1647 = vpop.permute.xlu0 %1646
  %vm1648 = vcmp.gt.f32.partialorder %v1562, 0.5
  %vm1649 = vcmp.gt.f32.partialorder %v1566, 0.5
  %vm1650 = vcmp.gt.f32.partialorder %v1570, 0.5
  %vm1651 = vcmp.gt.f32.partialorder %v1574, 0.5
  %vm1652 = vcmp.gt.f32.partialorder %v1578, 0.5
  %vm1653 = vcmp.gt.f32.partialorder %v1585, 0.5
  %vm1654 = vcmp.gt.f32.partialorder %v1589, 0.5
  %vm1655 = vcmp.gt.f32.partialorder %v1593, 0.5
  %vm1656 = vcmp.gt.f32.partialorder %v1597, 0.5
  %vm1657 = vcmp.gt.f32.partialorder %v1601, 0.5
  %vm1658 = vcmp.gt.f32.partialorder %v1608, 0.5
  %vm1659 = vcmp.gt.f32.partialorder %v1612, 0.5
  %vm1660 = vcmp.gt.f32.partialorder %v1616, 0.5
  %vm1661 = vcmp.gt.f32.partialorder %v1620, 0.5
  %vm1662 = vcmp.gt.f32.partialorder %v1624, 0.5
  %vm1663 = vcmp.gt.f32.partialorder %v1631, 0.5
  %vm1664 = vcmp.gt.f32.partialorder %v1635, 0.5
  %vm1665 = vcmp.gt.f32.partialorder %v1639, 0.5
  %vm1666 = vcmp.gt.f32.partialorder %v1643, 0.5
  %vm1667 = vcmp.gt.f32.partialorder %v1647, 0.5
  %v1670 = vunpack.c.l.s4 1966171168
  %v1671 = vunpack.c.0.s8 %v1670
  %v1672 = vlaneseq
  %v1673 = vshrl.u32 %v1672, 7
  %v1674 = vsub.s32 %v1671, %v1673
  %v1675 = vrot.slane %v73, %v1674
  %v1676 = vcombine.high %v1675, %v1675
  %v1678 = vunpack.c.l.s4 1966171168
  %v1679 = vunpack.c.0.s8 %v1678
  %v1680 = vlaneseq
  %v1681 = vshrl.u32 %v1680, 7
  %v1682 = vsub.s32 %v1679, %v1681
  %v1683 = vrot.slane %v1675, %v1682
  %v1685 = vunpack.c.l.s4 1966171168
  %v1686 = vunpack.c.0.s8 %v1685
  %v1687 = vlaneseq
  %v1688 = vshrl.u32 %v1687, 7
  %v1689 = vsub.s32 %v1686, %v1688
  %v1690 = vrot.slane %v1676, %v1689
  %v1691 = vcombine.high %v1683, %v1683
  %v1692 = vcombine.high %v1690, %v1690
  %vm1697 = vcmp.gt.f32.partialorder %v1683, 0.5
  %vm1698 = vcmp.gt.f32.partialorder %v1690, 0.5
  %vm1699 = vcmp.gt.f32.partialorder %v1691, 0.5
  %vm1700 = vcmp.gt.f32.partialorder %v1692, 0.5
  %v1701 = vsel %vm1648, 1, 0
  %v1702 = vsel %vm1649, 1, 0
  %v1703 = vsel %vm1650, 1, 0
  %v1704 = vsel %vm1651, 1, 0
  %v1705 = vsel %vm1652, 1, 0
  %v1706 = vsel %vm1653, 1, 0
  %v1707 = vsel %vm1654, 1, 0
  %v1708 = vsel %vm1655, 1, 0
  %v1709 = vsel %vm1656, 1, 0
  %v1710 = vsel %vm1657, 1, 0
  %v1711 = vsel %vm1658, 1, 0
  %v1712 = vsel %vm1659, 1, 0
  %v1713 = vsel %vm1660, 1, 0
  %v1714 = vsel %vm1661, 1, 0
  %v1715 = vsel %vm1662, 1, 0
  %v1716 = vsel %vm1663, 1, 0
  %v1717 = vsel %vm1664, 1, 0
  %v1718 = vsel %vm1665, 1, 0
  %v1719 = vsel %vm1666, 1, 0
  %v1720 = vsel %vm1667, 1, 0
  %vm1721 = vcmp.eq.s32.totalorder %v1701, 1
  %vm1722 = vcmp.eq.s32.totalorder %v1702, 1
  %vm1723 = vcmp.eq.s32.totalorder %v1703, 1
  %vm1724 = vcmp.eq.s32.totalorder %v1704, 1
  %vm1725 = vcmp.eq.s32.totalorder %v1705, 1
  %vm1726 = vcmp.eq.s32.totalorder %v1706, 1
  %vm1727 = vcmp.eq.s32.totalorder %v1707, 1
  %vm1728 = vcmp.eq.s32.totalorder %v1708, 1
  %vm1729 = vcmp.eq.s32.totalorder %v1709, 1
  %vm1730 = vcmp.eq.s32.totalorder %v1710, 1
  %vm1731 = vcmp.eq.s32.totalorder %v1711, 1
  %vm1732 = vcmp.eq.s32.totalorder %v1712, 1
  %vm1733 = vcmp.eq.s32.totalorder %v1713, 1
  %vm1734 = vcmp.eq.s32.totalorder %v1714, 1
  %vm1735 = vcmp.eq.s32.totalorder %v1715, 1
  %vm1736 = vcmp.eq.s32.totalorder %v1716, 1
  %vm1737 = vcmp.eq.s32.totalorder %v1717, 1
  %vm1738 = vcmp.eq.s32.totalorder %v1718, 1
  %vm1739 = vcmp.eq.s32.totalorder %v1719, 1
  %vm1740 = vcmp.eq.s32.totalorder %v1720, 1
  %v1741 = vsel %vm1697, 1, 0
  %v1742 = vsel %vm1698, 1, 0
  %v1743 = vsel %vm1699, 1, 0
  %v1744 = vsel %vm1700, 1, 0
  %v1745 = vlaneseq
  %v1746 = vshrl.u32 %v1745, 7
  %v1747 = vsub.s32 0, %v1746
  %v1748 = vrot.slane %v1741, %v1747
  %v1749 = vlaneseq
  %v1750 = vshrl.u32 %v1749, 7
  %v1751 = vsub.s32 0, %v1750
  %v1752 = vrot.slane %v1742, %v1751
  %v1753 = vlaneseq
  %v1754 = vshrl.u32 %v1753, 7
  %v1755 = vsub.s32 0, %v1754
  %v1756 = vrot.slane %v1743, %v1755
  %v1757 = vlaneseq
  %v1758 = vshrl.u32 %v1757, 7
  %v1759 = vsub.s32 0, %v1758
  %v1760 = vrot.slane %v1744, %v1759
  %vm1761 = vcmp.eq.s32.totalorder %v1748, 1
  %vm1762 = vcmp.eq.s32.totalorder %v1752, 1
  %vm1763 = vcmp.eq.s32.totalorder %v1756, 1
  %vm1764 = vcmp.eq.s32.totalorder %v1760, 1
  %vm1765 = vmand %vm1721, %vm1761
  %vm1766 = vmand %vm1722, %vm1761
  %vm1767 = vmand %vm1723, %vm1761
  %vm1768 = vmand %vm1724, %vm1761
  %vm1769 = vmand %vm1725, %vm1761
  %vm1770 = vmand %vm1726, %vm1762
  %vm1771 = vmand %vm1727, %vm1762
  %vm1772 = vmand %vm1728, %vm1762
  %vm1773 = vmand %vm1729, %vm1762
  %vm1774 = vmand %vm1730, %vm1762
  %vm1775 = vmand %vm1731, %vm1763
  %vm1776 = vmand %vm1732, %vm1763
  %vm1777 = vmand %vm1733, %vm1763
  %vm1778 = vmand %vm1734, %vm1763
  %vm1779 = vmand %vm1735, %vm1763
  %vm1780 = vmand %vm1736, %vm1764
  %vm1781 = vmand %vm1737, %vm1764
  %vm1782 = vmand %vm1738, %vm1764
  %vm1783 = vmand %vm1739, %vm1764
  %vm1784 = vmand %vm1740, %vm1764
  %v1785 = vlaneseq
  %v1786 = vshrl.u32 %v1785, 7
  %v1787 = vadd.s32 %v1786, 8
  %v1788 = vadd.s32 %v1786, 16
  %v1789 = vadd.s32 %v1786, 24
  %v1790 = vadd.s32 %v1786, 32
  %v1791 = vlaneseq
  %v1792 = vand.u32 %v1791, 127
  %vm1793 = vcmp.ge.s32.totalorder %v1786, %v1792
  %vm1794 = vcmp.ge.s32.totalorder %v1787, %v1792
  %vm1795 = vcmp.ge.s32.totalorder %v1788, %v1792
  %vm1796 = vcmp.ge.s32.totalorder %v1789, %v1792
  %vm1797 = vcmp.ge.s32.totalorder %v1790, %v1792
  %v1798 = vsel %vm1793, 1, 0
  %v1799 = vsel %vm1794, 1, 0
  %v1800 = vsel %vm1795, 1, 0
  %v1801 = vsel %vm1796, 1, 0
  %v1802 = vsel %vm1797, 1, 0
  %vm1803 = vcmp.eq.s32.totalorder %v1798, 1
  %vm1804 = vcmp.eq.s32.totalorder %v1799, 1
  %vm1805 = vcmp.eq.s32.totalorder %v1800, 1
  %vm1806 = vcmp.eq.s32.totalorder %v1801, 1
  %vm1807 = vcmp.eq.s32.totalorder %v1802, 1
  %vm1808 = vmand %vm1765, %vm1803
  %vm1809 = vmand %vm1766, %vm1804
  %vm1810 = vmand %vm1767, %vm1805
  %vm1811 = vmand %vm1768, %vm1806
  %vm1812 = vmand %vm1769, %vm1807
  %vm1813 = vmand %vm1770, %vm1803
  %vm1814 = vmand %vm1771, %vm1804
  %vm1815 = vmand %vm1772, %vm1805
  %vm1816 = vmand %vm1773, %vm1806
  %vm1817 = vmand %vm1774, %vm1807
  %vm1818 = vmand %vm1775, %vm1803
  %vm1819 = vmand %vm1776, %vm1804
  %vm1820 = vmand %vm1777, %vm1805
  %vm1821 = vmand %vm1778, %vm1806
  %vm1822 = vmand %vm1779, %vm1807
  %vm1823 = vmand %vm1780, %vm1803
  %vm1824 = vmand %vm1781, %vm1804
  %vm1825 = vmand %vm1782, %vm1805
  %vm1826 = vmand %vm1783, %vm1806
  %vm1827 = vmand %vm1784, %vm1807
  %v1828 = vld [vmem:[%s8] sm:$0xff]
  %v1829 = vld [vmem:[%s8 + $0x8] sm:$0xff]
  %v1830 = vld [vmem:[%s8 + $0x10] sm:$0xff]
  %v1831 = vld [vmem:[%s8 + $0x18] sm:$0xff]
  %v1832 = vld [vmem:[%s8 + $0x20] sm:$0x7]
  %v1833 = vld [vmem:[%s8 + $0x28] sm:$0xff]
  %v1834 = vld [vmem:[%s8 + $0x30] sm:$0xff]
  %v1835 = vld [vmem:[%s8 + $0x38] sm:$0xff]
  %v1836 = vld [vmem:[%s8 + $0x40] sm:$0xff]
  %v1837 = vld [vmem:[%s8 + $0x48] sm:$0x7]
  %v1838 = vld [vmem:[%s8 + $0x50] sm:$0xff]
  %v1839 = vld [vmem:[%s8 + $0x58] sm:$0xff]
  %v1840 = vld [vmem:[%s8 + $0x60] sm:$0xff]
  %v1841 = vld [vmem:[%s8 + $0x68] sm:$0xff]
  %v1842 = vld [vmem:[%s8 + $0x70] sm:$0x7]
  %v1843 = vld [vmem:[%s8 + $0x78] sm:$0xff]
  %v1844 = vld [vmem:[%s8 + $0x80] sm:$0xff]
  %v1845 = vld [vmem:[%s8 + $0x88] sm:$0xff]
  %v1846 = vld [vmem:[%s8 + $0x90] sm:$0xff]
  %v1847 = vld [vmem:[%s8 + $0x98] sm:$0x7]
  %v1848 = vmul.f32 %v482, %v482
  %v1849 = vmul.f32 %v487, %v487
  %v1850 = vmul.f32 %v492, %v492
  %v1851 = vmul.f32 %v497, %v497
  %v1852 = vmul.f32 %v502, %v502
  %v1853 = vmul.f32 %v587, %v587
  %v1854 = vmul.f32 %v592, %v592
  %v1855 = vmul.f32 %v597, %v597
  %v1856 = vmul.f32 %v602, %v602
  %v1857 = vmul.f32 %v607, %v607
  %v1858 = vmul.f32 %v692, %v692
  %v1859 = vmul.f32 %v697, %v697
  %v1860 = vmul.f32 %v702, %v702
  %v1861 = vmul.f32 %v707, %v707
  %v1862 = vmul.f32 %v712, %v712
  %v1863 = vmul.f32 %v797, %v797
  %v1864 = vmul.f32 %v802, %v802
  %v1865 = vmul.f32 %v807, %v807
  %v1866 = vmul.f32 %v812, %v812
  %v1867 = vmul.f32 %v817, %v817
  %vm1868 = vcmask 130048
  %v1869 = vsel %vm1868, %v1848, 0.0
  %1870 = vadd.xlane.f32.xlu0 %v1869
  %v1871 = vpop.xlane.xlu0 %1870
  %v1872 = vsel %vm1868, %v1849, 0.0
  %1873 = vadd.xlane.f32.xlu0 %v1872
  %v1874 = vpop.xlane.xlu0 %1873
  %v1875 = vsel %vm1868, %v1850, 0.0
  %1876 = vadd.xlane.f32.xlu0 %v1875
  %v1877 = vpop.xlane.xlu0 %1876
  %v1878 = vsel %vm1868, %v1851, 0.0
  %1879 = vadd.xlane.f32.xlu0 %v1878
  %v1880 = vpop.xlane.xlu0 %1879
  %vm1881 = vcmask 124928
  %v1882 = vsel %vm1881, %v1852, 0.0
  %1883 = vadd.xlane.f32.xlu0 %v1882
  %v1884 = vpop.xlane.xlu0 %1883
  %v1885 = vsel %vm1868, %v1853, 0.0
  %1886 = vadd.xlane.f32.xlu0 %v1885
  %v1887 = vpop.xlane.xlu0 %1886
  %v1888 = vsel %vm1868, %v1854, 0.0
  %1889 = vadd.xlane.f32.xlu0 %v1888
  %v1890 = vpop.xlane.xlu0 %1889
  %v1891 = vsel %vm1868, %v1855, 0.0
  %1892 = vadd.xlane.f32.xlu0 %v1891
  %v1893 = vpop.xlane.xlu0 %1892
  %v1894 = vsel %vm1868, %v1856, 0.0
  %1895 = vadd.xlane.f32.xlu0 %v1894
  %v1896 = vpop.xlane.xlu0 %1895
  %v1897 = vsel %vm1881, %v1857, 0.0
  %1898 = vadd.xlane.f32.xlu0 %v1897
  %v1899 = vpop.xlane.xlu0 %1898
  %v1900 = vsel %vm1868, %v1858, 0.0
  %1901 = vadd.xlane.f32.xlu0 %v1900
  %v1902 = vpop.xlane.xlu0 %1901
  %v1903 = vsel %vm1868, %v1859, 0.0
  %1904 = vadd.xlane.f32.xlu0 %v1903
  %v1905 = vpop.xlane.xlu0 %1904
  %v1906 = vsel %vm1868, %v1860, 0.0
  %1907 = vadd.xlane.f32.xlu0 %v1906
  %v1908 = vpop.xlane.xlu0 %1907
  %v1909 = vsel %vm1868, %v1861, 0.0
  %1910 = vadd.xlane.f32.xlu0 %v1909
  %v1911 = vpop.xlane.xlu0 %1910
  %v1912 = vsel %vm1881, %v1862, 0.0
  %1913 = vadd.xlane.f32.xlu0 %v1912
  %v1914 = vpop.xlane.xlu0 %1913
  %v1915 = vsel %vm1868, %v1863, 0.0
  %1916 = vadd.xlane.f32.xlu0 %v1915
  %v1917 = vpop.xlane.xlu0 %1916
  %v1918 = vsel %vm1868, %v1864, 0.0
  %1919 = vadd.xlane.f32.xlu0 %v1918
  %v1920 = vpop.xlane.xlu0 %1919
  %v1921 = vsel %vm1868, %v1865, 0.0
  %1922 = vadd.xlane.f32.xlu0 %v1921
  %v1923 = vpop.xlane.xlu0 %1922
  %v1924 = vsel %vm1868, %v1866, 0.0
  %1925 = vadd.xlane.f32.xlu0 %v1924
  %v1926 = vpop.xlane.xlu0 %1925
  %v1927 = vsel %vm1881, %v1867, 0.0
  %1928 = vadd.xlane.f32.xlu0 %v1927
  %v1929 = vpop.xlane.xlu0 %1928
  %v1930 = vadd.f32 %v1871, 1e-12
  %v1931 = vadd.f32 %v1874, 1e-12
  %v1932 = vadd.f32 %v1877, 1e-12
  %v1933 = vadd.f32 %v1880, 1e-12
  %v1934 = vadd.f32 %v1884, 1e-12
  %v1935 = vadd.f32 %v1887, 1e-12
  %v1936 = vadd.f32 %v1890, 1e-12
  %v1937 = vadd.f32 %v1893, 1e-12
  %v1938 = vadd.f32 %v1896, 1e-12
  %v1939 = vadd.f32 %v1899, 1e-12
  %v1940 = vadd.f32 %v1902, 1e-12
  %v1941 = vadd.f32 %v1905, 1e-12
  %v1942 = vadd.f32 %v1908, 1e-12
  %v1943 = vadd.f32 %v1911, 1e-12
  %v1944 = vadd.f32 %v1914, 1e-12
  %v1945 = vadd.f32 %v1917, 1e-12
  %v1946 = vadd.f32 %v1920, 1e-12
  %v1947 = vadd.f32 %v1923, 1e-12
  %v1948 = vadd.f32 %v1926, 1e-12
  %v1949 = vadd.f32 %v1929, 1e-12
  %v1950 = vrsqrt.pop %v1930
  %v1951 = vrsqrt.pop %v1931
  %v1952 = vrsqrt.pop %v1932
  %v1953 = vrsqrt.pop %v1933
  %v1954 = vrsqrt.pop %v1934
  %v1955 = vrsqrt.pop %v1935
  %v1956 = vrsqrt.pop %v1936
  %v1957 = vrsqrt.pop %v1937
  %v1958 = vrsqrt.pop %v1938
  %v1959 = vrsqrt.pop %v1939
  %v1960 = vrsqrt.pop %v1940
  %v1961 = vrsqrt.pop %v1941
  %v1962 = vrsqrt.pop %v1942
  %v1963 = vrsqrt.pop %v1943
  %v1964 = vrsqrt.pop %v1944
  %v1965 = vrsqrt.pop %v1945
  %v1966 = vrsqrt.pop %v1946
  %v1967 = vrsqrt.pop %v1947
  %v1968 = vrsqrt.pop %v1948
  %v1969 = vrsqrt.pop %v1949
  %v1970 = vstv %s74
  %v1971 = vmul.f32 %v1950, %v1970
  %v1972 = vmul.f32 %v1951, %v1970
  %v1973 = vmul.f32 %v1952, %v1970
  %v1974 = vmul.f32 %v1953, %v1970
  %v1975 = vmul.f32 %v1954, %v1970
  %v1976 = vmul.f32 %v1955, %v1970
  %v1977 = vmul.f32 %v1956, %v1970
  %v1978 = vmul.f32 %v1957, %v1970
  %v1979 = vmul.f32 %v1958, %v1970
  %v1980 = vmul.f32 %v1959, %v1970
  %v1981 = vmul.f32 %v1960, %v1970
  %v1982 = vmul.f32 %v1961, %v1970
  %v1983 = vmul.f32 %v1962, %v1970
  %v1984 = vmul.f32 %v1963, %v1970
  %v1985 = vmul.f32 %v1964, %v1970
  %v1986 = vmul.f32 %v1965, %v1970
  %v1987 = vmul.f32 %v1966, %v1970
  %v1988 = vmul.f32 %v1967, %v1970
  %v1989 = vmul.f32 %v1968, %v1970
  %v1990 = vmul.f32 %v1969, %v1970
  %v1991 = vmul.f32 %v482, %v1971
  %v1992 = vmul.f32 %v487, %v1972
  %v1993 = vmul.f32 %v492, %v1973
  %v1994 = vmul.f32 %v497, %v1974
  %v1995 = vmul.f32 %v502, %v1975
  %v1996 = vmul.f32 %v587, %v1976
  %v1997 = vmul.f32 %v592, %v1977
  %v1998 = vmul.f32 %v597, %v1978
  %v1999 = vmul.f32 %v602, %v1979
  %v2000 = vmul.f32 %v607, %v1980
  %v2001 = vmul.f32 %v692, %v1981
  %v2002 = vmul.f32 %v697, %v1982
  %v2003 = vmul.f32 %v702, %v1983
  %v2004 = vmul.f32 %v707, %v1984
  %v2005 = vmul.f32 %v712, %v1985
  %v2006 = vmul.f32 %v797, %v1986
  %v2007 = vmul.f32 %v802, %v1987
  %v2008 = vmul.f32 %v807, %v1988
  %v2009 = vmul.f32 %v812, %v1989
  %v2010 = vmul.f32 %v817, %v1990
  %v2011 = vmul.f32 %v895, %v895
  %v2012 = vmul.f32 %v900, %v900
  %v2013 = vmul.f32 %v905, %v905
  %v2014 = vmul.f32 %v910, %v910
  %v2015 = vmul.f32 %v915, %v915
  %v2016 = vmul.f32 %v985, %v985
  %v2017 = vmul.f32 %v990, %v990
  %v2018 = vmul.f32 %v995, %v995
  %v2019 = vmul.f32 %v1000, %v1000
  %v2020 = vmul.f32 %v1005, %v1005
  %v2021 = vmul.f32 %v1075, %v1075
  %v2022 = vmul.f32 %v1080, %v1080
  %v2023 = vmul.f32 %v1085, %v1085
  %v2024 = vmul.f32 %v1090, %v1090
  %v2025 = vmul.f32 %v1095, %v1095
  %v2026 = vmul.f32 %v1165, %v1165
  %v2027 = vmul.f32 %v1170, %v1170
  %v2028 = vmul.f32 %v1175, %v1175
  %v2029 = vmul.f32 %v1180, %v1180
  %v2030 = vmul.f32 %v1185, %v1185
  %v2031 = vsel %vm1868, %v2011, 0.0
  %2032 = vadd.xlane.f32.xlu0 %v2031
  %v2033 = vpop.xlane.xlu0 %2032
  %v2034 = vsel %vm1868, %v2012, 0.0
  %2035 = vadd.xlane.f32.xlu0 %v2034
  %v2036 = vpop.xlane.xlu0 %2035
  %v2037 = vsel %vm1868, %v2013, 0.0
  %2038 = vadd.xlane.f32.xlu0 %v2037
  %v2039 = vpop.xlane.xlu0 %2038
  %v2040 = vsel %vm1868, %v2014, 0.0
  %2041 = vadd.xlane.f32.xlu0 %v2040
  %v2042 = vpop.xlane.xlu0 %2041
  %v2043 = vsel %vm1881, %v2015, 0.0
  %2044 = vadd.xlane.f32.xlu0 %v2043
  %v2045 = vpop.xlane.xlu0 %2044
  %v2046 = vsel %vm1868, %v2016, 0.0
  %2047 = vadd.xlane.f32.xlu0 %v2046
  %v2048 = vpop.xlane.xlu0 %2047
  %v2049 = vsel %vm1868, %v2017, 0.0
  %2050 = vadd.xlane.f32.xlu0 %v2049
  %v2051 = vpop.xlane.xlu0 %2050
  %v2052 = vsel %vm1868, %v2018, 0.0
  %2053 = vadd.xlane.f32.xlu0 %v2052
  %v2054 = vpop.xlane.xlu0 %2053
  %v2055 = vsel %vm1868, %v2019, 0.0
  %2056 = vadd.xlane.f32.xlu0 %v2055
  %v2057 = vpop.xlane.xlu0 %2056
  %v2058 = vsel %vm1881, %v2020, 0.0
  %2059 = vadd.xlane.f32.xlu0 %v2058
  %v2060 = vpop.xlane.xlu0 %2059
  %v2061 = vsel %vm1868, %v2021, 0.0
  %2062 = vadd.xlane.f32.xlu0 %v2061
  %v2063 = vpop.xlane.xlu0 %2062
  %v2064 = vsel %vm1868, %v2022, 0.0
  %2065 = vadd.xlane.f32.xlu0 %v2064
  %v2066 = vpop.xlane.xlu0 %2065
  %v2067 = vsel %vm1868, %v2023, 0.0
  %2068 = vadd.xlane.f32.xlu0 %v2067
  %v2069 = vpop.xlane.xlu0 %2068
  %v2070 = vsel %vm1868, %v2024, 0.0
  %2071 = vadd.xlane.f32.xlu0 %v2070
  %v2072 = vpop.xlane.xlu0 %2071
  %v2073 = vsel %vm1881, %v2025, 0.0
  %2074 = vadd.xlane.f32.xlu0 %v2073
  %v2075 = vpop.xlane.xlu0 %2074
  %v2076 = vsel %vm1868, %v2026, 0.0
  %2077 = vadd.xlane.f32.xlu0 %v2076
  %v2078 = vpop.xlane.xlu0 %2077
  %v2079 = vsel %vm1868, %v2027, 0.0
  %2080 = vadd.xlane.f32.xlu0 %v2079
  %v2081 = vpop.xlane.xlu0 %2080
  %v2082 = vsel %vm1868, %v2028, 0.0
  %2083 = vadd.xlane.f32.xlu0 %v2082
  %v2084 = vpop.xlane.xlu0 %2083
  %v2085 = vsel %vm1868, %v2029, 0.0
  %2086 = vadd.xlane.f32.xlu0 %v2085
  %v2087 = vpop.xlane.xlu0 %2086
  %v2088 = vsel %vm1881, %v2030, 0.0
  %2089 = vadd.xlane.f32.xlu0 %v2088
  %v2090 = vpop.xlane.xlu0 %2089
  %v2091 = vadd.f32 %v2033, 1e-12
  %v2092 = vadd.f32 %v2036, 1e-12
  %v2093 = vadd.f32 %v2039, 1e-12
  %v2094 = vadd.f32 %v2042, 1e-12
  %v2095 = vadd.f32 %v2045, 1e-12
  %v2096 = vadd.f32 %v2048, 1e-12
  %v2097 = vadd.f32 %v2051, 1e-12
  %v2098 = vadd.f32 %v2054, 1e-12
  %v2099 = vadd.f32 %v2057, 1e-12
  %v2100 = vadd.f32 %v2060, 1e-12
  %v2101 = vadd.f32 %v2063, 1e-12
  %v2102 = vadd.f32 %v2066, 1e-12
  %v2103 = vadd.f32 %v2069, 1e-12
  %v2104 = vadd.f32 %v2072, 1e-12
  %v2105 = vadd.f32 %v2075, 1e-12
  %v2106 = vadd.f32 %v2078, 1e-12
  %v2107 = vadd.f32 %v2081, 1e-12
  %v2108 = vadd.f32 %v2084, 1e-12
  %v2109 = vadd.f32 %v2087, 1e-12
  %v2110 = vadd.f32 %v2090, 1e-12
  %v2111 = vrsqrt.pop %v2091
  %v2112 = vrsqrt.pop %v2092
  %v2113 = vrsqrt.pop %v2093
  %v2114 = vrsqrt.pop %v2094
  %v2115 = vrsqrt.pop %v2095
  %v2116 = vrsqrt.pop %v2096
  %v2117 = vrsqrt.pop %v2097
  %v2118 = vrsqrt.pop %v2098
  %v2119 = vrsqrt.pop %v2099
  %v2120 = vrsqrt.pop %v2100
  %v2121 = vrsqrt.pop %v2101
  %v2122 = vrsqrt.pop %v2102
  %v2123 = vrsqrt.pop %v2103
  %v2124 = vrsqrt.pop %v2104
  %v2125 = vrsqrt.pop %v2105
  %v2126 = vrsqrt.pop %v2106
  %v2127 = vrsqrt.pop %v2107
  %v2128 = vrsqrt.pop %v2108
  %v2129 = vrsqrt.pop %v2109
  %v2130 = vrsqrt.pop %v2110
  %v2131 = vmul.f32 %v895, %v2111
  %v2132 = vmul.f32 %v900, %v2112
  %v2133 = vmul.f32 %v905, %v2113
  %v2134 = vmul.f32 %v910, %v2114
  %v2135 = vmul.f32 %v915, %v2115
  %v2136 = vmul.f32 %v985, %v2116
  %v2137 = vmul.f32 %v990, %v2117
  %v2138 = vmul.f32 %v995, %v2118
  %v2139 = vmul.f32 %v1000, %v2119
  %v2140 = vmul.f32 %v1005, %v2120
  %v2141 = vmul.f32 %v1075, %v2121
  %v2142 = vmul.f32 %v1080, %v2122
  %v2143 = vmul.f32 %v1085, %v2123
  %v2144 = vmul.f32 %v1090, %v2124
  %v2145 = vmul.f32 %v1095, %v2125
  %v2146 = vmul.f32 %v1165, %v2126
  %v2147 = vmul.f32 %v1170, %v2127
  %v2148 = vmul.f32 %v1175, %v2128
  %v2149 = vmul.f32 %v1180, %v2129
  %v2150 = vmul.f32 %v1185, %v2130
  %v2152 = vsel %vm1868, %v1991, 0
  %v2155 = vsel %vm1868, %v1992, 0
  %v2158 = vsel %vm1868, %v1993, 0
  %v2161 = vsel %vm1868, %v1994, 0
  %v2164 = vsel %vm1868, %v1995, 0
  %v2167 = vsel %vm1868, %v2131, 0
  %v2170 = vsel %vm1868, %v2132, 0
  %v2173 = vsel %vm1868, %v2133, 0
  %v2176 = vsel %vm1868, %v2134, 0
  %v2179 = vsel %vm1868, %v2135, 0
  %2181 = vmatprep.subr.mxu0 0.0
  %2182 = vmatpush1.xpose.msra.mxu0 %v2167
  %2183 = vmatprep.subr.mxu0 0.0
  %2184 = vmatpush1.xpose.msra.mxu0 %v2170
  %2185 = vmatprep.subr.mxu0 0.0
  %2186 = vmatpush1.xpose.msra.mxu0 %v2173
  %2187 = vmatprep.subr.mxu0 0.0
  %2188 = vmatpush1.xpose.msra.mxu0 %v2176
  %2189 = vmatprep.subr.mxu0 0.0
  %2190 = vmatpush1.xpose.msra.mxu0 %v2179
  %2191 = vmatprep.subr.mxu0 0.0
  %2192 = vmatpush1.xpose.msra.mxu0 0.0
  %2193 = vmatprep.subr.mxu0 0.0
  %2194 = vmatpush1.xpose.msra.mxu0 0.0
  %2195 = vmatprep.subr.mxu0 0.0
  %2196 = vmatpush1.xpose.msra.mxu0 0.0
  %2197 = vmatprep.subr.mxu0 0.0
  %2198 = vmatpush1.xpose.msra.mxu0 0.0
  %2199 = vmatprep.subr.mxu0 0.0
  %2200 = vmatpush1.xpose.msra.mxu0 0.0
  %2201 = vmatprep.subr.mxu0 0.0
  %2202 = vmatpush1.xpose.msra.mxu0 0.0
  %2203 = vmatprep.subr.mxu0 0.0
  %2204 = vmatpush1.xpose.msra.mxu0 0.0
  %2205 = vmatprep.subr.mxu0 0.0
  %2206 = vmatpush1.xpose.msra.mxu0 0.0
  %2207 = vmatprep.subr.mxu0 0.0
  %2208 = vmatpush1.xpose.msra.mxu0 0.0
  %2209 = vmatprep.subr.mxu0 0.0
  %2210 = vmatpush1.xpose.msra.mxu0 0.0
  %2211 = vmatprep.subr.mxu0 0.0
  %2212 = vmatpush1.xpose.msra.mxu0 0.0
  %2213 = vmatprep.subr.mxu0 0.0
  %2214 = vmatpush1.xpose.msra.mxu0 0.0
  %2215 = vmatprep.subr.mxu0 0.0
  %2216 = vmatpush1.xpose.msra.mxu0 0.0
  %2217 = vmatprep.subr.mxu0 0.0
  %2218 = vmatpush1.xpose.msra.mxu0 0.0
  %2219 = vmatprep.subr.mxu0 0.0
  %2220 = vmatpush1.xpose.msra.mxu0 0.0
  %2221 = vmatprep.subr.mxu0 0.0
  %2222 = vmatpush1.xpose.msra.mxu0 0.0
  %2223 = vmatprep.subr.mxu0 0.0
  %2224 = vmatpush1.xpose.msra.mxu0 0.0
  %2225 = vmatprep.subr.mxu0 0.0
  %2226 = vmatpush1.xpose.msra.mxu0 0.0
  %2227 = vmatprep.subr.mxu0 0.0
  %2228 = vmatpush1.xpose.msra.mxu0 0.0
  %2229 = vmatprep.subr.mxu0 0.0
  %2230 = vmatpush1.xpose.msra.mxu0 0.0
  %2231 = vmatprep.subr.mxu0 0.0
  %2232 = vmatpush1.xpose.msra.mxu0 0.0
  %2233 = vmatprep.subr.mxu0 0.0
  %2234 = vmatpush1.xpose.msra.mxu0 0.0
  %2235 = vmatprep.subr.mxu0 0.0
  %2236 = vmatpush1.xpose.msra.mxu0 0.0
  %2237 = vmatprep.subr.mxu0 0.0
  %2238 = vmatpush1.xpose.msra.mxu0 0.0
  %2239 = vmatprep.subr.mxu0 0.0
  %2240 = vmatpush1.xpose.msra.mxu0 0.0
  %2241 = vmatprep.subr.mxu0 0.0
  %2242 = vmatpush1.xpose.msra.mxu0 0.0
  %2243 = vmatprep.subr.mxu0 0.0
  %2244 = vmatpush1.xpose.msra.mxu0 0.0
  %2245 = vmatprep.mubr.f32.mxu0 0.0
  %2246 = vmatmul.mubr.f32.gmra.mrb[0].mxu0 %v2152
  %v2247 = vpop.f32.mrb[0].mxu0
  %v2248 = vadd.f32 %v1828, %v2247
  %v2249 = vpop.f32.mrb[0].mxu0
  %2250 = vmatprep.mubr.f32.mxu0 0.0
  %2251 = vmatmul.mubr.f32.gmra.mrb[0].mxu0 %v2155
  %v2252 = vpop.f32.mrb[0].mxu0
  %v2253 = vadd.f32 %v1829, %v2252
  %v2254 = vpop.f32.mrb[0].mxu0
  %2255 = vmatprep.mubr.f32.mxu0 0.0
  %2256 = vmatmul.mubr.f32.gmra.mrb[0].mxu0 %v2158
  %v2257 = vpop.f32.mrb[0].mxu0
  %v2258 = vadd.f32 %v1830, %v2257
  %v2259 = vpop.f32.mrb[0].mxu0
  %2260 = vmatprep.mubr.f32.mxu0 0.0
  %2261 = vmatmul.mubr.f32.gmra.mrb[0].mxu0 %v2161
  %v2262 = vpop.f32.mrb[0].mxu0
  %v2263 = vadd.f32 %v1831, %v2262
  %v2264 = vpop.f32.mrb[0].mxu0
  %2265 = vmatprep.mubr.f32.mxu0 0.0
  %2266 = vmatmul.mubr.f32.gmra.mrb[0].mxu0 %v2164
  %v2267 = vpop.f32.mrb[0].mxu0
  %v2268 = vadd.f32 %v1832, %v2267
  %v2269 = vpop.f32.mrb[0].mxu0
  %2270 = vdwg.mxu0
  %v2272 = vsel %vm1868, %v1996, 0
  %v2275 = vsel %vm1868, %v1997, 0
  %v2278 = vsel %vm1868, %v1998, 0
  %v2281 = vsel %vm1868, %v1999, 0
  %v2284 = vsel %vm1868, %v2000, 0
  %v2287 = vsel %vm1868, %v2136, 0
  %v2290 = vsel %vm1868, %v2137, 0
  %v2293 = vsel %vm1868, %v2138, 0
  %v2296 = vsel %vm1868, %v2139, 0
  %v2299 = vsel %vm1868, %v2140, 0
  %2301 = vmatprep.subr.mxu0 0.0
  %2302 = vmatpush1.xpose.msra.mxu0 %v2287
  %2303 = vmatprep.subr.mxu0 0.0
  %2304 = vmatpush1.xpose.msra.mxu0 %v2290
  %2305 = vmatprep.subr.mxu0 0.0
  %2306 = vmatpush1.xpose.msra.mxu0 %v2293
  %2307 = vmatprep.subr.mxu0 0.0
  %2308 = vmatpush1.xpose.msra.mxu0 %v2296
  %2309 = vmatprep.subr.mxu0 0.0
  %2310 = vmatpush1.xpose.msra.mxu0 %v2299
  %2311 = vmatprep.subr.mxu0 0.0
  %2312 = vmatpush1.xpose.msra.mxu0 0.0
  %2313 = vmatprep.subr.mxu0 0.0
  %2314 = vmatpush1.xpose.msra.mxu0 0.0
  %2315 = vmatprep.subr.mxu0 0.0
  %2316 = vmatpush1.xpose.msra.mxu0 0.0
  %2317 = vmatprep.subr.mxu0 0.0
  %2318 = vmatpush1.xpose.msra.mxu0 0.0
  %2319 = vmatprep.subr.mxu0 0.0
  %2320 = vmatpush1.xpose.msra.mxu0 0.0
  %2321 = vmatprep.subr.mxu0 0.0
  %2322 = vmatpush1.xpose.msra.mxu0 0.0
  %2323 = vmatprep.subr.mxu0 0.0
  %2324 = vmatpush1.xpose.msra.mxu0 0.0
  %2325 = vmatprep.subr.mxu0 0.0
  %2326 = vmatpush1.xpose.msra.mxu0 0.0
  %2327 = vmatprep.subr.mxu0 0.0
  %2328 = vmatpush1.xpose.msra.mxu0 0.0
  %2329 = vmatprep.subr.mxu0 0.0
  %2330 = vmatpush1.xpose.msra.mxu0 0.0
  %2331 = vmatprep.subr.mxu0 0.0
  %2332 = vmatpush1.xpose.msra.mxu0 0.0
  %2333 = vmatprep.subr.mxu0 0.0
  %2334 = vmatpush1.xpose.msra.mxu0 0.0
  %2335 = vmatprep.subr.mxu0 0.0
  %2336 = vmatpush1.xpose.msra.mxu0 0.0
  %2337 = vmatprep.subr.mxu0 0.0
  %2338 = vmatpush1.xpose.msra.mxu0 0.0
  %2339 = vmatprep.subr.mxu0 0.0
  %2340 = vmatpush1.xpose.msra.mxu0 0.0
  %2341 = vmatprep.subr.mxu0 0.0
  %2342 = vmatpush1.xpose.msra.mxu0 0.0
  %2343 = vmatprep.subr.mxu0 0.0
  %2344 = vmatpush1.xpose.msra.mxu0 0.0
  %2345 = vmatprep.subr.mxu0 0.0
  %2346 = vmatpush1.xpose.msra.mxu0 0.0
  %2347 = vmatprep.subr.mxu0 0.0
  %2348 = vmatpush1.xpose.msra.mxu0 0.0
  %2349 = vmatprep.subr.mxu0 0.0
  %2350 = vmatpush1.xpose.msra.mxu0 0.0
  %2351 = vmatprep.subr.mxu0 0.0
  %2352 = vmatpush1.xpose.msra.mxu0 0.0
  %2353 = vmatprep.subr.mxu0 0.0
  %2354 = vmatpush1.xpose.msra.mxu0 0.0
  %2355 = vmatprep.subr.mxu0 0.0
  %2356 = vmatpush1.xpose.msra.mxu0 0.0
  %2357 = vmatprep.subr.mxu0 0.0
  %2358 = vmatpush1.xpose.msra.mxu0 0.0
  %2359 = vmatprep.subr.mxu0 0.0
  %2360 = vmatpush1.xpose.msra.mxu0 0.0
  %2361 = vmatprep.subr.mxu0 0.0
  %2362 = vmatpush1.xpose.msra.mxu0 0.0
  %2363 = vmatprep.subr.mxu0 0.0
  %2364 = vmatpush1.xpose.msra.mxu0 0.0
  %2365 = vmatprep.mubr.f32.mxu0 0.0
  %2366 = vmatmul.mubr.f32.gmra.mrb[0].mxu0 %v2272
  %v2367 = vpop.f32.mrb[0].mxu0
  %v2368 = vadd.f32 %v1828, %v2367
  %v2369 = vpop.f32.mrb[0].mxu0
  %2370 = vmatprep.mubr.f32.mxu0 0.0
  %2371 = vmatmul.mubr.f32.gmra.mrb[0].mxu0 %v2275
  %v2372 = vpop.f32.mrb[0].mxu0
  %v2373 = vadd.f32 %v1829, %v2372
  %v2374 = vpop.f32.mrb[0].mxu0
  %2375 = vmatprep.mubr.f32.mxu0 0.0
  %2376 = vmatmul.mubr.f32.gmra.mrb[0].mxu0 %v2278
  %v2377 = vpop.f32.mrb[0].mxu0
  %v2378 = vadd.f32 %v1830, %v2377
  %v2379 = vpop.f32.mrb[0].mxu0
  %2380 = vmatprep.mubr.f32.mxu0 0.0
  %2381 = vmatmul.mubr.f32.gmra.mrb[0].mxu0 %v2281
  %v2382 = vpop.f32.mrb[0].mxu0
  %v2383 = vadd.f32 %v1831, %v2382
  %v2384 = vpop.f32.mrb[0].mxu0
  %2385 = vmatprep.mubr.f32.mxu0 0.0
  %2386 = vmatmul.mubr.f32.gmra.mrb[0].mxu0 %v2284
  %v2387 = vpop.f32.mrb[0].mxu0
  %v2388 = vadd.f32 %v1832, %v2387
  %v2389 = vpop.f32.mrb[0].mxu0
  %2390 = vdwg.mxu0
  %v2392 = vsel %vm1868, %v2001, 0
  %v2395 = vsel %vm1868, %v2002, 0
  %v2398 = vsel %vm1868, %v2003, 0
  %v2401 = vsel %vm1868, %v2004, 0
  %v2404 = vsel %vm1868, %v2005, 0
  %v2407 = vsel %vm1868, %v2141, 0
  %v2410 = vsel %vm1868, %v2142, 0
  %v2413 = vsel %vm1868, %v2143, 0
  %v2416 = vsel %vm1868, %v2144, 0
  %v2419 = vsel %vm1868, %v2145, 0
  %2421 = vmatprep.subr.mxu0 0.0
  %2422 = vmatpush1.xpose.msra.mxu0 %v2407
  %2423 = vmatprep.subr.mxu0 0.0
  %2424 = vmatpush1.xpose.msra.mxu0 %v2410
  %2425 = vmatprep.subr.mxu0 0.0
  %2426 = vmatpush1.xpose.msra.mxu0 %v2413
  %2427 = vmatprep.subr.mxu0 0.0
  %2428 = vmatpush1.xpose.msra.mxu0 %v2416
  %2429 = vmatprep.subr.mxu0 0.0
  %2430 = vmatpush1.xpose.msra.mxu0 %v2419
  %2431 = vmatprep.subr.mxu0 0.0
  %2432 = vmatpush1.xpose.msra.mxu0 0.0
  %2433 = vmatprep.subr.mxu0 0.0
  %2434 = vmatpush1.xpose.msra.mxu0 0.0
  %2435 = vmatprep.subr.mxu0 0.0
  %2436 = vmatpush1.xpose.msra.mxu0 0.0
  %2437 = vmatprep.subr.mxu0 0.0
  %2438 = vmatpush1.xpose.msra.mxu0 0.0
  %2439 = vmatprep.subr.mxu0 0.0
  %2440 = vmatpush1.xpose.msra.mxu0 0.0
  %2441 = vmatprep.subr.mxu0 0.0
  %2442 = vmatpush1.xpose.msra.mxu0 0.0
  %2443 = vmatprep.subr.mxu0 0.0
  %2444 = vmatpush1.xpose.msra.mxu0 0.0
  %2445 = vmatprep.subr.mxu0 0.0
  %2446 = vmatpush1.xpose.msra.mxu0 0.0
  %2447 = vmatprep.subr.mxu0 0.0
  %2448 = vmatpush1.xpose.msra.mxu0 0.0
  %2449 = vmatprep.subr.mxu0 0.0
  %2450 = vmatpush1.xpose.msra.mxu0 0.0
  %2451 = vmatprep.subr.mxu0 0.0
  %2452 = vmatpush1.xpose.msra.mxu0 0.0
  %2453 = vmatprep.subr.mxu0 0.0
  %2454 = vmatpush1.xpose.msra.mxu0 0.0
  %2455 = vmatprep.subr.mxu0 0.0
  %2456 = vmatpush1.xpose.msra.mxu0 0.0
  %2457 = vmatprep.subr.mxu0 0.0
  %2458 = vmatpush1.xpose.msra.mxu0 0.0
  %2459 = vmatprep.subr.mxu0 0.0
  %2460 = vmatpush1.xpose.msra.mxu0 0.0
  %2461 = vmatprep.subr.mxu0 0.0
  %2462 = vmatpush1.xpose.msra.mxu0 0.0
  %2463 = vmatprep.subr.mxu0 0.0
  %2464 = vmatpush1.xpose.msra.mxu0 0.0
  %2465 = vmatprep.subr.mxu0 0.0
  %2466 = vmatpush1.xpose.msra.mxu0 0.0
  %2467 = vmatprep.subr.mxu0 0.0
  %2468 = vmatpush1.xpose.msra.mxu0 0.0
  %2469 = vmatprep.subr.mxu0 0.0
  %2470 = vmatpush1.xpose.msra.mxu0 0.0
  %2471 = vmatprep.subr.mxu0 0.0
  %2472 = vmatpush1.xpose.msra.mxu0 0.0
  %2473 = vmatprep.subr.mxu0 0.0
  %2474 = vmatpush1.xpose.msra.mxu0 0.0
  %2475 = vmatprep.subr.mxu0 0.0
  %2476 = vmatpush1.xpose.msra.mxu0 0.0
  %2477 = vmatprep.subr.mxu0 0.0
  %2478 = vmatpush1.xpose.msra.mxu0 0.0
  %2479 = vmatprep.subr.mxu0 0.0
  %2480 = vmatpush1.xpose.msra.mxu0 0.0
  %2481 = vmatprep.subr.mxu0 0.0
  %2482 = vmatpush1.xpose.msra.mxu0 0.0
  %2483 = vmatprep.subr.mxu0 0.0
  %2484 = vmatpush1.xpose.msra.mxu0 0.0
  %2485 = vmatprep.mubr.f32.mxu0 0.0
  %2486 = vmatmul.mubr.f32.gmra.mrb[0].mxu0 %v2392
  %v2487 = vpop.f32.mrb[0].mxu0
  %v2488 = vadd.f32 %v1828, %v2487
  %v2489 = vpop.f32.mrb[0].mxu0
  %2490 = vmatprep.mubr.f32.mxu0 0.0
  %2491 = vmatmul.mubr.f32.gmra.mrb[0].mxu0 %v2395
  %v2492 = vpop.f32.mrb[0].mxu0
  %v2493 = vadd.f32 %v1829, %v2492
  %v2494 = vpop.f32.mrb[0].mxu0
  %2495 = vmatprep.mubr.f32.mxu0 0.0
  %2496 = vmatmul.mubr.f32.gmra.mrb[0].mxu0 %v2398
  %v2497 = vpop.f32.mrb[0].mxu0
  %v2498 = vadd.f32 %v1830, %v2497
  %v2499 = vpop.f32.mrb[0].mxu0
  %2500 = vmatprep.mubr.f32.mxu0 0.0
  %2501 = vmatmul.mubr.f32.gmra.mrb[0].mxu0 %v2401
  %v2502 = vpop.f32.mrb[0].mxu0
  %v2503 = vadd.f32 %v1831, %v2502
  %v2504 = vpop.f32.mrb[0].mxu0
  %2505 = vmatprep.mubr.f32.mxu0 0.0
  %2506 = vmatmul.mubr.f32.gmra.mrb[0].mxu0 %v2404
  %v2507 = vpop.f32.mrb[0].mxu0
  %v2508 = vadd.f32 %v1832, %v2507
  %v2509 = vpop.f32.mrb[0].mxu0
  %2510 = vdwg.mxu0
  %v2512 = vsel %vm1868, %v2006, 0
  %v2515 = vsel %vm1868, %v2007, 0
  %v2518 = vsel %vm1868, %v2008, 0
  %v2521 = vsel %vm1868, %v2009, 0
  %v2524 = vsel %vm1868, %v2010, 0
  %v2527 = vsel %vm1868, %v2146, 0
  %v2530 = vsel %vm1868, %v2147, 0
  %v2533 = vsel %vm1868, %v2148, 0
  %v2536 = vsel %vm1868, %v2149, 0
  %v2539 = vsel %vm1868, %v2150, 0
  %2541 = vmatprep.subr.mxu0 0.0
  %2542 = vmatpush1.xpose.msra.mxu0 %v2527
  %2543 = vmatprep.subr.mxu0 0.0
  %2544 = vmatpush1.xpose.msra.mxu0 %v2530
  %2545 = vmatprep.subr.mxu0 0.0
  %2546 = vmatpush1.xpose.msra.mxu0 %v2533
  %2547 = vmatprep.subr.mxu0 0.0
  %2548 = vmatpush1.xpose.msra.mxu0 %v2536
  %2549 = vmatprep.subr.mxu0 0.0
  %2550 = vmatpush1.xpose.msra.mxu0 %v2539
  %2551 = vmatprep.subr.mxu0 0.0
  %2552 = vmatpush1.xpose.msra.mxu0 0.0
  %2553 = vmatprep.subr.mxu0 0.0
  %2554 = vmatpush1.xpose.msra.mxu0 0.0
  %2555 = vmatprep.subr.mxu0 0.0
  %2556 = vmatpush1.xpose.msra.mxu0 0.0
  %2557 = vmatprep.subr.mxu0 0.0
  %2558 = vmatpush1.xpose.msra.mxu0 0.0
  %2559 = vmatprep.subr.mxu0 0.0
  %2560 = vmatpush1.xpose.msra.mxu0 0.0
  %2561 = vmatprep.subr.mxu0 0.0
  %2562 = vmatpush1.xpose.msra.mxu0 0.0
  %2563 = vmatprep.subr.mxu0 0.0
  %2564 = vmatpush1.xpose.msra.mxu0 0.0
  %2565 = vmatprep.subr.mxu0 0.0
  %2566 = vmatpush1.xpose.msra.mxu0 0.0
  %2567 = vmatprep.subr.mxu0 0.0
  %2568 = vmatpush1.xpose.msra.mxu0 0.0
  %2569 = vmatprep.subr.mxu0 0.0
  %2570 = vmatpush1.xpose.msra.mxu0 0.0
  %2571 = vmatprep.subr.mxu0 0.0
  %2572 = vmatpush1.xpose.msra.mxu0 0.0
  %2573 = vmatprep.subr.mxu0 0.0
  %2574 = vmatpush1.xpose.msra.mxu0 0.0
  %2575 = vmatprep.subr.mxu0 0.0
  %2576 = vmatpush1.xpose.msra.mxu0 0.0
  %2577 = vmatprep.subr.mxu0 0.0
  %2578 = vmatpush1.xpose.msra.mxu0 0.0
  %2579 = vmatprep.subr.mxu0 0.0
  %2580 = vmatpush1.xpose.msra.mxu0 0.0
  %2581 = vmatprep.subr.mxu0 0.0
  %2582 = vmatpush1.xpose.msra.mxu0 0.0
  %2583 = vmatprep.subr.mxu0 0.0
  %2584 = vmatpush1.xpose.msra.mxu0 0.0
  %2585 = vmatprep.subr.mxu0 0.0
  %2586 = vmatpush1.xpose.msra.mxu0 0.0
  %2587 = vmatprep.subr.mxu0 0.0
  %2588 = vmatpush1.xpose.msra.mxu0 0.0
  %2589 = vmatprep.subr.mxu0 0.0
  %2590 = vmatpush1.xpose.msra.mxu0 0.0
  %2591 = vmatprep.subr.mxu0 0.0
  %2592 = vmatpush1.xpose.msra.mxu0 0.0
  %2593 = vmatprep.subr.mxu0 0.0
  %2594 = vmatpush1.xpose.msra.mxu0 0.0
  %2595 = vmatprep.subr.mxu0 0.0
  %2596 = vmatpush1.xpose.msra.mxu0 0.0
  %2597 = vmatprep.subr.mxu0 0.0
  %2598 = vmatpush1.xpose.msra.mxu0 0.0
  %2599 = vmatprep.subr.mxu0 0.0
  %2600 = vmatpush1.xpose.msra.mxu0 0.0
  %2601 = vmatprep.subr.mxu0 0.0
  %2602 = vmatpush1.xpose.msra.mxu0 0.0
  %2603 = vmatprep.subr.mxu0 0.0
  %2604 = vmatpush1.xpose.msra.mxu0 0.0
  %2605 = vmatprep.mubr.f32.mxu0 0.0
  %2606 = vmatmul.mubr.f32.gmra.mrb[0].mxu0 %v2512
  %v2607 = vpop.f32.mrb[0].mxu0
  %v2608 = vadd.f32 %v1828, %v2607
  %v2609 = vpop.f32.mrb[0].mxu0
  %2610 = vmatprep.mubr.f32.mxu0 0.0
  %2611 = vmatmul.mubr.f32.gmra.mrb[0].mxu0 %v2515
  %v2612 = vpop.f32.mrb[0].mxu0
  %v2613 = vadd.f32 %v1829, %v2612
  %v2614 = vpop.f32.mrb[0].mxu0
  %2615 = vmatprep.mubr.f32.mxu0 0.0
  %2616 = vmatmul.mubr.f32.gmra.mrb[0].mxu0 %v2518
  %v2617 = vpop.f32.mrb[0].mxu0
  %v2618 = vadd.f32 %v1830, %v2617
  %v2619 = vpop.f32.mrb[0].mxu0
  %2620 = vmatprep.mubr.f32.mxu0 0.0
  %2621 = vmatmul.mubr.f32.gmra.mrb[0].mxu0 %v2521
  %v2622 = vpop.f32.mrb[0].mxu0
  %v2623 = vadd.f32 %v1831, %v2622
  %v2624 = vpop.f32.mrb[0].mxu0
  %2625 = vmatprep.mubr.f32.mxu0 0.0
  %2626 = vmatmul.mubr.f32.gmra.mrb[0].mxu0 %v2524
  %v2627 = vpop.f32.mrb[0].mxu0
  %v2628 = vadd.f32 %v1832, %v2627
  %v2629 = vpop.f32.mrb[0].mxu0
  %2630 = vdwg.mxu0
  %v2631 = vsel %vm1808, %v2248, -3.4028235e+38
  %v2632 = vsel %vm1809, %v2253, -3.4028235e+38
  %v2633 = vsel %vm1810, %v2258, -3.4028235e+38
  %v2634 = vsel %vm1811, %v2263, -3.4028235e+38
  %v2635 = vsel %vm1812, %v2268, -3.4028235e+38
  %v2636 = vsel %vm1813, %v2368, -3.4028235e+38
  %v2637 = vsel %vm1814, %v2373, -3.4028235e+38
  %v2638 = vsel %vm1815, %v2378, -3.4028235e+38
  %v2639 = vsel %vm1816, %v2383, -3.4028235e+38
  %v2640 = vsel %vm1817, %v2388, -3.4028235e+38
  %v2641 = vsel %vm1818, %v2488, -3.4028235e+38
  %v2642 = vsel %vm1819, %v2493, -3.4028235e+38
  %v2643 = vsel %vm1820, %v2498, -3.4028235e+38
  %v2644 = vsel %vm1821, %v2503, -3.4028235e+38
  %v2645 = vsel %vm1822, %v2508, -3.4028235e+38
  %v2646 = vsel %vm1823, %v2608, -3.4028235e+38
  %v2647 = vsel %vm1824, %v2613, -3.4028235e+38
  %v2648 = vsel %vm1825, %v2618, -3.4028235e+38
  %v2649 = vsel %vm1826, %v2623, -3.4028235e+38
  %v2650 = vsel %vm1827, %v2628, -3.4028235e+38
  %vm2651 = vcmask 285696
  %v2652 = vsel %vm2651, %v2631, -inf
  %2653 = vmax.xlane.f32.xlu0 %v2652
  %v2654 = vpop.xlane.xlu0 %2653
  %v2655 = vsel %vm2651, %v2632, -inf
  %2656 = vmax.xlane.f32.xlu0 %v2655
  %v2657 = vpop.xlane.xlu0 %2656
  %v2658 = vsel %vm2651, %v2633, -inf
  %2659 = vmax.xlane.f32.xlu0 %v2658
  %v2660 = vpop.xlane.xlu0 %2659
  %v2661 = vsel %vm2651, %v2634, -inf
  %2662 = vmax.xlane.f32.xlu0 %v2661
  %v2663 = vpop.xlane.xlu0 %2662
  %vm2664 = vcmask 280576
  %v2665 = vsel %vm2664, %v2635, -inf
  %2666 = vmax.xlane.f32.xlu0 %v2665
  %v2667 = vpop.xlane.xlu0 %2666
  %v2668 = vsel %vm2651, %v2636, -inf
  %2669 = vmax.xlane.f32.xlu0 %v2668
  %v2670 = vpop.xlane.xlu0 %2669
  %v2671 = vsel %vm2651, %v2637, -inf
  %2672 = vmax.xlane.f32.xlu0 %v2671
  %v2673 = vpop.xlane.xlu0 %2672
  %v2674 = vsel %vm2651, %v2638, -inf
  %2675 = vmax.xlane.f32.xlu0 %v2674
  %v2676 = vpop.xlane.xlu0 %2675
  %v2677 = vsel %vm2651, %v2639, -inf
  %2678 = vmax.xlane.f32.xlu0 %v2677
  %v2679 = vpop.xlane.xlu0 %2678
  %v2680 = vsel %vm2664, %v2640, -inf
  %2681 = vmax.xlane.f32.xlu0 %v2680
  %v2682 = vpop.xlane.xlu0 %2681
  %v2683 = vsel %vm2651, %v2641, -inf
  %2684 = vmax.xlane.f32.xlu0 %v2683
  %v2685 = vpop.xlane.xlu0 %2684
  %v2686 = vsel %vm2651, %v2642, -inf
  %2687 = vmax.xlane.f32.xlu0 %v2686
  %v2688 = vpop.xlane.xlu0 %2687
  %v2689 = vsel %vm2651, %v2643, -inf
  %2690 = vmax.xlane.f32.xlu0 %v2689
  %v2691 = vpop.xlane.xlu0 %2690
  %v2692 = vsel %vm2651, %v2644, -inf
  %2693 = vmax.xlane.f32.xlu0 %v2692
  %v2694 = vpop.xlane.xlu0 %2693
  %v2695 = vsel %vm2664, %v2645, -inf
  %2696 = vmax.xlane.f32.xlu0 %v2695
  %v2697 = vpop.xlane.xlu0 %2696
  %v2698 = vsel %vm2651, %v2646, -inf
  %2699 = vmax.xlane.f32.xlu0 %v2698
  %v2700 = vpop.xlane.xlu0 %2699
  %v2701 = vsel %vm2651, %v2647, -inf
  %2702 = vmax.xlane.f32.xlu0 %v2701
  %v2703 = vpop.xlane.xlu0 %2702
  %v2704 = vsel %vm2651, %v2648, -inf
  %2705 = vmax.xlane.f32.xlu0 %v2704
  %v2706 = vpop.xlane.xlu0 %2705
  %v2707 = vsel %vm2651, %v2649, -inf
  %2708 = vmax.xlane.f32.xlu0 %v2707
  %v2709 = vpop.xlane.xlu0 %2708
  %v2710 = vsel %vm2664, %v2650, -inf
  %2711 = vmax.xlane.f32.xlu0 %v2710
  %v2712 = vpop.xlane.xlu0 %2711
  %v2713 = vsub.f32 %v2631, %v2654
  %v2714 = vsub.f32 %v2632, %v2657
  %v2715 = vsub.f32 %v2633, %v2660
  %v2716 = vsub.f32 %v2634, %v2663
  %v2717 = vsub.f32 %v2635, %v2667
  %v2718 = vsub.f32 %v2636, %v2670
  %v2719 = vsub.f32 %v2637, %v2673
  %v2720 = vsub.f32 %v2638, %v2676
  %v2721 = vsub.f32 %v2639, %v2679
  %v2722 = vsub.f32 %v2640, %v2682
  %v2723 = vsub.f32 %v2641, %v2685
  %v2724 = vsub.f32 %v2642, %v2688
  %v2725 = vsub.f32 %v2643, %v2691
  %v2726 = vsub.f32 %v2644, %v2694
  %v2727 = vsub.f32 %v2645, %v2697
  %v2728 = vsub.f32 %v2646, %v2700
  %v2729 = vsub.f32 %v2647, %v2703
  %v2730 = vsub.f32 %v2648, %v2706
  %v2731 = vsub.f32 %v2649, %v2709
  %v2732 = vsub.f32 %v2650, %v2712
  %v2733 = vmul.f32 %v2713, 1.442695
  %v2734 = vpow.pop %v2733
  %v2735 = vmul.f32 %v2714, 1.442695
  %v2736 = vpow.pop %v2735
  %v2737 = vmul.f32 %v2715, 1.442695
  %v2738 = vpow.pop %v2737
  %v2739 = vmul.f32 %v2716, 1.442695
  %v2740 = vpow.pop %v2739
  %v2741 = vmul.f32 %v2717, 1.442695
  %v2742 = vpow.pop %v2741
  %v2743 = vmul.f32 %v2718, 1.442695
  %v2744 = vpow.pop %v2743
  %v2745 = vmul.f32 %v2719, 1.442695
  %v2746 = vpow.pop %v2745
  %v2747 = vmul.f32 %v2720, 1.442695
  %v2748 = vpow.pop %v2747
  %v2749 = vmul.f32 %v2721, 1.442695
  %v2750 = vpow.pop %v2749
  %v2751 = vmul.f32 %v2722, 1.442695
  %v2752 = vpow.pop %v2751
  %v2753 = vmul.f32 %v2723, 1.442695
  %v2754 = vpow.pop %v2753
  %v2755 = vmul.f32 %v2724, 1.442695
  %v2756 = vpow.pop %v2755
  %v2757 = vmul.f32 %v2725, 1.442695
  %v2758 = vpow.pop %v2757
  %v2759 = vmul.f32 %v2726, 1.442695
  %v2760 = vpow.pop %v2759
  %v2761 = vmul.f32 %v2727, 1.442695
  %v2762 = vpow.pop %v2761
  %v2763 = vmul.f32 %v2728, 1.442695
  %v2764 = vpow.pop %v2763
  %v2765 = vmul.f32 %v2729, 1.442695
  %v2766 = vpow.pop %v2765
  %v2767 = vmul.f32 %v2730, 1.442695
  %v2768 = vpow.pop %v2767
  %v2769 = vmul.f32 %v2731, 1.442695
  %v2770 = vpow.pop %v2769
  %v2771 = vmul.f32 %v2732, 1.442695
  %v2772 = vpow.pop %v2771
  %v2773 = vsel %vm2651, %v2734, 0.0
  %2774 = vadd.xlane.f32.xlu0 %v2773
  %v2775 = vpop.xlane.xlu0 %2774
  %v2776 = vsel %vm2651, %v2736, 0.0
  %2777 = vadd.xlane.f32.xlu0 %v2776
  %v2778 = vpop.xlane.xlu0 %2777
  %v2779 = vsel %vm2651, %v2738, 0.0
  %2780 = vadd.xlane.f32.xlu0 %v2779
  %v2781 = vpop.xlane.xlu0 %2780
  %v2782 = vsel %vm2651, %v2740, 0.0
  %2783 = vadd.xlane.f32.xlu0 %v2782
  %v2784 = vpop.xlane.xlu0 %2783
  %v2785 = vsel %vm2664, %v2742, 0.0
  %2786 = vadd.xlane.f32.xlu0 %v2785
  %v2787 = vpop.xlane.xlu0 %2786
  %v2788 = vsel %vm2651, %v2744, 0.0
  %2789 = vadd.xlane.f32.xlu0 %v2788
  %v2790 = vpop.xlane.xlu0 %2789
  %v2791 = vsel %vm2651, %v2746, 0.0
  %2792 = vadd.xlane.f32.xlu0 %v2791
  %v2793 = vpop.xlane.xlu0 %2792
  %v2794 = vsel %vm2651, %v2748, 0.0
  %2795 = vadd.xlane.f32.xlu0 %v2794
  %v2796 = vpop.xlane.xlu0 %2795
  %v2797 = vsel %vm2651, %v2750, 0.0
  %2798 = vadd.xlane.f32.xlu0 %v2797
  %v2799 = vpop.xlane.xlu0 %2798
  %v2800 = vsel %vm2664, %v2752, 0.0
  %2801 = vadd.xlane.f32.xlu0 %v2800
  %v2802 = vpop.xlane.xlu0 %2801
  %v2803 = vsel %vm2651, %v2754, 0.0
  %2804 = vadd.xlane.f32.xlu0 %v2803
  %v2805 = vpop.xlane.xlu0 %2804
  %v2806 = vsel %vm2651, %v2756, 0.0
  %2807 = vadd.xlane.f32.xlu0 %v2806
  %v2808 = vpop.xlane.xlu0 %2807
  %v2809 = vsel %vm2651, %v2758, 0.0
  %2810 = vadd.xlane.f32.xlu0 %v2809
  %v2811 = vpop.xlane.xlu0 %2810
  %v2812 = vsel %vm2651, %v2760, 0.0
  %2813 = vadd.xlane.f32.xlu0 %v2812
  %v2814 = vpop.xlane.xlu0 %2813
  %v2815 = vsel %vm2664, %v2762, 0.0
  %2816 = vadd.xlane.f32.xlu0 %v2815
  %v2817 = vpop.xlane.xlu0 %2816
  %v2818 = vsel %vm2651, %v2764, 0.0
  %2819 = vadd.xlane.f32.xlu0 %v2818
  %v2820 = vpop.xlane.xlu0 %2819
  %v2821 = vsel %vm2651, %v2766, 0.0
  %2822 = vadd.xlane.f32.xlu0 %v2821
  %v2823 = vpop.xlane.xlu0 %2822
  %v2824 = vsel %vm2651, %v2768, 0.0
  %2825 = vadd.xlane.f32.xlu0 %v2824
  %v2826 = vpop.xlane.xlu0 %2825
  %v2827 = vsel %vm2651, %v2770, 0.0
  %2828 = vadd.xlane.f32.xlu0 %v2827
  %v2829 = vpop.xlane.xlu0 %2828
  %v2830 = vsel %vm2664, %v2772, 0.0
  %2831 = vadd.xlane.f32.xlu0 %v2830
  %v2832 = vpop.xlane.xlu0 %2831
  %v2833 = vrcp.pop %v2775
  %v2834 = vmul.f32 %v2734, %v2833
  %v2835 = vrcp.pop %v2778
  %v2836 = vmul.f32 %v2736, %v2835
  %v2837 = vrcp.pop %v2781
  %v2838 = vmul.f32 %v2738, %v2837
  %v2839 = vrcp.pop %v2784
  %v2840 = vmul.f32 %v2740, %v2839
  %v2841 = vrcp.pop %v2787
  %v2842 = vmul.f32 %v2742, %v2841
  %v2843 = vrcp.pop %v2790
  %v2844 = vmul.f32 %v2744, %v2843
  %v2845 = vrcp.pop %v2793
  %v2846 = vmul.f32 %v2746, %v2845
  %v2847 = vrcp.pop %v2796
  %v2848 = vmul.f32 %v2748, %v2847
  %v2849 = vrcp.pop %v2799
  %v2850 = vmul.f32 %v2750, %v2849
  %v2851 = vrcp.pop %v2802
  %v2852 = vmul.f32 %v2752, %v2851
  %v2853 = vrcp.pop %v2805
  %v2854 = vmul.f32 %v2754, %v2853
  %v2855 = vrcp.pop %v2808
  %v2856 = vmul.f32 %v2756, %v2855
  %v2857 = vrcp.pop %v2811
  %v2858 = vmul.f32 %v2758, %v2857
  %v2859 = vrcp.pop %v2814
  %v2860 = vmul.f32 %v2760, %v2859
  %v2861 = vrcp.pop %v2817
  %v2862 = vmul.f32 %v2762, %v2861
  %v2863 = vrcp.pop %v2820
  %v2864 = vmul.f32 %v2764, %v2863
  %v2865 = vrcp.pop %v2823
  %v2866 = vmul.f32 %v2766, %v2865
  %v2867 = vrcp.pop %v2826
  %v2868 = vmul.f32 %v2768, %v2867
  %v2869 = vrcp.pop %v2829
  %v2870 = vmul.f32 %v2770, %v2869
  %v2871 = vrcp.pop %v2832
  %v2872 = vmul.f32 %v2772, %v2871
  %v2874 = vsel %vm2651, %v2834, 0
  %v2877 = vsel %vm2651, %v2836, 0
  %v2880 = vsel %vm2651, %v2838, 0
  %v2883 = vsel %vm2651, %v2840, 0
  %v2886 = vsel %vm2651, %v2842, 0
  %vm2888 = vcmask 1042432
  %v2890 = vsel %vm2888, %v1283, 0
  %2892 = vmatprep.subr.mxu0 0.0
  %2893 = vmatpush1.msra.mxu0 %v1263
  %2894 = vmatprep.subr.mxu0 0.0
  %2895 = vmatpush1.msra.mxu0 %v1268
  %2896 = vmatprep.subr.mxu0 0.0
  %2897 = vmatpush1.msra.mxu0 %v1273
  %2898 = vmatprep.subr.mxu0 0.0
  %2899 = vmatpush1.msra.mxu0 %v1278
  %2900 = vmatprep.subr.mxu0 0.0
  %2901 = vmatpush1.msra.mxu0 %v2890
  %2902 = vmatprep.subr.mxu0 0.0
  %2903 = vmatpush1.msra.mxu0 0.0
  %2904 = vmatprep.subr.mxu0 0.0
  %2905 = vmatpush1.msra.mxu0 0.0
  %2906 = vmatprep.subr.mxu0 0.0
  %2907 = vmatpush1.msra.mxu0 0.0
  %2908 = vmatprep.subr.mxu0 0.0
  %2909 = vmatpush1.msra.mxu0 0.0
  %2910 = vmatprep.subr.mxu0 0.0
  %2911 = vmatpush1.msra.mxu0 0.0
  %2912 = vmatprep.subr.mxu0 0.0
  %2913 = vmatpush1.msra.mxu0 0.0
  %2914 = vmatprep.subr.mxu0 0.0
  %2915 = vmatpush1.msra.mxu0 0.0
  %2916 = vmatprep.subr.mxu0 0.0
  %2917 = vmatpush1.msra.mxu0 0.0
  %2918 = vmatprep.subr.mxu0 0.0
  %2919 = vmatpush1.msra.mxu0 0.0
  %2920 = vmatprep.subr.mxu0 0.0
  %2921 = vmatpush1.msra.mxu0 0.0
  %2922 = vmatprep.subr.mxu0 0.0
  %2923 = vmatpush1.msra.mxu0 0.0
  %2924 = vmatprep.subr.mxu0 0.0
  %2925 = vmatpush1.msra.mxu0 0.0
  %2926 = vmatprep.subr.mxu0 0.0
  %2927 = vmatpush1.msra.mxu0 0.0
  %2928 = vmatprep.subr.mxu0 0.0
  %2929 = vmatpush1.msra.mxu0 0.0
  %2930 = vmatprep.subr.mxu0 0.0
  %2931 = vmatpush1.msra.mxu0 0.0
  %2932 = vmatprep.subr.mxu0 0.0
  %2933 = vmatpush1.msra.mxu0 0.0
  %2934 = vmatprep.subr.mxu0 0.0
  %2935 = vmatpush1.msra.mxu0 0.0
  %2936 = vmatprep.subr.mxu0 0.0
  %2937 = vmatpush1.msra.mxu0 0.0
  %2938 = vmatprep.subr.mxu0 0.0
  %2939 = vmatpush1.msra.mxu0 0.0
  %2940 = vmatprep.subr.mxu0 0.0
  %2941 = vmatpush1.msra.mxu0 0.0
  %2942 = vmatprep.subr.mxu0 0.0
  %2943 = vmatpush1.msra.mxu0 0.0
  %2944 = vmatprep.subr.mxu0 0.0
  %2945 = vmatpush1.msra.mxu0 0.0
  %2946 = vmatprep.subr.mxu0 0.0
  %2947 = vmatpush1.msra.mxu0 0.0
  %2948 = vmatprep.subr.mxu0 0.0
  %2949 = vmatpush1.msra.mxu0 0.0
  %2950 = vmatprep.subr.mxu0 0.0
  %2951 = vmatpush1.msra.mxu0 0.0
  %2952 = vmatprep.subr.mxu0 0.0
  %2953 = vmatpush1.msra.mxu0 0.0
  %2954 = vmatprep.subr.mxu0 0.0
  %2955 = vmatpush1.msra.mxu0 0.0
  %2956 = vmatprep.mubr.f32.mxu0 0.0
  %2957 = vmatmul.mubr.f32.gmra.mrb[0].mxu0 %v2874
  %v2958 = vpop.f32.mrb[0].mxu0
  %v2959 = vadd.f32 0.0, %v2958
  %v2960 = vpop.f32.mrb[0].mxu0
  %2961 = vmatprep.mubr.f32.mxu0 0.0
  %2962 = vmatmul.mubr.f32.gmra.mrb[0].mxu0 %v2877
  %v2963 = vpop.f32.mrb[0].mxu0
  %v2964 = vadd.f32 0.0, %v2963
  %v2965 = vpop.f32.mrb[0].mxu0
  %2966 = vmatprep.mubr.f32.mxu0 0.0
  %2967 = vmatmul.mubr.f32.gmra.mrb[0].mxu0 %v2880
  %v2968 = vpop.f32.mrb[0].mxu0
  %v2969 = vadd.f32 0.0, %v2968
  %v2970 = vpop.f32.mrb[0].mxu0
  %2971 = vmatprep.mubr.f32.mxu0 0.0
  %2972 = vmatmul.mubr.f32.gmra.mrb[0].mxu0 %v2883
  %v2973 = vpop.f32.mrb[0].mxu0
  %v2974 = vadd.f32 0.0, %v2973
  %v2975 = vpop.f32.mrb[0].mxu0
  %2976 = vmatprep.mubr.f32.mxu0 0.0
  %2977 = vmatmul.mubr.f32.gmra.mrb[0].mxu0 %v2886
  %v2978 = vpop.f32.mrb[0].mxu0
  %v2979 = vadd.f32 0.0, %v2978
  %v2980 = vpop.f32.mrb[0].mxu0
  %2981 = vdwg.mxu0
  %v2983 = vsel %vm2651, %v2844, 0
  %v2986 = vsel %vm2651, %v2846, 0
  %v2989 = vsel %vm2651, %v2848, 0
  %v2992 = vsel %vm2651, %v2850, 0
  %v2995 = vsel %vm2651, %v2852, 0
  %v2998 = vsel %vm2888, %v1373, 0
  %3000 = vmatprep.subr.mxu0 0.0
  %3001 = vmatpush1.msra.mxu0 %v1353
  %3002 = vmatprep.subr.mxu0 0.0
  %3003 = vmatpush1.msra.mxu0 %v1358
  %3004 = vmatprep.subr.mxu0 0.0
  %3005 = vmatpush1.msra.mxu0 %v1363
  %3006 = vmatprep.subr.mxu0 0.0
  %3007 = vmatpush1.msra.mxu0 %v1368
  %3008 = vmatprep.subr.mxu0 0.0
  %3009 = vmatpush1.msra.mxu0 %v2998
  %3010 = vmatprep.subr.mxu0 0.0
  %3011 = vmatpush1.msra.mxu0 0.0
  %3012 = vmatprep.subr.mxu0 0.0
  %3013 = vmatpush1.msra.mxu0 0.0
  %3014 = vmatprep.subr.mxu0 0.0
  %3015 = vmatpush1.msra.mxu0 0.0
  %3016 = vmatprep.subr.mxu0 0.0
  %3017 = vmatpush1.msra.mxu0 0.0
  %3018 = vmatprep.subr.mxu0 0.0
  %3019 = vmatpush1.msra.mxu0 0.0
  %3020 = vmatprep.subr.mxu0 0.0
  %3021 = vmatpush1.msra.mxu0 0.0
  %3022 = vmatprep.subr.mxu0 0.0
  %3023 = vmatpush1.msra.mxu0 0.0
  %3024 = vmatprep.subr.mxu0 0.0
  %3025 = vmatpush1.msra.mxu0 0.0
  %3026 = vmatprep.subr.mxu0 0.0
  %3027 = vmatpush1.msra.mxu0 0.0
  %3028 = vmatprep.subr.mxu0 0.0
  %3029 = vmatpush1.msra.mxu0 0.0
  %3030 = vmatprep.subr.mxu0 0.0
  %3031 = vmatpush1.msra.mxu0 0.0
  %3032 = vmatprep.subr.mxu0 0.0
  %3033 = vmatpush1.msra.mxu0 0.0
  %3034 = vmatprep.subr.mxu0 0.0
  %3035 = vmatpush1.msra.mxu0 0.0
  %3036 = vmatprep.subr.mxu0 0.0
  %3037 = vmatpush1.msra.mxu0 0.0
  %3038 = vmatprep.subr.mxu0 0.0
  %3039 = vmatpush1.msra.mxu0 0.0
  %3040 = vmatprep.subr.mxu0 0.0
  %3041 = vmatpush1.msra.mxu0 0.0
  %3042 = vmatprep.subr.mxu0 0.0
  %3043 = vmatpush1.msra.mxu0 0.0
  %3044 = vmatprep.subr.mxu0 0.0
  %3045 = vmatpush1.msra.mxu0 0.0
  %3046 = vmatprep.subr.mxu0 0.0
  %3047 = vmatpush1.msra.mxu0 0.0
  %3048 = vmatprep.subr.mxu0 0.0
  %3049 = vmatpush1.msra.mxu0 0.0
  %3050 = vmatprep.subr.mxu0 0.0
  %3051 = vmatpush1.msra.mxu0 0.0
  %3052 = vmatprep.subr.mxu0 0.0
  %3053 = vmatpush1.msra.mxu0 0.0
  %3054 = vmatprep.subr.mxu0 0.0
  %3055 = vmatpush1.msra.mxu0 0.0
  %3056 = vmatprep.subr.mxu0 0.0
  %3057 = vmatpush1.msra.mxu0 0.0
  %3058 = vmatprep.subr.mxu0 0.0
  %3059 = vmatpush1.msra.mxu0 0.0
  %3060 = vmatprep.subr.mxu0 0.0
  %3061 = vmatpush1.msra.mxu0 0.0
  %3062 = vmatprep.subr.mxu0 0.0
  %3063 = vmatpush1.msra.mxu0 0.0
  %3064 = vmatprep.mubr.f32.mxu0 0.0
  %3065 = vmatmul.mubr.f32.gmra.mrb[0].mxu0 %v2983
  %v3066 = vpop.f32.mrb[0].mxu0
  %v3067 = vadd.f32 0.0, %v3066
  %v3068 = vpop.f32.mrb[0].mxu0
  %3069 = vmatprep.mubr.f32.mxu0 0.0
  %3070 = vmatmul.mubr.f32.gmra.mrb[0].mxu0 %v2986
  %v3071 = vpop.f32.mrb[0].mxu0
  %v3072 = vadd.f32 0.0, %v3071
  %v3073 = vpop.f32.mrb[0].mxu0
  %3074 = vmatprep.mubr.f32.mxu0 0.0
  %3075 = vmatmul.mubr.f32.gmra.mrb[0].mxu0 %v2989
  %v3076 = vpop.f32.mrb[0].mxu0
  %v3077 = vadd.f32 0.0, %v3076
  %v3078 = vpop.f32.mrb[0].mxu0
  %3079 = vmatprep.mubr.f32.mxu0 0.0
  %3080 = vmatmul.mubr.f32.gmra.mrb[0].mxu0 %v2992
  %v3081 = vpop.f32.mrb[0].mxu0
  %v3082 = vadd.f32 0.0, %v3081
  %v3083 = vpop.f32.mrb[0].mxu0
  %3084 = vmatprep.mubr.f32.mxu0 0.0
  %3085 = vmatmul.mubr.f32.gmra.mrb[0].mxu0 %v2995
  %v3086 = vpop.f32.mrb[0].mxu0
  %v3087 = vadd.f32 0.0, %v3086
  %v3088 = vpop.f32.mrb[0].mxu0
  %3089 = vdwg.mxu0
  %v3091 = vsel %vm2651, %v2854, 0
  %v3094 = vsel %vm2651, %v2856, 0
  %v3097 = vsel %vm2651, %v2858, 0
  %v3100 = vsel %vm2651, %v2860, 0
  %v3103 = vsel %vm2651, %v2862, 0
  %v3106 = vsel %vm2888, %v1463, 0
  %3108 = vmatprep.subr.mxu0 0.0
  %3109 = vmatpush1.msra.mxu0 %v1443
  %3110 = vmatprep.subr.mxu0 0.0
  %3111 = vmatpush1.msra.mxu0 %v1448
  %3112 = vmatprep.subr.mxu0 0.0
  %3113 = vmatpush1.msra.mxu0 %v1453
  %3114 = vmatprep.subr.mxu0 0.0
  %3115 = vmatpush1.msra.mxu0 %v1458
  %3116 = vmatprep.subr.mxu0 0.0
  %3117 = vmatpush1.msra.mxu0 %v3106
  %3118 = vmatprep.subr.mxu0 0.0
  %3119 = vmatpush1.msra.mxu0 0.0
  %3120 = vmatprep.subr.mxu0 0.0
  %3121 = vmatpush1.msra.mxu0 0.0
  %3122 = vmatprep.subr.mxu0 0.0
  %3123 = vmatpush1.msra.mxu0 0.0
  %3124 = vmatprep.subr.mxu0 0.0
  %3125 = vmatpush1.msra.mxu0 0.0
  %3126 = vmatprep.subr.mxu0 0.0
  %3127 = vmatpush1.msra.mxu0 0.0
  %3128 = vmatprep.subr.mxu0 0.0
  %3129 = vmatpush1.msra.mxu0 0.0
  %3130 = vmatprep.subr.mxu0 0.0
  %3131 = vmatpush1.msra.mxu0 0.0
  %3132 = vmatprep.subr.mxu0 0.0
  %3133 = vmatpush1.msra.mxu0 0.0
  %3134 = vmatprep.subr.mxu0 0.0
  %3135 = vmatpush1.msra.mxu0 0.0
  %3136 = vmatprep.subr.mxu0 0.0
  %3137 = vmatpush1.msra.mxu0 0.0
  %3138 = vmatprep.subr.mxu0 0.0
  %3139 = vmatpush1.msra.mxu0 0.0
  %3140 = vmatprep.subr.mxu0 0.0
  %3141 = vmatpush1.msra.mxu0 0.0
  %3142 = vmatprep.subr.mxu0 0.0
  %3143 = vmatpush1.msra.mxu0 0.0
  %3144 = vmatprep.subr.mxu0 0.0
  %3145 = vmatpush1.msra.mxu0 0.0
  %3146 = vmatprep.subr.mxu0 0.0
  %3147 = vmatpush1.msra.mxu0 0.0
  %3148 = vmatprep.subr.mxu0 0.0
  %3149 = vmatpush1.msra.mxu0 0.0
  %3150 = vmatprep.subr.mxu0 0.0
  %3151 = vmatpush1.msra.mxu0 0.0
  %3152 = vmatprep.subr.mxu0 0.0
  %3153 = vmatpush1.msra.mxu0 0.0
  %3154 = vmatprep.subr.mxu0 0.0
  %3155 = vmatpush1.msra.mxu0 0.0
  %3156 = vmatprep.subr.mxu0 0.0
  %3157 = vmatpush1.msra.mxu0 0.0
  %3158 = vmatprep.subr.mxu0 0.0
  %3159 = vmatpush1.msra.mxu0 0.0
  %3160 = vmatprep.subr.mxu0 0.0
  %3161 = vmatpush1.msra.mxu0 0.0
  %3162 = vmatprep.subr.mxu0 0.0
  %3163 = vmatpush1.msra.mxu0 0.0
  %3164 = vmatprep.subr.mxu0 0.0
  %3165 = vmatpush1.msra.mxu0 0.0
  %3166 = vmatprep.subr.mxu0 0.0
  %3167 = vmatpush1.msra.mxu0 0.0
  %3168 = vmatprep.subr.mxu0 0.0
  %3169 = vmatpush1.msra.mxu0 0.0
  %3170 = vmatprep.subr.mxu0 0.0
  %3171 = vmatpush1.msra.mxu0 0.0
  %3172 = vmatprep.mubr.f32.mxu0 0.0
  %3173 = vmatmul.mubr.f32.gmra.mrb[0].mxu0 %v3091
  %v3174 = vpop.f32.mrb[0].mxu0
  %v3175 = vadd.f32 0.0, %v3174
  %v3176 = vpop.f32.mrb[0].mxu0
  %3177 = vmatprep.mubr.f32.mxu0 0.0
  %3178 = vmatmul.mubr.f32.gmra.mrb[0].mxu0 %v3094
  %v3179 = vpop.f32.mrb[0].mxu0
  %v3180 = vadd.f32 0.0, %v3179
  %v3181 = vpop.f32.mrb[0].mxu0
  %3182 = vmatprep.mubr.f32.mxu0 0.0
  %3183 = vmatmul.mubr.f32.gmra.mrb[0].mxu0 %v3097
  %v3184 = vpop.f32.mrb[0].mxu0
  %v3185 = vadd.f32 0.0, %v3184
  %v3186 = vpop.f32.mrb[0].mxu0
  %3187 = vmatprep.mubr.f32.mxu0 0.0
  %3188 = vmatmul.mubr.f32.gmra.mrb[0].mxu0 %v3100
  %v3189 = vpop.f32.mrb[0].mxu0
  %v3190 = vadd.f32 0.0, %v3189
  %v3191 = vpop.f32.mrb[0].mxu0
  %3192 = vmatprep.mubr.f32.mxu0 0.0
  %3193 = vmatmul.mubr.f32.gmra.mrb[0].mxu0 %v3103
  %v3194 = vpop.f32.mrb[0].mxu0
  %v3195 = vadd.f32 0.0, %v3194
  %v3196 = vpop.f32.mrb[0].mxu0
  %3197 = vdwg.mxu0
  %v3199 = vsel %vm2651, %v2864, 0
  %v3202 = vsel %vm2651, %v2866, 0
  %v3205 = vsel %vm2651, %v2868, 0
  %v3208 = vsel %vm2651, %v2870, 0
  %v3211 = vsel %vm2651, %v2872, 0
  %v3214 = vsel %vm2888, %v1553, 0
  %3216 = vmatprep.subr.mxu0 0.0
  %3217 = vmatpush1.msra.mxu0 %v1533
  %3218 = vmatprep.subr.mxu0 0.0
  %3219 = vmatpush1.msra.mxu0 %v1538
  %3220 = vmatprep.subr.mxu0 0.0
  %3221 = vmatpush1.msra.mxu0 %v1543
  %3222 = vmatprep.subr.mxu0 0.0
  %3223 = vmatpush1.msra.mxu0 %v1548
  %3224 = vmatprep.subr.mxu0 0.0
  %3225 = vmatpush1.msra.mxu0 %v3214
  %3226 = vmatprep.subr.mxu0 0.0
  %3227 = vmatpush1.msra.mxu0 0.0
  %3228 = vmatprep.subr.mxu0 0.0
  %3229 = vmatpush1.msra.mxu0 0.0
  %3230 = vmatprep.subr.mxu0 0.0
  %3231 = vmatpush1.msra.mxu0 0.0
  %3232 = vmatprep.subr.mxu0 0.0
  %3233 = vmatpush1.msra.mxu0 0.0
  %3234 = vmatprep.subr.mxu0 0.0
  %3235 = vmatpush1.msra.mxu0 0.0
  %3236 = vmatprep.subr.mxu0 0.0
  %3237 = vmatpush1.msra.mxu0 0.0
  %3238 = vmatprep.subr.mxu0 0.0
  %3239 = vmatpush1.msra.mxu0 0.0
  %3240 = vmatprep.subr.mxu0 0.0
  %3241 = vmatpush1.msra.mxu0 0.0
  %3242 = vmatprep.subr.mxu0 0.0
  %3243 = vmatpush1.msra.mxu0 0.0
  %3244 = vmatprep.subr.mxu0 0.0
  %3245 = vmatpush1.msra.mxu0 0.0
  %3246 = vmatprep.subr.mxu0 0.0
  %3247 = vmatpush1.msra.mxu0 0.0
  %3248 = vmatprep.subr.mxu0 0.0
  %3249 = vmatpush1.msra.mxu0 0.0
  %3250 = vmatprep.subr.mxu0 0.0
  %3251 = vmatpush1.msra.mxu0 0.0
  %3252 = vmatprep.subr.mxu0 0.0
  %3253 = vmatpush1.msra.mxu0 0.0
  %3254 = vmatprep.subr.mxu0 0.0
  %3255 = vmatpush1.msra.mxu0 0.0
  %3256 = vmatprep.subr.mxu0 0.0
  %3257 = vmatpush1.msra.mxu0 0.0
  %3258 = vmatprep.subr.mxu0 0.0
  %3259 = vmatpush1.msra.mxu0 0.0
  %3260 = vmatprep.subr.mxu0 0.0
  %3261 = vmatpush1.msra.mxu0 0.0
  %3262 = vmatprep.subr.mxu0 0.0
  %3263 = vmatpush1.msra.mxu0 0.0
  %3264 = vmatprep.subr.mxu0 0.0
  %3265 = vmatpush1.msra.mxu0 0.0
  %3266 = vmatprep.subr.mxu0 0.0
  %3267 = vmatpush1.msra.mxu0 0.0
  %3268 = vmatprep.subr.mxu0 0.0
  %3269 = vmatpush1.msra.mxu0 0.0
  %3270 = vmatprep.subr.mxu0 0.0
  %3271 = vmatpush1.msra.mxu0 0.0
  %3272 = vmatprep.subr.mxu0 0.0
  %3273 = vmatpush1.msra.mxu0 0.0
  %3274 = vmatprep.subr.mxu0 0.0
  %3275 = vmatpush1.msra.mxu0 0.0
  %3276 = vmatprep.subr.mxu0 0.0
  %3277 = vmatpush1.msra.mxu0 0.0
  %3278 = vmatprep.subr.mxu0 0.0
  %3279 = vmatpush1.msra.mxu0 0.0
  %3280 = vmatprep.mubr.f32.mxu0 0.0
  %3281 = vmatmul.mubr.f32.gmra.mrb[0].mxu0 %v3199
  %v3282 = vpop.f32.mrb[0].mxu0
  %v3283 = vadd.f32 0.0, %v3282
  %v3284 = vpop.f32.mrb[0].mxu0
  %3285 = vmatprep.mubr.f32.mxu0 0.0
  %3286 = vmatmul.mubr.f32.gmra.mrb[0].mxu0 %v3202
  %v3287 = vpop.f32.mrb[0].mxu0
  %v3288 = vadd.f32 0.0, %v3287
  %v3289 = vpop.f32.mrb[0].mxu0
  %3290 = vmatprep.mubr.f32.mxu0 0.0
  %3291 = vmatmul.mubr.f32.gmra.mrb[0].mxu0 %v3205
  %v3292 = vpop.f32.mrb[0].mxu0
  %v3293 = vadd.f32 0.0, %v3292
  %v3294 = vpop.f32.mrb[0].mxu0
  %3295 = vmatprep.mubr.f32.mxu0 0.0
  %3296 = vmatmul.mubr.f32.gmra.mrb[0].mxu0 %v3208
  %v3297 = vpop.f32.mrb[0].mxu0
  %v3298 = vadd.f32 0.0, %v3297
  %v3299 = vpop.f32.mrb[0].mxu0
  %3300 = vmatprep.mubr.f32.mxu0 0.0
  %3301 = vmatmul.mubr.f32.gmra.mrb[0].mxu0 %v3211
  %v3302 = vpop.f32.mrb[0].mxu0
  %v3303 = vadd.f32 0.0, %v3302
  %v3304 = vpop.f32.mrb[0].mxu0
  %3305 = vdwg.mxu0
  %3326 = vrot.lane.b32.xlu0 %v1848, 112
  %v3327 = vpop.permute.xlu0 %3326
  %3328 = vrot.lane.b32.xlu0 %v1849, 112
  %v3329 = vpop.permute.xlu0 %3328
  %3330 = vrot.lane.b32.xlu0 %v1850, 112
  %v3331 = vpop.permute.xlu0 %3330
  %3332 = vrot.lane.b32.xlu0 %v1851, 112
  %v3333 = vpop.permute.xlu0 %3332
  %3334 = vrot.lane.b32.xlu0 %v1852, 112
  %v3335 = vpop.permute.xlu0 %3334
  %3336 = vrot.lane.b32.xlu0 %v1853, 112
  %v3337 = vpop.permute.xlu0 %3336
  %3338 = vrot.lane.b32.xlu0 %v1854, 112
  %v3339 = vpop.permute.xlu0 %3338
  %3340 = vrot.lane.b32.xlu0 %v1855, 112
  %v3341 = vpop.permute.xlu0 %3340
  %3342 = vrot.lane.b32.xlu0 %v1856, 112
  %v3343 = vpop.permute.xlu0 %3342
  %3344 = vrot.lane.b32.xlu0 %v1857, 112
  %v3345 = vpop.permute.xlu0 %3344
  %3346 = vrot.lane.b32.xlu0 %v1858, 112
  %v3347 = vpop.permute.xlu0 %3346
  %3348 = vrot.lane.b32.xlu0 %v1859, 112
  %v3349 = vpop.permute.xlu0 %3348
  %3350 = vrot.lane.b32.xlu0 %v1860, 112
  %v3351 = vpop.permute.xlu0 %3350
  %3352 = vrot.lane.b32.xlu0 %v1861, 112
  %v3353 = vpop.permute.xlu0 %3352
  %3354 = vrot.lane.b32.xlu0 %v1862, 112
  %v3355 = vpop.permute.xlu0 %3354
  %3356 = vrot.lane.b32.xlu0 %v1863, 112
  %v3357 = vpop.permute.xlu0 %3356
  %3358 = vrot.lane.b32.xlu0 %v1864, 112
  %v3359 = vpop.permute.xlu0 %3358
  %3360 = vrot.lane.b32.xlu0 %v1865, 112
  %v3361 = vpop.permute.xlu0 %3360
  %3362 = vrot.lane.b32.xlu0 %v1866, 112
  %v3363 = vpop.permute.xlu0 %3362
  %3364 = vrot.lane.b32.xlu0 %v1867, 112
  %v3365 = vpop.permute.xlu0 %3364
  %v3386 = vsel %vm1868, %v3327, 0.0
  %3387 = vadd.xlane.f32.xlu0 %v3386
  %v3388 = vpop.xlane.xlu0 %3387
  %v3389 = vsel %vm1868, %v3329, 0.0
  %3390 = vadd.xlane.f32.xlu0 %v3389
  %v3391 = vpop.xlane.xlu0 %3390
  %v3392 = vsel %vm1868, %v3331, 0.0
  %3393 = vadd.xlane.f32.xlu0 %v3392
  %v3394 = vpop.xlane.xlu0 %3393
  %v3395 = vsel %vm1868, %v3333, 0.0
  %3396 = vadd.xlane.f32.xlu0 %v3395
  %v3397 = vpop.xlane.xlu0 %3396
  %v3398 = vsel %vm1881, %v3335, 0.0
  %3399 = vadd.xlane.f32.xlu0 %v3398
  %v3400 = vpop.xlane.xlu0 %3399
  %v3401 = vsel %vm1868, %v3337, 0.0
  %3402 = vadd.xlane.f32.xlu0 %v3401
  %v3403 = vpop.xlane.xlu0 %3402
  %v3404 = vsel %vm1868, %v3339, 0.0
  %3405 = vadd.xlane.f32.xlu0 %v3404
  %v3406 = vpop.xlane.xlu0 %3405
  %v3407 = vsel %vm1868, %v3341, 0.0
  %3408 = vadd.xlane.f32.xlu0 %v3407
  %v3409 = vpop.xlane.xlu0 %3408
  %v3410 = vsel %vm1868, %v3343, 0.0
  %3411 = vadd.xlane.f32.xlu0 %v3410
  %v3412 = vpop.xlane.xlu0 %3411
  %v3413 = vsel %vm1881, %v3345, 0.0
  %3414 = vadd.xlane.f32.xlu0 %v3413
  %v3415 = vpop.xlane.xlu0 %3414
  %v3416 = vsel %vm1868, %v3347, 0.0
  %3417 = vadd.xlane.f32.xlu0 %v3416
  %v3418 = vpop.xlane.xlu0 %3417
  %v3419 = vsel %vm1868, %v3349, 0.0
  %3420 = vadd.xlane.f32.xlu0 %v3419
  %v3421 = vpop.xlane.xlu0 %3420
  %v3422 = vsel %vm1868, %v3351, 0.0
  %3423 = vadd.xlane.f32.xlu0 %v3422
  %v3424 = vpop.xlane.xlu0 %3423
  %v3425 = vsel %vm1868, %v3353, 0.0
  %3426 = vadd.xlane.f32.xlu0 %v3425
  %v3427 = vpop.xlane.xlu0 %3426
  %v3428 = vsel %vm1881, %v3355, 0.0
  %3429 = vadd.xlane.f32.xlu0 %v3428
  %v3430 = vpop.xlane.xlu0 %3429
  %v3431 = vsel %vm1868, %v3357, 0.0
  %3432 = vadd.xlane.f32.xlu0 %v3431
  %v3433 = vpop.xlane.xlu0 %3432
  %v3434 = vsel %vm1868, %v3359, 0.0
  %3435 = vadd.xlane.f32.xlu0 %v3434
  %v3436 = vpop.xlane.xlu0 %3435
  %v3437 = vsel %vm1868, %v3361, 0.0
  %3438 = vadd.xlane.f32.xlu0 %v3437
  %v3439 = vpop.xlane.xlu0 %3438
  %v3440 = vsel %vm1868, %v3363, 0.0
  %3441 = vadd.xlane.f32.xlu0 %v3440
  %v3442 = vpop.xlane.xlu0 %3441
  %v3443 = vsel %vm1881, %v3365, 0.0
  %3444 = vadd.xlane.f32.xlu0 %v3443
  %v3445 = vpop.xlane.xlu0 %3444
  %v3446 = vadd.f32 %v3388, 1e-12
  %v3447 = vadd.f32 %v3391, 1e-12
  %v3448 = vadd.f32 %v3394, 1e-12
  %v3449 = vadd.f32 %v3397, 1e-12
  %v3450 = vadd.f32 %v3400, 1e-12
  %v3451 = vadd.f32 %v3403, 1e-12
  %v3452 = vadd.f32 %v3406, 1e-12
  %v3453 = vadd.f32 %v3409, 1e-12
  %v3454 = vadd.f32 %v3412, 1e-12
  %v3455 = vadd.f32 %v3415, 1e-12
  %v3456 = vadd.f32 %v3418, 1e-12
  %v3457 = vadd.f32 %v3421, 1e-12
  %v3458 = vadd.f32 %v3424, 1e-12
  %v3459 = vadd.f32 %v3427, 1e-12
  %v3460 = vadd.f32 %v3430, 1e-12
  %v3461 = vadd.f32 %v3433, 1e-12
  %v3462 = vadd.f32 %v3436, 1e-12
  %v3463 = vadd.f32 %v3439, 1e-12
  %v3464 = vadd.f32 %v3442, 1e-12
  %v3465 = vadd.f32 %v3445, 1e-12
  %v3466 = vrsqrt.pop %v3446
  %v3467 = vrsqrt.pop %v3447
  %v3468 = vrsqrt.pop %v3448
  %v3469 = vrsqrt.pop %v3449
  %v3470 = vrsqrt.pop %v3450
  %v3471 = vrsqrt.pop %v3451
  %v3472 = vrsqrt.pop %v3452
  %v3473 = vrsqrt.pop %v3453
  %v3474 = vrsqrt.pop %v3454
  %v3475 = vrsqrt.pop %v3455
  %v3476 = vrsqrt.pop %v3456
  %v3477 = vrsqrt.pop %v3457
  %v3478 = vrsqrt.pop %v3458
  %v3479 = vrsqrt.pop %v3459
  %v3480 = vrsqrt.pop %v3460
  %v3481 = vrsqrt.pop %v3461
  %v3482 = vrsqrt.pop %v3462
  %v3483 = vrsqrt.pop %v3463
  %v3484 = vrsqrt.pop %v3464
  %v3485 = vrsqrt.pop %v3465
  %v3486 = vmul.f32 %v3466, %v1970
  %v3487 = vmul.f32 %v3467, %v1970
  %v3488 = vmul.f32 %v3468, %v1970
  %v3489 = vmul.f32 %v3469, %v1970
  %v3490 = vmul.f32 %v3470, %v1970
  %v3491 = vmul.f32 %v3471, %v1970
  %v3492 = vmul.f32 %v3472, %v1970
  %v3493 = vmul.f32 %v3473, %v1970
  %v3494 = vmul.f32 %v3474, %v1970
  %v3495 = vmul.f32 %v3475, %v1970
  %v3496 = vmul.f32 %v3476, %v1970
  %v3497 = vmul.f32 %v3477, %v1970
  %v3498 = vmul.f32 %v3478, %v1970
  %v3499 = vmul.f32 %v3479, %v1970
  %v3500 = vmul.f32 %v3480, %v1970
  %v3501 = vmul.f32 %v3481, %v1970
  %v3502 = vmul.f32 %v3482, %v1970
  %v3503 = vmul.f32 %v3483, %v1970
  %v3504 = vmul.f32 %v3484, %v1970
  %v3505 = vmul.f32 %v3485, %v1970
  %v3506 = vmul.f32 %v482, %v3486
  %v3507 = vmul.f32 %v487, %v3487
  %v3508 = vmul.f32 %v492, %v3488
  %v3509 = vmul.f32 %v497, %v3489
  %v3510 = vmul.f32 %v502, %v3490
  %v3511 = vmul.f32 %v587, %v3491
  %v3512 = vmul.f32 %v592, %v3492
  %v3513 = vmul.f32 %v597, %v3493
  %v3514 = vmul.f32 %v602, %v3494
  %v3515 = vmul.f32 %v607, %v3495
  %v3516 = vmul.f32 %v692, %v3496
  %v3517 = vmul.f32 %v697, %v3497
  %v3518 = vmul.f32 %v702, %v3498
  %v3519 = vmul.f32 %v707, %v3499
  %v3520 = vmul.f32 %v712, %v3500
  %v3521 = vmul.f32 %v797, %v3501
  %v3522 = vmul.f32 %v802, %v3502
  %v3523 = vmul.f32 %v807, %v3503
  %v3524 = vmul.f32 %v812, %v3504
  %v3525 = vmul.f32 %v817, %v3505
  %3546 = vrot.lane.b32.xlu0 %v2011, 112
  %v3547 = vpop.permute.xlu0 %3546
  %3548 = vrot.lane.b32.xlu0 %v2012, 112
  %v3549 = vpop.permute.xlu0 %3548
  %3550 = vrot.lane.b32.xlu0 %v2013, 112
  %v3551 = vpop.permute.xlu0 %3550
  %3552 = vrot.lane.b32.xlu0 %v2014, 112
  %v3553 = vpop.permute.xlu0 %3552
  %3554 = vrot.lane.b32.xlu0 %v2015, 112
  %v3555 = vpop.permute.xlu0 %3554
  %3556 = vrot.lane.b32.xlu0 %v2016, 112
  %v3557 = vpop.permute.xlu0 %3556
  %3558 = vrot.lane.b32.xlu0 %v2017, 112
  %v3559 = vpop.permute.xlu0 %3558
  %3560 = vrot.lane.b32.xlu0 %v2018, 112
  %v3561 = vpop.permute.xlu0 %3560
  %3562 = vrot.lane.b32.xlu0 %v2019, 112
  %v3563 = vpop.permute.xlu0 %3562
  %3564 = vrot.lane.b32.xlu0 %v2020, 112
  %v3565 = vpop.permute.xlu0 %3564
  %3566 = vrot.lane.b32.xlu0 %v2021, 112
  %v3567 = vpop.permute.xlu0 %3566
  %3568 = vrot.lane.b32.xlu0 %v2022, 112
  %v3569 = vpop.permute.xlu0 %3568
  %3570 = vrot.lane.b32.xlu0 %v2023, 112
  %v3571 = vpop.permute.xlu0 %3570
  %3572 = vrot.lane.b32.xlu0 %v2024, 112
  %v3573 = vpop.permute.xlu0 %3572
  %3574 = vrot.lane.b32.xlu0 %v2025, 112
  %v3575 = vpop.permute.xlu0 %3574
  %3576 = vrot.lane.b32.xlu0 %v2026, 112
  %v3577 = vpop.permute.xlu0 %3576
  %3578 = vrot.lane.b32.xlu0 %v2027, 112
  %v3579 = vpop.permute.xlu0 %3578
  %3580 = vrot.lane.b32.xlu0 %v2028, 112
  %v3581 = vpop.permute.xlu0 %3580
  %3582 = vrot.lane.b32.xlu0 %v2029, 112
  %v3583 = vpop.permute.xlu0 %3582
  %3584 = vrot.lane.b32.xlu0 %v2030, 112
  %v3585 = vpop.permute.xlu0 %3584
  %v3606 = vsel %vm1868, %v3547, 0.0
  %3607 = vadd.xlane.f32.xlu0 %v3606
  %v3608 = vpop.xlane.xlu0 %3607
  %v3609 = vsel %vm1868, %v3549, 0.0
  %3610 = vadd.xlane.f32.xlu0 %v3609
  %v3611 = vpop.xlane.xlu0 %3610
  %v3612 = vsel %vm1868, %v3551, 0.0
  %3613 = vadd.xlane.f32.xlu0 %v3612
  %v3614 = vpop.xlane.xlu0 %3613
  %v3615 = vsel %vm1868, %v3553, 0.0
  %3616 = vadd.xlane.f32.xlu0 %v3615
  %v3617 = vpop.xlane.xlu0 %3616
  %v3618 = vsel %vm1881, %v3555, 0.0
  %3619 = vadd.xlane.f32.xlu0 %v3618
  %v3620 = vpop.xlane.xlu0 %3619
  %v3621 = vsel %vm1868, %v3557, 0.0
  %3622 = vadd.xlane.f32.xlu0 %v3621
  %v3623 = vpop.xlane.xlu0 %3622
  %v3624 = vsel %vm1868, %v3559, 0.0
  %3625 = vadd.xlane.f32.xlu0 %v3624
  %v3626 = vpop.xlane.xlu0 %3625
  %v3627 = vsel %vm1868, %v3561, 0.0
  %3628 = vadd.xlane.f32.xlu0 %v3627
  %v3629 = vpop.xlane.xlu0 %3628
  %v3630 = vsel %vm1868, %v3563, 0.0
  %3631 = vadd.xlane.f32.xlu0 %v3630
  %v3632 = vpop.xlane.xlu0 %3631
  %v3633 = vsel %vm1881, %v3565, 0.0
  %3634 = vadd.xlane.f32.xlu0 %v3633
  %v3635 = vpop.xlane.xlu0 %3634
  %v3636 = vsel %vm1868, %v3567, 0.0
  %3637 = vadd.xlane.f32.xlu0 %v3636
  %v3638 = vpop.xlane.xlu0 %3637
  %v3639 = vsel %vm1868, %v3569, 0.0
  %3640 = vadd.xlane.f32.xlu0 %v3639
  %v3641 = vpop.xlane.xlu0 %3640
  %v3642 = vsel %vm1868, %v3571, 0.0
  %3643 = vadd.xlane.f32.xlu0 %v3642
  %v3644 = vpop.xlane.xlu0 %3643
  %v3645 = vsel %vm1868, %v3573, 0.0
  %3646 = vadd.xlane.f32.xlu0 %v3645
  %v3647 = vpop.xlane.xlu0 %3646
  %v3648 = vsel %vm1881, %v3575, 0.0
  %3649 = vadd.xlane.f32.xlu0 %v3648
  %v3650 = vpop.xlane.xlu0 %3649
  %v3651 = vsel %vm1868, %v3577, 0.0
  %3652 = vadd.xlane.f32.xlu0 %v3651
  %v3653 = vpop.xlane.xlu0 %3652
  %v3654 = vsel %vm1868, %v3579, 0.0
  %3655 = vadd.xlane.f32.xlu0 %v3654
  %v3656 = vpop.xlane.xlu0 %3655
  %v3657 = vsel %vm1868, %v3581, 0.0
  %3658 = vadd.xlane.f32.xlu0 %v3657
  %v3659 = vpop.xlane.xlu0 %3658
  %v3660 = vsel %vm1868, %v3583, 0.0
  %3661 = vadd.xlane.f32.xlu0 %v3660
  %v3662 = vpop.xlane.xlu0 %3661
  %v3663 = vsel %vm1881, %v3585, 0.0
  %3664 = vadd.xlane.f32.xlu0 %v3663
  %v3665 = vpop.xlane.xlu0 %3664
  %v3666 = vadd.f32 %v3608, 1e-12
  %v3667 = vadd.f32 %v3611, 1e-12
  %v3668 = vadd.f32 %v3614, 1e-12
  %v3669 = vadd.f32 %v3617, 1e-12
  %v3670 = vadd.f32 %v3620, 1e-12
  %v3671 = vadd.f32 %v3623, 1e-12
  %v3672 = vadd.f32 %v3626, 1e-12
  %v3673 = vadd.f32 %v3629, 1e-12
  %v3674 = vadd.f32 %v3632, 1e-12
  %v3675 = vadd.f32 %v3635, 1e-12
  %v3676 = vadd.f32 %v3638, 1e-12
  %v3677 = vadd.f32 %v3641, 1e-12
  %v3678 = vadd.f32 %v3644, 1e-12
  %v3679 = vadd.f32 %v3647, 1e-12
  %v3680 = vadd.f32 %v3650, 1e-12
  %v3681 = vadd.f32 %v3653, 1e-12
  %v3682 = vadd.f32 %v3656, 1e-12
  %v3683 = vadd.f32 %v3659, 1e-12
  %v3684 = vadd.f32 %v3662, 1e-12
  %v3685 = vadd.f32 %v3665, 1e-12
  %v3686 = vrsqrt.pop %v3666
  %v3687 = vrsqrt.pop %v3667
  %v3688 = vrsqrt.pop %v3668
  %v3689 = vrsqrt.pop %v3669
  %v3690 = vrsqrt.pop %v3670
  %v3691 = vrsqrt.pop %v3671
  %v3692 = vrsqrt.pop %v3672
  %v3693 = vrsqrt.pop %v3673
  %v3694 = vrsqrt.pop %v3674
  %v3695 = vrsqrt.pop %v3675
  %v3696 = vrsqrt.pop %v3676
  %v3697 = vrsqrt.pop %v3677
  %v3698 = vrsqrt.pop %v3678
  %v3699 = vrsqrt.pop %v3679
  %v3700 = vrsqrt.pop %v3680
  %v3701 = vrsqrt.pop %v3681
  %v3702 = vrsqrt.pop %v3682
  %v3703 = vrsqrt.pop %v3683
  %v3704 = vrsqrt.pop %v3684
  %v3705 = vrsqrt.pop %v3685
  %v3706 = vmul.f32 %v895, %v3686
  %v3707 = vmul.f32 %v900, %v3687
  %v3708 = vmul.f32 %v905, %v3688
  %v3709 = vmul.f32 %v910, %v3689
  %v3710 = vmul.f32 %v915, %v3690
  %v3711 = vmul.f32 %v985, %v3691
  %v3712 = vmul.f32 %v990, %v3692
  %v3713 = vmul.f32 %v995, %v3693
  %v3714 = vmul.f32 %v1000, %v3694
  %v3715 = vmul.f32 %v1005, %v3695
  %v3716 = vmul.f32 %v1075, %v3696
  %v3717 = vmul.f32 %v1080, %v3697
  %v3718 = vmul.f32 %v1085, %v3698
  %v3719 = vmul.f32 %v1090, %v3699
  %v3720 = vmul.f32 %v1095, %v3700
  %v3721 = vmul.f32 %v1165, %v3701
  %v3722 = vmul.f32 %v1170, %v3702
  %v3723 = vmul.f32 %v1175, %v3703
  %v3724 = vmul.f32 %v1180, %v3704
  %v3725 = vmul.f32 %v1185, %v3705
  %3731 = vrot.lane.b32.xlu0 %v3506, 112
  %v3732 = vpop.permute.xlu0 %3731
  %3733 = vrot.lane.b32.xlu0 %v3507, 112
  %v3734 = vpop.permute.xlu0 %3733
  %3735 = vrot.lane.b32.xlu0 %v3508, 112
  %v3736 = vpop.permute.xlu0 %3735
  %3737 = vrot.lane.b32.xlu0 %v3509, 112
  %v3738 = vpop.permute.xlu0 %3737
  %3739 = vrot.lane.b32.xlu0 %v3510, 112
  %v3740 = vpop.permute.xlu0 %3739
  %3746 = vrot.lane.b32.xlu0 %v3706, 112
  %v3747 = vpop.permute.xlu0 %3746
  %3748 = vrot.lane.b32.xlu0 %v3707, 112
  %v3749 = vpop.permute.xlu0 %3748
  %3750 = vrot.lane.b32.xlu0 %v3708, 112
  %v3751 = vpop.permute.xlu0 %3750
  %3752 = vrot.lane.b32.xlu0 %v3709, 112
  %v3753 = vpop.permute.xlu0 %3752
  %3754 = vrot.lane.b32.xlu0 %v3710, 112
  %v3755 = vpop.permute.xlu0 %3754
  %v3756 = vsel %vm1868, %v3732, 0
  %v3758 = vsel %vm1868, %v3734, 0
  %v3760 = vsel %vm1868, %v3736, 0
  %v3762 = vsel %vm1868, %v3738, 0
  %v3764 = vsel %vm1868, %v3740, 0
  %v3766 = vsel %vm1868, %v3747, 0
  %v3768 = vsel %vm1868, %v3749, 0
  %v3770 = vsel %vm1868, %v3751, 0
  %v3772 = vsel %vm1868, %v3753, 0
  %v3774 = vsel %vm1868, %v3755, 0
  %3776 = vmatprep.subr.mxu0 0.0
  %3777 = vmatpush1.xpose.msra.mxu0 %v3766
  %3778 = vmatprep.subr.mxu0 0.0
  %3779 = vmatpush1.xpose.msra.mxu0 %v3768
  %3780 = vmatprep.subr.mxu0 0.0
  %3781 = vmatpush1.xpose.msra.mxu0 %v3770
  %3782 = vmatprep.subr.mxu0 0.0
  %3783 = vmatpush1.xpose.msra.mxu0 %v3772
  %3784 = vmatprep.subr.mxu0 0.0
  %3785 = vmatpush1.xpose.msra.mxu0 %v3774
  %3786 = vmatprep.subr.mxu0 0.0
  %3787 = vmatpush1.xpose.msra.mxu0 0.0
  %3788 = vmatprep.subr.mxu0 0.0
  %3789 = vmatpush1.xpose.msra.mxu0 0.0
  %3790 = vmatprep.subr.mxu0 0.0
  %3791 = vmatpush1.xpose.msra.mxu0 0.0
  %3792 = vmatprep.subr.mxu0 0.0
  %3793 = vmatpush1.xpose.msra.mxu0 0.0
  %3794 = vmatprep.subr.mxu0 0.0
  %3795 = vmatpush1.xpose.msra.mxu0 0.0
  %3796 = vmatprep.subr.mxu0 0.0
  %3797 = vmatpush1.xpose.msra.mxu0 0.0
  %3798 = vmatprep.subr.mxu0 0.0
  %3799 = vmatpush1.xpose.msra.mxu0 0.0
  %3800 = vmatprep.subr.mxu0 0.0
  %3801 = vmatpush1.xpose.msra.mxu0 0.0
  %3802 = vmatprep.subr.mxu0 0.0
  %3803 = vmatpush1.xpose.msra.mxu0 0.0
  %3804 = vmatprep.subr.mxu0 0.0
  %3805 = vmatpush1.xpose.msra.mxu0 0.0
  %3806 = vmatprep.subr.mxu0 0.0
  %3807 = vmatpush1.xpose.msra.mxu0 0.0
  %3808 = vmatprep.subr.mxu0 0.0
  %3809 = vmatpush1.xpose.msra.mxu0 0.0
  %3810 = vmatprep.subr.mxu0 0.0
  %3811 = vmatpush1.xpose.msra.mxu0 0.0
  %3812 = vmatprep.subr.mxu0 0.0
  %3813 = vmatpush1.xpose.msra.mxu0 0.0
  %3814 = vmatprep.subr.mxu0 0.0
  %3815 = vmatpush1.xpose.msra.mxu0 0.0
  %3816 = vmatprep.subr.mxu0 0.0
  %3817 = vmatpush1.xpose.msra.mxu0 0.0
  %3818 = vmatprep.subr.mxu0 0.0
  %3819 = vmatpush1.xpose.msra.mxu0 0.0
  %3820 = vmatprep.subr.mxu0 0.0
  %3821 = vmatpush1.xpose.msra.mxu0 0.0
  %3822 = vmatprep.subr.mxu0 0.0
  %3823 = vmatpush1.xpose.msra.mxu0 0.0
  %3824 = vmatprep.subr.mxu0 0.0
  %3825 = vmatpush1.xpose.msra.mxu0 0.0
  %3826 = vmatprep.subr.mxu0 0.0
  %3827 = vmatpush1.xpose.msra.mxu0 0.0
  %3828 = vmatprep.subr.mxu0 0.0
  %3829 = vmatpush1.xpose.msra.mxu0 0.0
  %3830 = vmatprep.subr.mxu0 0.0
  %3831 = vmatpush1.xpose.msra.mxu0 0.0
  %3832 = vmatprep.subr.mxu0 0.0
  %3833 = vmatpush1.xpose.msra.mxu0 0.0
  %3834 = vmatprep.subr.mxu0 0.0
  %3835 = vmatpush1.xpose.msra.mxu0 0.0
  %3836 = vmatprep.subr.mxu0 0.0
  %3837 = vmatpush1.xpose.msra.mxu0 0.0
  %3838 = vmatprep.subr.mxu0 0.0
  %3839 = vmatpush1.xpose.msra.mxu0 0.0
  %3840 = vmatprep.mubr.f32.mxu0 0.0
  %3841 = vmatmul.mubr.f32.gmra.mrb[0].mxu0 %v3756
  %v3842 = vpop.f32.mrb[0].mxu0
  %v3843 = vadd.f32 %v1833, %v3842
  %v3844 = vpop.f32.mrb[0].mxu0
  %3845 = vmatprep.mubr.f32.mxu0 0.0
  %3846 = vmatmul.mubr.f32.gmra.mrb[0].mxu0 %v3758
  %v3847 = vpop.f32.mrb[0].mxu0
  %v3848 = vadd.f32 %v1834, %v3847
  %v3849 = vpop.f32.mrb[0].mxu0
  %3850 = vmatprep.mubr.f32.mxu0 0.0
  %3851 = vmatmul.mubr.f32.gmra.mrb[0].mxu0 %v3760
  %v3852 = vpop.f32.mrb[0].mxu0
  %v3853 = vadd.f32 %v1835, %v3852
  %v3854 = vpop.f32.mrb[0].mxu0
  %3855 = vmatprep.mubr.f32.mxu0 0.0
  %3856 = vmatmul.mubr.f32.gmra.mrb[0].mxu0 %v3762
  %v3857 = vpop.f32.mrb[0].mxu0
  %v3858 = vadd.f32 %v1836, %v3857
  %v3859 = vpop.f32.mrb[0].mxu0
  %3860 = vmatprep.mubr.f32.mxu0 0.0
  %3861 = vmatmul.mubr.f32.gmra.mrb[0].mxu0 %v3764
  %v3862 = vpop.f32.mrb[0].mxu0
  %v3863 = vadd.f32 %v1837, %v3862
  %v3864 = vpop.f32.mrb[0].mxu0
  %3865 = vdwg.mxu0
  %3871 = vrot.lane.b32.xlu0 %v3511, 112
  %v3872 = vpop.permute.xlu0 %3871
  %3873 = vrot.lane.b32.xlu0 %v3512, 112
  %v3874 = vpop.permute.xlu0 %3873
  %3875 = vrot.lane.b32.xlu0 %v3513, 112
  %v3876 = vpop.permute.xlu0 %3875
  %3877 = vrot.lane.b32.xlu0 %v3514, 112
  %v3878 = vpop.permute.xlu0 %3877
  %3879 = vrot.lane.b32.xlu0 %v3515, 112
  %v3880 = vpop.permute.xlu0 %3879
  %3886 = vrot.lane.b32.xlu0 %v3711, 112
  %v3887 = vpop.permute.xlu0 %3886
  %3888 = vrot.lane.b32.xlu0 %v3712, 112
  %v3889 = vpop.permute.xlu0 %3888
  %3890 = vrot.lane.b32.xlu0 %v3713, 112
  %v3891 = vpop.permute.xlu0 %3890
  %3892 = vrot.lane.b32.xlu0 %v3714, 112
  %v3893 = vpop.permute.xlu0 %3892
  %3894 = vrot.lane.b32.xlu0 %v3715, 112
  %v3895 = vpop.permute.xlu0 %3894
  %v3896 = vsel %vm1868, %v3872, 0
  %v3898 = vsel %vm1868, %v3874, 0
  %v3900 = vsel %vm1868, %v3876, 0
  %v3902 = vsel %vm1868, %v3878, 0
  %v3904 = vsel %vm1868, %v3880, 0
  %v3906 = vsel %vm1868, %v3887, 0
  %v3908 = vsel %vm1868, %v3889, 0
  %v3910 = vsel %vm1868, %v3891, 0
  %v3912 = vsel %vm1868, %v3893, 0
  %v3914 = vsel %vm1868, %v3895, 0
  %3916 = vmatprep.subr.mxu0 0.0
  %3917 = vmatpush1.xpose.msra.mxu0 %v3906
  %3918 = vmatprep.subr.mxu0 0.0
  %3919 = vmatpush1.xpose.msra.mxu0 %v3908
  %3920 = vmatprep.subr.mxu0 0.0
  %3921 = vmatpush1.xpose.msra.mxu0 %v3910
  %3922 = vmatprep.subr.mxu0 0.0
  %3923 = vmatpush1.xpose.msra.mxu0 %v3912
  %3924 = vmatprep.subr.mxu0 0.0
  %3925 = vmatpush1.xpose.msra.mxu0 %v3914
  %3926 = vmatprep.subr.mxu0 0.0
  %3927 = vmatpush1.xpose.msra.mxu0 0.0
  %3928 = vmatprep.subr.mxu0 0.0
  %3929 = vmatpush1.xpose.msra.mxu0 0.0
  %3930 = vmatprep.subr.mxu0 0.0
  %3931 = vmatpush1.xpose.msra.mxu0 0.0
  %3932 = vmatprep.subr.mxu0 0.0
  %3933 = vmatpush1.xpose.msra.mxu0 0.0
  %3934 = vmatprep.subr.mxu0 0.0
  %3935 = vmatpush1.xpose.msra.mxu0 0.0
  %3936 = vmatprep.subr.mxu0 0.0
  %3937 = vmatpush1.xpose.msra.mxu0 0.0
  %3938 = vmatprep.subr.mxu0 0.0
  %3939 = vmatpush1.xpose.msra.mxu0 0.0
  %3940 = vmatprep.subr.mxu0 0.0
  %3941 = vmatpush1.xpose.msra.mxu0 0.0
  %3942 = vmatprep.subr.mxu0 0.0
  %3943 = vmatpush1.xpose.msra.mxu0 0.0
  %3944 = vmatprep.subr.mxu0 0.0
  %3945 = vmatpush1.xpose.msra.mxu0 0.0
  %3946 = vmatprep.subr.mxu0 0.0
  %3947 = vmatpush1.xpose.msra.mxu0 0.0
  %3948 = vmatprep.subr.mxu0 0.0
  %3949 = vmatpush1.xpose.msra.mxu0 0.0
  %3950 = vmatprep.subr.mxu0 0.0
  %3951 = vmatpush1.xpose.msra.mxu0 0.0
  %3952 = vmatprep.subr.mxu0 0.0
  %3953 = vmatpush1.xpose.msra.mxu0 0.0
  %3954 = vmatprep.subr.mxu0 0.0
  %3955 = vmatpush1.xpose.msra.mxu0 0.0
  %3956 = vmatprep.subr.mxu0 0.0
  %3957 = vmatpush1.xpose.msra.mxu0 0.0
  %3958 = vmatprep.subr.mxu0 0.0
  %3959 = vmatpush1.xpose.msra.mxu0 0.0
  %3960 = vmatprep.subr.mxu0 0.0
  %3961 = vmatpush1.xpose.msra.mxu0 0.0
  %3962 = vmatprep.subr.mxu0 0.0
  %3963 = vmatpush1.xpose.msra.mxu0 0.0
  %3964 = vmatprep.subr.mxu0 0.0
  %3965 = vmatpush1.xpose.msra.mxu0 0.0
  %3966 = vmatprep.subr.mxu0 0.0
  %3967 = vmatpush1.xpose.msra.mxu0 0.0
  %3968 = vmatprep.subr.mxu0 0.0
  %3969 = vmatpush1.xpose.msra.mxu0 0.0
  %3970 = vmatprep.subr.mxu0 0.0
  %3971 = vmatpush1.xpose.msra.mxu0 0.0
  %3972 = vmatprep.subr.mxu0 0.0
  %3973 = vmatpush1.xpose.msra.mxu0 0.0
  %3974 = vmatprep.subr.mxu0 0.0
  %3975 = vmatpush1.xpose.msra.mxu0 0.0
  %3976 = vmatprep.subr.mxu0 0.0
  %3977 = vmatpush1.xpose.msra.mxu0 0.0
  %3978 = vmatprep.subr.mxu0 0.0
  %3979 = vmatpush1.xpose.msra.mxu0 0.0
  %3980 = vmatprep.mubr.f32.mxu0 0.0
  %3981 = vmatmul.mubr.f32.gmra.mrb[0].mxu0 %v3896
  %v3982 = vpop.f32.mrb[0].mxu0
  %v3983 = vadd.f32 %v1833, %v3982
  %v3984 = vpop.f32.mrb[0].mxu0
  %3985 = vmatprep.mubr.f32.mxu0 0.0
  %3986 = vmatmul.mubr.f32.gmra.mrb[0].mxu0 %v3898
  %v3987 = vpop.f32.mrb[0].mxu0
  %v3988 = vadd.f32 %v1834, %v3987
  %v3989 = vpop.f32.mrb[0].mxu0
  %3990 = vmatprep.mubr.f32.mxu0 0.0
  %3991 = vmatmul.mubr.f32.gmra.mrb[0].mxu0 %v3900
  %v3992 = vpop.f32.mrb[0].mxu0
  %v3993 = vadd.f32 %v1835, %v3992
  %v3994 = vpop.f32.mrb[0].mxu0
  %3995 = vmatprep.mubr.f32.mxu0 0.0
  %3996 = vmatmul.mubr.f32.gmra.mrb[0].mxu0 %v3902
  %v3997 = vpop.f32.mrb[0].mxu0
  %v3998 = vadd.f32 %v1836, %v3997
  %v3999 = vpop.f32.mrb[0].mxu0
  %4000 = vmatprep.mubr.f32.mxu0 0.0
  %4001 = vmatmul.mubr.f32.gmra.mrb[0].mxu0 %v3904
  %v4002 = vpop.f32.mrb[0].mxu0
  %v4003 = vadd.f32 %v1837, %v4002
  %v4004 = vpop.f32.mrb[0].mxu0
  %4005 = vdwg.mxu0
  %4011 = vrot.lane.b32.xlu0 %v3516, 112
  %v4012 = vpop.permute.xlu0 %4011
  %4013 = vrot.lane.b32.xlu0 %v3517, 112
  %v4014 = vpop.permute.xlu0 %4013
  %4015 = vrot.lane.b32.xlu0 %v3518, 112
  %v4016 = vpop.permute.xlu0 %4015
  %4017 = vrot.lane.b32.xlu0 %v3519, 112
  %v4018 = vpop.permute.xlu0 %4017
  %4019 = vrot.lane.b32.xlu0 %v3520, 112
  %v4020 = vpop.permute.xlu0 %4019
  %4026 = vrot.lane.b32.xlu0 %v3716, 112
  %v4027 = vpop.permute.xlu0 %4026
  %4028 = vrot.lane.b32.xlu0 %v3717, 112
  %v4029 = vpop.permute.xlu0 %4028
  %4030 = vrot.lane.b32.xlu0 %v3718, 112
  %v4031 = vpop.permute.xlu0 %4030
  %4032 = vrot.lane.b32.xlu0 %v3719, 112
  %v4033 = vpop.permute.xlu0 %4032
  %4034 = vrot.lane.b32.xlu0 %v3720, 112
  %v4035 = vpop.permute.xlu0 %4034
  %v4036 = vsel %vm1868, %v4012, 0
  %v4038 = vsel %vm1868, %v4014, 0
  %v4040 = vsel %vm1868, %v4016, 0
  %v4042 = vsel %vm1868, %v4018, 0
  %v4044 = vsel %vm1868, %v4020, 0
  %v4046 = vsel %vm1868, %v4027, 0
  %v4048 = vsel %vm1868, %v4029, 0
  %v4050 = vsel %vm1868, %v4031, 0
  %v4052 = vsel %vm1868, %v4033, 0
  %v4054 = vsel %vm1868, %v4035, 0
  %4056 = vmatprep.subr.mxu0 0.0
  %4057 = vmatpush1.xpose.msra.mxu0 %v4046
  %4058 = vmatprep.subr.mxu0 0.0
  %4059 = vmatpush1.xpose.msra.mxu0 %v4048
  %4060 = vmatprep.subr.mxu0 0.0
  %4061 = vmatpush1.xpose.msra.mxu0 %v4050
  %4062 = vmatprep.subr.mxu0 0.0
  %4063 = vmatpush1.xpose.msra.mxu0 %v4052
  %4064 = vmatprep.subr.mxu0 0.0
  %4065 = vmatpush1.xpose.msra.mxu0 %v4054
  %4066 = vmatprep.subr.mxu0 0.0
  %4067 = vmatpush1.xpose.msra.mxu0 0.0
  %4068 = vmatprep.subr.mxu0 0.0
  %4069 = vmatpush1.xpose.msra.mxu0 0.0
  %4070 = vmatprep.subr.mxu0 0.0
  %4071 = vmatpush1.xpose.msra.mxu0 0.0
  %4072 = vmatprep.subr.mxu0 0.0
  %4073 = vmatpush1.xpose.msra.mxu0 0.0
  %4074 = vmatprep.subr.mxu0 0.0
  %4075 = vmatpush1.xpose.msra.mxu0 0.0
  %4076 = vmatprep.subr.mxu0 0.0
  %4077 = vmatpush1.xpose.msra.mxu0 0.0
  %4078 = vmatprep.subr.mxu0 0.0
  %4079 = vmatpush1.xpose.msra.mxu0 0.0
  %4080 = vmatprep.subr.mxu0 0.0
  %4081 = vmatpush1.xpose.msra.mxu0 0.0
  %4082 = vmatprep.subr.mxu0 0.0
  %4083 = vmatpush1.xpose.msra.mxu0 0.0
  %4084 = vmatprep.subr.mxu0 0.0
  %4085 = vmatpush1.xpose.msra.mxu0 0.0
  %4086 = vmatprep.subr.mxu0 0.0
  %4087 = vmatpush1.xpose.msra.mxu0 0.0
  %4088 = vmatprep.subr.mxu0 0.0
  %4089 = vmatpush1.xpose.msra.mxu0 0.0
  %4090 = vmatprep.subr.mxu0 0.0
  %4091 = vmatpush1.xpose.msra.mxu0 0.0
  %4092 = vmatprep.subr.mxu0 0.0
  %4093 = vmatpush1.xpose.msra.mxu0 0.0
  %4094 = vmatprep.subr.mxu0 0.0
  %4095 = vmatpush1.xpose.msra.mxu0 0.0
  %4096 = vmatprep.subr.mxu0 0.0
  %4097 = vmatpush1.xpose.msra.mxu0 0.0
  %4098 = vmatprep.subr.mxu0 0.0
  %4099 = vmatpush1.xpose.msra.mxu0 0.0
  %4100 = vmatprep.subr.mxu0 0.0
  %4101 = vmatpush1.xpose.msra.mxu0 0.0
  %4102 = vmatprep.subr.mxu0 0.0
  %4103 = vmatpush1.xpose.msra.mxu0 0.0
  %4104 = vmatprep.subr.mxu0 0.0
  %4105 = vmatpush1.xpose.msra.mxu0 0.0
  %4106 = vmatprep.subr.mxu0 0.0
  %4107 = vmatpush1.xpose.msra.mxu0 0.0
  %4108 = vmatprep.subr.mxu0 0.0
  %4109 = vmatpush1.xpose.msra.mxu0 0.0
  %4110 = vmatprep.subr.mxu0 0.0
  %4111 = vmatpush1.xpose.msra.mxu0 0.0
  %4112 = vmatprep.subr.mxu0 0.0
  %4113 = vmatpush1.xpose.msra.mxu0 0.0
  %4114 = vmatprep.subr.mxu0 0.0
  %4115 = vmatpush1.xpose.msra.mxu0 0.0
  %4116 = vmatprep.subr.mxu0 0.0
  %4117 = vmatpush1.xpose.msra.mxu0 0.0
  %4118 = vmatprep.subr.mxu0 0.0
  %4119 = vmatpush1.xpose.msra.mxu0 0.0
  %4120 = vmatprep.mubr.f32.mxu0 0.0
  %4121 = vmatmul.mubr.f32.gmra.mrb[0].mxu0 %v4036
  %v4122 = vpop.f32.mrb[0].mxu0
  %v4123 = vadd.f32 %v1833, %v4122
  %v4124 = vpop.f32.mrb[0].mxu0
  %4125 = vmatprep.mubr.f32.mxu0 0.0
  %4126 = vmatmul.mubr.f32.gmra.mrb[0].mxu0 %v4038
  %v4127 = vpop.f32.mrb[0].mxu0
  %v4128 = vadd.f32 %v1834, %v4127
  %v4129 = vpop.f32.mrb[0].mxu0
  %4130 = vmatprep.mubr.f32.mxu0 0.0
  %4131 = vmatmul.mubr.f32.gmra.mrb[0].mxu0 %v4040
  %v4132 = vpop.f32.mrb[0].mxu0
  %v4133 = vadd.f32 %v1835, %v4132
  %v4134 = vpop.f32.mrb[0].mxu0
  %4135 = vmatprep.mubr.f32.mxu0 0.0
  %4136 = vmatmul.mubr.f32.gmra.mrb[0].mxu0 %v4042
  %v4137 = vpop.f32.mrb[0].mxu0
  %v4138 = vadd.f32 %v1836, %v4137
  %v4139 = vpop.f32.mrb[0].mxu0
  %4140 = vmatprep.mubr.f32.mxu0 0.0
  %4141 = vmatmul.mubr.f32.gmra.mrb[0].mxu0 %v4044
  %v4142 = vpop.f32.mrb[0].mxu0
  %v4143 = vadd.f32 %v1837, %v4142
  %v4144 = vpop.f32.mrb[0].mxu0
  %4145 = vdwg.mxu0
  %4151 = vrot.lane.b32.xlu0 %v3521, 112
  %v4152 = vpop.permute.xlu0 %4151
  %4153 = vrot.lane.b32.xlu0 %v3522, 112
  %v4154 = vpop.permute.xlu0 %4153
  %4155 = vrot.lane.b32.xlu0 %v3523, 112
  %v4156 = vpop.permute.xlu0 %4155
  %4157 = vrot.lane.b32.xlu0 %v3524, 112
  %v4158 = vpop.permute.xlu0 %4157
  %4159 = vrot.lane.b32.xlu0 %v3525, 112
  %v4160 = vpop.permute.xlu0 %4159
  %4166 = vrot.lane.b32.xlu0 %v3721, 112
  %v4167 = vpop.permute.xlu0 %4166
  %4168 = vrot.lane.b32.xlu0 %v3722, 112
  %v4169 = vpop.permute.xlu0 %4168
  %4170 = vrot.lane.b32.xlu0 %v3723, 112
  %v4171 = vpop.permute.xlu0 %4170
  %4172 = vrot.lane.b32.xlu0 %v3724, 112
  %v4173 = vpop.permute.xlu0 %4172
  %4174 = vrot.lane.b32.xlu0 %v3725, 112
  %v4175 = vpop.permute.xlu0 %4174
  %v4176 = vsel %vm1868, %v4152, 0
  %v4178 = vsel %vm1868, %v4154, 0
  %v4180 = vsel %vm1868, %v4156, 0
  %v4182 = vsel %vm1868, %v4158, 0
  %v4184 = vsel %vm1868, %v4160, 0
  %v4186 = vsel %vm1868, %v4167, 0
  %v4188 = vsel %vm1868, %v4169, 0
  %v4190 = vsel %vm1868, %v4171, 0
  %v4192 = vsel %vm1868, %v4173, 0
  %v4194 = vsel %vm1868, %v4175, 0
  %4196 = vmatprep.subr.mxu0 0.0
  %4197 = vmatpush1.xpose.msra.mxu0 %v4186
  %4198 = vmatprep.subr.mxu0 0.0
  %4199 = vmatpush1.xpose.msra.mxu0 %v4188
  %4200 = vmatprep.subr.mxu0 0.0
  %4201 = vmatpush1.xpose.msra.mxu0 %v4190
  %4202 = vmatprep.subr.mxu0 0.0
  %4203 = vmatpush1.xpose.msra.mxu0 %v4192
  %4204 = vmatprep.subr.mxu0 0.0
  %4205 = vmatpush1.xpose.msra.mxu0 %v4194
  %4206 = vmatprep.subr.mxu0 0.0
  %4207 = vmatpush1.xpose.msra.mxu0 0.0
  %4208 = vmatprep.subr.mxu0 0.0
  %4209 = vmatpush1.xpose.msra.mxu0 0.0
  %4210 = vmatprep.subr.mxu0 0.0
  %4211 = vmatpush1.xpose.msra.mxu0 0.0
  %4212 = vmatprep.subr.mxu0 0.0
  %4213 = vmatpush1.xpose.msra.mxu0 0.0
  %4214 = vmatprep.subr.mxu0 0.0
  %4215 = vmatpush1.xpose.msra.mxu0 0.0
  %4216 = vmatprep.subr.mxu0 0.0
  %4217 = vmatpush1.xpose.msra.mxu0 0.0
  %4218 = vmatprep.subr.mxu0 0.0
  %4219 = vmatpush1.xpose.msra.mxu0 0.0
  %4220 = vmatprep.subr.mxu0 0.0
  %4221 = vmatpush1.xpose.msra.mxu0 0.0
  %4222 = vmatprep.subr.mxu0 0.0
  %4223 = vmatpush1.xpose.msra.mxu0 0.0
  %4224 = vmatprep.subr.mxu0 0.0
  %4225 = vmatpush1.xpose.msra.mxu0 0.0
  %4226 = vmatprep.subr.mxu0 0.0
  %4227 = vmatpush1.xpose.msra.mxu0 0.0
  %4228 = vmatprep.subr.mxu0 0.0
  %4229 = vmatpush1.xpose.msra.mxu0 0.0
  %4230 = vmatprep.subr.mxu0 0.0
  %4231 = vmatpush1.xpose.msra.mxu0 0.0
  %4232 = vmatprep.subr.mxu0 0.0
  %4233 = vmatpush1.xpose.msra.mxu0 0.0
  %4234 = vmatprep.subr.mxu0 0.0
  %4235 = vmatpush1.xpose.msra.mxu0 0.0
  %4236 = vmatprep.subr.mxu0 0.0
  %4237 = vmatpush1.xpose.msra.mxu0 0.0
  %4238 = vmatprep.subr.mxu0 0.0
  %4239 = vmatpush1.xpose.msra.mxu0 0.0
  %4240 = vmatprep.subr.mxu0 0.0
  %4241 = vmatpush1.xpose.msra.mxu0 0.0
  %4242 = vmatprep.subr.mxu0 0.0
  %4243 = vmatpush1.xpose.msra.mxu0 0.0
  %4244 = vmatprep.subr.mxu0 0.0
  %4245 = vmatpush1.xpose.msra.mxu0 0.0
  %4246 = vmatprep.subr.mxu0 0.0
  %4247 = vmatpush1.xpose.msra.mxu0 0.0
  %4248 = vmatprep.subr.mxu0 0.0
  %4249 = vmatpush1.xpose.msra.mxu0 0.0
  %4250 = vmatprep.subr.mxu0 0.0
  %4251 = vmatpush1.xpose.msra.mxu0 0.0
  %4252 = vmatprep.subr.mxu0 0.0
  %4253 = vmatpush1.xpose.msra.mxu0 0.0
  %4254 = vmatprep.subr.mxu0 0.0
  %4255 = vmatpush1.xpose.msra.mxu0 0.0
  %4256 = vmatprep.subr.mxu0 0.0
  %4257 = vmatpush1.xpose.msra.mxu0 0.0
  %4258 = vmatprep.subr.mxu0 0.0
  %4259 = vmatpush1.xpose.msra.mxu0 0.0
  %4260 = vmatprep.mubr.f32.mxu0 0.0
  %4261 = vmatmul.mubr.f32.gmra.mrb[0].mxu0 %v4176
  %v4262 = vpop.f32.mrb[0].mxu0
  %v4263 = vadd.f32 %v1833, %v4262
  %v4264 = vpop.f32.mrb[0].mxu0
  %4265 = vmatprep.mubr.f32.mxu0 0.0
  %4266 = vmatmul.mubr.f32.gmra.mrb[0].mxu0 %v4178
  %v4267 = vpop.f32.mrb[0].mxu0
  %v4268 = vadd.f32 %v1834, %v4267
  %v4269 = vpop.f32.mrb[0].mxu0
  %4270 = vmatprep.mubr.f32.mxu0 0.0
  %4271 = vmatmul.mubr.f32.gmra.mrb[0].mxu0 %v4180
  %v4272 = vpop.f32.mrb[0].mxu0
  %v4273 = vadd.f32 %v1835, %v4272
  %v4274 = vpop.f32.mrb[0].mxu0
  %4275 = vmatprep.mubr.f32.mxu0 0.0
  %4276 = vmatmul.mubr.f32.gmra.mrb[0].mxu0 %v4182
  %v4277 = vpop.f32.mrb[0].mxu0
  %v4278 = vadd.f32 %v1836, %v4277
  %v4279 = vpop.f32.mrb[0].mxu0
  %4280 = vmatprep.mubr.f32.mxu0 0.0
  %4281 = vmatmul.mubr.f32.gmra.mrb[0].mxu0 %v4184
  %v4282 = vpop.f32.mrb[0].mxu0
  %v4283 = vadd.f32 %v1837, %v4282
  %v4284 = vpop.f32.mrb[0].mxu0
  %4285 = vdwg.mxu0
  %v4286 = vsel %vm1808, %v3843, -3.4028235e+38
  %v4287 = vsel %vm1809, %v3848, -3.4028235e+38
  %v4288 = vsel %vm1810, %v3853, -3.4028235e+38
  %v4289 = vsel %vm1811, %v3858, -3.4028235e+38
  %v4290 = vsel %vm1812, %v3863, -3.4028235e+38
  %v4291 = vsel %vm1813, %v3983, -3.4028235e+38
  %v4292 = vsel %vm1814, %v3988, -3.4028235e+38
  %v4293 = vsel %vm1815, %v3993, -3.4028235e+38
  %v4294 = vsel %vm1816, %v3998, -3.4028235e+38
  %v4295 = vsel %vm1817, %v4003, -3.4028235e+38
  %v4296 = vsel %vm1818, %v4123, -3.4028235e+38
  %v4297 = vsel %vm1819, %v4128, -3.4028235e+38
  %v4298 = vsel %vm1820, %v4133, -3.4028235e+38
  %v4299 = vsel %vm1821, %v4138, -3.4028235e+38
  %v4300 = vsel %vm1822, %v4143, -3.4028235e+38
  %v4301 = vsel %vm1823, %v4263, -3.4028235e+38
  %v4302 = vsel %vm1824, %v4268, -3.4028235e+38
  %v4303 = vsel %vm1825, %v4273, -3.4028235e+38
  %v4304 = vsel %vm1826, %v4278, -3.4028235e+38
  %v4305 = vsel %vm1827, %v4283, -3.4028235e+38
  %v4306 = vsel %vm2651, %v4286, -inf
  %4307 = vmax.xlane.f32.xlu0 %v4306
  %v4308 = vpop.xlane.xlu0 %4307
  %v4309 = vsel %vm2651, %v4287, -inf
  %4310 = vmax.xlane.f32.xlu0 %v4309
  %v4311 = vpop.xlane.xlu0 %4310
  %v4312 = vsel %vm2651, %v4288, -inf
  %4313 = vmax.xlane.f32.xlu0 %v4312
  %v4314 = vpop.xlane.xlu0 %4313
  %v4315 = vsel %vm2651, %v4289, -inf
  %4316 = vmax.xlane.f32.xlu0 %v4315
  %v4317 = vpop.xlane.xlu0 %4316
  %v4318 = vsel %vm2664, %v4290, -inf
  %4319 = vmax.xlane.f32.xlu0 %v4318
  %v4320 = vpop.xlane.xlu0 %4319
  %v4321 = vsel %vm2651, %v4291, -inf
  %4322 = vmax.xlane.f32.xlu0 %v4321
  %v4323 = vpop.xlane.xlu0 %4322
  %v4324 = vsel %vm2651, %v4292, -inf
  %4325 = vmax.xlane.f32.xlu0 %v4324
  %v4326 = vpop.xlane.xlu0 %4325
  %v4327 = vsel %vm2651, %v4293, -inf
  %4328 = vmax.xlane.f32.xlu0 %v4327
  %v4329 = vpop.xlane.xlu0 %4328
  %v4330 = vsel %vm2651, %v4294, -inf
  %4331 = vmax.xlane.f32.xlu0 %v4330
  %v4332 = vpop.xlane.xlu0 %4331
  %v4333 = vsel %vm2664, %v4295, -inf
  %4334 = vmax.xlane.f32.xlu0 %v4333
  %v4335 = vpop.xlane.xlu0 %4334
  %v4336 = vsel %vm2651, %v4296, -inf
  %4337 = vmax.xlane.f32.xlu0 %v4336
  %v4338 = vpop.xlane.xlu0 %4337
  %v4339 = vsel %vm2651, %v4297, -inf
  %4340 = vmax.xlane.f32.xlu0 %v4339
  %v4341 = vpop.xlane.xlu0 %4340
  %v4342 = vsel %vm2651, %v4298, -inf
  %4343 = vmax.xlane.f32.xlu0 %v4342
  %v4344 = vpop.xlane.xlu0 %4343
  %v4345 = vsel %vm2651, %v4299, -inf
  %4346 = vmax.xlane.f32.xlu0 %v4345
  %v4347 = vpop.xlane.xlu0 %4346
  %v4348 = vsel %vm2664, %v4300, -inf
  %4349 = vmax.xlane.f32.xlu0 %v4348
  %v4350 = vpop.xlane.xlu0 %4349
  %v4351 = vsel %vm2651, %v4301, -inf
  %4352 = vmax.xlane.f32.xlu0 %v4351
  %v4353 = vpop.xlane.xlu0 %4352
  %v4354 = vsel %vm2651, %v4302, -inf
  %4355 = vmax.xlane.f32.xlu0 %v4354
  %v4356 = vpop.xlane.xlu0 %4355
  %v4357 = vsel %vm2651, %v4303, -inf
  %4358 = vmax.xlane.f32.xlu0 %v4357
  %v4359 = vpop.xlane.xlu0 %4358
  %v4360 = vsel %vm2651, %v4304, -inf
  %4361 = vmax.xlane.f32.xlu0 %v4360
  %v4362 = vpop.xlane.xlu0 %4361
  %v4363 = vsel %vm2664, %v4305, -inf
  %4364 = vmax.xlane.f32.xlu0 %v4363
  %v4365 = vpop.xlane.xlu0 %4364
  %v4366 = vsub.f32 %v4286, %v4308
  %v4367 = vsub.f32 %v4287, %v4311
  %v4368 = vsub.f32 %v4288, %v4314
  %v4369 = vsub.f32 %v4289, %v4317
  %v4370 = vsub.f32 %v4290, %v4320
  %v4371 = vsub.f32 %v4291, %v4323
  %v4372 = vsub.f32 %v4292, %v4326
  %v4373 = vsub.f32 %v4293, %v4329
  %v4374 = vsub.f32 %v4294, %v4332
  %v4375 = vsub.f32 %v4295, %v4335
  %v4376 = vsub.f32 %v4296, %v4338
  %v4377 = vsub.f32 %v4297, %v4341
  %v4378 = vsub.f32 %v4298, %v4344
  %v4379 = vsub.f32 %v4299, %v4347
  %v4380 = vsub.f32 %v4300, %v4350
  %v4381 = vsub.f32 %v4301, %v4353
  %v4382 = vsub.f32 %v4302, %v4356
  %v4383 = vsub.f32 %v4303, %v4359
  %v4384 = vsub.f32 %v4304, %v4362
  %v4385 = vsub.f32 %v4305, %v4365
  %v4386 = vmul.f32 %v4366, 1.442695
  %v4387 = vpow.pop %v4386
  %v4388 = vmul.f32 %v4367, 1.442695
  %v4389 = vpow.pop %v4388
  %v4390 = vmul.f32 %v4368, 1.442695
  %v4391 = vpow.pop %v4390
  %v4392 = vmul.f32 %v4369, 1.442695
  %v4393 = vpow.pop %v4392
  %v4394 = vmul.f32 %v4370, 1.442695
  %v4395 = vpow.pop %v4394
  %v4396 = vmul.f32 %v4371, 1.442695
  %v4397 = vpow.pop %v4396
  %v4398 = vmul.f32 %v4372, 1.442695
  %v4399 = vpow.pop %v4398
  %v4400 = vmul.f32 %v4373, 1.442695
  %v4401 = vpow.pop %v4400
  %v4402 = vmul.f32 %v4374, 1.442695
  %v4403 = vpow.pop %v4402
  %v4404 = vmul.f32 %v4375, 1.442695
  %v4405 = vpow.pop %v4404
  %v4406 = vmul.f32 %v4376, 1.442695
  %v4407 = vpow.pop %v4406
  %v4408 = vmul.f32 %v4377, 1.442695
  %v4409 = vpow.pop %v4408
  %v4410 = vmul.f32 %v4378, 1.442695
  %v4411 = vpow.pop %v4410
  %v4412 = vmul.f32 %v4379, 1.442695
  %v4413 = vpow.pop %v4412
  %v4414 = vmul.f32 %v4380, 1.442695
  %v4415 = vpow.pop %v4414
  %v4416 = vmul.f32 %v4381, 1.442695
  %v4417 = vpow.pop %v4416
  %v4418 = vmul.f32 %v4382, 1.442695
  %v4419 = vpow.pop %v4418
  %v4420 = vmul.f32 %v4383, 1.442695
  %v4421 = vpow.pop %v4420
  %v4422 = vmul.f32 %v4384, 1.442695
  %v4423 = vpow.pop %v4422
  %v4424 = vmul.f32 %v4385, 1.442695
  %v4425 = vpow.pop %v4424
  %v4426 = vsel %vm2651, %v4387, 0.0
  %4427 = vadd.xlane.f32.xlu0 %v4426
  %v4428 = vpop.xlane.xlu0 %4427
  %v4429 = vsel %vm2651, %v4389, 0.0
  %4430 = vadd.xlane.f32.xlu0 %v4429
  %v4431 = vpop.xlane.xlu0 %4430
  %v4432 = vsel %vm2651, %v4391, 0.0
  %4433 = vadd.xlane.f32.xlu0 %v4432
  %v4434 = vpop.xlane.xlu0 %4433
  %v4435 = vsel %vm2651, %v4393, 0.0
  %4436 = vadd.xlane.f32.xlu0 %v4435
  %v4437 = vpop.xlane.xlu0 %4436
  %v4438 = vsel %vm2664, %v4395, 0.0
  %4439 = vadd.xlane.f32.xlu0 %v4438
  %v4440 = vpop.xlane.xlu0 %4439
  %v4441 = vsel %vm2651, %v4397, 0.0
  %4442 = vadd.xlane.f32.xlu0 %v4441
  %v4443 = vpop.xlane.xlu0 %4442
  %v4444 = vsel %vm2651, %v4399, 0.0
  %4445 = vadd.xlane.f32.xlu0 %v4444
  %v4446 = vpop.xlane.xlu0 %4445
  %v4447 = vsel %vm2651, %v4401, 0.0
  %4448 = vadd.xlane.f32.xlu0 %v4447
  %v4449 = vpop.xlane.xlu0 %4448
  %v4450 = vsel %vm2651, %v4403, 0.0
  %4451 = vadd.xlane.f32.xlu0 %v4450
  %v4452 = vpop.xlane.xlu0 %4451
  %v4453 = vsel %vm2664, %v4405, 0.0
  %4454 = vadd.xlane.f32.xlu0 %v4453
  %v4455 = vpop.xlane.xlu0 %4454
  %v4456 = vsel %vm2651, %v4407, 0.0
  %4457 = vadd.xlane.f32.xlu0 %v4456
  %v4458 = vpop.xlane.xlu0 %4457
  %v4459 = vsel %vm2651, %v4409, 0.0
  %4460 = vadd.xlane.f32.xlu0 %v4459
  %v4461 = vpop.xlane.xlu0 %4460
  %v4462 = vsel %vm2651, %v4411, 0.0
  %4463 = vadd.xlane.f32.xlu0 %v4462
  %v4464 = vpop.xlane.xlu0 %4463
  %v4465 = vsel %vm2651, %v4413, 0.0
  %4466 = vadd.xlane.f32.xlu0 %v4465
  %v4467 = vpop.xlane.xlu0 %4466
  %v4468 = vsel %vm2664, %v4415, 0.0
  %4469 = vadd.xlane.f32.xlu0 %v4468
  %v4470 = vpop.xlane.xlu0 %4469
  %v4471 = vsel %vm2651, %v4417, 0.0
  %4472 = vadd.xlane.f32.xlu0 %v4471
  %v4473 = vpop.xlane.xlu0 %4472
  %v4474 = vsel %vm2651, %v4419, 0.0
  %4475 = vadd.xlane.f32.xlu0 %v4474
  %v4476 = vpop.xlane.xlu0 %4475
  %v4477 = vsel %vm2651, %v4421, 0.0
  %4478 = vadd.xlane.f32.xlu0 %v4477
  %v4479 = vpop.xlane.xlu0 %4478
  %v4480 = vsel %vm2651, %v4423, 0.0
  %4481 = vadd.xlane.f32.xlu0 %v4480
  %v4482 = vpop.xlane.xlu0 %4481
  %v4483 = vsel %vm2664, %v4425, 0.0
  %4484 = vadd.xlane.f32.xlu0 %v4483
  %v4485 = vpop.xlane.xlu0 %4484
  %v4486 = vrcp.pop %v4428
  %v4487 = vmul.f32 %v4387, %v4486
  %v4488 = vrcp.pop %v4431
  %v4489 = vmul.f32 %v4389, %v4488
  %v4490 = vrcp.pop %v4434
  %v4491 = vmul.f32 %v4391, %v4490
  %v4492 = vrcp.pop %v4437
  %v4493 = vmul.f32 %v4393, %v4492
  %v4494 = vrcp.pop %v4440
  %v4495 = vmul.f32 %v4395, %v4494
  %v4496 = vrcp.pop %v4443
  %v4497 = vmul.f32 %v4397, %v4496
  %v4498 = vrcp.pop %v4446
  %v4499 = vmul.f32 %v4399, %v4498
  %v4500 = vrcp.pop %v4449
  %v4501 = vmul.f32 %v4401, %v4500
  %v4502 = vrcp.pop %v4452
  %v4503 = vmul.f32 %v4403, %v4502
  %v4504 = vrcp.pop %v4455
  %v4505 = vmul.f32 %v4405, %v4504
  %v4506 = vrcp.pop %v4458
  %v4507 = vmul.f32 %v4407, %v4506
  %v4508 = vrcp.pop %v4461
  %v4509 = vmul.f32 %v4409, %v4508
  %v4510 = vrcp.pop %v4464
  %v4511 = vmul.f32 %v4411, %v4510
  %v4512 = vrcp.pop %v4467
  %v4513 = vmul.f32 %v4413, %v4512
  %v4514 = vrcp.pop %v4470
  %v4515 = vmul.f32 %v4415, %v4514
  %v4516 = vrcp.pop %v4473
  %v4517 = vmul.f32 %v4417, %v4516
  %v4518 = vrcp.pop %v4476
  %v4519 = vmul.f32 %v4419, %v4518
  %v4520 = vrcp.pop %v4479
  %v4521 = vmul.f32 %v4421, %v4520
  %v4522 = vrcp.pop %v4482
  %v4523 = vmul.f32 %v4423, %v4522
  %v4524 = vrcp.pop %v4485
  %v4525 = vmul.f32 %v4425, %v4524
  %4530 = vrot.lane.b32.xlu0 %v1263, 112
  %v4531 = vpop.permute.xlu0 %4530
  %4532 = vrot.lane.b32.xlu0 %v1268, 112
  %v4533 = vpop.permute.xlu0 %4532
  %4534 = vrot.lane.b32.xlu0 %v1273, 112
  %v4535 = vpop.permute.xlu0 %4534
  %4536 = vrot.lane.b32.xlu0 %v1278, 112
  %v4537 = vpop.permute.xlu0 %4536
  %4538 = vrot.lane.b32.xlu0 %v1283, 112
  %v4539 = vpop.permute.xlu0 %4538
  %v4545 = vsel %vm2651, %v4487, 0
  %v4548 = vsel %vm2651, %v4489, 0
  %v4551 = vsel %vm2651, %v4491, 0
  %v4554 = vsel %vm2651, %v4493, 0
  %v4557 = vsel %vm2651, %v4495, 0
  %v4559 = vsel %vm2888, %v4539, 0
  %4561 = vmatprep.subr.mxu0 0.0
  %4562 = vmatpush1.msra.mxu0 %v4531
  %4563 = vmatprep.subr.mxu0 0.0
  %4564 = vmatpush1.msra.mxu0 %v4533
  %4565 = vmatprep.subr.mxu0 0.0
  %4566 = vmatpush1.msra.mxu0 %v4535
  %4567 = vmatprep.subr.mxu0 0.0
  %4568 = vmatpush1.msra.mxu0 %v4537
  %4569 = vmatprep.subr.mxu0 0.0
  %4570 = vmatpush1.msra.mxu0 %v4559
  %4571 = vmatprep.subr.mxu0 0.0
  %4572 = vmatpush1.msra.mxu0 0.0
  %4573 = vmatprep.subr.mxu0 0.0
  %4574 = vmatpush1.msra.mxu0 0.0
  %4575 = vmatprep.subr.mxu0 0.0
  %4576 = vmatpush1.msra.mxu0 0.0
  %4577 = vmatprep.subr.mxu0 0.0
  %4578 = vmatpush1.msra.mxu0 0.0
  %4579 = vmatprep.subr.mxu0 0.0
  %4580 = vmatpush1.msra.mxu0 0.0
  %4581 = vmatprep.subr.mxu0 0.0
  %4582 = vmatpush1.msra.mxu0 0.0
  %4583 = vmatprep.subr.mxu0 0.0
  %4584 = vmatpush1.msra.mxu0 0.0
  %4585 = vmatprep.subr.mxu0 0.0
  %4586 = vmatpush1.msra.mxu0 0.0
  %4587 = vmatprep.subr.mxu0 0.0
  %4588 = vmatpush1.msra.mxu0 0.0
  %4589 = vmatprep.subr.mxu0 0.0
  %4590 = vmatpush1.msra.mxu0 0.0
  %4591 = vmatprep.subr.mxu0 0.0
  %4592 = vmatpush1.msra.mxu0 0.0
  %4593 = vmatprep.subr.mxu0 0.0
  %4594 = vmatpush1.msra.mxu0 0.0
  %4595 = vmatprep.subr.mxu0 0.0
  %4596 = vmatpush1.msra.mxu0 0.0
  %4597 = vmatprep.subr.mxu0 0.0
  %4598 = vmatpush1.msra.mxu0 0.0
  %4599 = vmatprep.subr.mxu0 0.0
  %4600 = vmatpush1.msra.mxu0 0.0
  %4601 = vmatprep.subr.mxu0 0.0
  %4602 = vmatpush1.msra.mxu0 0.0
  %4603 = vmatprep.subr.mxu0 0.0
  %4604 = vmatpush1.msra.mxu0 0.0
  %4605 = vmatprep.subr.mxu0 0.0
  %4606 = vmatpush1.msra.mxu0 0.0
  %4607 = vmatprep.subr.mxu0 0.0
  %4608 = vmatpush1.msra.mxu0 0.0
  %4609 = vmatprep.subr.mxu0 0.0
  %4610 = vmatpush1.msra.mxu0 0.0
  %4611 = vmatprep.subr.mxu0 0.0
  %4612 = vmatpush1.msra.mxu0 0.0
  %4613 = vmatprep.subr.mxu0 0.0
  %4614 = vmatpush1.msra.mxu0 0.0
  %4615 = vmatprep.subr.mxu0 0.0
  %4616 = vmatpush1.msra.mxu0 0.0
  %4617 = vmatprep.subr.mxu0 0.0
  %4618 = vmatpush1.msra.mxu0 0.0
  %4619 = vmatprep.subr.mxu0 0.0
  %4620 = vmatpush1.msra.mxu0 0.0
  %4621 = vmatprep.subr.mxu0 0.0
  %4622 = vmatpush1.msra.mxu0 0.0
  %4623 = vmatprep.subr.mxu0 0.0
  %4624 = vmatpush1.msra.mxu0 0.0
  %4625 = vmatprep.mubr.f32.mxu0 0.0
  %4626 = vmatmul.mubr.f32.gmra.mrb[0].mxu0 %v4545
  %v4627 = vpop.f32.mrb[0].mxu0
  %v4628 = vadd.f32 0.0, %v4627
  %v4629 = vpop.f32.mrb[0].mxu0
  %4630 = vmatprep.mubr.f32.mxu0 0.0
  %4631 = vmatmul.mubr.f32.gmra.mrb[0].mxu0 %v4548
  %v4632 = vpop.f32.mrb[0].mxu0
  %v4633 = vadd.f32 0.0, %v4632
  %v4634 = vpop.f32.mrb[0].mxu0
  %4635 = vmatprep.mubr.f32.mxu0 0.0
  %4636 = vmatmul.mubr.f32.gmra.mrb[0].mxu0 %v4551
  %v4637 = vpop.f32.mrb[0].mxu0
  %v4638 = vadd.f32 0.0, %v4637
  %v4639 = vpop.f32.mrb[0].mxu0
  %4640 = vmatprep.mubr.f32.mxu0 0.0
  %4641 = vmatmul.mubr.f32.gmra.mrb[0].mxu0 %v4554
  %v4642 = vpop.f32.mrb[0].mxu0
  %v4643 = vadd.f32 0.0, %v4642
  %v4644 = vpop.f32.mrb[0].mxu0
  %4645 = vmatprep.mubr.f32.mxu0 0.0
  %4646 = vmatmul.mubr.f32.gmra.mrb[0].mxu0 %v4557
  %v4647 = vpop.f32.mrb[0].mxu0
  %v4648 = vadd.f32 0.0, %v4647
  %v4649 = vpop.f32.mrb[0].mxu0
  %4650 = vdwg.mxu0
  %4655 = vrot.lane.b32.xlu0 %v1353, 112
  %v4656 = vpop.permute.xlu0 %4655
  %4657 = vrot.lane.b32.xlu0 %v1358, 112
  %v4658 = vpop.permute.xlu0 %4657
  %4659 = vrot.lane.b32.xlu0 %v1363, 112
  %v4660 = vpop.permute.xlu0 %4659
  %4661 = vrot.lane.b32.xlu0 %v1368, 112
  %v4662 = vpop.permute.xlu0 %4661
  %4663 = vrot.lane.b32.xlu0 %v1373, 112
  %v4664 = vpop.permute.xlu0 %4663
  %v4670 = vsel %vm2651, %v4497, 0
  %v4673 = vsel %vm2651, %v4499, 0
  %v4676 = vsel %vm2651, %v4501, 0
  %v4679 = vsel %vm2651, %v4503, 0
  %v4682 = vsel %vm2651, %v4505, 0
  %v4684 = vsel %vm2888, %v4664, 0
  %4686 = vmatprep.subr.mxu0 0.0
  %4687 = vmatpush1.msra.mxu0 %v4656
  %4688 = vmatprep.subr.mxu0 0.0
  %4689 = vmatpush1.msra.mxu0 %v4658
  %4690 = vmatprep.subr.mxu0 0.0
  %4691 = vmatpush1.msra.mxu0 %v4660
  %4692 = vmatprep.subr.mxu0 0.0
  %4693 = vmatpush1.msra.mxu0 %v4662
  %4694 = vmatprep.subr.mxu0 0.0
  %4695 = vmatpush1.msra.mxu0 %v4684
  %4696 = vmatprep.subr.mxu0 0.0
  %4697 = vmatpush1.msra.mxu0 0.0
  %4698 = vmatprep.subr.mxu0 0.0
  %4699 = vmatpush1.msra.mxu0 0.0
  %4700 = vmatprep.subr.mxu0 0.0
  %4701 = vmatpush1.msra.mxu0 0.0
  %4702 = vmatprep.subr.mxu0 0.0
  %4703 = vmatpush1.msra.mxu0 0.0
  %4704 = vmatprep.subr.mxu0 0.0
  %4705 = vmatpush1.msra.mxu0 0.0
  %4706 = vmatprep.subr.mxu0 0.0
  %4707 = vmatpush1.msra.mxu0 0.0
  %4708 = vmatprep.subr.mxu0 0.0
  %4709 = vmatpush1.msra.mxu0 0.0
  %4710 = vmatprep.subr.mxu0 0.0
  %4711 = vmatpush1.msra.mxu0 0.0
  %4712 = vmatprep.subr.mxu0 0.0
  %4713 = vmatpush1.msra.mxu0 0.0
  %4714 = vmatprep.subr.mxu0 0.0
  %4715 = vmatpush1.msra.mxu0 0.0
  %4716 = vmatprep.subr.mxu0 0.0
  %4717 = vmatpush1.msra.mxu0 0.0
  %4718 = vmatprep.subr.mxu0 0.0
  %4719 = vmatpush1.msra.mxu0 0.0
  %4720 = vmatprep.subr.mxu0 0.0
  %4721 = vmatpush1.msra.mxu0 0.0
  %4722 = vmatprep.subr.mxu0 0.0
  %4723 = vmatpush1.msra.mxu0 0.0
  %4724 = vmatprep.subr.mxu0 0.0
  %4725 = vmatpush1.msra.mxu0 0.0
  %4726 = vmatprep.subr.mxu0 0.0
  %4727 = vmatpush1.msra.mxu0 0.0
  %4728 = vmatprep.subr.mxu0 0.0
  %4729 = vmatpush1.msra.mxu0 0.0
  %4730 = vmatprep.subr.mxu0 0.0
  %4731 = vmatpush1.msra.mxu0 0.0
  %4732 = vmatprep.subr.mxu0 0.0
  %4733 = vmatpush1.msra.mxu0 0.0
  %4734 = vmatprep.subr.mxu0 0.0
  %4735 = vmatpush1.msra.mxu0 0.0
  %4736 = vmatprep.subr.mxu0 0.0
  %4737 = vmatpush1.msra.mxu0 0.0
  %4738 = vmatprep.subr.mxu0 0.0
  %4739 = vmatpush1.msra.mxu0 0.0
  %4740 = vmatprep.subr.mxu0 0.0
  %4741 = vmatpush1.msra.mxu0 0.0
  %4742 = vmatprep.subr.mxu0 0.0
  %4743 = vmatpush1.msra.mxu0 0.0
  %4744 = vmatprep.subr.mxu0 0.0
  %4745 = vmatpush1.msra.mxu0 0.0
  %4746 = vmatprep.subr.mxu0 0.0
  %4747 = vmatpush1.msra.mxu0 0.0
  %4748 = vmatprep.subr.mxu0 0.0
  %4749 = vmatpush1.msra.mxu0 0.0
  %4750 = vmatprep.mubr.f32.mxu0 0.0
  %4751 = vmatmul.mubr.f32.gmra.mrb[0].mxu0 %v4670
  %v4752 = vpop.f32.mrb[0].mxu0
  %v4753 = vadd.f32 0.0, %v4752
  %v4754 = vpop.f32.mrb[0].mxu0
  %4755 = vmatprep.mubr.f32.mxu0 0.0
  %4756 = vmatmul.mubr.f32.gmra.mrb[0].mxu0 %v4673
  %v4757 = vpop.f32.mrb[0].mxu0
  %v4758 = vadd.f32 0.0, %v4757
  %v4759 = vpop.f32.mrb[0].mxu0
  %4760 = vmatprep.mubr.f32.mxu0 0.0
  %4761 = vmatmul.mubr.f32.gmra.mrb[0].mxu0 %v4676
  %v4762 = vpop.f32.mrb[0].mxu0
  %v4763 = vadd.f32 0.0, %v4762
  %v4764 = vpop.f32.mrb[0].mxu0
  %4765 = vmatprep.mubr.f32.mxu0 0.0
  %4766 = vmatmul.mubr.f32.gmra.mrb[0].mxu0 %v4679
  %v4767 = vpop.f32.mrb[0].mxu0
  %v4768 = vadd.f32 0.0, %v4767
  %v4769 = vpop.f32.mrb[0].mxu0
  %4770 = vmatprep.mubr.f32.mxu0 0.0
  %4771 = vmatmul.mubr.f32.gmra.mrb[0].mxu0 %v4682
  %v4772 = vpop.f32.mrb[0].mxu0
  %v4773 = vadd.f32 0.0, %v4772
  %v4774 = vpop.f32.mrb[0].mxu0
  %4775 = vdwg.mxu0
  %4780 = vrot.lane.b32.xlu0 %v1443, 112
  %v4781 = vpop.permute.xlu0 %4780
  %4782 = vrot.lane.b32.xlu0 %v1448, 112
  %v4783 = vpop.permute.xlu0 %4782
  %4784 = vrot.lane.b32.xlu0 %v1453, 112
  %v4785 = vpop.permute.xlu0 %4784
  %4786 = vrot.lane.b32.xlu0 %v1458, 112
  %v4787 = vpop.permute.xlu0 %4786
  %4788 = vrot.lane.b32.xlu0 %v1463, 112
  %v4789 = vpop.permute.xlu0 %4788
  %v4795 = vsel %vm2651, %v4507, 0
  %v4798 = vsel %vm2651, %v4509, 0
  %v4801 = vsel %vm2651, %v4511, 0
  %v4804 = vsel %vm2651, %v4513, 0
  %v4807 = vsel %vm2651, %v4515, 0
  %v4809 = vsel %vm2888, %v4789, 0
  %4811 = vmatprep.subr.mxu0 0.0
  %4812 = vmatpush1.msra.mxu0 %v4781
  %4813 = vmatprep.subr.mxu0 0.0
  %4814 = vmatpush1.msra.mxu0 %v4783
  %4815 = vmatprep.subr.mxu0 0.0
  %4816 = vmatpush1.msra.mxu0 %v4785
  %4817 = vmatprep.subr.mxu0 0.0
  %4818 = vmatpush1.msra.mxu0 %v4787
  %4819 = vmatprep.subr.mxu0 0.0
  %4820 = vmatpush1.msra.mxu0 %v4809
  %4821 = vmatprep.subr.mxu0 0.0
  %4822 = vmatpush1.msra.mxu0 0.0
  %4823 = vmatprep.subr.mxu0 0.0
  %4824 = vmatpush1.msra.mxu0 0.0
  %4825 = vmatprep.subr.mxu0 0.0
  %4826 = vmatpush1.msra.mxu0 0.0
  %4827 = vmatprep.subr.mxu0 0.0
  %4828 = vmatpush1.msra.mxu0 0.0
  %4829 = vmatprep.subr.mxu0 0.0
  %4830 = vmatpush1.msra.mxu0 0.0
  %4831 = vmatprep.subr.mxu0 0.0
  %4832 = vmatpush1.msra.mxu0 0.0
  %4833 = vmatprep.subr.mxu0 0.0
  %4834 = vmatpush1.msra.mxu0 0.0
  %4835 = vmatprep.subr.mxu0 0.0
  %4836 = vmatpush1.msra.mxu0 0.0
  %4837 = vmatprep.subr.mxu0 0.0
  %4838 = vmatpush1.msra.mxu0 0.0
  %4839 = vmatprep.subr.mxu0 0.0
  %4840 = vmatpush1.msra.mxu0 0.0
  %4841 = vmatprep.subr.mxu0 0.0
  %4842 = vmatpush1.msra.mxu0 0.0
  %4843 = vmatprep.subr.mxu0 0.0
  %4844 = vmatpush1.msra.mxu0 0.0
  %4845 = vmatprep.subr.mxu0 0.0
  %4846 = vmatpush1.msra.mxu0 0.0
  %4847 = vmatprep.subr.mxu0 0.0
  %4848 = vmatpush1.msra.mxu0 0.0
  %4849 = vmatprep.subr.mxu0 0.0
  %4850 = vmatpush1.msra.mxu0 0.0
  %4851 = vmatprep.subr.mxu0 0.0
  %4852 = vmatpush1.msra.mxu0 0.0
  %4853 = vmatprep.subr.mxu0 0.0
  %4854 = vmatpush1.msra.mxu0 0.0
  %4855 = vmatprep.subr.mxu0 0.0
  %4856 = vmatpush1.msra.mxu0 0.0
  %4857 = vmatprep.subr.mxu0 0.0
  %4858 = vmatpush1.msra.mxu0 0.0
  %4859 = vmatprep.subr.mxu0 0.0
  %4860 = vmatpush1.msra.mxu0 0.0
  %4861 = vmatprep.subr.mxu0 0.0
  %4862 = vmatpush1.msra.mxu0 0.0
  %4863 = vmatprep.subr.mxu0 0.0
  %4864 = vmatpush1.msra.mxu0 0.0
  %4865 = vmatprep.subr.mxu0 0.0
  %4866 = vmatpush1.msra.mxu0 0.0
  %4867 = vmatprep.subr.mxu0 0.0
  %4868 = vmatpush1.msra.mxu0 0.0
  %4869 = vmatprep.subr.mxu0 0.0
  %4870 = vmatpush1.msra.mxu0 0.0
  %4871 = vmatprep.subr.mxu0 0.0
  %4872 = vmatpush1.msra.mxu0 0.0
  %4873 = vmatprep.subr.mxu0 0.0
  %4874 = vmatpush1.msra.mxu0 0.0
  %4875 = vmatprep.mubr.f32.mxu0 0.0
  %4876 = vmatmul.mubr.f32.gmra.mrb[0].mxu0 %v4795
  %v4877 = vpop.f32.mrb[0].mxu0
  %v4878 = vadd.f32 0.0, %v4877
  %v4879 = vpop.f32.mrb[0].mxu0
  %4880 = vmatprep.mubr.f32.mxu0 0.0
  %4881 = vmatmul.mubr.f32.gmra.mrb[0].mxu0 %v4798
  %v4882 = vpop.f32.mrb[0].mxu0
  %v4883 = vadd.f32 0.0, %v4882
  %v4884 = vpop.f32.mrb[0].mxu0
  %4885 = vmatprep.mubr.f32.mxu0 0.0
  %4886 = vmatmul.mubr.f32.gmra.mrb[0].mxu0 %v4801
  %v4887 = vpop.f32.mrb[0].mxu0
  %v4888 = vadd.f32 0.0, %v4887
  %v4889 = vpop.f32.mrb[0].mxu0
  %4890 = vmatprep.mubr.f32.mxu0 0.0
  %4891 = vmatmul.mubr.f32.gmra.mrb[0].mxu0 %v4804
  %v4892 = vpop.f32.mrb[0].mxu0
  %v4893 = vadd.f32 0.0, %v4892
  %v4894 = vpop.f32.mrb[0].mxu0
  %4895 = vmatprep.mubr.f32.mxu0 0.0
  %4896 = vmatmul.mubr.f32.gmra.mrb[0].mxu0 %v4807
  %v4897 = vpop.f32.mrb[0].mxu0
  %v4898 = vadd.f32 0.0, %v4897
  %v4899 = vpop.f32.mrb[0].mxu0
  %4900 = vdwg.mxu0
  %4905 = vrot.lane.b32.xlu0 %v1533, 112
  %v4906 = vpop.permute.xlu0 %4905
  %4907 = vrot.lane.b32.xlu0 %v1538, 112
  %v4908 = vpop.permute.xlu0 %4907
  %4909 = vrot.lane.b32.xlu0 %v1543, 112
  %v4910 = vpop.permute.xlu0 %4909
  %4911 = vrot.lane.b32.xlu0 %v1548, 112
  %v4912 = vpop.permute.xlu0 %4911
  %4913 = vrot.lane.b32.xlu0 %v1553, 112
  %v4914 = vpop.permute.xlu0 %4913
  %v4920 = vsel %vm2651, %v4517, 0
  %v4923 = vsel %vm2651, %v4519, 0
  %v4926 = vsel %vm2651, %v4521, 0
  %v4929 = vsel %vm2651, %v4523, 0
  %v4932 = vsel %vm2651, %v4525, 0
  %v4934 = vsel %vm2888, %v4914, 0
  %4936 = vmatprep.subr.mxu0 0.0
  %4937 = vmatpush1.msra.mxu0 %v4906
  %4938 = vmatprep.subr.mxu0 0.0
  %4939 = vmatpush1.msra.mxu0 %v4908
  %4940 = vmatprep.subr.mxu0 0.0
  %4941 = vmatpush1.msra.mxu0 %v4910
  %4942 = vmatprep.subr.mxu0 0.0
  %4943 = vmatpush1.msra.mxu0 %v4912
  %4944 = vmatprep.subr.mxu0 0.0
  %4945 = vmatpush1.msra.mxu0 %v4934
  %4946 = vmatprep.subr.mxu0 0.0
  %4947 = vmatpush1.msra.mxu0 0.0
  %4948 = vmatprep.subr.mxu0 0.0
  %4949 = vmatpush1.msra.mxu0 0.0
  %4950 = vmatprep.subr.mxu0 0.0
  %4951 = vmatpush1.msra.mxu0 0.0
  %4952 = vmatprep.subr.mxu0 0.0
  %4953 = vmatpush1.msra.mxu0 0.0
  %4954 = vmatprep.subr.mxu0 0.0
  %4955 = vmatpush1.msra.mxu0 0.0
  %4956 = vmatprep.subr.mxu0 0.0
  %4957 = vmatpush1.msra.mxu0 0.0
  %4958 = vmatprep.subr.mxu0 0.0
  %4959 = vmatpush1.msra.mxu0 0.0
  %4960 = vmatprep.subr.mxu0 0.0
  %4961 = vmatpush1.msra.mxu0 0.0
  %4962 = vmatprep.subr.mxu0 0.0
  %4963 = vmatpush1.msra.mxu0 0.0
  %4964 = vmatprep.subr.mxu0 0.0
  %4965 = vmatpush1.msra.mxu0 0.0
  %4966 = vmatprep.subr.mxu0 0.0
  %4967 = vmatpush1.msra.mxu0 0.0
  %4968 = vmatprep.subr.mxu0 0.0
  %4969 = vmatpush1.msra.mxu0 0.0
  %4970 = vmatprep.subr.mxu0 0.0
  %4971 = vmatpush1.msra.mxu0 0.0
  %4972 = vmatprep.subr.mxu0 0.0
  %4973 = vmatpush1.msra.mxu0 0.0
  %4974 = vmatprep.subr.mxu0 0.0
  %4975 = vmatpush1.msra.mxu0 0.0
  %4976 = vmatprep.subr.mxu0 0.0
  %4977 = vmatpush1.msra.mxu0 0.0
  %4978 = vmatprep.subr.mxu0 0.0
  %4979 = vmatpush1.msra.mxu0 0.0
  %4980 = vmatprep.subr.mxu0 0.0
  %4981 = vmatpush1.msra.mxu0 0.0
  %4982 = vmatprep.subr.mxu0 0.0
  %4983 = vmatpush1.msra.mxu0 0.0
  %4984 = vmatprep.subr.mxu0 0.0
  %4985 = vmatpush1.msra.mxu0 0.0
  %4986 = vmatprep.subr.mxu0 0.0
  %4987 = vmatpush1.msra.mxu0 0.0
  %4988 = vmatprep.subr.mxu0 0.0
  %4989 = vmatpush1.msra.mxu0 0.0
  %4990 = vmatprep.subr.mxu0 0.0
  %4991 = vmatpush1.msra.mxu0 0.0
  %4992 = vmatprep.subr.mxu0 0.0
  %4993 = vmatpush1.msra.mxu0 0.0
  %4994 = vmatprep.subr.mxu0 0.0
  %4995 = vmatpush1.msra.mxu0 0.0
  %4996 = vmatprep.subr.mxu0 0.0
  %4997 = vmatpush1.msra.mxu0 0.0
  %4998 = vmatprep.subr.mxu0 0.0
  %4999 = vmatpush1.msra.mxu0 0.0
  %5000 = vmatprep.mubr.f32.mxu0 0.0
  %5001 = vmatmul.mubr.f32.gmra.mrb[0].mxu0 %v4920
  %v5002 = vpop.f32.mrb[0].mxu0
  %v5003 = vadd.f32 0.0, %v5002
  %v5004 = vpop.f32.mrb[0].mxu0
  %5005 = vmatprep.mubr.f32.mxu0 0.0
  %5006 = vmatmul.mubr.f32.gmra.mrb[0].mxu0 %v4923
  %v5007 = vpop.f32.mrb[0].mxu0
  %v5008 = vadd.f32 0.0, %v5007
  %v5009 = vpop.f32.mrb[0].mxu0
  %5010 = vmatprep.mubr.f32.mxu0 0.0
  %5011 = vmatmul.mubr.f32.gmra.mrb[0].mxu0 %v4926
  %v5012 = vpop.f32.mrb[0].mxu0
  %v5013 = vadd.f32 0.0, %v5012
  %v5014 = vpop.f32.mrb[0].mxu0
  %5015 = vmatprep.mubr.f32.mxu0 0.0
  %5016 = vmatmul.mubr.f32.gmra.mrb[0].mxu0 %v4929
  %v5017 = vpop.f32.mrb[0].mxu0
  %v5018 = vadd.f32 0.0, %v5017
  %v5019 = vpop.f32.mrb[0].mxu0
  %5020 = vmatprep.mubr.f32.mxu0 0.0
  %5021 = vmatmul.mubr.f32.gmra.mrb[0].mxu0 %v4932
  %v5022 = vpop.f32.mrb[0].mxu0
  %v5023 = vadd.f32 0.0, %v5022
  %v5024 = vpop.f32.mrb[0].mxu0
  %5025 = vdwg.mxu0
  %5026 = vrot.lane.b32.xlu0 %v1848, 96
  %v5027 = vpop.permute.xlu0 %5026
  %5028 = vrot.lane.b32.xlu0 %v1849, 96
  %v5029 = vpop.permute.xlu0 %5028
  %5030 = vrot.lane.b32.xlu0 %v1850, 96
  %v5031 = vpop.permute.xlu0 %5030
  %5032 = vrot.lane.b32.xlu0 %v1851, 96
  %v5033 = vpop.permute.xlu0 %5032
  %5034 = vrot.lane.b32.xlu0 %v1852, 96
  %v5035 = vpop.permute.xlu0 %5034
  %5036 = vrot.lane.b32.xlu0 %v1853, 96
  %v5037 = vpop.permute.xlu0 %5036
  %5038 = vrot.lane.b32.xlu0 %v1854, 96
  %v5039 = vpop.permute.xlu0 %5038
  %5040 = vrot.lane.b32.xlu0 %v1855, 96
  %v5041 = vpop.permute.xlu0 %5040
  %5042 = vrot.lane.b32.xlu0 %v1856, 96
  %v5043 = vpop.permute.xlu0 %5042
  %5044 = vrot.lane.b32.xlu0 %v1857, 96
  %v5045 = vpop.permute.xlu0 %5044
  %5046 = vrot.lane.b32.xlu0 %v1858, 96
  %v5047 = vpop.permute.xlu0 %5046
  %5048 = vrot.lane.b32.xlu0 %v1859, 96
  %v5049 = vpop.permute.xlu0 %5048
  %5050 = vrot.lane.b32.xlu0 %v1860, 96
  %v5051 = vpop.permute.xlu0 %5050
  %5052 = vrot.lane.b32.xlu0 %v1861, 96
  %v5053 = vpop.permute.xlu0 %5052
  %5054 = vrot.lane.b32.xlu0 %v1862, 96
  %v5055 = vpop.permute.xlu0 %5054
  %5056 = vrot.lane.b32.xlu0 %v1863, 96
  %v5057 = vpop.permute.xlu0 %5056
  %5058 = vrot.lane.b32.xlu0 %v1864, 96
  %v5059 = vpop.permute.xlu0 %5058
  %5060 = vrot.lane.b32.xlu0 %v1865, 96
  %v5061 = vpop.permute.xlu0 %5060
  %5062 = vrot.lane.b32.xlu0 %v1866, 96
  %v5063 = vpop.permute.xlu0 %5062
  %5064 = vrot.lane.b32.xlu0 %v1867, 96
  %v5065 = vpop.permute.xlu0 %5064
  %v5086 = vsel %vm1868, %v5027, 0.0
  %5087 = vadd.xlane.f32.xlu0 %v5086
  %v5088 = vpop.xlane.xlu0 %5087
  %v5089 = vsel %vm1868, %v5029, 0.0
  %5090 = vadd.xlane.f32.xlu0 %v5089
  %v5091 = vpop.xlane.xlu0 %5090
  %v5092 = vsel %vm1868, %v5031, 0.0
  %5093 = vadd.xlane.f32.xlu0 %v5092
  %v5094 = vpop.xlane.xlu0 %5093
  %v5095 = vsel %vm1868, %v5033, 0.0
  %5096 = vadd.xlane.f32.xlu0 %v5095
  %v5097 = vpop.xlane.xlu0 %5096
  %v5098 = vsel %vm1881, %v5035, 0.0
  %5099 = vadd.xlane.f32.xlu0 %v5098
  %v5100 = vpop.xlane.xlu0 %5099
  %v5101 = vsel %vm1868, %v5037, 0.0
  %5102 = vadd.xlane.f32.xlu0 %v5101
  %v5103 = vpop.xlane.xlu0 %5102
  %v5104 = vsel %vm1868, %v5039, 0.0
  %5105 = vadd.xlane.f32.xlu0 %v5104
  %v5106 = vpop.xlane.xlu0 %5105
  %v5107 = vsel %vm1868, %v5041, 0.0
  %5108 = vadd.xlane.f32.xlu0 %v5107
  %v5109 = vpop.xlane.xlu0 %5108
  %v5110 = vsel %vm1868, %v5043, 0.0
  %5111 = vadd.xlane.f32.xlu0 %v5110
  %v5112 = vpop.xlane.xlu0 %5111
  %v5113 = vsel %vm1881, %v5045, 0.0
  %5114 = vadd.xlane.f32.xlu0 %v5113
  %v5115 = vpop.xlane.xlu0 %5114
  %v5116 = vsel %vm1868, %v5047, 0.0
  %5117 = vadd.xlane.f32.xlu0 %v5116
  %v5118 = vpop.xlane.xlu0 %5117
  %v5119 = vsel %vm1868, %v5049, 0.0
  %5120 = vadd.xlane.f32.xlu0 %v5119
  %v5121 = vpop.xlane.xlu0 %5120
  %v5122 = vsel %vm1868, %v5051, 0.0
  %5123 = vadd.xlane.f32.xlu0 %v5122
  %v5124 = vpop.xlane.xlu0 %5123
  %v5125 = vsel %vm1868, %v5053, 0.0
  %5126 = vadd.xlane.f32.xlu0 %v5125
  %v5127 = vpop.xlane.xlu0 %5126
  %v5128 = vsel %vm1881, %v5055, 0.0
  %5129 = vadd.xlane.f32.xlu0 %v5128
  %v5130 = vpop.xlane.xlu0 %5129
  %v5131 = vsel %vm1868, %v5057, 0.0
  %5132 = vadd.xlane.f32.xlu0 %v5131
  %v5133 = vpop.xlane.xlu0 %5132
  %v5134 = vsel %vm1868, %v5059, 0.0
  %5135 = vadd.xlane.f32.xlu0 %v5134
  %v5136 = vpop.xlane.xlu0 %5135
  %v5137 = vsel %vm1868, %v5061, 0.0
  %5138 = vadd.xlane.f32.xlu0 %v5137
  %v5139 = vpop.xlane.xlu0 %5138
  %v5140 = vsel %vm1868, %v5063, 0.0
  %5141 = vadd.xlane.f32.xlu0 %v5140
  %v5142 = vpop.xlane.xlu0 %5141
  %v5143 = vsel %vm1881, %v5065, 0.0
  %5144 = vadd.xlane.f32.xlu0 %v5143
  %v5145 = vpop.xlane.xlu0 %5144
  %v5146 = vadd.f32 %v5088, 1e-12
  %v5147 = vadd.f32 %v5091, 1e-12
  %v5148 = vadd.f32 %v5094, 1e-12
  %v5149 = vadd.f32 %v5097, 1e-12
  %v5150 = vadd.f32 %v5100, 1e-12
  %v5151 = vadd.f32 %v5103, 1e-12
  %v5152 = vadd.f32 %v5106, 1e-12
  %v5153 = vadd.f32 %v5109, 1e-12
  %v5154 = vadd.f32 %v5112, 1e-12
  %v5155 = vadd.f32 %v5115, 1e-12
  %v5156 = vadd.f32 %v5118, 1e-12
  %v5157 = vadd.f32 %v5121, 1e-12
  %v5158 = vadd.f32 %v5124, 1e-12
  %v5159 = vadd.f32 %v5127, 1e-12
  %v5160 = vadd.f32 %v5130, 1e-12
  %v5161 = vadd.f32 %v5133, 1e-12
  %v5162 = vadd.f32 %v5136, 1e-12
  %v5163 = vadd.f32 %v5139, 1e-12
  %v5164 = vadd.f32 %v5142, 1e-12
  %v5165 = vadd.f32 %v5145, 1e-12
  %v5166 = vrsqrt.pop %v5146
  %v5167 = vrsqrt.pop %v5147
  %v5168 = vrsqrt.pop %v5148
  %v5169 = vrsqrt.pop %v5149
  %v5170 = vrsqrt.pop %v5150
  %v5171 = vrsqrt.pop %v5151
  %v5172 = vrsqrt.pop %v5152
  %v5173 = vrsqrt.pop %v5153
  %v5174 = vrsqrt.pop %v5154
  %v5175 = vrsqrt.pop %v5155
  %v5176 = vrsqrt.pop %v5156
  %v5177 = vrsqrt.pop %v5157
  %v5178 = vrsqrt.pop %v5158
  %v5179 = vrsqrt.pop %v5159
  %v5180 = vrsqrt.pop %v5160
  %v5181 = vrsqrt.pop %v5161
  %v5182 = vrsqrt.pop %v5162
  %v5183 = vrsqrt.pop %v5163
  %v5184 = vrsqrt.pop %v5164
  %v5185 = vrsqrt.pop %v5165
  %v5186 = vmul.f32 %v5166, %v1970
  %v5187 = vmul.f32 %v5167, %v1970
  %v5188 = vmul.f32 %v5168, %v1970
  %v5189 = vmul.f32 %v5169, %v1970
  %v5190 = vmul.f32 %v5170, %v1970
  %v5191 = vmul.f32 %v5171, %v1970
  %v5192 = vmul.f32 %v5172, %v1970
  %v5193 = vmul.f32 %v5173, %v1970
  %v5194 = vmul.f32 %v5174, %v1970
  %v5195 = vmul.f32 %v5175, %v1970
  %v5196 = vmul.f32 %v5176, %v1970
  %v5197 = vmul.f32 %v5177, %v1970
  %v5198 = vmul.f32 %v5178, %v1970
  %v5199 = vmul.f32 %v5179, %v1970
  %v5200 = vmul.f32 %v5180, %v1970
  %v5201 = vmul.f32 %v5181, %v1970
  %v5202 = vmul.f32 %v5182, %v1970
  %v5203 = vmul.f32 %v5183, %v1970
  %v5204 = vmul.f32 %v5184, %v1970
  %v5205 = vmul.f32 %v5185, %v1970
  %v5206 = vmul.f32 %v482, %v5186
  %v5207 = vmul.f32 %v487, %v5187
  %v5208 = vmul.f32 %v492, %v5188
  %v5209 = vmul.f32 %v497, %v5189
  %v5210 = vmul.f32 %v502, %v5190
  %v5211 = vmul.f32 %v587, %v5191
  %v5212 = vmul.f32 %v592, %v5192
  %v5213 = vmul.f32 %v597, %v5193
  %v5214 = vmul.f32 %v602, %v5194
  %v5215 = vmul.f32 %v607, %v5195
  %v5216 = vmul.f32 %v692, %v5196
  %v5217 = vmul.f32 %v697, %v5197
  %v5218 = vmul.f32 %v702, %v5198
  %v5219 = vmul.f32 %v707, %v5199
  %v5220 = vmul.f32 %v712, %v5200
  %v5221 = vmul.f32 %v797, %v5201
  %v5222 = vmul.f32 %v802, %v5202
  %v5223 = vmul.f32 %v807, %v5203
  %v5224 = vmul.f32 %v812, %v5204
  %v5225 = vmul.f32 %v817, %v5205
  %5226 = vrot.lane.b32.xlu0 %v2011, 96
  %v5227 = vpop.permute.xlu0 %5226
  %5228 = vrot.lane.b32.xlu0 %v2012, 96
  %v5229 = vpop.permute.xlu0 %5228
  %5230 = vrot.lane.b32.xlu0 %v2013, 96
  %v5231 = vpop.permute.xlu0 %5230
  %5232 = vrot.lane.b32.xlu0 %v2014, 96
  %v5233 = vpop.permute.xlu0 %5232
  %5234 = vrot.lane.b32.xlu0 %v2015, 96
  %v5235 = vpop.permute.xlu0 %5234
  %5236 = vrot.lane.b32.xlu0 %v2016, 96
  %v5237 = vpop.permute.xlu0 %5236
  %5238 = vrot.lane.b32.xlu0 %v2017, 96
  %v5239 = vpop.permute.xlu0 %5238
  %5240 = vrot.lane.b32.xlu0 %v2018, 96
  %v5241 = vpop.permute.xlu0 %5240
  %5242 = vrot.lane.b32.xlu0 %v2019, 96
  %v5243 = vpop.permute.xlu0 %5242
  %5244 = vrot.lane.b32.xlu0 %v2020, 96
  %v5245 = vpop.permute.xlu0 %5244
  %5246 = vrot.lane.b32.xlu0 %v2021, 96
  %v5247 = vpop.permute.xlu0 %5246
  %5248 = vrot.lane.b32.xlu0 %v2022, 96
  %v5249 = vpop.permute.xlu0 %5248
  %5250 = vrot.lane.b32.xlu0 %v2023, 96
  %v5251 = vpop.permute.xlu0 %5250
  %5252 = vrot.lane.b32.xlu0 %v2024, 96
  %v5253 = vpop.permute.xlu0 %5252
  %5254 = vrot.lane.b32.xlu0 %v2025, 96
  %v5255 = vpop.permute.xlu0 %5254
  %5256 = vrot.lane.b32.xlu0 %v2026, 96
  %v5257 = vpop.permute.xlu0 %5256
  %5258 = vrot.lane.b32.xlu0 %v2027, 96
  %v5259 = vpop.permute.xlu0 %5258
  %5260 = vrot.lane.b32.xlu0 %v2028, 96
  %v5261 = vpop.permute.xlu0 %5260
  %5262 = vrot.lane.b32.xlu0 %v2029, 96
  %v5263 = vpop.permute.xlu0 %5262
  %5264 = vrot.lane.b32.xlu0 %v2030, 96
  %v5265 = vpop.permute.xlu0 %5264
  %v5286 = vsel %vm1868, %v5227, 0.0
  %5287 = vadd.xlane.f32.xlu0 %v5286
  %v5288 = vpop.xlane.xlu0 %5287
  %v5289 = vsel %vm1868, %v5229, 0.0
  %5290 = vadd.xlane.f32.xlu0 %v5289
  %v5291 = vpop.xlane.xlu0 %5290
  %v5292 = vsel %vm1868, %v5231, 0.0
  %5293 = vadd.xlane.f32.xlu0 %v5292
  %v5294 = vpop.xlane.xlu0 %5293
  %v5295 = vsel %vm1868, %v5233, 0.0
  %5296 = vadd.xlane.f32.xlu0 %v5295
  %v5297 = vpop.xlane.xlu0 %5296
  %v5298 = vsel %vm1881, %v5235, 0.0
  %5299 = vadd.xlane.f32.xlu0 %v5298
  %v5300 = vpop.xlane.xlu0 %5299
  %v5301 = vsel %vm1868, %v5237, 0.0
  %5302 = vadd.xlane.f32.xlu0 %v5301
  %v5303 = vpop.xlane.xlu0 %5302
  %v5304 = vsel %vm1868, %v5239, 0.0
  %5305 = vadd.xlane.f32.xlu0 %v5304
  %v5306 = vpop.xlane.xlu0 %5305
  %v5307 = vsel %vm1868, %v5241, 0.0
  %5308 = vadd.xlane.f32.xlu0 %v5307
  %v5309 = vpop.xlane.xlu0 %5308
  %v5310 = vsel %vm1868, %v5243, 0.0
  %5311 = vadd.xlane.f32.xlu0 %v5310
  %v5312 = vpop.xlane.xlu0 %5311
  %v5313 = vsel %vm1881, %v5245, 0.0
  %5314 = vadd.xlane.f32.xlu0 %v5313
  %v5315 = vpop.xlane.xlu0 %5314
  %v5316 = vsel %vm1868, %v5247, 0.0
  %5317 = vadd.xlane.f32.xlu0 %v5316
  %v5318 = vpop.xlane.xlu0 %5317
  %v5319 = vsel %vm1868, %v5249, 0.0
  %5320 = vadd.xlane.f32.xlu0 %v5319
  %v5321 = vpop.xlane.xlu0 %5320
  %v5322 = vsel %vm1868, %v5251, 0.0
  %5323 = vadd.xlane.f32.xlu0 %v5322
  %v5324 = vpop.xlane.xlu0 %5323
  %v5325 = vsel %vm1868, %v5253, 0.0
  %5326 = vadd.xlane.f32.xlu0 %v5325
  %v5327 = vpop.xlane.xlu0 %5326
  %v5328 = vsel %vm1881, %v5255, 0.0
  %5329 = vadd.xlane.f32.xlu0 %v5328
  %v5330 = vpop.xlane.xlu0 %5329
  %v5331 = vsel %vm1868, %v5257, 0.0
  %5332 = vadd.xlane.f32.xlu0 %v5331
  %v5333 = vpop.xlane.xlu0 %5332
  %v5334 = vsel %vm1868, %v5259, 0.0
  %5335 = vadd.xlane.f32.xlu0 %v5334
  %v5336 = vpop.xlane.xlu0 %5335
  %v5337 = vsel %vm1868, %v5261, 0.0
  %5338 = vadd.xlane.f32.xlu0 %v5337
  %v5339 = vpop.xlane.xlu0 %5338
  %v5340 = vsel %vm1868, %v5263, 0.0
  %5341 = vadd.xlane.f32.xlu0 %v5340
  %v5342 = vpop.xlane.xlu0 %5341
  %v5343 = vsel %vm1881, %v5265, 0.0
  %5344 = vadd.xlane.f32.xlu0 %v5343
  %v5345 = vpop.xlane.xlu0 %5344
  %v5346 = vadd.f32 %v5288, 1e-12
  %v5347 = vadd.f32 %v5291, 1e-12
  %v5348 = vadd.f32 %v5294, 1e-12
  %v5349 = vadd.f32 %v5297, 1e-12
  %v5350 = vadd.f32 %v5300, 1e-12
  %v5351 = vadd.f32 %v5303, 1e-12
  %v5352 = vadd.f32 %v5306, 1e-12
  %v5353 = vadd.f32 %v5309, 1e-12
  %v5354 = vadd.f32 %v5312, 1e-12
  %v5355 = vadd.f32 %v5315, 1e-12
  %v5356 = vadd.f32 %v5318, 1e-12
  %v5357 = vadd.f32 %v5321, 1e-12
  %v5358 = vadd.f32 %v5324, 1e-12
  %v5359 = vadd.f32 %v5327, 1e-12
  %v5360 = vadd.f32 %v5330, 1e-12
  %v5361 = vadd.f32 %v5333, 1e-12
  %v5362 = vadd.f32 %v5336, 1e-12
  %v5363 = vadd.f32 %v5339, 1e-12
  %v5364 = vadd.f32 %v5342, 1e-12
  %v5365 = vadd.f32 %v5345, 1e-12
  %v5366 = vrsqrt.pop %v5346
  %v5367 = vrsqrt.pop %v5347
  %v5368 = vrsqrt.pop %v5348
  %v5369 = vrsqrt.pop %v5349
  %v5370 = vrsqrt.pop %v5350
  %v5371 = vrsqrt.pop %v5351
  %v5372 = vrsqrt.pop %v5352
  %v5373 = vrsqrt.pop %v5353
  %v5374 = vrsqrt.pop %v5354
  %v5375 = vrsqrt.pop %v5355
  %v5376 = vrsqrt.pop %v5356
  %v5377 = vrsqrt.pop %v5357
  %v5378 = vrsqrt.pop %v5358
  %v5379 = vrsqrt.pop %v5359
  %v5380 = vrsqrt.pop %v5360
  %v5381 = vrsqrt.pop %v5361
  %v5382 = vrsqrt.pop %v5362
  %v5383 = vrsqrt.pop %v5363
  %v5384 = vrsqrt.pop %v5364
  %v5385 = vrsqrt.pop %v5365
  %v5386 = vmul.f32 %v895, %v5366
  %v5387 = vmul.f32 %v900, %v5367
  %v5388 = vmul.f32 %v905, %v5368
  %v5389 = vmul.f32 %v910, %v5369
  %v5390 = vmul.f32 %v915, %v5370
  %v5391 = vmul.f32 %v985, %v5371
  %v5392 = vmul.f32 %v990, %v5372
  %v5393 = vmul.f32 %v995, %v5373
  %v5394 = vmul.f32 %v1000, %v5374
  %v5395 = vmul.f32 %v1005, %v5375
  %v5396 = vmul.f32 %v1075, %v5376
  %v5397 = vmul.f32 %v1080, %v5377
  %v5398 = vmul.f32 %v1085, %v5378
  %v5399 = vmul.f32 %v1090, %v5379
  %v5400 = vmul.f32 %v1095, %v5380
  %v5401 = vmul.f32 %v1165, %v5381
  %v5402 = vmul.f32 %v1170, %v5382
  %v5403 = vmul.f32 %v1175, %v5383
  %v5404 = vmul.f32 %v1180, %v5384
  %v5405 = vmul.f32 %v1185, %v5385
  %5411 = vrot.lane.b32.xlu0 %v5206, 96
  %v5412 = vpop.permute.xlu0 %5411
  %5413 = vrot.lane.b32.xlu0 %v5207, 96
  %v5414 = vpop.permute.xlu0 %5413
  %5415 = vrot.lane.b32.xlu0 %v5208, 96
  %v5416 = vpop.permute.xlu0 %5415
  %5417 = vrot.lane.b32.xlu0 %v5209, 96
  %v5418 = vpop.permute.xlu0 %5417
  %5419 = vrot.lane.b32.xlu0 %v5210, 96
  %v5420 = vpop.permute.xlu0 %5419
  %5426 = vrot.lane.b32.xlu0 %v5386, 96
  %v5427 = vpop.permute.xlu0 %5426
  %5428 = vrot.lane.b32.xlu0 %v5387, 96
  %v5429 = vpop.permute.xlu0 %5428
  %5430 = vrot.lane.b32.xlu0 %v5388, 96
  %v5431 = vpop.permute.xlu0 %5430
  %5432 = vrot.lane.b32.xlu0 %v5389, 96
  %v5433 = vpop.permute.xlu0 %5432
  %5434 = vrot.lane.b32.xlu0 %v5390, 96
  %v5435 = vpop.permute.xlu0 %5434
  %v5436 = vsel %vm1868, %v5412, 0
  %v5438 = vsel %vm1868, %v5414, 0
  %v5440 = vsel %vm1868, %v5416, 0
  %v5442 = vsel %vm1868, %v5418, 0
  %v5444 = vsel %vm1868, %v5420, 0
  %v5446 = vsel %vm1868, %v5427, 0
  %v5448 = vsel %vm1868, %v5429, 0
  %v5450 = vsel %vm1868, %v5431, 0
  %v5452 = vsel %vm1868, %v5433, 0
  %v5454 = vsel %vm1868, %v5435, 0
  %5456 = vmatprep.subr.mxu0 0.0
  %5457 = vmatpush1.xpose.msra.mxu0 %v5446
  %5458 = vmatprep.subr.mxu0 0.0
  %5459 = vmatpush1.xpose.msra.mxu0 %v5448
  %5460 = vmatprep.subr.mxu0 0.0
  %5461 = vmatpush1.xpose.msra.mxu0 %v5450
  %5462 = vmatprep.subr.mxu0 0.0
  %5463 = vmatpush1.xpose.msra.mxu0 %v5452
  %5464 = vmatprep.subr.mxu0 0.0
  %5465 = vmatpush1.xpose.msra.mxu0 %v5454
  %5466 = vmatprep.subr.mxu0 0.0
  %5467 = vmatpush1.xpose.msra.mxu0 0.0
  %5468 = vmatprep.subr.mxu0 0.0
  %5469 = vmatpush1.xpose.msra.mxu0 0.0
  %5470 = vmatprep.subr.mxu0 0.0
  %5471 = vmatpush1.xpose.msra.mxu0 0.0
  %5472 = vmatprep.subr.mxu0 0.0
  %5473 = vmatpush1.xpose.msra.mxu0 0.0
  %5474 = vmatprep.subr.mxu0 0.0
  %5475 = vmatpush1.xpose.msra.mxu0 0.0
  %5476 = vmatprep.subr.mxu0 0.0
  %5477 = vmatpush1.xpose.msra.mxu0 0.0
  %5478 = vmatprep.subr.mxu0 0.0
  %5479 = vmatpush1.xpose.msra.mxu0 0.0
  %5480 = vmatprep.subr.mxu0 0.0
  %5481 = vmatpush1.xpose.msra.mxu0 0.0
  %5482 = vmatprep.subr.mxu0 0.0
  %5483 = vmatpush1.xpose.msra.mxu0 0.0
  %5484 = vmatprep.subr.mxu0 0.0
  %5485 = vmatpush1.xpose.msra.mxu0 0.0
  %5486 = vmatprep.subr.mxu0 0.0
  %5487 = vmatpush1.xpose.msra.mxu0 0.0
  %5488 = vmatprep.subr.mxu0 0.0
  %5489 = vmatpush1.xpose.msra.mxu0 0.0
  %5490 = vmatprep.subr.mxu0 0.0
  %5491 = vmatpush1.xpose.msra.mxu0 0.0
  %5492 = vmatprep.subr.mxu0 0.0
  %5493 = vmatpush1.xpose.msra.mxu0 0.0
  %5494 = vmatprep.subr.mxu0 0.0
  %5495 = vmatpush1.xpose.msra.mxu0 0.0
  %5496 = vmatprep.subr.mxu0 0.0
  %5497 = vmatpush1.xpose.msra.mxu0 0.0
  %5498 = vmatprep.subr.mxu0 0.0
  %5499 = vmatpush1.xpose.msra.mxu0 0.0
  %5500 = vmatprep.subr.mxu0 0.0
  %5501 = vmatpush1.xpose.msra.mxu0 0.0
  %5502 = vmatprep.subr.mxu0 0.0
  %5503 = vmatpush1.xpose.msra.mxu0 0.0
  %5504 = vmatprep.subr.mxu0 0.0
  %5505 = vmatpush1.xpose.msra.mxu0 0.0
  %5506 = vmatprep.subr.mxu0 0.0
  %5507 = vmatpush1.xpose.msra.mxu0 0.0
  %5508 = vmatprep.subr.mxu0 0.0
  %5509 = vmatpush1.xpose.msra.mxu0 0.0
  %5510 = vmatprep.subr.mxu0 0.0
  %5511 = vmatpush1.xpose.msra.mxu0 0.0
  %5512 = vmatprep.subr.mxu0 0.0
  %5513 = vmatpush1.xpose.msra.mxu0 0.0
  %5514 = vmatprep.subr.mxu0 0.0
  %5515 = vmatpush1.xpose.msra.mxu0 0.0
  %5516 = vmatprep.subr.mxu0 0.0
  %5517 = vmatpush1.xpose.msra.mxu0 0.0
  %5518 = vmatprep.subr.mxu0 0.0
  %5519 = vmatpush1.xpose.msra.mxu0 0.0
  %5520 = vmatprep.mubr.f32.mxu0 0.0
  %5521 = vmatmul.mubr.f32.gmra.mrb[0].mxu0 %v5436
  %v5522 = vpop.f32.mrb[0].mxu0
  %v5523 = vadd.f32 %v1838, %v5522
  %v5524 = vpop.f32.mrb[0].mxu0
  %5525 = vmatprep.mubr.f32.mxu0 0.0
  %5526 = vmatmul.mubr.f32.gmra.mrb[0].mxu0 %v5438
  %v5527 = vpop.f32.mrb[0].mxu0
  %v5528 = vadd.f32 %v1839, %v5527
  %v5529 = vpop.f32.mrb[0].mxu0
  %5530 = vmatprep.mubr.f32.mxu0 0.0
  %5531 = vmatmul.mubr.f32.gmra.mrb[0].mxu0 %v5440
  %v5532 = vpop.f32.mrb[0].mxu0
  %v5533 = vadd.f32 %v1840, %v5532
  %v5534 = vpop.f32.mrb[0].mxu0
  %5535 = vmatprep.mubr.f32.mxu0 0.0
  %5536 = vmatmul.mubr.f32.gmra.mrb[0].mxu0 %v5442
  %v5537 = vpop.f32.mrb[0].mxu0
  %v5538 = vadd.f32 %v1841, %v5537
  %v5539 = vpop.f32.mrb[0].mxu0
  %5540 = vmatprep.mubr.f32.mxu0 0.0
  %5541 = vmatmul.mubr.f32.gmra.mrb[0].mxu0 %v5444
  %v5542 = vpop.f32.mrb[0].mxu0
  %v5543 = vadd.f32 %v1842, %v5542
  %v5544 = vpop.f32.mrb[0].mxu0
  %5545 = vdwg.mxu0
  %5551 = vrot.lane.b32.xlu0 %v5211, 96
  %v5552 = vpop.permute.xlu0 %5551
  %5553 = vrot.lane.b32.xlu0 %v5212, 96
  %v5554 = vpop.permute.xlu0 %5553
  %5555 = vrot.lane.b32.xlu0 %v5213, 96
  %v5556 = vpop.permute.xlu0 %5555
  %5557 = vrot.lane.b32.xlu0 %v5214, 96
  %v5558 = vpop.permute.xlu0 %5557
  %5559 = vrot.lane.b32.xlu0 %v5215, 96
  %v5560 = vpop.permute.xlu0 %5559
  %5566 = vrot.lane.b32.xlu0 %v5391, 96
  %v5567 = vpop.permute.xlu0 %5566
  %5568 = vrot.lane.b32.xlu0 %v5392, 96
  %v5569 = vpop.permute.xlu0 %5568
  %5570 = vrot.lane.b32.xlu0 %v5393, 96
  %v5571 = vpop.permute.xlu0 %5570
  %5572 = vrot.lane.b32.xlu0 %v5394, 96
  %v5573 = vpop.permute.xlu0 %5572
  %5574 = vrot.lane.b32.xlu0 %v5395, 96
  %v5575 = vpop.permute.xlu0 %5574
  %v5576 = vsel %vm1868, %v5552, 0
  %v5578 = vsel %vm1868, %v5554, 0
  %v5580 = vsel %vm1868, %v5556, 0
  %v5582 = vsel %vm1868, %v5558, 0
  %v5584 = vsel %vm1868, %v5560, 0
  %v5586 = vsel %vm1868, %v5567, 0
  %v5588 = vsel %vm1868, %v5569, 0
  %v5590 = vsel %vm1868, %v5571, 0
  %v5592 = vsel %vm1868, %v5573, 0
  %v5594 = vsel %vm1868, %v5575, 0
  %5596 = vmatprep.subr.mxu0 0.0
  %5597 = vmatpush1.xpose.msra.mxu0 %v5586
  %5598 = vmatprep.subr.mxu0 0.0
  %5599 = vmatpush1.xpose.msra.mxu0 %v5588
  %5600 = vmatprep.subr.mxu0 0.0
  %5601 = vmatpush1.xpose.msra.mxu0 %v5590
  %5602 = vmatprep.subr.mxu0 0.0
  %5603 = vmatpush1.xpose.msra.mxu0 %v5592
  %5604 = vmatprep.subr.mxu0 0.0
  %5605 = vmatpush1.xpose.msra.mxu0 %v5594
  %5606 = vmatprep.subr.mxu0 0.0
  %5607 = vmatpush1.xpose.msra.mxu0 0.0
  %5608 = vmatprep.subr.mxu0 0.0
  %5609 = vmatpush1.xpose.msra.mxu0 0.0
  %5610 = vmatprep.subr.mxu0 0.0
  %5611 = vmatpush1.xpose.msra.mxu0 0.0
  %5612 = vmatprep.subr.mxu0 0.0
  %5613 = vmatpush1.xpose.msra.mxu0 0.0
  %5614 = vmatprep.subr.mxu0 0.0
  %5615 = vmatpush1.xpose.msra.mxu0 0.0
  %5616 = vmatprep.subr.mxu0 0.0
  %5617 = vmatpush1.xpose.msra.mxu0 0.0
  %5618 = vmatprep.subr.mxu0 0.0
  %5619 = vmatpush1.xpose.msra.mxu0 0.0
  %5620 = vmatprep.subr.mxu0 0.0
  %5621 = vmatpush1.xpose.msra.mxu0 0.0
  %5622 = vmatprep.subr.mxu0 0.0
  %5623 = vmatpush1.xpose.msra.mxu0 0.0
  %5624 = vmatprep.subr.mxu0 0.0
  %5625 = vmatpush1.xpose.msra.mxu0 0.0
  %5626 = vmatprep.subr.mxu0 0.0
  %5627 = vmatpush1.xpose.msra.mxu0 0.0
  %5628 = vmatprep.subr.mxu0 0.0
  %5629 = vmatpush1.xpose.msra.mxu0 0.0
  %5630 = vmatprep.subr.mxu0 0.0
  %5631 = vmatpush1.xpose.msra.mxu0 0.0
  %5632 = vmatprep.subr.mxu0 0.0
  %5633 = vmatpush1.xpose.msra.mxu0 0.0
  %5634 = vmatprep.subr.mxu0 0.0
  %5635 = vmatpush1.xpose.msra.mxu0 0.0
  %5636 = vmatprep.subr.mxu0 0.0
  %5637 = vmatpush1.xpose.msra.mxu0 0.0
  %5638 = vmatprep.subr.mxu0 0.0
  %5639 = vmatpush1.xpose.msra.mxu0 0.0
  %5640 = vmatprep.subr.mxu0 0.0
  %5641 = vmatpush1.xpose.msra.mxu0 0.0
  %5642 = vmatprep.subr.mxu0 0.0
  %5643 = vmatpush1.xpose.msra.mxu0 0.0
  %5644 = vmatprep.subr.mxu0 0.0
  %5645 = vmatpush1.xpose.msra.mxu0 0.0
  %5646 = vmatprep.subr.mxu0 0.0
  %5647 = vmatpush1.xpose.msra.mxu0 0.0
  %5648 = vmatprep.subr.mxu0 0.0
  %5649 = vmatpush1.xpose.msra.mxu0 0.0
  %5650 = vmatprep.subr.mxu0 0.0
  %5651 = vmatpush1.xpose.msra.mxu0 0.0
  %5652 = vmatprep.subr.mxu0 0.0
  %5653 = vmatpush1.xpose.msra.mxu0 0.0
  %5654 = vmatprep.subr.mxu0 0.0
  %5655 = vmatpush1.xpose.msra.mxu0 0.0
  %5656 = vmatprep.subr.mxu0 0.0
  %5657 = vmatpush1.xpose.msra.mxu0 0.0
  %5658 = vmatprep.subr.mxu0 0.0
  %5659 = vmatpush1.xpose.msra.mxu0 0.0
  %5660 = vmatprep.mubr.f32.mxu0 0.0
  %5661 = vmatmul.mubr.f32.gmra.mrb[0].mxu0 %v5576
  %v5662 = vpop.f32.mrb[0].mxu0
  %v5663 = vadd.f32 %v1838, %v5662
  %v5664 = vpop.f32.mrb[0].mxu0
  %5665 = vmatprep.mubr.f32.mxu0 0.0
  %5666 = vmatmul.mubr.f32.gmra.mrb[0].mxu0 %v5578
  %v5667 = vpop.f32.mrb[0].mxu0
  %v5668 = vadd.f32 %v1839, %v5667
  %v5669 = vpop.f32.mrb[0].mxu0
  %5670 = vmatprep.mubr.f32.mxu0 0.0
  %5671 = vmatmul.mubr.f32.gmra.mrb[0].mxu0 %v5580
  %v5672 = vpop.f32.mrb[0].mxu0
  %v5673 = vadd.f32 %v1840, %v5672
  %v5674 = vpop.f32.mrb[0].mxu0
  %5675 = vmatprep.mubr.f32.mxu0 0.0
  %5676 = vmatmul.mubr.f32.gmra.mrb[0].mxu0 %v5582
  %v5677 = vpop.f32.mrb[0].mxu0
  %v5678 = vadd.f32 %v1841, %v5677
  %v5679 = vpop.f32.mrb[0].mxu0
  %5680 = vmatprep.mubr.f32.mxu0 0.0
  %5681 = vmatmul.mubr.f32.gmra.mrb[0].mxu0 %v5584
  %v5682 = vpop.f32.mrb[0].mxu0
  %v5683 = vadd.f32 %v1842, %v5682
  %v5684 = vpop.f32.mrb[0].mxu0
  %5685 = vdwg.mxu0
  %5691 = vrot.lane.b32.xlu0 %v5216, 96
  %v5692 = vpop.permute.xlu0 %5691
  %5693 = vrot.lane.b32.xlu0 %v5217, 96
  %v5694 = vpop.permute.xlu0 %5693
  %5695 = vrot.lane.b32.xlu0 %v5218, 96
  %v5696 = vpop.permute.xlu0 %5695
  %5697 = vrot.lane.b32.xlu0 %v5219, 96
  %v5698 = vpop.permute.xlu0 %5697
  %5699 = vrot.lane.b32.xlu0 %v5220, 96
  %v5700 = vpop.permute.xlu0 %5699
  %5706 = vrot.lane.b32.xlu0 %v5396, 96
  %v5707 = vpop.permute.xlu0 %5706
  %5708 = vrot.lane.b32.xlu0 %v5397, 96
  %v5709 = vpop.permute.xlu0 %5708
  %5710 = vrot.lane.b32.xlu0 %v5398, 96
  %v5711 = vpop.permute.xlu0 %5710
  %5712 = vrot.lane.b32.xlu0 %v5399, 96
  %v5713 = vpop.permute.xlu0 %5712
  %5714 = vrot.lane.b32.xlu0 %v5400, 96
  %v5715 = vpop.permute.xlu0 %5714
  %v5716 = vsel %vm1868, %v5692, 0
  %v5718 = vsel %vm1868, %v5694, 0
  %v5720 = vsel %vm1868, %v5696, 0
  %v5722 = vsel %vm1868, %v5698, 0
  %v5724 = vsel %vm1868, %v5700, 0
  %v5726 = vsel %vm1868, %v5707, 0
  %v5728 = vsel %vm1868, %v5709, 0
  %v5730 = vsel %vm1868, %v5711, 0
  %v5732 = vsel %vm1868, %v5713, 0
  %v5734 = vsel %vm1868, %v5715, 0
  %5736 = vmatprep.subr.mxu0 0.0
  %5737 = vmatpush1.xpose.msra.mxu0 %v5726
  %5738 = vmatprep.subr.mxu0 0.0
  %5739 = vmatpush1.xpose.msra.mxu0 %v5728
  %5740 = vmatprep.subr.mxu0 0.0
  %5741 = vmatpush1.xpose.msra.mxu0 %v5730
  %5742 = vmatprep.subr.mxu0 0.0
  %5743 = vmatpush1.xpose.msra.mxu0 %v5732
  %5744 = vmatprep.subr.mxu0 0.0
  %5745 = vmatpush1.xpose.msra.mxu0 %v5734
  %5746 = vmatprep.subr.mxu0 0.0
  %5747 = vmatpush1.xpose.msra.mxu0 0.0
  %5748 = vmatprep.subr.mxu0 0.0
  %5749 = vmatpush1.xpose.msra.mxu0 0.0
  %5750 = vmatprep.subr.mxu0 0.0
  %5751 = vmatpush1.xpose.msra.mxu0 0.0
  %5752 = vmatprep.subr.mxu0 0.0
  %5753 = vmatpush1.xpose.msra.mxu0 0.0
  %5754 = vmatprep.subr.mxu0 0.0
  %5755 = vmatpush1.xpose.msra.mxu0 0.0
  %5756 = vmatprep.subr.mxu0 0.0
  %5757 = vmatpush1.xpose.msra.mxu0 0.0
  %5758 = vmatprep.subr.mxu0 0.0
  %5759 = vmatpush1.xpose.msra.mxu0 0.0
  %5760 = vmatprep.subr.mxu0 0.0
  %5761 = vmatpush1.xpose.msra.mxu0 0.0
  %5762 = vmatprep.subr.mxu0 0.0
  %5763 = vmatpush1.xpose.msra.mxu0 0.0
  %5764 = vmatprep.subr.mxu0 0.0
  %5765 = vmatpush1.xpose.msra.mxu0 0.0
  %5766 = vmatprep.subr.mxu0 0.0
  %5767 = vmatpush1.xpose.msra.mxu0 0.0
  %5768 = vmatprep.subr.mxu0 0.0
  %5769 = vmatpush1.xpose.msra.mxu0 0.0
  %5770 = vmatprep.subr.mxu0 0.0
  %5771 = vmatpush1.xpose.msra.mxu0 0.0
  %5772 = vmatprep.subr.mxu0 0.0
  %5773 = vmatpush1.xpose.msra.mxu0 0.0
  %5774 = vmatprep.subr.mxu0 0.0
  %5775 = vmatpush1.xpose.msra.mxu0 0.0
  %5776 = vmatprep.subr.mxu0 0.0
  %5777 = vmatpush1.xpose.msra.mxu0 0.0
  %5778 = vmatprep.subr.mxu0 0.0
  %5779 = vmatpush1.xpose.msra.mxu0 0.0
  %5780 = vmatprep.subr.mxu0 0.0
  %5781 = vmatpush1.xpose.msra.mxu0 0.0
  %5782 = vmatprep.subr.mxu0 0.0
  %5783 = vmatpush1.xpose.msra.mxu0 0.0
  %5784 = vmatprep.subr.mxu0 0.0
  %5785 = vmatpush1.xpose.msra.mxu0 0.0
  %5786 = vmatprep.subr.mxu0 0.0
  %5787 = vmatpush1.xpose.msra.mxu0 0.0
  %5788 = vmatprep.subr.mxu0 0.0
  %5789 = vmatpush1.xpose.msra.mxu0 0.0
  %5790 = vmatprep.subr.mxu0 0.0
  %5791 = vmatpush1.xpose.msra.mxu0 0.0
  %5792 = vmatprep.subr.mxu0 0.0
  %5793 = vmatpush1.xpose.msra.mxu0 0.0
  %5794 = vmatprep.subr.mxu0 0.0
  %5795 = vmatpush1.xpose.msra.mxu0 0.0
  %5796 = vmatprep.subr.mxu0 0.0
  %5797 = vmatpush1.xpose.msra.mxu0 0.0
  %5798 = vmatprep.subr.mxu0 0.0
  %5799 = vmatpush1.xpose.msra.mxu0 0.0
  %5800 = vmatprep.mubr.f32.mxu0 0.0
  %5801 = vmatmul.mubr.f32.gmra.mrb[0].mxu0 %v5716
  %v5802 = vpop.f32.mrb[0].mxu0
  %v5803 = vadd.f32 %v1838, %v5802
  %v5804 = vpop.f32.mrb[0].mxu0
  %5805 = vmatprep.mubr.f32.mxu0 0.0
  %5806 = vmatmul.mubr.f32.gmra.mrb[0].mxu0 %v5718
  %v5807 = vpop.f32.mrb[0].mxu0
  %v5808 = vadd.f32 %v1839, %v5807
  %v5809 = vpop.f32.mrb[0].mxu0
  %5810 = vmatprep.mubr.f32.mxu0 0.0
  %5811 = vmatmul.mubr.f32.gmra.mrb[0].mxu0 %v5720
  %v5812 = vpop.f32.mrb[0].mxu0
  %v5813 = vadd.f32 %v1840, %v5812
  %v5814 = vpop.f32.mrb[0].mxu0
  %5815 = vmatprep.mubr.f32.mxu0 0.0
  %5816 = vmatmul.mubr.f32.gmra.mrb[0].mxu0 %v5722
  %v5817 = vpop.f32.mrb[0].mxu0
  %v5818 = vadd.f32 %v1841, %v5817
  %v5819 = vpop.f32.mrb[0].mxu0
  %5820 = vmatprep.mubr.f32.mxu0 0.0
  %5821 = vmatmul.mubr.f32.gmra.mrb[0].mxu0 %v5724
  %v5822 = vpop.f32.mrb[0].mxu0
  %v5823 = vadd.f32 %v1842, %v5822
  %v5824 = vpop.f32.mrb[0].mxu0
  %5825 = vdwg.mxu0
  %5831 = vrot.lane.b32.xlu0 %v5221, 96
  %v5832 = vpop.permute.xlu0 %5831
  %5833 = vrot.lane.b32.xlu0 %v5222, 96
  %v5834 = vpop.permute.xlu0 %5833
  %5835 = vrot.lane.b32.xlu0 %v5223, 96
  %v5836 = vpop.permute.xlu0 %5835
  %5837 = vrot.lane.b32.xlu0 %v5224, 96
  %v5838 = vpop.permute.xlu0 %5837
  %5839 = vrot.lane.b32.xlu0 %v5225, 96
  %v5840 = vpop.permute.xlu0 %5839
  %5846 = vrot.lane.b32.xlu0 %v5401, 96
  %v5847 = vpop.permute.xlu0 %5846
  %5848 = vrot.lane.b32.xlu0 %v5402, 96
  %v5849 = vpop.permute.xlu0 %5848
  %5850 = vrot.lane.b32.xlu0 %v5403, 96
  %v5851 = vpop.permute.xlu0 %5850
  %5852 = vrot.lane.b32.xlu0 %v5404, 96
  %v5853 = vpop.permute.xlu0 %5852
  %5854 = vrot.lane.b32.xlu0 %v5405, 96
  %v5855 = vpop.permute.xlu0 %5854
  %v5856 = vsel %vm1868, %v5832, 0
  %v5858 = vsel %vm1868, %v5834, 0
  %v5860 = vsel %vm1868, %v5836, 0
  %v5862 = vsel %vm1868, %v5838, 0
  %v5864 = vsel %vm1868, %v5840, 0
  %v5866 = vsel %vm1868, %v5847, 0
  %v5868 = vsel %vm1868, %v5849, 0
  %v5870 = vsel %vm1868, %v5851, 0
  %v5872 = vsel %vm1868, %v5853, 0
  %v5874 = vsel %vm1868, %v5855, 0
  %5876 = vmatprep.subr.mxu0 0.0
  %5877 = vmatpush1.xpose.msra.mxu0 %v5866
  %5878 = vmatprep.subr.mxu0 0.0
  %5879 = vmatpush1.xpose.msra.mxu0 %v5868
  %5880 = vmatprep.subr.mxu0 0.0
  %5881 = vmatpush1.xpose.msra.mxu0 %v5870
  %5882 = vmatprep.subr.mxu0 0.0
  %5883 = vmatpush1.xpose.msra.mxu0 %v5872
  %5884 = vmatprep.subr.mxu0 0.0
  %5885 = vmatpush1.xpose.msra.mxu0 %v5874
  %5886 = vmatprep.subr.mxu0 0.0
  %5887 = vmatpush1.xpose.msra.mxu0 0.0
  %5888 = vmatprep.subr.mxu0 0.0
  %5889 = vmatpush1.xpose.msra.mxu0 0.0
  %5890 = vmatprep.subr.mxu0 0.0
  %5891 = vmatpush1.xpose.msra.mxu0 0.0
  %5892 = vmatprep.subr.mxu0 0.0
  %5893 = vmatpush1.xpose.msra.mxu0 0.0
  %5894 = vmatprep.subr.mxu0 0.0
  %5895 = vmatpush1.xpose.msra.mxu0 0.0
  %5896 = vmatprep.subr.mxu0 0.0
  %5897 = vmatpush1.xpose.msra.mxu0 0.0
  %5898 = vmatprep.subr.mxu0 0.0
  %5899 = vmatpush1.xpose.msra.mxu0 0.0
  %5900 = vmatprep.subr.mxu0 0.0
  %5901 = vmatpush1.xpose.msra.mxu0 0.0
  %5902 = vmatprep.subr.mxu0 0.0
  %5903 = vmatpush1.xpose.msra.mxu0 0.0
  %5904 = vmatprep.subr.mxu0 0.0
  %5905 = vmatpush1.xpose.msra.mxu0 0.0
  %5906 = vmatprep.subr.mxu0 0.0
  %5907 = vmatpush1.xpose.msra.mxu0 0.0
  %5908 = vmatprep.subr.mxu0 0.0
  %5909 = vmatpush1.xpose.msra.mxu0 0.0
  %5910 = vmatprep.subr.mxu0 0.0
  %5911 = vmatpush1.xpose.msra.mxu0 0.0
  %5912 = vmatprep.subr.mxu0 0.0
  %5913 = vmatpush1.xpose.msra.mxu0 0.0
  %5914 = vmatprep.subr.mxu0 0.0
  %5915 = vmatpush1.xpose.msra.mxu0 0.0
  %5916 = vmatprep.subr.mxu0 0.0
  %5917 = vmatpush1.xpose.msra.mxu0 0.0
  %5918 = vmatprep.subr.mxu0 0.0
  %5919 = vmatpush1.xpose.msra.mxu0 0.0
  %5920 = vmatprep.subr.mxu0 0.0
  %5921 = vmatpush1.xpose.msra.mxu0 0.0
  %5922 = vmatprep.subr.mxu0 0.0
  %5923 = vmatpush1.xpose.msra.mxu0 0.0
  %5924 = vmatprep.subr.mxu0 0.0
  %5925 = vmatpush1.xpose.msra.mxu0 0.0
  %5926 = vmatprep.subr.mxu0 0.0
  %5927 = vmatpush1.xpose.msra.mxu0 0.0
  %5928 = vmatprep.subr.mxu0 0.0
  %5929 = vmatpush1.xpose.msra.mxu0 0.0
  %5930 = vmatprep.subr.mxu0 0.0
  %5931 = vmatpush1.xpose.msra.mxu0 0.0
  %5932 = vmatprep.subr.mxu0 0.0
  %5933 = vmatpush1.xpose.msra.mxu0 0.0
  %5934 = vmatprep.subr.mxu0 0.0
  %5935 = vmatpush1.xpose.msra.mxu0 0.0
  %5936 = vmatprep.subr.mxu0 0.0
  %5937 = vmatpush1.xpose.msra.mxu0 0.0
  %5938 = vmatprep.subr.mxu0 0.0
  %5939 = vmatpush1.xpose.msra.mxu0 0.0
  %5940 = vmatprep.mubr.f32.mxu0 0.0
  %5941 = vmatmul.mubr.f32.gmra.mrb[0].mxu0 %v5856
  %v5942 = vpop.f32.mrb[0].mxu0
  %v5943 = vadd.f32 %v1838, %v5942
  %v5944 = vpop.f32.mrb[0].mxu0
  %5945 = vmatprep.mubr.f32.mxu0 0.0
  %5946 = vmatmul.mubr.f32.gmra.mrb[0].mxu0 %v5858
  %v5947 = vpop.f32.mrb[0].mxu0
  %v5948 = vadd.f32 %v1839, %v5947
  %v5949 = vpop.f32.mrb[0].mxu0
  %5950 = vmatprep.mubr.f32.mxu0 0.0
  %5951 = vmatmul.mubr.f32.gmra.mrb[0].mxu0 %v5860
  %v5952 = vpop.f32.mrb[0].mxu0
  %v5953 = vadd.f32 %v1840, %v5952
  %v5954 = vpop.f32.mrb[0].mxu0
  %5955 = vmatprep.mubr.f32.mxu0 0.0
  %5956 = vmatmul.mubr.f32.gmra.mrb[0].mxu0 %v5862
  %v5957 = vpop.f32.mrb[0].mxu0
  %v5958 = vadd.f32 %v1841, %v5957
  %v5959 = vpop.f32.mrb[0].mxu0
  %5960 = vmatprep.mubr.f32.mxu0 0.0
  %5961 = vmatmul.mubr.f32.gmra.mrb[0].mxu0 %v5864
  %v5962 = vpop.f32.mrb[0].mxu0
  %v5963 = vadd.f32 %v1842, %v5962
  %v5964 = vpop.f32.mrb[0].mxu0
  %5965 = vdwg.mxu0
  %v5966 = vsel %vm1808, %v5523, -3.4028235e+38
  %v5967 = vsel %vm1809, %v5528, -3.4028235e+38
  %v5968 = vsel %vm1810, %v5533, -3.4028235e+38
  %v5969 = vsel %vm1811, %v5538, -3.4028235e+38
  %v5970 = vsel %vm1812, %v5543, -3.4028235e+38
  %v5971 = vsel %vm1813, %v5663, -3.4028235e+38
  %v5972 = vsel %vm1814, %v5668, -3.4028235e+38
  %v5973 = vsel %vm1815, %v5673, -3.4028235e+38
  %v5974 = vsel %vm1816, %v5678, -3.4028235e+38
  %v5975 = vsel %vm1817, %v5683, -3.4028235e+38
  %v5976 = vsel %vm1818, %v5803, -3.4028235e+38
  %v5977 = vsel %vm1819, %v5808, -3.4028235e+38
  %v5978 = vsel %vm1820, %v5813, -3.4028235e+38
  %v5979 = vsel %vm1821, %v5818, -3.4028235e+38
  %v5980 = vsel %vm1822, %v5823, -3.4028235e+38
  %v5981 = vsel %vm1823, %v5943, -3.4028235e+38
  %v5982 = vsel %vm1824, %v5948, -3.4028235e+38
  %v5983 = vsel %vm1825, %v5953, -3.4028235e+38
  %v5984 = vsel %vm1826, %v5958, -3.4028235e+38
  %v5985 = vsel %vm1827, %v5963, -3.4028235e+38
  %v5986 = vsel %vm2651, %v5966, -inf
  %5987 = vmax.xlane.f32.xlu0 %v5986
  %v5988 = vpop.xlane.xlu0 %5987
  %v5989 = vsel %vm2651, %v5967, -inf
  %5990 = vmax.xlane.f32.xlu0 %v5989
  %v5991 = vpop.xlane.xlu0 %5990
  %v5992 = vsel %vm2651, %v5968, -inf
  %5993 = vmax.xlane.f32.xlu0 %v5992
  %v5994 = vpop.xlane.xlu0 %5993
  %v5995 = vsel %vm2651, %v5969, -inf
  %5996 = vmax.xlane.f32.xlu0 %v5995
  %v5997 = vpop.xlane.xlu0 %5996
  %v5998 = vsel %vm2664, %v5970, -inf
  %5999 = vmax.xlane.f32.xlu0 %v5998
  %v6000 = vpop.xlane.xlu0 %5999
  %v6001 = vsel %vm2651, %v5971, -inf
  %6002 = vmax.xlane.f32.xlu0 %v6001
  %v6003 = vpop.xlane.xlu0 %6002
  %v6004 = vsel %vm2651, %v5972, -inf
  %6005 = vmax.xlane.f32.xlu0 %v6004
  %v6006 = vpop.xlane.xlu0 %6005
  %v6007 = vsel %vm2651, %v5973, -inf
  %6008 = vmax.xlane.f32.xlu0 %v6007
  %v6009 = vpop.xlane.xlu0 %6008
  %v6010 = vsel %vm2651, %v5974, -inf
  %6011 = vmax.xlane.f32.xlu0 %v6010
  %v6012 = vpop.xlane.xlu0 %6011
  %v6013 = vsel %vm2664, %v5975, -inf
  %6014 = vmax.xlane.f32.xlu0 %v6013
  %v6015 = vpop.xlane.xlu0 %6014
  %v6016 = vsel %vm2651, %v5976, -inf
  %6017 = vmax.xlane.f32.xlu0 %v6016
  %v6018 = vpop.xlane.xlu0 %6017
  %v6019 = vsel %vm2651, %v5977, -inf
  %6020 = vmax.xlane.f32.xlu0 %v6019
  %v6021 = vpop.xlane.xlu0 %6020
  %v6022 = vsel %vm2651, %v5978, -inf
  %6023 = vmax.xlane.f32.xlu0 %v6022
  %v6024 = vpop.xlane.xlu0 %6023
  %v6025 = vsel %vm2651, %v5979, -inf
  %6026 = vmax.xlane.f32.xlu0 %v6025
  %v6027 = vpop.xlane.xlu0 %6026
  %v6028 = vsel %vm2664, %v5980, -inf
  %6029 = vmax.xlane.f32.xlu0 %v6028
  %v6030 = vpop.xlane.xlu0 %6029
  %v6031 = vsel %vm2651, %v5981, -inf
  %6032 = vmax.xlane.f32.xlu0 %v6031
  %v6033 = vpop.xlane.xlu0 %6032
  %v6034 = vsel %vm2651, %v5982, -inf
  %6035 = vmax.xlane.f32.xlu0 %v6034
  %v6036 = vpop.xlane.xlu0 %6035
  %v6037 = vsel %vm2651, %v5983, -inf
  %6038 = vmax.xlane.f32.xlu0 %v6037
  %v6039 = vpop.xlane.xlu0 %6038
  %v6040 = vsel %vm2651, %v5984, -inf
  %6041 = vmax.xlane.f32.xlu0 %v6040
  %v6042 = vpop.xlane.xlu0 %6041
  %v6043 = vsel %vm2664, %v5985, -inf
  %6044 = vmax.xlane.f32.xlu0 %v6043
  %v6045 = vpop.xlane.xlu0 %6044
  %v6046 = vsub.f32 %v5966, %v5988
  %v6047 = vsub.f32 %v5967, %v5991
  %v6048 = vsub.f32 %v5968, %v5994
  %v6049 = vsub.f32 %v5969, %v5997
  %v6050 = vsub.f32 %v5970, %v6000
  %v6051 = vsub.f32 %v5971, %v6003
  %v6052 = vsub.f32 %v5972, %v6006
  %v6053 = vsub.f32 %v5973, %v6009
  %v6054 = vsub.f32 %v5974, %v6012
  %v6055 = vsub.f32 %v5975, %v6015
  %v6056 = vsub.f32 %v5976, %v6018
  %v6057 = vsub.f32 %v5977, %v6021
  %v6058 = vsub.f32 %v5978, %v6024
  %v6059 = vsub.f32 %v5979, %v6027
  %v6060 = vsub.f32 %v5980, %v6030
  %v6061 = vsub.f32 %v5981, %v6033
  %v6062 = vsub.f32 %v5982, %v6036
  %v6063 = vsub.f32 %v5983, %v6039
  %v6064 = vsub.f32 %v5984, %v6042
  %v6065 = vsub.f32 %v5985, %v6045
  %v6066 = vmul.f32 %v6046, 1.442695
  %v6067 = vpow.pop %v6066
  %v6068 = vmul.f32 %v6047, 1.442695
  %v6069 = vpow.pop %v6068
  %v6070 = vmul.f32 %v6048, 1.442695
  %v6071 = vpow.pop %v6070
  %v6072 = vmul.f32 %v6049, 1.442695
  %v6073 = vpow.pop %v6072
  %v6074 = vmul.f32 %v6050, 1.442695
  %v6075 = vpow.pop %v6074
  %v6076 = vmul.f32 %v6051, 1.442695
  %v6077 = vpow.pop %v6076
  %v6078 = vmul.f32 %v6052, 1.442695
  %v6079 = vpow.pop %v6078
  %v6080 = vmul.f32 %v6053, 1.442695
  %v6081 = vpow.pop %v6080
  %v6082 = vmul.f32 %v6054, 1.442695
  %v6083 = vpow.pop %v6082
  %v6084 = vmul.f32 %v6055, 1.442695
  %v6085 = vpow.pop %v6084
  %v6086 = vmul.f32 %v6056, 1.442695
  %v6087 = vpow.pop %v6086
  %v6088 = vmul.f32 %v6057, 1.442695
  %v6089 = vpow.pop %v6088
  %v6090 = vmul.f32 %v6058, 1.442695
  %v6091 = vpow.pop %v6090
  %v6092 = vmul.f32 %v6059, 1.442695
  %v6093 = vpow.pop %v6092
  %v6094 = vmul.f32 %v6060, 1.442695
  %v6095 = vpow.pop %v6094
  %v6096 = vmul.f32 %v6061, 1.442695
  %v6097 = vpow.pop %v6096
  %v6098 = vmul.f32 %v6062, 1.442695
  %v6099 = vpow.pop %v6098
  %v6100 = vmul.f32 %v6063, 1.442695
  %v6101 = vpow.pop %v6100
  %v6102 = vmul.f32 %v6064, 1.442695
  %v6103 = vpow.pop %v6102
  %v6104 = vmul.f32 %v6065, 1.442695
  %v6105 = vpow.pop %v6104
  %v6106 = vsel %vm2651, %v6067, 0.0
  %6107 = vadd.xlane.f32.xlu0 %v6106
  %v6108 = vpop.xlane.xlu0 %6107
  %v6109 = vsel %vm2651, %v6069, 0.0
  %6110 = vadd.xlane.f32.xlu0 %v6109
  %v6111 = vpop.xlane.xlu0 %6110
  %v6112 = vsel %vm2651, %v6071, 0.0
  %6113 = vadd.xlane.f32.xlu0 %v6112
  %v6114 = vpop.xlane.xlu0 %6113
  %v6115 = vsel %vm2651, %v6073, 0.0
  %6116 = vadd.xlane.f32.xlu0 %v6115
  %v6117 = vpop.xlane.xlu0 %6116
  %v6118 = vsel %vm2664, %v6075, 0.0
  %6119 = vadd.xlane.f32.xlu0 %v6118
  %v6120 = vpop.xlane.xlu0 %6119
  %v6121 = vsel %vm2651, %v6077, 0.0
  %6122 = vadd.xlane.f32.xlu0 %v6121
  %v6123 = vpop.xlane.xlu0 %6122
  %v6124 = vsel %vm2651, %v6079, 0.0
  %6125 = vadd.xlane.f32.xlu0 %v6124
  %v6126 = vpop.xlane.xlu0 %6125
  %v6127 = vsel %vm2651, %v6081, 0.0
  %6128 = vadd.xlane.f32.xlu0 %v6127
  %v6129 = vpop.xlane.xlu0 %6128
  %v6130 = vsel %vm2651, %v6083, 0.0
  %6131 = vadd.xlane.f32.xlu0 %v6130
  %v6132 = vpop.xlane.xlu0 %6131
  %v6133 = vsel %vm2664, %v6085, 0.0
  %6134 = vadd.xlane.f32.xlu0 %v6133
  %v6135 = vpop.xlane.xlu0 %6134
  %v6136 = vsel %vm2651, %v6087, 0.0
  %6137 = vadd.xlane.f32.xlu0 %v6136
  %v6138 = vpop.xlane.xlu0 %6137
  %v6139 = vsel %vm2651, %v6089, 0.0
  %6140 = vadd.xlane.f32.xlu0 %v6139
  %v6141 = vpop.xlane.xlu0 %6140
  %v6142 = vsel %vm2651, %v6091, 0.0
  %6143 = vadd.xlane.f32.xlu0 %v6142
  %v6144 = vpop.xlane.xlu0 %6143
  %v6145 = vsel %vm2651, %v6093, 0.0
  %6146 = vadd.xlane.f32.xlu0 %v6145
  %v6147 = vpop.xlane.xlu0 %6146
  %v6148 = vsel %vm2664, %v6095, 0.0
  %6149 = vadd.xlane.f32.xlu0 %v6148
  %v6150 = vpop.xlane.xlu0 %6149
  %v6151 = vsel %vm2651, %v6097, 0.0
  %6152 = vadd.xlane.f32.xlu0 %v6151
  %v6153 = vpop.xlane.xlu0 %6152
  %v6154 = vsel %vm2651, %v6099, 0.0
  %6155 = vadd.xlane.f32.xlu0 %v6154
  %v6156 = vpop.xlane.xlu0 %6155
  %v6157 = vsel %vm2651, %v6101, 0.0
  %6158 = vadd.xlane.f32.xlu0 %v6157
  %v6159 = vpop.xlane.xlu0 %6158
  %v6160 = vsel %vm2651, %v6103, 0.0
  %6161 = vadd.xlane.f32.xlu0 %v6160
  %v6162 = vpop.xlane.xlu0 %6161
  %v6163 = vsel %vm2664, %v6105, 0.0
  %6164 = vadd.xlane.f32.xlu0 %v6163
  %v6165 = vpop.xlane.xlu0 %6164
  %v6166 = vrcp.pop %v6108
  %v6167 = vmul.f32 %v6067, %v6166
  %v6168 = vrcp.pop %v6111
  %v6169 = vmul.f32 %v6069, %v6168
  %v6170 = vrcp.pop %v6114
  %v6171 = vmul.f32 %v6071, %v6170
  %v6172 = vrcp.pop %v6117
  %v6173 = vmul.f32 %v6073, %v6172
  %v6174 = vrcp.pop %v6120
  %v6175 = vmul.f32 %v6075, %v6174
  %v6176 = vrcp.pop %v6123
  %v6177 = vmul.f32 %v6077, %v6176
  %v6178 = vrcp.pop %v6126
  %v6179 = vmul.f32 %v6079, %v6178
  %v6180 = vrcp.pop %v6129
  %v6181 = vmul.f32 %v6081, %v6180
  %v6182 = vrcp.pop %v6132
  %v6183 = vmul.f32 %v6083, %v6182
  %v6184 = vrcp.pop %v6135
  %v6185 = vmul.f32 %v6085, %v6184
  %v6186 = vrcp.pop %v6138
  %v6187 = vmul.f32 %v6087, %v6186
  %v6188 = vrcp.pop %v6141
  %v6189 = vmul.f32 %v6089, %v6188
  %v6190 = vrcp.pop %v6144
  %v6191 = vmul.f32 %v6091, %v6190
  %v6192 = vrcp.pop %v6147
  %v6193 = vmul.f32 %v6093, %v6192
  %v6194 = vrcp.pop %v6150
  %v6195 = vmul.f32 %v6095, %v6194
  %v6196 = vrcp.pop %v6153
  %v6197 = vmul.f32 %v6097, %v6196
  %v6198 = vrcp.pop %v6156
  %v6199 = vmul.f32 %v6099, %v6198
  %v6200 = vrcp.pop %v6159
  %v6201 = vmul.f32 %v6101, %v6200
  %v6202 = vrcp.pop %v6162
  %v6203 = vmul.f32 %v6103, %v6202
  %v6204 = vrcp.pop %v6165
  %v6205 = vmul.f32 %v6105, %v6204
  %6206 = vrot.lane.b32.xlu0 %v1263, 96
  %v6207 = vpop.permute.xlu0 %6206
  %6208 = vrot.lane.b32.xlu0 %v1268, 96
  %v6209 = vpop.permute.xlu0 %6208
  %6210 = vrot.lane.b32.xlu0 %v1273, 96
  %v6211 = vpop.permute.xlu0 %6210
  %6212 = vrot.lane.b32.xlu0 %v1278, 96
  %v6213 = vpop.permute.xlu0 %6212
  %6214 = vrot.lane.b32.xlu0 %v1283, 96
  %v6215 = vpop.permute.xlu0 %6214
  %v6221 = vsel %vm2651, %v6167, 0
  %v6224 = vsel %vm2651, %v6169, 0
  %v6227 = vsel %vm2651, %v6171, 0
  %v6230 = vsel %vm2651, %v6173, 0
  %v6233 = vsel %vm2651, %v6175, 0
  %v6235 = vsel %vm2888, %v6215, 0
  %6237 = vmatprep.subr.mxu0 0.0
  %6238 = vmatpush1.msra.mxu0 %v6207
  %6239 = vmatprep.subr.mxu0 0.0
  %6240 = vmatpush1.msra.mxu0 %v6209
  %6241 = vmatprep.subr.mxu0 0.0
  %6242 = vmatpush1.msra.mxu0 %v6211
  %6243 = vmatprep.subr.mxu0 0.0
  %6244 = vmatpush1.msra.mxu0 %v6213
  %6245 = vmatprep.subr.mxu0 0.0
  %6246 = vmatpush1.msra.mxu0 %v6235
  %6247 = vmatprep.subr.mxu0 0.0
  %6248 = vmatpush1.msra.mxu0 0.0
  %6249 = vmatprep.subr.mxu0 0.0
  %6250 = vmatpush1.msra.mxu0 0.0
  %6251 = vmatprep.subr.mxu0 0.0
  %6252 = vmatpush1.msra.mxu0 0.0
  %6253 = vmatprep.subr.mxu0 0.0
  %6254 = vmatpush1.msra.mxu0 0.0
  %6255 = vmatprep.subr.mxu0 0.0
  %6256 = vmatpush1.msra.mxu0 0.0
  %6257 = vmatprep.subr.mxu0 0.0
  %6258 = vmatpush1.msra.mxu0 0.0
  %6259 = vmatprep.subr.mxu0 0.0
  %6260 = vmatpush1.msra.mxu0 0.0
  %6261 = vmatprep.subr.mxu0 0.0
  %6262 = vmatpush1.msra.mxu0 0.0
  %6263 = vmatprep.subr.mxu0 0.0
  %6264 = vmatpush1.msra.mxu0 0.0
  %6265 = vmatprep.subr.mxu0 0.0
  %6266 = vmatpush1.msra.mxu0 0.0
  %6267 = vmatprep.subr.mxu0 0.0
  %6268 = vmatpush1.msra.mxu0 0.0
  %6269 = vmatprep.subr.mxu0 0.0
  %6270 = vmatpush1.msra.mxu0 0.0
  %6271 = vmatprep.subr.mxu0 0.0
  %6272 = vmatpush1.msra.mxu0 0.0
  %6273 = vmatprep.subr.mxu0 0.0
  %6274 = vmatpush1.msra.mxu0 0.0
  %6275 = vmatprep.subr.mxu0 0.0
  %6276 = vmatpush1.msra.mxu0 0.0
  %6277 = vmatprep.subr.mxu0 0.0
  %6278 = vmatpush1.msra.mxu0 0.0
  %6279 = vmatprep.subr.mxu0 0.0
  %6280 = vmatpush1.msra.mxu0 0.0
  %6281 = vmatprep.subr.mxu0 0.0
  %6282 = vmatpush1.msra.mxu0 0.0
  %6283 = vmatprep.subr.mxu0 0.0
  %6284 = vmatpush1.msra.mxu0 0.0
  %6285 = vmatprep.subr.mxu0 0.0
  %6286 = vmatpush1.msra.mxu0 0.0
  %6287 = vmatprep.subr.mxu0 0.0
  %6288 = vmatpush1.msra.mxu0 0.0
  %6289 = vmatprep.subr.mxu0 0.0
  %6290 = vmatpush1.msra.mxu0 0.0
  %6291 = vmatprep.subr.mxu0 0.0
  %6292 = vmatpush1.msra.mxu0 0.0
  %6293 = vmatprep.subr.mxu0 0.0
  %6294 = vmatpush1.msra.mxu0 0.0
  %6295 = vmatprep.subr.mxu0 0.0
  %6296 = vmatpush1.msra.mxu0 0.0
  %6297 = vmatprep.subr.mxu0 0.0
  %6298 = vmatpush1.msra.mxu0 0.0
  %6299 = vmatprep.subr.mxu0 0.0
  %6300 = vmatpush1.msra.mxu0 0.0
  %6301 = vmatprep.mubr.f32.mxu0 0.0
  %6302 = vmatmul.mubr.f32.gmra.mrb[0].mxu0 %v6221
  %v6303 = vpop.f32.mrb[0].mxu0
  %v6304 = vadd.f32 0.0, %v6303
  %v6305 = vpop.f32.mrb[0].mxu0
  %6306 = vmatprep.mubr.f32.mxu0 0.0
  %6307 = vmatmul.mubr.f32.gmra.mrb[0].mxu0 %v6224
  %v6308 = vpop.f32.mrb[0].mxu0
  %v6309 = vadd.f32 0.0, %v6308
  %v6310 = vpop.f32.mrb[0].mxu0
  %6311 = vmatprep.mubr.f32.mxu0 0.0
  %6312 = vmatmul.mubr.f32.gmra.mrb[0].mxu0 %v6227
  %v6313 = vpop.f32.mrb[0].mxu0
  %v6314 = vadd.f32 0.0, %v6313
  %v6315 = vpop.f32.mrb[0].mxu0
  %6316 = vmatprep.mubr.f32.mxu0 0.0
  %6317 = vmatmul.mubr.f32.gmra.mrb[0].mxu0 %v6230
  %v6318 = vpop.f32.mrb[0].mxu0
  %v6319 = vadd.f32 0.0, %v6318
  %v6320 = vpop.f32.mrb[0].mxu0
  %6321 = vmatprep.mubr.f32.mxu0 0.0
  %6322 = vmatmul.mubr.f32.gmra.mrb[0].mxu0 %v6233
  %v6323 = vpop.f32.mrb[0].mxu0
  %v6324 = vadd.f32 0.0, %v6323
  %v6325 = vpop.f32.mrb[0].mxu0
  %6326 = vdwg.mxu0
  %6327 = vrot.lane.b32.xlu0 %v1353, 96
  %v6328 = vpop.permute.xlu0 %6327
  %6329 = vrot.lane.b32.xlu0 %v1358, 96
  %v6330 = vpop.permute.xlu0 %6329
  %6331 = vrot.lane.b32.xlu0 %v1363, 96
  %v6332 = vpop.permute.xlu0 %6331
  %6333 = vrot.lane.b32.xlu0 %v1368, 96
  %v6334 = vpop.permute.xlu0 %6333
  %6335 = vrot.lane.b32.xlu0 %v1373, 96
  %v6336 = vpop.permute.xlu0 %6335
  %v6342 = vsel %vm2651, %v6177, 0
  %v6345 = vsel %vm2651, %v6179, 0
  %v6348 = vsel %vm2651, %v6181, 0
  %v6351 = vsel %vm2651, %v6183, 0
  %v6354 = vsel %vm2651, %v6185, 0
  %v6356 = vsel %vm2888, %v6336, 0
  %6358 = vmatprep.subr.mxu0 0.0
  %6359 = vmatpush1.msra.mxu0 %v6328
  %6360 = vmatprep.subr.mxu0 0.0
  %6361 = vmatpush1.msra.mxu0 %v6330
  %6362 = vmatprep.subr.mxu0 0.0
  %6363 = vmatpush1.msra.mxu0 %v6332
  %6364 = vmatprep.subr.mxu0 0.0
  %6365 = vmatpush1.msra.mxu0 %v6334
  %6366 = vmatprep.subr.mxu0 0.0
  %6367 = vmatpush1.msra.mxu0 %v6356
  %6368 = vmatprep.subr.mxu0 0.0
  %6369 = vmatpush1.msra.mxu0 0.0
  %6370 = vmatprep.subr.mxu0 0.0
  %6371 = vmatpush1.msra.mxu0 0.0
  %6372 = vmatprep.subr.mxu0 0.0
  %6373 = vmatpush1.msra.mxu0 0.0
  %6374 = vmatprep.subr.mxu0 0.0
  %6375 = vmatpush1.msra.mxu0 0.0
  %6376 = vmatprep.subr.mxu0 0.0
  %6377 = vmatpush1.msra.mxu0 0.0
  %6378 = vmatprep.subr.mxu0 0.0
  %6379 = vmatpush1.msra.mxu0 0.0
  %6380 = vmatprep.subr.mxu0 0.0
  %6381 = vmatpush1.msra.mxu0 0.0
  %6382 = vmatprep.subr.mxu0 0.0
  %6383 = vmatpush1.msra.mxu0 0.0
  %6384 = vmatprep.subr.mxu0 0.0
  %6385 = vmatpush1.msra.mxu0 0.0
  %6386 = vmatprep.subr.mxu0 0.0
  %6387 = vmatpush1.msra.mxu0 0.0
  %6388 = vmatprep.subr.mxu0 0.0
  %6389 = vmatpush1.msra.mxu0 0.0
  %6390 = vmatprep.subr.mxu0 0.0
  %6391 = vmatpush1.msra.mxu0 0.0
  %6392 = vmatprep.subr.mxu0 0.0
  %6393 = vmatpush1.msra.mxu0 0.0
  %6394 = vmatprep.subr.mxu0 0.0
  %6395 = vmatpush1.msra.mxu0 0.0
  %6396 = vmatprep.subr.mxu0 0.0
  %6397 = vmatpush1.msra.mxu0 0.0
  %6398 = vmatprep.subr.mxu0 0.0
  %6399 = vmatpush1.msra.mxu0 0.0
  %6400 = vmatprep.subr.mxu0 0.0
  %6401 = vmatpush1.msra.mxu0 0.0
  %6402 = vmatprep.subr.mxu0 0.0
  %6403 = vmatpush1.msra.mxu0 0.0
  %6404 = vmatprep.subr.mxu0 0.0
  %6405 = vmatpush1.msra.mxu0 0.0
  %6406 = vmatprep.subr.mxu0 0.0
  %6407 = vmatpush1.msra.mxu0 0.0
  %6408 = vmatprep.subr.mxu0 0.0
  %6409 = vmatpush1.msra.mxu0 0.0
  %6410 = vmatprep.subr.mxu0 0.0
  %6411 = vmatpush1.msra.mxu0 0.0
  %6412 = vmatprep.subr.mxu0 0.0
  %6413 = vmatpush1.msra.mxu0 0.0
  %6414 = vmatprep.subr.mxu0 0.0
  %6415 = vmatpush1.msra.mxu0 0.0
  %6416 = vmatprep.subr.mxu0 0.0
  %6417 = vmatpush1.msra.mxu0 0.0
  %6418 = vmatprep.subr.mxu0 0.0
  %6419 = vmatpush1.msra.mxu0 0.0
  %6420 = vmatprep.subr.mxu0 0.0
  %6421 = vmatpush1.msra.mxu0 0.0
  %6422 = vmatprep.mubr.f32.mxu0 0.0
  %6423 = vmatmul.mubr.f32.gmra.mrb[0].mxu0 %v6342
  %v6424 = vpop.f32.mrb[0].mxu0
  %v6425 = vadd.f32 0.0, %v6424
  %v6426 = vpop.f32.mrb[0].mxu0
  %6427 = vmatprep.mubr.f32.mxu0 0.0
  %6428 = vmatmul.mubr.f32.gmra.mrb[0].mxu0 %v6345
  %v6429 = vpop.f32.mrb[0].mxu0
  %v6430 = vadd.f32 0.0, %v6429
  %v6431 = vpop.f32.mrb[0].mxu0
  %6432 = vmatprep.mubr.f32.mxu0 0.0
  %6433 = vmatmul.mubr.f32.gmra.mrb[0].mxu0 %v6348
  %v6434 = vpop.f32.mrb[0].mxu0
  %v6435 = vadd.f32 0.0, %v6434
  %v6436 = vpop.f32.mrb[0].mxu0
  %6437 = vmatprep.mubr.f32.mxu0 0.0
  %6438 = vmatmul.mubr.f32.gmra.mrb[0].mxu0 %v6351
  %v6439 = vpop.f32.mrb[0].mxu0
  %v6440 = vadd.f32 0.0, %v6439
  %v6441 = vpop.f32.mrb[0].mxu0
  %6442 = vmatprep.mubr.f32.mxu0 0.0
  %6443 = vmatmul.mubr.f32.gmra.mrb[0].mxu0 %v6354
  %v6444 = vpop.f32.mrb[0].mxu0
  %v6445 = vadd.f32 0.0, %v6444
  %v6446 = vpop.f32.mrb[0].mxu0
  %6447 = vdwg.mxu0
  %6448 = vrot.lane.b32.xlu0 %v1443, 96
  %v6449 = vpop.permute.xlu0 %6448
  %6450 = vrot.lane.b32.xlu0 %v1448, 96
  %v6451 = vpop.permute.xlu0 %6450
  %6452 = vrot.lane.b32.xlu0 %v1453, 96
  %v6453 = vpop.permute.xlu0 %6452
  %6454 = vrot.lane.b32.xlu0 %v1458, 96
  %v6455 = vpop.permute.xlu0 %6454
  %6456 = vrot.lane.b32.xlu0 %v1463, 96
  %v6457 = vpop.permute.xlu0 %6456
  %v6463 = vsel %vm2651, %v6187, 0
  %v6466 = vsel %vm2651, %v6189, 0
  %v6469 = vsel %vm2651, %v6191, 0
  %v6472 = vsel %vm2651, %v6193, 0
  %v6475 = vsel %vm2651, %v6195, 0
  %v6477 = vsel %vm2888, %v6457, 0
  %6479 = vmatprep.subr.mxu0 0.0
  %6480 = vmatpush1.msra.mxu0 %v6449
  %6481 = vmatprep.subr.mxu0 0.0
  %6482 = vmatpush1.msra.mxu0 %v6451
  %6483 = vmatprep.subr.mxu0 0.0
  %6484 = vmatpush1.msra.mxu0 %v6453
  %6485 = vmatprep.subr.mxu0 0.0
  %6486 = vmatpush1.msra.mxu0 %v6455
  %6487 = vmatprep.subr.mxu0 0.0
  %6488 = vmatpush1.msra.mxu0 %v6477
  %6489 = vmatprep.subr.mxu0 0.0
  %6490 = vmatpush1.msra.mxu0 0.0
  %6491 = vmatprep.subr.mxu0 0.0
  %6492 = vmatpush1.msra.mxu0 0.0
  %6493 = vmatprep.subr.mxu0 0.0
  %6494 = vmatpush1.msra.mxu0 0.0
  %6495 = vmatprep.subr.mxu0 0.0
  %6496 = vmatpush1.msra.mxu0 0.0
  %6497 = vmatprep.subr.mxu0 0.0
  %6498 = vmatpush1.msra.mxu0 0.0
  %6499 = vmatprep.subr.mxu0 0.0
  %6500 = vmatpush1.msra.mxu0 0.0
  %6501 = vmatprep.subr.mxu0 0.0
  %6502 = vmatpush1.msra.mxu0 0.0
  %6503 = vmatprep.subr.mxu0 0.0
  %6504 = vmatpush1.msra.mxu0 0.0
  %6505 = vmatprep.subr.mxu0 0.0
  %6506 = vmatpush1.msra.mxu0 0.0
  %6507 = vmatprep.subr.mxu0 0.0
  %6508 = vmatpush1.msra.mxu0 0.0
  %6509 = vmatprep.subr.mxu0 0.0
  %6510 = vmatpush1.msra.mxu0 0.0
  %6511 = vmatprep.subr.mxu0 0.0
  %6512 = vmatpush1.msra.mxu0 0.0
  %6513 = vmatprep.subr.mxu0 0.0
  %6514 = vmatpush1.msra.mxu0 0.0
  %6515 = vmatprep.subr.mxu0 0.0
  %6516 = vmatpush1.msra.mxu0 0.0
  %6517 = vmatprep.subr.mxu0 0.0
  %6518 = vmatpush1.msra.mxu0 0.0
  %6519 = vmatprep.subr.mxu0 0.0
  %6520 = vmatpush1.msra.mxu0 0.0
  %6521 = vmatprep.subr.mxu0 0.0
  %6522 = vmatpush1.msra.mxu0 0.0
  %6523 = vmatprep.subr.mxu0 0.0
  %6524 = vmatpush1.msra.mxu0 0.0
  %6525 = vmatprep.subr.mxu0 0.0
  %6526 = vmatpush1.msra.mxu0 0.0
  %6527 = vmatprep.subr.mxu0 0.0
  %6528 = vmatpush1.msra.mxu0 0.0
  %6529 = vmatprep.subr.mxu0 0.0
  %6530 = vmatpush1.msra.mxu0 0.0
  %6531 = vmatprep.subr.mxu0 0.0
  %6532 = vmatpush1.msra.mxu0 0.0
  %6533 = vmatprep.subr.mxu0 0.0
  %6534 = vmatpush1.msra.mxu0 0.0
  %6535 = vmatprep.subr.mxu0 0.0
  %6536 = vmatpush1.msra.mxu0 0.0
  %6537 = vmatprep.subr.mxu0 0.0
  %6538 = vmatpush1.msra.mxu0 0.0
  %6539 = vmatprep.subr.mxu0 0.0
  %6540 = vmatpush1.msra.mxu0 0.0
  %6541 = vmatprep.subr.mxu0 0.0
  %6542 = vmatpush1.msra.mxu0 0.0
  %6543 = vmatprep.mubr.f32.mxu0 0.0
  %6544 = vmatmul.mubr.f32.gmra.mrb[0].mxu0 %v6463
  %v6545 = vpop.f32.mrb[0].mxu0
  %v6546 = vadd.f32 0.0, %v6545
  %v6547 = vpop.f32.mrb[0].mxu0
  %6548 = vmatprep.mubr.f32.mxu0 0.0
  %6549 = vmatmul.mubr.f32.gmra.mrb[0].mxu0 %v6466
  %v6550 = vpop.f32.mrb[0].mxu0
  %v6551 = vadd.f32 0.0, %v6550
  %v6552 = vpop.f32.mrb[0].mxu0
  %6553 = vmatprep.mubr.f32.mxu0 0.0
  %6554 = vmatmul.mubr.f32.gmra.mrb[0].mxu0 %v6469
  %v6555 = vpop.f32.mrb[0].mxu0
  %v6556 = vadd.f32 0.0, %v6555
  %v6557 = vpop.f32.mrb[0].mxu0
  %6558 = vmatprep.mubr.f32.mxu0 0.0
  %6559 = vmatmul.mubr.f32.gmra.mrb[0].mxu0 %v6472
  %v6560 = vpop.f32.mrb[0].mxu0
  %v6561 = vadd.f32 0.0, %v6560
  %v6562 = vpop.f32.mrb[0].mxu0
  %6563 = vmatprep.mubr.f32.mxu0 0.0
  %6564 = vmatmul.mubr.f32.gmra.mrb[0].mxu0 %v6475
  %v6565 = vpop.f32.mrb[0].mxu0
  %v6566 = vadd.f32 0.0, %v6565
  %v6567 = vpop.f32.mrb[0].mxu0
  %6568 = vdwg.mxu0
  %6569 = vrot.lane.b32.xlu0 %v1533, 96
  %v6570 = vpop.permute.xlu0 %6569
  %6571 = vrot.lane.b32.xlu0 %v1538, 96
  %v6572 = vpop.permute.xlu0 %6571
  %6573 = vrot.lane.b32.xlu0 %v1543, 96
  %v6574 = vpop.permute.xlu0 %6573
  %6575 = vrot.lane.b32.xlu0 %v1548, 96
  %v6576 = vpop.permute.xlu0 %6575
  %6577 = vrot.lane.b32.xlu0 %v1553, 96
  %v6578 = vpop.permute.xlu0 %6577
  %v6584 = vsel %vm2651, %v6197, 0
  %v6587 = vsel %vm2651, %v6199, 0
  %v6590 = vsel %vm2651, %v6201, 0
  %v6593 = vsel %vm2651, %v6203, 0
  %v6596 = vsel %vm2651, %v6205, 0
  %v6598 = vsel %vm2888, %v6578, 0
  %6600 = vmatprep.subr.mxu0 0.0
  %6601 = vmatpush1.msra.mxu0 %v6570
  %6602 = vmatprep.subr.mxu0 0.0
  %6603 = vmatpush1.msra.mxu0 %v6572
  %6604 = vmatprep.subr.mxu0 0.0
  %6605 = vmatpush1.msra.mxu0 %v6574
  %6606 = vmatprep.subr.mxu0 0.0
  %6607 = vmatpush1.msra.mxu0 %v6576
  %6608 = vmatprep.subr.mxu0 0.0
  %6609 = vmatpush1.msra.mxu0 %v6598
  %6610 = vmatprep.subr.mxu0 0.0
  %6611 = vmatpush1.msra.mxu0 0.0
  %6612 = vmatprep.subr.mxu0 0.0
  %6613 = vmatpush1.msra.mxu0 0.0
  %6614 = vmatprep.subr.mxu0 0.0
  %6615 = vmatpush1.msra.mxu0 0.0
  %6616 = vmatprep.subr.mxu0 0.0
  %6617 = vmatpush1.msra.mxu0 0.0
  %6618 = vmatprep.subr.mxu0 0.0
  %6619 = vmatpush1.msra.mxu0 0.0
  %6620 = vmatprep.subr.mxu0 0.0
  %6621 = vmatpush1.msra.mxu0 0.0
  %6622 = vmatprep.subr.mxu0 0.0
  %6623 = vmatpush1.msra.mxu0 0.0
  %6624 = vmatprep.subr.mxu0 0.0
  %6625 = vmatpush1.msra.mxu0 0.0
  %6626 = vmatprep.subr.mxu0 0.0
  %6627 = vmatpush1.msra.mxu0 0.0
  %6628 = vmatprep.subr.mxu0 0.0
  %6629 = vmatpush1.msra.mxu0 0.0
  %6630 = vmatprep.subr.mxu0 0.0
  %6631 = vmatpush1.msra.mxu0 0.0
  %6632 = vmatprep.subr.mxu0 0.0
  %6633 = vmatpush1.msra.mxu0 0.0
  %6634 = vmatprep.subr.mxu0 0.0
  %6635 = vmatpush1.msra.mxu0 0.0
  %6636 = vmatprep.subr.mxu0 0.0
  %6637 = vmatpush1.msra.mxu0 0.0
  %6638 = vmatprep.subr.mxu0 0.0
  %6639 = vmatpush1.msra.mxu0 0.0
  %6640 = vmatprep.subr.mxu0 0.0
  %6641 = vmatpush1.msra.mxu0 0.0
  %6642 = vmatprep.subr.mxu0 0.0
  %6643 = vmatpush1.msra.mxu0 0.0
  %6644 = vmatprep.subr.mxu0 0.0
  %6645 = vmatpush1.msra.mxu0 0.0
  %6646 = vmatprep.subr.mxu0 0.0
  %6647 = vmatpush1.msra.mxu0 0.0
  %6648 = vmatprep.subr.mxu0 0.0
  %6649 = vmatpush1.msra.mxu0 0.0
  %6650 = vmatprep.subr.mxu0 0.0
  %6651 = vmatpush1.msra.mxu0 0.0
  %6652 = vmatprep.subr.mxu0 0.0
  %6653 = vmatpush1.msra.mxu0 0.0
  %6654 = vmatprep.subr.mxu0 0.0
  %6655 = vmatpush1.msra.mxu0 0.0
  %6656 = vmatprep.subr.mxu0 0.0
  %6657 = vmatpush1.msra.mxu0 0.0
  %6658 = vmatprep.subr.mxu0 0.0
  %6659 = vmatpush1.msra.mxu0 0.0
  %6660 = vmatprep.subr.mxu0 0.0
  %6661 = vmatpush1.msra.mxu0 0.0
  %6662 = vmatprep.subr.mxu0 0.0
  %6663 = vmatpush1.msra.mxu0 0.0
  %6664 = vmatprep.mubr.f32.mxu0 0.0
  %6665 = vmatmul.mubr.f32.gmra.mrb[0].mxu0 %v6584
  %v6666 = vpop.f32.mrb[0].mxu0
  %v6667 = vadd.f32 0.0, %v6666
  %v6668 = vpop.f32.mrb[0].mxu0
  %6669 = vmatprep.mubr.f32.mxu0 0.0
  %6670 = vmatmul.mubr.f32.gmra.mrb[0].mxu0 %v6587
  %v6671 = vpop.f32.mrb[0].mxu0
  %v6672 = vadd.f32 0.0, %v6671
  %v6673 = vpop.f32.mrb[0].mxu0
  %6674 = vmatprep.mubr.f32.mxu0 0.0
  %6675 = vmatmul.mubr.f32.gmra.mrb[0].mxu0 %v6590
  %v6676 = vpop.f32.mrb[0].mxu0
  %v6677 = vadd.f32 0.0, %v6676
  %v6678 = vpop.f32.mrb[0].mxu0
  %6679 = vmatprep.mubr.f32.mxu0 0.0
  %6680 = vmatmul.mubr.f32.gmra.mrb[0].mxu0 %v6593
  %v6681 = vpop.f32.mrb[0].mxu0
  %v6682 = vadd.f32 0.0, %v6681
  %v6683 = vpop.f32.mrb[0].mxu0
  %6684 = vmatprep.mubr.f32.mxu0 0.0
  %6685 = vmatmul.mubr.f32.gmra.mrb[0].mxu0 %v6596
  %v6686 = vpop.f32.mrb[0].mxu0
  %v6687 = vadd.f32 0.0, %v6686
  %v6688 = vpop.f32.mrb[0].mxu0
  %6689 = vdwg.mxu0
  %6690 = vrot.lane.b32.xlu0 %v1848, 80
  %v6691 = vpop.permute.xlu0 %6690
  %6692 = vrot.lane.b32.xlu0 %v1849, 80
  %v6693 = vpop.permute.xlu0 %6692
  %6694 = vrot.lane.b32.xlu0 %v1850, 80
  %v6695 = vpop.permute.xlu0 %6694
  %6696 = vrot.lane.b32.xlu0 %v1851, 80
  %v6697 = vpop.permute.xlu0 %6696
  %6698 = vrot.lane.b32.xlu0 %v1852, 80
  %v6699 = vpop.permute.xlu0 %6698
  %6700 = vrot.lane.b32.xlu0 %v1853, 80
  %v6701 = vpop.permute.xlu0 %6700
  %6702 = vrot.lane.b32.xlu0 %v1854, 80
  %v6703 = vpop.permute.xlu0 %6702
  %6704 = vrot.lane.b32.xlu0 %v1855, 80
  %v6705 = vpop.permute.xlu0 %6704
  %6706 = vrot.lane.b32.xlu0 %v1856, 80
  %v6707 = vpop.permute.xlu0 %6706
  %6708 = vrot.lane.b32.xlu0 %v1857, 80
  %v6709 = vpop.permute.xlu0 %6708
  %6710 = vrot.lane.b32.xlu0 %v1858, 80
  %v6711 = vpop.permute.xlu0 %6710
  %6712 = vrot.lane.b32.xlu0 %v1859, 80
  %v6713 = vpop.permute.xlu0 %6712
  %6714 = vrot.lane.b32.xlu0 %v1860, 80
  %v6715 = vpop.permute.xlu0 %6714
  %6716 = vrot.lane.b32.xlu0 %v1861, 80
  %v6717 = vpop.permute.xlu0 %6716
  %6718 = vrot.lane.b32.xlu0 %v1862, 80
  %v6719 = vpop.permute.xlu0 %6718
  %6720 = vrot.lane.b32.xlu0 %v1863, 80
  %v6721 = vpop.permute.xlu0 %6720
  %6722 = vrot.lane.b32.xlu0 %v1864, 80
  %v6723 = vpop.permute.xlu0 %6722
  %6724 = vrot.lane.b32.xlu0 %v1865, 80
  %v6725 = vpop.permute.xlu0 %6724
  %6726 = vrot.lane.b32.xlu0 %v1866, 80
  %v6727 = vpop.permute.xlu0 %6726
  %6728 = vrot.lane.b32.xlu0 %v1867, 80
  %v6729 = vpop.permute.xlu0 %6728
  %v6750 = vsel %vm1868, %v6691, 0.0
  %6751 = vadd.xlane.f32.xlu0 %v6750
  %v6752 = vpop.xlane.xlu0 %6751
  %v6753 = vsel %vm1868, %v6693, 0.0
  %6754 = vadd.xlane.f32.xlu0 %v6753
  %v6755 = vpop.xlane.xlu0 %6754
  %v6756 = vsel %vm1868, %v6695, 0.0
  %6757 = vadd.xlane.f32.xlu0 %v6756
  %v6758 = vpop.xlane.xlu0 %6757
  %v6759 = vsel %vm1868, %v6697, 0.0
  %6760 = vadd.xlane.f32.xlu0 %v6759
  %v6761 = vpop.xlane.xlu0 %6760
  %v6762 = vsel %vm1881, %v6699, 0.0
  %6763 = vadd.xlane.f32.xlu0 %v6762
  %v6764 = vpop.xlane.xlu0 %6763
  %v6765 = vsel %vm1868, %v6701, 0.0
  %6766 = vadd.xlane.f32.xlu0 %v6765
  %v6767 = vpop.xlane.xlu0 %6766
  %v6768 = vsel %vm1868, %v6703, 0.0
  %6769 = vadd.xlane.f32.xlu0 %v6768
  %v6770 = vpop.xlane.xlu0 %6769
  %v6771 = vsel %vm1868, %v6705, 0.0
  %6772 = vadd.xlane.f32.xlu0 %v6771
  %v6773 = vpop.xlane.xlu0 %6772
  %v6774 = vsel %vm1868, %v6707, 0.0
  %6775 = vadd.xlane.f32.xlu0 %v6774
  %v6776 = vpop.xlane.xlu0 %6775
  %v6777 = vsel %vm1881, %v6709, 0.0
  %6778 = vadd.xlane.f32.xlu0 %v6777
  %v6779 = vpop.xlane.xlu0 %6778
  %v6780 = vsel %vm1868, %v6711, 0.0
  %6781 = vadd.xlane.f32.xlu0 %v6780
  %v6782 = vpop.xlane.xlu0 %6781
  %v6783 = vsel %vm1868, %v6713, 0.0
  %6784 = vadd.xlane.f32.xlu0 %v6783
  %v6785 = vpop.xlane.xlu0 %6784
  %v6786 = vsel %vm1868, %v6715, 0.0
  %6787 = vadd.xlane.f32.xlu0 %v6786
  %v6788 = vpop.xlane.xlu0 %6787
  %v6789 = vsel %vm1868, %v6717, 0.0
  %6790 = vadd.xlane.f32.xlu0 %v6789
  %v6791 = vpop.xlane.xlu0 %6790
  %v6792 = vsel %vm1881, %v6719, 0.0
  %6793 = vadd.xlane.f32.xlu0 %v6792
  %v6794 = vpop.xlane.xlu0 %6793
  %v6795 = vsel %vm1868, %v6721, 0.0
  %6796 = vadd.xlane.f32.xlu0 %v6795
  %v6797 = vpop.xlane.xlu0 %6796
  %v6798 = vsel %vm1868, %v6723, 0.0
  %6799 = vadd.xlane.f32.xlu0 %v6798
  %v6800 = vpop.xlane.xlu0 %6799
  %v6801 = vsel %vm1868, %v6725, 0.0
  %6802 = vadd.xlane.f32.xlu0 %v6801
  %v6803 = vpop.xlane.xlu0 %6802
  %v6804 = vsel %vm1868, %v6727, 0.0
  %6805 = vadd.xlane.f32.xlu0 %v6804
  %v6806 = vpop.xlane.xlu0 %6805
  %v6807 = vsel %vm1881, %v6729, 0.0
  %6808 = vadd.xlane.f32.xlu0 %v6807
  %v6809 = vpop.xlane.xlu0 %6808
  %v6810 = vadd.f32 %v6752, 1e-12
  %v6811 = vadd.f32 %v6755, 1e-12
  %v6812 = vadd.f32 %v6758, 1e-12
  %v6813 = vadd.f32 %v6761, 1e-12
  %v6814 = vadd.f32 %v6764, 1e-12
  %v6815 = vadd.f32 %v6767, 1e-12
  %v6816 = vadd.f32 %v6770, 1e-12
  %v6817 = vadd.f32 %v6773, 1e-12
  %v6818 = vadd.f32 %v6776, 1e-12
  %v6819 = vadd.f32 %v6779, 1e-12
  %v6820 = vadd.f32 %v6782, 1e-12
  %v6821 = vadd.f32 %v6785, 1e-12
  %v6822 = vadd.f32 %v6788, 1e-12
  %v6823 = vadd.f32 %v6791, 1e-12
  %v6824 = vadd.f32 %v6794, 1e-12
  %v6825 = vadd.f32 %v6797, 1e-12
  %v6826 = vadd.f32 %v6800, 1e-12
  %v6827 = vadd.f32 %v6803, 1e-12
  %v6828 = vadd.f32 %v6806, 1e-12
  %v6829 = vadd.f32 %v6809, 1e-12
  %v6830 = vrsqrt.pop %v6810
  %v6831 = vrsqrt.pop %v6811
  %v6832 = vrsqrt.pop %v6812
  %v6833 = vrsqrt.pop %v6813
  %v6834 = vrsqrt.pop %v6814
  %v6835 = vrsqrt.pop %v6815
  %v6836 = vrsqrt.pop %v6816
  %v6837 = vrsqrt.pop %v6817
  %v6838 = vrsqrt.pop %v6818
  %v6839 = vrsqrt.pop %v6819
  %v6840 = vrsqrt.pop %v6820
  %v6841 = vrsqrt.pop %v6821
  %v6842 = vrsqrt.pop %v6822
  %v6843 = vrsqrt.pop %v6823
  %v6844 = vrsqrt.pop %v6824
  %v6845 = vrsqrt.pop %v6825
  %v6846 = vrsqrt.pop %v6826
  %v6847 = vrsqrt.pop %v6827
  %v6848 = vrsqrt.pop %v6828
  %v6849 = vrsqrt.pop %v6829
  %v6850 = vmul.f32 %v6830, %v1970
  %v6851 = vmul.f32 %v6831, %v1970
  %v6852 = vmul.f32 %v6832, %v1970
  %v6853 = vmul.f32 %v6833, %v1970
  %v6854 = vmul.f32 %v6834, %v1970
  %v6855 = vmul.f32 %v6835, %v1970
  %v6856 = vmul.f32 %v6836, %v1970
  %v6857 = vmul.f32 %v6837, %v1970
  %v6858 = vmul.f32 %v6838, %v1970
  %v6859 = vmul.f32 %v6839, %v1970
  %v6860 = vmul.f32 %v6840, %v1970
  %v6861 = vmul.f32 %v6841, %v1970
  %v6862 = vmul.f32 %v6842, %v1970
  %v6863 = vmul.f32 %v6843, %v1970
  %v6864 = vmul.f32 %v6844, %v1970
  %v6865 = vmul.f32 %v6845, %v1970
  %v6866 = vmul.f32 %v6846, %v1970
  %v6867 = vmul.f32 %v6847, %v1970
  %v6868 = vmul.f32 %v6848, %v1970
  %v6869 = vmul.f32 %v6849, %v1970
  %v6870 = vmul.f32 %v482, %v6850
  %v6871 = vmul.f32 %v487, %v6851
  %v6872 = vmul.f32 %v492, %v6852
  %v6873 = vmul.f32 %v497, %v6853
  %v6874 = vmul.f32 %v502, %v6854
  %v6875 = vmul.f32 %v587, %v6855
  %v6876 = vmul.f32 %v592, %v6856
  %v6877 = vmul.f32 %v597, %v6857
  %v6878 = vmul.f32 %v602, %v6858
  %v6879 = vmul.f32 %v607, %v6859
  %v6880 = vmul.f32 %v692, %v6860
  %v6881 = vmul.f32 %v697, %v6861
  %v6882 = vmul.f32 %v702, %v6862
  %v6883 = vmul.f32 %v707, %v6863
  %v6884 = vmul.f32 %v712, %v6864
  %v6885 = vmul.f32 %v797, %v6865
  %v6886 = vmul.f32 %v802, %v6866
  %v6887 = vmul.f32 %v807, %v6867
  %v6888 = vmul.f32 %v812, %v6868
  %v6889 = vmul.f32 %v817, %v6869
  %6890 = vrot.lane.b32.xlu0 %v2011, 80
  %v6891 = vpop.permute.xlu0 %6890
  %6892 = vrot.lane.b32.xlu0 %v2012, 80
  %v6893 = vpop.permute.xlu0 %6892
  %6894 = vrot.lane.b32.xlu0 %v2013, 80
  %v6895 = vpop.permute.xlu0 %6894
  %6896 = vrot.lane.b32.xlu0 %v2014, 80
  %v6897 = vpop.permute.xlu0 %6896
  %6898 = vrot.lane.b32.xlu0 %v2015, 80
  %v6899 = vpop.permute.xlu0 %6898
  %6900 = vrot.lane.b32.xlu0 %v2016, 80
  %v6901 = vpop.permute.xlu0 %6900
  %6902 = vrot.lane.b32.xlu0 %v2017, 80
  %v6903 = vpop.permute.xlu0 %6902
  %6904 = vrot.lane.b32.xlu0 %v2018, 80
  %v6905 = vpop.permute.xlu0 %6904
  %6906 = vrot.lane.b32.xlu0 %v2019, 80
  %v6907 = vpop.permute.xlu0 %6906
  %6908 = vrot.lane.b32.xlu0 %v2020, 80
  %v6909 = vpop.permute.xlu0 %6908
  %6910 = vrot.lane.b32.xlu0 %v2021, 80
  %v6911 = vpop.permute.xlu0 %6910
  %6912 = vrot.lane.b32.xlu0 %v2022, 80
  %v6913 = vpop.permute.xlu0 %6912
  %6914 = vrot.lane.b32.xlu0 %v2023, 80
  %v6915 = vpop.permute.xlu0 %6914
  %6916 = vrot.lane.b32.xlu0 %v2024, 80
  %v6917 = vpop.permute.xlu0 %6916
  %6918 = vrot.lane.b32.xlu0 %v2025, 80
  %v6919 = vpop.permute.xlu0 %6918
  %6920 = vrot.lane.b32.xlu0 %v2026, 80
  %v6921 = vpop.permute.xlu0 %6920
  %6922 = vrot.lane.b32.xlu0 %v2027, 80
  %v6923 = vpop.permute.xlu0 %6922
  %6924 = vrot.lane.b32.xlu0 %v2028, 80
  %v6925 = vpop.permute.xlu0 %6924
  %6926 = vrot.lane.b32.xlu0 %v2029, 80
  %v6927 = vpop.permute.xlu0 %6926
  %6928 = vrot.lane.b32.xlu0 %v2030, 80
  %v6929 = vpop.permute.xlu0 %6928
  %v6950 = vsel %vm1868, %v6891, 0.0
  %6951 = vadd.xlane.f32.xlu0 %v6950
  %v6952 = vpop.xlane.xlu0 %6951
  %v6953 = vsel %vm1868, %v6893, 0.0
  %6954 = vadd.xlane.f32.xlu0 %v6953
  %v6955 = vpop.xlane.xlu0 %6954
  %v6956 = vsel %vm1868, %v6895, 0.0
  %6957 = vadd.xlane.f32.xlu0 %v6956
  %v6958 = vpop.xlane.xlu0 %6957
  %v6959 = vsel %vm1868, %v6897, 0.0
  %6960 = vadd.xlane.f32.xlu0 %v6959
  %v6961 = vpop.xlane.xlu0 %6960
  %v6962 = vsel %vm1881, %v6899, 0.0
  %6963 = vadd.xlane.f32.xlu0 %v6962
  %v6964 = vpop.xlane.xlu0 %6963
  %v6965 = vsel %vm1868, %v6901, 0.0
  %6966 = vadd.xlane.f32.xlu0 %v6965
  %v6967 = vpop.xlane.xlu0 %6966
  %v6968 = vsel %vm1868, %v6903, 0.0
  %6969 = vadd.xlane.f32.xlu0 %v6968
  %v6970 = vpop.xlane.xlu0 %6969
  %v6971 = vsel %vm1868, %v6905, 0.0
  %6972 = vadd.xlane.f32.xlu0 %v6971
  %v6973 = vpop.xlane.xlu0 %6972
  %v6974 = vsel %vm1868, %v6907, 0.0
  %6975 = vadd.xlane.f32.xlu0 %v6974
  %v6976 = vpop.xlane.xlu0 %6975
  %v6977 = vsel %vm1881, %v6909, 0.0
  %6978 = vadd.xlane.f32.xlu0 %v6977
  %v6979 = vpop.xlane.xlu0 %6978
  %v6980 = vsel %vm1868, %v6911, 0.0
  %6981 = vadd.xlane.f32.xlu0 %v6980
  %v6982 = vpop.xlane.xlu0 %6981
  %v6983 = vsel %vm1868, %v6913, 0.0
  %6984 = vadd.xlane.f32.xlu0 %v6983
  %v6985 = vpop.xlane.xlu0 %6984
  %v6986 = vsel %vm1868, %v6915, 0.0
  %6987 = vadd.xlane.f32.xlu0 %v6986
  %v6988 = vpop.xlane.xlu0 %6987
  %v6989 = vsel %vm1868, %v6917, 0.0
  %6990 = vadd.xlane.f32.xlu0 %v6989
  %v6991 = vpop.xlane.xlu0 %6990
  %v6992 = vsel %vm1881, %v6919, 0.0
  %6993 = vadd.xlane.f32.xlu0 %v6992
  %v6994 = vpop.xlane.xlu0 %6993
  %v6995 = vsel %vm1868, %v6921, 0.0
  %6996 = vadd.xlane.f32.xlu0 %v6995
  %v6997 = vpop.xlane.xlu0 %6996
  %v6998 = vsel %vm1868, %v6923, 0.0
  %6999 = vadd.xlane.f32.xlu0 %v6998
  %v7000 = vpop.xlane.xlu0 %6999
  %v7001 = vsel %vm1868, %v6925, 0.0
  %7002 = vadd.xlane.f32.xlu0 %v7001
  %v7003 = vpop.xlane.xlu0 %7002
  %v7004 = vsel %vm1868, %v6927, 0.0
  %7005 = vadd.xlane.f32.xlu0 %v7004
  %v7006 = vpop.xlane.xlu0 %7005
  %v7007 = vsel %vm1881, %v6929, 0.0
  %7008 = vadd.xlane.f32.xlu0 %v7007
  %v7009 = vpop.xlane.xlu0 %7008
  %v7010 = vadd.f32 %v6952, 1e-12
  %v7011 = vadd.f32 %v6955, 1e-12
  %v7012 = vadd.f32 %v6958, 1e-12
  %v7013 = vadd.f32 %v6961, 1e-12
  %v7014 = vadd.f32 %v6964, 1e-12
  %v7015 = vadd.f32 %v6967, 1e-12
  %v7016 = vadd.f32 %v6970, 1e-12
  %v7017 = vadd.f32 %v6973, 1e-12
  %v7018 = vadd.f32 %v6976, 1e-12
  %v7019 = vadd.f32 %v6979, 1e-12
  %v7020 = vadd.f32 %v6982, 1e-12
  %v7021 = vadd.f32 %v6985, 1e-12
  %v7022 = vadd.f32 %v6988, 1e-12
  %v7023 = vadd.f32 %v6991, 1e-12
  %v7024 = vadd.f32 %v6994, 1e-12
  %v7025 = vadd.f32 %v6997, 1e-12
  %v7026 = vadd.f32 %v7000, 1e-12
  %v7027 = vadd.f32 %v7003, 1e-12
  %v7028 = vadd.f32 %v7006, 1e-12
  %v7029 = vadd.f32 %v7009, 1e-12
  %v7030 = vrsqrt.pop %v7010
  %v7031 = vrsqrt.pop %v7011
  %v7032 = vrsqrt.pop %v7012
  %v7033 = vrsqrt.pop %v7013
  %v7034 = vrsqrt.pop %v7014
  %v7035 = vrsqrt.pop %v7015
  %v7036 = vrsqrt.pop %v7016
  %v7037 = vrsqrt.pop %v7017
  %v7038 = vrsqrt.pop %v7018
  %v7039 = vrsqrt.pop %v7019
  %v7040 = vrsqrt.pop %v7020
  %v7041 = vrsqrt.pop %v7021
  %v7042 = vrsqrt.pop %v7022
  %v7043 = vrsqrt.pop %v7023
  %v7044 = vrsqrt.pop %v7024
  %v7045 = vrsqrt.pop %v7025
  %v7046 = vrsqrt.pop %v7026
  %v7047 = vrsqrt.pop %v7027
  %v7048 = vrsqrt.pop %v7028
  %v7049 = vrsqrt.pop %v7029
  %v7050 = vmul.f32 %v895, %v7030
  %v7051 = vmul.f32 %v900, %v7031
  %v7052 = vmul.f32 %v905, %v7032
  %v7053 = vmul.f32 %v910, %v7033
  %v7054 = vmul.f32 %v915, %v7034
  %v7055 = vmul.f32 %v985, %v7035
  %v7056 = vmul.f32 %v990, %v7036
  %v7057 = vmul.f32 %v995, %v7037
  %v7058 = vmul.f32 %v1000, %v7038
  %v7059 = vmul.f32 %v1005, %v7039
  %v7060 = vmul.f32 %v1075, %v7040
  %v7061 = vmul.f32 %v1080, %v7041
  %v7062 = vmul.f32 %v1085, %v7042
  %v7063 = vmul.f32 %v1090, %v7043
  %v7064 = vmul.f32 %v1095, %v7044
  %v7065 = vmul.f32 %v1165, %v7045
  %v7066 = vmul.f32 %v1170, %v7046
  %v7067 = vmul.f32 %v1175, %v7047
  %v7068 = vmul.f32 %v1180, %v7048
  %v7069 = vmul.f32 %v1185, %v7049
  %7075 = vrot.lane.b32.xlu0 %v6870, 80
  %v7076 = vpop.permute.xlu0 %7075
  %7077 = vrot.lane.b32.xlu0 %v6871, 80
  %v7078 = vpop.permute.xlu0 %7077
  %7079 = vrot.lane.b32.xlu0 %v6872, 80
  %v7080 = vpop.permute.xlu0 %7079
  %7081 = vrot.lane.b32.xlu0 %v6873, 80
  %v7082 = vpop.permute.xlu0 %7081
  %7083 = vrot.lane.b32.xlu0 %v6874, 80
  %v7084 = vpop.permute.xlu0 %7083
  %7090 = vrot.lane.b32.xlu0 %v7050, 80
  %v7091 = vpop.permute.xlu0 %7090
  %7092 = vrot.lane.b32.xlu0 %v7051, 80
  %v7093 = vpop.permute.xlu0 %7092
  %7094 = vrot.lane.b32.xlu0 %v7052, 80
  %v7095 = vpop.permute.xlu0 %7094
  %7096 = vrot.lane.b32.xlu0 %v7053, 80
  %v7097 = vpop.permute.xlu0 %7096
  %7098 = vrot.lane.b32.xlu0 %v7054, 80
  %v7099 = vpop.permute.xlu0 %7098
  %v7100 = vsel %vm1868, %v7076, 0
  %v7102 = vsel %vm1868, %v7078, 0
  %v7104 = vsel %vm1868, %v7080, 0
  %v7106 = vsel %vm1868, %v7082, 0
  %v7108 = vsel %vm1868, %v7084, 0
  %v7110 = vsel %vm1868, %v7091, 0
  %v7112 = vsel %vm1868, %v7093, 0
  %v7114 = vsel %vm1868, %v7095, 0
  %v7116 = vsel %vm1868, %v7097, 0
  %v7118 = vsel %vm1868, %v7099, 0
  %7120 = vmatprep.subr.mxu0 0.0
  %7121 = vmatpush1.xpose.msra.mxu0 %v7110
  %7122 = vmatprep.subr.mxu0 0.0
  %7123 = vmatpush1.xpose.msra.mxu0 %v7112
  %7124 = vmatprep.subr.mxu0 0.0
  %7125 = vmatpush1.xpose.msra.mxu0 %v7114
  %7126 = vmatprep.subr.mxu0 0.0
  %7127 = vmatpush1.xpose.msra.mxu0 %v7116
  %7128 = vmatprep.subr.mxu0 0.0
  %7129 = vmatpush1.xpose.msra.mxu0 %v7118
  %7130 = vmatprep.subr.mxu0 0.0
  %7131 = vmatpush1.xpose.msra.mxu0 0.0
  %7132 = vmatprep.subr.mxu0 0.0
  %7133 = vmatpush1.xpose.msra.mxu0 0.0
  %7134 = vmatprep.subr.mxu0 0.0
  %7135 = vmatpush1.xpose.msra.mxu0 0.0
  %7136 = vmatprep.subr.mxu0 0.0
  %7137 = vmatpush1.xpose.msra.mxu0 0.0
  %7138 = vmatprep.subr.mxu0 0.0
  %7139 = vmatpush1.xpose.msra.mxu0 0.0
  %7140 = vmatprep.subr.mxu0 0.0
  %7141 = vmatpush1.xpose.msra.mxu0 0.0
  %7142 = vmatprep.subr.mxu0 0.0
  %7143 = vmatpush1.xpose.msra.mxu0 0.0
  %7144 = vmatprep.subr.mxu0 0.0
  %7145 = vmatpush1.xpose.msra.mxu0 0.0
  %7146 = vmatprep.subr.mxu0 0.0
  %7147 = vmatpush1.xpose.msra.mxu0 0.0
  %7148 = vmatprep.subr.mxu0 0.0
  %7149 = vmatpush1.xpose.msra.mxu0 0.0
  %7150 = vmatprep.subr.mxu0 0.0
  %7151 = vmatpush1.xpose.msra.mxu0 0.0
  %7152 = vmatprep.subr.mxu0 0.0
  %7153 = vmatpush1.xpose.msra.mxu0 0.0
  %7154 = vmatprep.subr.mxu0 0.0
  %7155 = vmatpush1.xpose.msra.mxu0 0.0
  %7156 = vmatprep.subr.mxu0 0.0
  %7157 = vmatpush1.xpose.msra.mxu0 0.0
  %7158 = vmatprep.subr.mxu0 0.0
  %7159 = vmatpush1.xpose.msra.mxu0 0.0
  %7160 = vmatprep.subr.mxu0 0.0
  %7161 = vmatpush1.xpose.msra.mxu0 0.0
  %7162 = vmatprep.subr.mxu0 0.0
  %7163 = vmatpush1.xpose.msra.mxu0 0.0
  %7164 = vmatprep.subr.mxu0 0.0
  %7165 = vmatpush1.xpose.msra.mxu0 0.0
  %7166 = vmatprep.subr.mxu0 0.0
  %7167 = vmatpush1.xpose.msra.mxu0 0.0
  %7168 = vmatprep.subr.mxu0 0.0
  %7169 = vmatpush1.xpose.msra.mxu0 0.0
  %7170 = vmatprep.subr.mxu0 0.0
  %7171 = vmatpush1.xpose.msra.mxu0 0.0
  %7172 = vmatprep.subr.mxu0 0.0
  %7173 = vmatpush1.xpose.msra.mxu0 0.0
  %7174 = vmatprep.subr.mxu0 0.0
  %7175 = vmatpush1.xpose.msra.mxu0 0.0
  %7176 = vmatprep.subr.mxu0 0.0
  %7177 = vmatpush1.xpose.msra.mxu0 0.0
  %7178 = vmatprep.subr.mxu0 0.0
  %7179 = vmatpush1.xpose.msra.mxu0 0.0
  %7180 = vmatprep.subr.mxu0 0.0
  %7181 = vmatpush1.xpose.msra.mxu0 0.0
  %7182 = vmatprep.subr.mxu0 0.0
  %7183 = vmatpush1.xpose.msra.mxu0 0.0
  %7184 = vmatprep.mubr.f32.mxu0 0.0
  %7185 = vmatmul.mubr.f32.gmra.mrb[0].mxu0 %v7100
  %v7186 = vpop.f32.mrb[0].mxu0
  %v7187 = vadd.f32 %v1843, %v7186
  %v7188 = vpop.f32.mrb[0].mxu0
  %7189 = vmatprep.mubr.f32.mxu0 0.0
  %7190 = vmatmul.mubr.f32.gmra.mrb[0].mxu0 %v7102
  %v7191 = vpop.f32.mrb[0].mxu0
  %v7192 = vadd.f32 %v1844, %v7191
  %v7193 = vpop.f32.mrb[0].mxu0
  %7194 = vmatprep.mubr.f32.mxu0 0.0
  %7195 = vmatmul.mubr.f32.gmra.mrb[0].mxu0 %v7104
  %v7196 = vpop.f32.mrb[0].mxu0
  %v7197 = vadd.f32 %v1845, %v7196
  %v7198 = vpop.f32.mrb[0].mxu0
  %7199 = vmatprep.mubr.f32.mxu0 0.0
  %7200 = vmatmul.mubr.f32.gmra.mrb[0].mxu0 %v7106
  %v7201 = vpop.f32.mrb[0].mxu0
  %v7202 = vadd.f32 %v1846, %v7201
  %v7203 = vpop.f32.mrb[0].mxu0
  %7204 = vmatprep.mubr.f32.mxu0 0.0
  %7205 = vmatmul.mubr.f32.gmra.mrb[0].mxu0 %v7108
  %v7206 = vpop.f32.mrb[0].mxu0
  %v7207 = vadd.f32 %v1847, %v7206
  %v7208 = vpop.f32.mrb[0].mxu0
  %7209 = vdwg.mxu0
  %7215 = vrot.lane.b32.xlu0 %v6875, 80
  %v7216 = vpop.permute.xlu0 %7215
  %7217 = vrot.lane.b32.xlu0 %v6876, 80
  %v7218 = vpop.permute.xlu0 %7217
  %7219 = vrot.lane.b32.xlu0 %v6877, 80
  %v7220 = vpop.permute.xlu0 %7219
  %7221 = vrot.lane.b32.xlu0 %v6878, 80
  %v7222 = vpop.permute.xlu0 %7221
  %7223 = vrot.lane.b32.xlu0 %v6879, 80
  %v7224 = vpop.permute.xlu0 %7223
  %7230 = vrot.lane.b32.xlu0 %v7055, 80
  %v7231 = vpop.permute.xlu0 %7230
  %7232 = vrot.lane.b32.xlu0 %v7056, 80
  %v7233 = vpop.permute.xlu0 %7232
  %7234 = vrot.lane.b32.xlu0 %v7057, 80
  %v7235 = vpop.permute.xlu0 %7234
  %7236 = vrot.lane.b32.xlu0 %v7058, 80
  %v7237 = vpop.permute.xlu0 %7236
  %7238 = vrot.lane.b32.xlu0 %v7059, 80
  %v7239 = vpop.permute.xlu0 %7238
  %v7240 = vsel %vm1868, %v7216, 0
  %v7242 = vsel %vm1868, %v7218, 0
  %v7244 = vsel %vm1868, %v7220, 0
  %v7246 = vsel %vm1868, %v7222, 0
  %v7248 = vsel %vm1868, %v7224, 0
  %v7250 = vsel %vm1868, %v7231, 0
  %v7252 = vsel %vm1868, %v7233, 0
  %v7254 = vsel %vm1868, %v7235, 0
  %v7256 = vsel %vm1868, %v7237, 0
  %v7258 = vsel %vm1868, %v7239, 0
  %7260 = vmatprep.subr.mxu0 0.0
  %7261 = vmatpush1.xpose.msra.mxu0 %v7250
  %7262 = vmatprep.subr.mxu0 0.0
  %7263 = vmatpush1.xpose.msra.mxu0 %v7252
  %7264 = vmatprep.subr.mxu0 0.0
  %7265 = vmatpush1.xpose.msra.mxu0 %v7254
  %7266 = vmatprep.subr.mxu0 0.0
  %7267 = vmatpush1.xpose.msra.mxu0 %v7256
  %7268 = vmatprep.subr.mxu0 0.0
  %7269 = vmatpush1.xpose.msra.mxu0 %v7258
  %7270 = vmatprep.subr.mxu0 0.0
  %7271 = vmatpush1.xpose.msra.mxu0 0.0
  %7272 = vmatprep.subr.mxu0 0.0
  %7273 = vmatpush1.xpose.msra.mxu0 0.0
  %7274 = vmatprep.subr.mxu0 0.0
  %7275 = vmatpush1.xpose.msra.mxu0 0.0
  %7276 = vmatprep.subr.mxu0 0.0
  %7277 = vmatpush1.xpose.msra.mxu0 0.0
  %7278 = vmatprep.subr.mxu0 0.0
  %7279 = vmatpush1.xpose.msra.mxu0 0.0
  %7280 = vmatprep.subr.mxu0 0.0
  %7281 = vmatpush1.xpose.msra.mxu0 0.0
  %7282 = vmatprep.subr.mxu0 0.0
  %7283 = vmatpush1.xpose.msra.mxu0 0.0
  %7284 = vmatprep.subr.mxu0 0.0
  %7285 = vmatpush1.xpose.msra.mxu0 0.0
  %7286 = vmatprep.subr.mxu0 0.0
  %7287 = vmatpush1.xpose.msra.mxu0 0.0
  %7288 = vmatprep.subr.mxu0 0.0
  %7289 = vmatpush1.xpose.msra.mxu0 0.0
  %7290 = vmatprep.subr.mxu0 0.0
  %7291 = vmatpush1.xpose.msra.mxu0 0.0
  %7292 = vmatprep.subr.mxu0 0.0
  %7293 = vmatpush1.xpose.msra.mxu0 0.0
  %7294 = vmatprep.subr.mxu0 0.0
  %7295 = vmatpush1.xpose.msra.mxu0 0.0
  %7296 = vmatprep.subr.mxu0 0.0
  %7297 = vmatpush1.xpose.msra.mxu0 0.0
  %7298 = vmatprep.subr.mxu0 0.0
  %7299 = vmatpush1.xpose.msra.mxu0 0.0
  %7300 = vmatprep.subr.mxu0 0.0
  %7301 = vmatpush1.xpose.msra.mxu0 0.0
  %7302 = vmatprep.subr.mxu0 0.0
  %7303 = vmatpush1.xpose.msra.mxu0 0.0
  %7304 = vmatprep.subr.mxu0 0.0
  %7305 = vmatpush1.xpose.msra.mxu0 0.0
  %7306 = vmatprep.subr.mxu0 0.0
  %7307 = vmatpush1.xpose.msra.mxu0 0.0
  %7308 = vmatprep.subr.mxu0 0.0
  %7309 = vmatpush1.xpose.msra.mxu0 0.0
  %7310 = vmatprep.subr.mxu0 0.0
  %7311 = vmatpush1.xpose.msra.mxu0 0.0
  %7312 = vmatprep.subr.mxu0 0.0
  %7313 = vmatpush1.xpose.msra.mxu0 0.0
  %7314 = vmatprep.subr.mxu0 0.0
  %7315 = vmatpush1.xpose.msra.mxu0 0.0
  %7316 = vmatprep.subr.mxu0 0.0
  %7317 = vmatpush1.xpose.msra.mxu0 0.0
  %7318 = vmatprep.subr.mxu0 0.0
  %7319 = vmatpush1.xpose.msra.mxu0 0.0
  %7320 = vmatprep.subr.mxu0 0.0
  %7321 = vmatpush1.xpose.msra.mxu0 0.0
  %7322 = vmatprep.subr.mxu0 0.0
  %7323 = vmatpush1.xpose.msra.mxu0 0.0
  %7324 = vmatprep.mubr.f32.mxu0 0.0
  %7325 = vmatmul.mubr.f32.gmra.mrb[0].mxu0 %v7240
  %v7326 = vpop.f32.mrb[0].mxu0
  %v7327 = vadd.f32 %v1843, %v7326
  %v7328 = vpop.f32.mrb[0].mxu0
  %7329 = vmatprep.mubr.f32.mxu0 0.0
  %7330 = vmatmul.mubr.f32.gmra.mrb[0].mxu0 %v7242
  %v7331 = vpop.f32.mrb[0].mxu0
  %v7332 = vadd.f32 %v1844, %v7331
  %v7333 = vpop.f32.mrb[0].mxu0
  %7334 = vmatprep.mubr.f32.mxu0 0.0
  %7335 = vmatmul.mubr.f32.gmra.mrb[0].mxu0 %v7244
  %v7336 = vpop.f32.mrb[0].mxu0
  %v7337 = vadd.f32 %v1845, %v7336
  %v7338 = vpop.f32.mrb[0].mxu0
  %7339 = vmatprep.mubr.f32.mxu0 0.0
  %7340 = vmatmul.mubr.f32.gmra.mrb[0].mxu0 %v7246
  %v7341 = vpop.f32.mrb[0].mxu0
  %v7342 = vadd.f32 %v1846, %v7341
  %v7343 = vpop.f32.mrb[0].mxu0
  %7344 = vmatprep.mubr.f32.mxu0 0.0
  %7345 = vmatmul.mubr.f32.gmra.mrb[0].mxu0 %v7248
  %v7346 = vpop.f32.mrb[0].mxu0
  %v7347 = vadd.f32 %v1847, %v7346
  %v7348 = vpop.f32.mrb[0].mxu0
  %7349 = vdwg.mxu0
  %7355 = vrot.lane.b32.xlu0 %v6880, 80
  %v7356 = vpop.permute.xlu0 %7355
  %7357 = vrot.lane.b32.xlu0 %v6881, 80
  %v7358 = vpop.permute.xlu0 %7357
  %7359 = vrot.lane.b32.xlu0 %v6882, 80
  %v7360 = vpop.permute.xlu0 %7359
  %7361 = vrot.lane.b32.xlu0 %v6883, 80
  %v7362 = vpop.permute.xlu0 %7361
  %7363 = vrot.lane.b32.xlu0 %v6884, 80
  %v7364 = vpop.permute.xlu0 %7363
  %7370 = vrot.lane.b32.xlu0 %v7060, 80
  %v7371 = vpop.permute.xlu0 %7370
  %7372 = vrot.lane.b32.xlu0 %v7061, 80
  %v7373 = vpop.permute.xlu0 %7372
  %7374 = vrot.lane.b32.xlu0 %v7062, 80
  %v7375 = vpop.permute.xlu0 %7374
  %7376 = vrot.lane.b32.xlu0 %v7063, 80
  %v7377 = vpop.permute.xlu0 %7376
  %7378 = vrot.lane.b32.xlu0 %v7064, 80
  %v7379 = vpop.permute.xlu0 %7378
  %v7380 = vsel %vm1868, %v7356, 0
  %v7382 = vsel %vm1868, %v7358, 0
  %v7384 = vsel %vm1868, %v7360, 0
  %v7386 = vsel %vm1868, %v7362, 0
  %v7388 = vsel %vm1868, %v7364, 0
  %v7390 = vsel %vm1868, %v7371, 0
  %v7392 = vsel %vm1868, %v7373, 0
  %v7394 = vsel %vm1868, %v7375, 0
  %v7396 = vsel %vm1868, %v7377, 0
  %v7398 = vsel %vm1868, %v7379, 0
  %7400 = vmatprep.subr.mxu0 0.0
  %7401 = vmatpush1.xpose.msra.mxu0 %v7390
  %7402 = vmatprep.subr.mxu0 0.0
  %7403 = vmatpush1.xpose.msra.mxu0 %v7392
  %7404 = vmatprep.subr.mxu0 0.0
  %7405 = vmatpush1.xpose.msra.mxu0 %v7394
  %7406 = vmatprep.subr.mxu0 0.0
  %7407 = vmatpush1.xpose.msra.mxu0 %v7396
  %7408 = vmatprep.subr.mxu0 0.0
  %7409 = vmatpush1.xpose.msra.mxu0 %v7398
  %7410 = vmatprep.subr.mxu0 0.0
  %7411 = vmatpush1.xpose.msra.mxu0 0.0
  %7412 = vmatprep.subr.mxu0 0.0
  %7413 = vmatpush1.xpose.msra.mxu0 0.0
  %7414 = vmatprep.subr.mxu0 0.0
  %7415 = vmatpush1.xpose.msra.mxu0 0.0
  %7416 = vmatprep.subr.mxu0 0.0
  %7417 = vmatpush1.xpose.msra.mxu0 0.0
  %7418 = vmatprep.subr.mxu0 0.0
  %7419 = vmatpush1.xpose.msra.mxu0 0.0
  %7420 = vmatprep.subr.mxu0 0.0
  %7421 = vmatpush1.xpose.msra.mxu0 0.0
  %7422 = vmatprep.subr.mxu0 0.0
  %7423 = vmatpush1.xpose.msra.mxu0 0.0
  %7424 = vmatprep.subr.mxu0 0.0
  %7425 = vmatpush1.xpose.msra.mxu0 0.0
  %7426 = vmatprep.subr.mxu0 0.0
  %7427 = vmatpush1.xpose.msra.mxu0 0.0
  %7428 = vmatprep.subr.mxu0 0.0
  %7429 = vmatpush1.xpose.msra.mxu0 0.0
  %7430 = vmatprep.subr.mxu0 0.0
  %7431 = vmatpush1.xpose.msra.mxu0 0.0
  %7432 = vmatprep.subr.mxu0 0.0
  %7433 = vmatpush1.xpose.msra.mxu0 0.0
  %7434 = vmatprep.subr.mxu0 0.0
  %7435 = vmatpush1.xpose.msra.mxu0 0.0
  %7436 = vmatprep.subr.mxu0 0.0
  %7437 = vmatpush1.xpose.msra.mxu0 0.0
  %7438 = vmatprep.subr.mxu0 0.0
  %7439 = vmatpush1.xpose.msra.mxu0 0.0
  %7440 = vmatprep.subr.mxu0 0.0
  %7441 = vmatpush1.xpose.msra.mxu0 0.0
  %7442 = vmatprep.subr.mxu0 0.0
  %7443 = vmatpush1.xpose.msra.mxu0 0.0
  %7444 = vmatprep.subr.mxu0 0.0
  %7445 = vmatpush1.xpose.msra.mxu0 0.0
  %7446 = vmatprep.subr.mxu0 0.0
  %7447 = vmatpush1.xpose.msra.mxu0 0.0
  %7448 = vmatprep.subr.mxu0 0.0
  %7449 = vmatpush1.xpose.msra.mxu0 0.0
  %7450 = vmatprep.subr.mxu0 0.0
  %7451 = vmatpush1.xpose.msra.mxu0 0.0
  %7452 = vmatprep.subr.mxu0 0.0
  %7453 = vmatpush1.xpose.msra.mxu0 0.0
  %7454 = vmatprep.subr.mxu0 0.0
  %7455 = vmatpush1.xpose.msra.mxu0 0.0
  %7456 = vmatprep.subr.mxu0 0.0
  %7457 = vmatpush1.xpose.msra.mxu0 0.0
  %7458 = vmatprep.subr.mxu0 0.0
  %7459 = vmatpush1.xpose.msra.mxu0 0.0
  %7460 = vmatprep.subr.mxu0 0.0
  %7461 = vmatpush1.xpose.msra.mxu0 0.0
  %7462 = vmatprep.subr.mxu0 0.0
  %7463 = vmatpush1.xpose.msra.mxu0 0.0
  %7464 = vmatprep.mubr.f32.mxu0 0.0
  %7465 = vmatmul.mubr.f32.gmra.mrb[0].mxu0 %v7380
  %v7466 = vpop.f32.mrb[0].mxu0
  %v7467 = vadd.f32 %v1843, %v7466
  %v7468 = vpop.f32.mrb[0].mxu0
  %7469 = vmatprep.mubr.f32.mxu0 0.0
  %7470 = vmatmul.mubr.f32.gmra.mrb[0].mxu0 %v7382
  %v7471 = vpop.f32.mrb[0].mxu0
  %v7472 = vadd.f32 %v1844, %v7471
  %v7473 = vpop.f32.mrb[0].mxu0
  %7474 = vmatprep.mubr.f32.mxu0 0.0
  %7475 = vmatmul.mubr.f32.gmra.mrb[0].mxu0 %v7384
  %v7476 = vpop.f32.mrb[0].mxu0
  %v7477 = vadd.f32 %v1845, %v7476
  %v7478 = vpop.f32.mrb[0].mxu0
  %7479 = vmatprep.mubr.f32.mxu0 0.0
  %7480 = vmatmul.mubr.f32.gmra.mrb[0].mxu0 %v7386
  %v7481 = vpop.f32.mrb[0].mxu0
  %v7482 = vadd.f32 %v1846, %v7481
  %v7483 = vpop.f32.mrb[0].mxu0
  %7484 = vmatprep.mubr.f32.mxu0 0.0
  %7485 = vmatmul.mubr.f32.gmra.mrb[0].mxu0 %v7388
  %v7486 = vpop.f32.mrb[0].mxu0
  %v7487 = vadd.f32 %v1847, %v7486
  %v7488 = vpop.f32.mrb[0].mxu0
  %7489 = vdwg.mxu0
  %7495 = vrot.lane.b32.xlu0 %v6885, 80
  %v7496 = vpop.permute.xlu0 %7495
  %7497 = vrot.lane.b32.xlu0 %v6886, 80
  %v7498 = vpop.permute.xlu0 %7497
  %7499 = vrot.lane.b32.xlu0 %v6887, 80
  %v7500 = vpop.permute.xlu0 %7499
  %7501 = vrot.lane.b32.xlu0 %v6888, 80
  %v7502 = vpop.permute.xlu0 %7501
  %7503 = vrot.lane.b32.xlu0 %v6889, 80
  %v7504 = vpop.permute.xlu0 %7503
  %7510 = vrot.lane.b32.xlu0 %v7065, 80
  %v7511 = vpop.permute.xlu0 %7510
  %7512 = vrot.lane.b32.xlu0 %v7066, 80
  %v7513 = vpop.permute.xlu0 %7512
  %7514 = vrot.lane.b32.xlu0 %v7067, 80
  %v7515 = vpop.permute.xlu0 %7514
  %7516 = vrot.lane.b32.xlu0 %v7068, 80
  %v7517 = vpop.permute.xlu0 %7516
  %7518 = vrot.lane.b32.xlu0 %v7069, 80
  %v7519 = vpop.permute.xlu0 %7518
  %v7520 = vsel %vm1868, %v7496, 0
  %v7522 = vsel %vm1868, %v7498, 0
  %v7524 = vsel %vm1868, %v7500, 0
  %v7526 = vsel %vm1868, %v7502, 0
  %v7528 = vsel %vm1868, %v7504, 0
  %v7530 = vsel %vm1868, %v7511, 0
  %v7532 = vsel %vm1868, %v7513, 0
  %v7534 = vsel %vm1868, %v7515, 0
  %v7536 = vsel %vm1868, %v7517, 0
  %v7538 = vsel %vm1868, %v7519, 0
  %7540 = vmatprep.subr.mxu0 0.0
  %7541 = vmatpush1.xpose.msra.mxu0 %v7530
  %7542 = vmatprep.subr.mxu0 0.0
  %7543 = vmatpush1.xpose.msra.mxu0 %v7532
  %7544 = vmatprep.subr.mxu0 0.0
  %7545 = vmatpush1.xpose.msra.mxu0 %v7534
  %7546 = vmatprep.subr.mxu0 0.0
  %7547 = vmatpush1.xpose.msra.mxu0 %v7536
  %7548 = vmatprep.subr.mxu0 0.0
  %7549 = vmatpush1.xpose.msra.mxu0 %v7538
  %7550 = vmatprep.subr.mxu0 0.0
  %7551 = vmatpush1.xpose.msra.mxu0 0.0
  %7552 = vmatprep.subr.mxu0 0.0
  %7553 = vmatpush1.xpose.msra.mxu0 0.0
  %7554 = vmatprep.subr.mxu0 0.0
  %7555 = vmatpush1.xpose.msra.mxu0 0.0
  %7556 = vmatprep.subr.mxu0 0.0
  %7557 = vmatpush1.xpose.msra.mxu0 0.0
  %7558 = vmatprep.subr.mxu0 0.0
  %7559 = vmatpush1.xpose.msra.mxu0 0.0
  %7560 = vmatprep.subr.mxu0 0.0
  %7561 = vmatpush1.xpose.msra.mxu0 0.0
  %7562 = vmatprep.subr.mxu0 0.0
  %7563 = vmatpush1.xpose.msra.mxu0 0.0
  %7564 = vmatprep.subr.mxu0 0.0
  %7565 = vmatpush1.xpose.msra.mxu0 0.0
  %7566 = vmatprep.subr.mxu0 0.0
  %7567 = vmatpush1.xpose.msra.mxu0 0.0
  %7568 = vmatprep.subr.mxu0 0.0
  %7569 = vmatpush1.xpose.msra.mxu0 0.0
  %7570 = vmatprep.subr.mxu0 0.0
  %7571 = vmatpush1.xpose.msra.mxu0 0.0
  %7572 = vmatprep.subr.mxu0 0.0
  %7573 = vmatpush1.xpose.msra.mxu0 0.0
  %7574 = vmatprep.subr.mxu0 0.0
  %7575 = vmatpush1.xpose.msra.mxu0 0.0
  %7576 = vmatprep.subr.mxu0 0.0
  %7577 = vmatpush1.xpose.msra.mxu0 0.0
  %7578 = vmatprep.subr.mxu0 0.0
  %7579 = vmatpush1.xpose.msra.mxu0 0.0
  %7580 = vmatprep.subr.mxu0 0.0
  %7581 = vmatpush1.xpose.msra.mxu0 0.0
  %7582 = vmatprep.subr.mxu0 0.0
  %7583 = vmatpush1.xpose.msra.mxu0 0.0
  %7584 = vmatprep.subr.mxu0 0.0
  %7585 = vmatpush1.xpose.msra.mxu0 0.0
  %7586 = vmatprep.subr.mxu0 0.0
  %7587 = vmatpush1.xpose.msra.mxu0 0.0
  %7588 = vmatprep.subr.mxu0 0.0
  %7589 = vmatpush1.xpose.msra.mxu0 0.0
  %7590 = vmatprep.subr.mxu0 0.0
  %7591 = vmatpush1.xpose.msra.mxu0 0.0
  %7592 = vmatprep.subr.mxu0 0.0
  %7593 = vmatpush1.xpose.msra.mxu0 0.0
  %7594 = vmatprep.subr.mxu0 0.0
  %7595 = vmatpush1.xpose.msra.mxu0 0.0
  %7596 = vmatprep.subr.mxu0 0.0
  %7597 = vmatpush1.xpose.msra.mxu0 0.0
  %7598 = vmatprep.subr.mxu0 0.0
  %7599 = vmatpush1.xpose.msra.mxu0 0.0
  %7600 = vmatprep.subr.mxu0 0.0
  %7601 = vmatpush1.xpose.msra.mxu0 0.0
  %7602 = vmatprep.subr.mxu0 0.0
  %7603 = vmatpush1.xpose.msra.mxu0 0.0
  %7604 = vmatprep.mubr.f32.mxu0 0.0
  %7605 = vmatmul.mubr.f32.gmra.mrb[0].mxu0 %v7520
  %v7606 = vpop.f32.mrb[0].mxu0
  %v7607 = vadd.f32 %v1843, %v7606
  %v7608 = vpop.f32.mrb[0].mxu0
  %7609 = vmatprep.mubr.f32.mxu0 0.0
  %7610 = vmatmul.mubr.f32.gmra.mrb[0].mxu0 %v7522
  %v7611 = vpop.f32.mrb[0].mxu0
  %v7612 = vadd.f32 %v1844, %v7611
  %v7613 = vpop.f32.mrb[0].mxu0
  %7614 = vmatprep.mubr.f32.mxu0 0.0
  %7615 = vmatmul.mubr.f32.gmra.mrb[0].mxu0 %v7524
  %v7616 = vpop.f32.mrb[0].mxu0
  %v7617 = vadd.f32 %v1845, %v7616
  %v7618 = vpop.f32.mrb[0].mxu0
  %7619 = vmatprep.mubr.f32.mxu0 0.0
  %7620 = vmatmul.mubr.f32.gmra.mrb[0].mxu0 %v7526
  %v7621 = vpop.f32.mrb[0].mxu0
  %v7622 = vadd.f32 %v1846, %v7621
  %v7623 = vpop.f32.mrb[0].mxu0
  %7624 = vmatprep.mubr.f32.mxu0 0.0
  %7625 = vmatmul.mubr.f32.gmra.mrb[0].mxu0 %v7528
  %v7626 = vpop.f32.mrb[0].mxu0
  %v7627 = vadd.f32 %v1847, %v7626
  %v7628 = vpop.f32.mrb[0].mxu0
  %7629 = vdwg.mxu0
  %v7630 = vsel %vm1808, %v7187, -3.4028235e+38
  %v7631 = vsel %vm1809, %v7192, -3.4028235e+38
  %v7632 = vsel %vm1810, %v7197, -3.4028235e+38
  %v7633 = vsel %vm1811, %v7202, -3.4028235e+38
  %v7634 = vsel %vm1812, %v7207, -3.4028235e+38
  %v7635 = vsel %vm1813, %v7327, -3.4028235e+38
  %v7636 = vsel %vm1814, %v7332, -3.4028235e+38
  %v7637 = vsel %vm1815, %v7337, -3.4028235e+38
  %v7638 = vsel %vm1816, %v7342, -3.4028235e+38
  %v7639 = vsel %vm1817, %v7347, -3.4028235e+38
  %v7640 = vsel %vm1818, %v7467, -3.4028235e+38
  %v7641 = vsel %vm1819, %v7472, -3.4028235e+38
  %v7642 = vsel %vm1820, %v7477, -3.4028235e+38
  %v7643 = vsel %vm1821, %v7482, -3.4028235e+38
  %v7644 = vsel %vm1822, %v7487, -3.4028235e+38
  %v7645 = vsel %vm1823, %v7607, -3.4028235e+38
  %v7646 = vsel %vm1824, %v7612, -3.4028235e+38
  %v7647 = vsel %vm1825, %v7617, -3.4028235e+38
  %v7648 = vsel %vm1826, %v7622, -3.4028235e+38
  %v7649 = vsel %vm1827, %v7627, -3.4028235e+38
  %v7650 = vsel %vm2651, %v7630, -inf
  %7651 = vmax.xlane.f32.xlu0 %v7650
  %v7652 = vpop.xlane.xlu0 %7651
  %v7653 = vsel %vm2651, %v7631, -inf
  %7654 = vmax.xlane.f32.xlu0 %v7653
  %v7655 = vpop.xlane.xlu0 %7654
  %v7656 = vsel %vm2651, %v7632, -inf
  %7657 = vmax.xlane.f32.xlu0 %v7656
  %v7658 = vpop.xlane.xlu0 %7657
  %v7659 = vsel %vm2651, %v7633, -inf
  %7660 = vmax.xlane.f32.xlu0 %v7659
  %v7661 = vpop.xlane.xlu0 %7660
  %v7662 = vsel %vm2664, %v7634, -inf
  %7663 = vmax.xlane.f32.xlu0 %v7662
  %v7664 = vpop.xlane.xlu0 %7663
  %v7665 = vsel %vm2651, %v7635, -inf
  %7666 = vmax.xlane.f32.xlu0 %v7665
  %v7667 = vpop.xlane.xlu0 %7666
  %v7668 = vsel %vm2651, %v7636, -inf
  %7669 = vmax.xlane.f32.xlu0 %v7668
  %v7670 = vpop.xlane.xlu0 %7669
  %v7671 = vsel %vm2651, %v7637, -inf
  %7672 = vmax.xlane.f32.xlu0 %v7671
  %v7673 = vpop.xlane.xlu0 %7672
  %v7674 = vsel %vm2651, %v7638, -inf
  %7675 = vmax.xlane.f32.xlu0 %v7674
  %v7676 = vpop.xlane.xlu0 %7675
  %v7677 = vsel %vm2664, %v7639, -inf
  %7678 = vmax.xlane.f32.xlu0 %v7677
  %v7679 = vpop.xlane.xlu0 %7678
  %v7680 = vsel %vm2651, %v7640, -inf
  %7681 = vmax.xlane.f32.xlu0 %v7680
  %v7682 = vpop.xlane.xlu0 %7681
  %v7683 = vsel %vm2651, %v7641, -inf
  %7684 = vmax.xlane.f32.xlu0 %v7683
  %v7685 = vpop.xlane.xlu0 %7684
  %v7686 = vsel %vm2651, %v7642, -inf
  %7687 = vmax.xlane.f32.xlu0 %v7686
  %v7688 = vpop.xlane.xlu0 %7687
  %v7689 = vsel %vm2651, %v7643, -inf
  %7690 = vmax.xlane.f32.xlu0 %v7689
  %v7691 = vpop.xlane.xlu0 %7690
  %v7692 = vsel %vm2664, %v7644, -inf
  %7693 = vmax.xlane.f32.xlu0 %v7692
  %v7694 = vpop.xlane.xlu0 %7693
  %v7695 = vsel %vm2651, %v7645, -inf
  %7696 = vmax.xlane.f32.xlu0 %v7695
  %v7697 = vpop.xlane.xlu0 %7696
  %v7698 = vsel %vm2651, %v7646, -inf
  %7699 = vmax.xlane.f32.xlu0 %v7698
  %v7700 = vpop.xlane.xlu0 %7699
  %v7701 = vsel %vm2651, %v7647, -inf
  %7702 = vmax.xlane.f32.xlu0 %v7701
  %v7703 = vpop.xlane.xlu0 %7702
  %v7704 = vsel %vm2651, %v7648, -inf
  %7705 = vmax.xlane.f32.xlu0 %v7704
  %v7706 = vpop.xlane.xlu0 %7705
  %v7707 = vsel %vm2664, %v7649, -inf
  %7708 = vmax.xlane.f32.xlu0 %v7707
  %v7709 = vpop.xlane.xlu0 %7708
  %v7710 = vsub.f32 %v7630, %v7652
  %v7711 = vsub.f32 %v7631, %v7655
  %v7712 = vsub.f32 %v7632, %v7658
  %v7713 = vsub.f32 %v7633, %v7661
  %v7714 = vsub.f32 %v7634, %v7664
  %v7715 = vsub.f32 %v7635, %v7667
  %v7716 = vsub.f32 %v7636, %v7670
  %v7717 = vsub.f32 %v7637, %v7673
  %v7718 = vsub.f32 %v7638, %v7676
  %v7719 = vsub.f32 %v7639, %v7679
  %v7720 = vsub.f32 %v7640, %v7682
  %v7721 = vsub.f32 %v7641, %v7685
  %v7722 = vsub.f32 %v7642, %v7688
  %v7723 = vsub.f32 %v7643, %v7691
  %v7724 = vsub.f32 %v7644, %v7694
  %v7725 = vsub.f32 %v7645, %v7697
  %v7726 = vsub.f32 %v7646, %v7700
  %v7727 = vsub.f32 %v7647, %v7703
  %v7728 = vsub.f32 %v7648, %v7706
  %v7729 = vsub.f32 %v7649, %v7709
  %v7730 = vmul.f32 %v7710, 1.442695
  %v7731 = vpow.pop %v7730
  %v7732 = vmul.f32 %v7711, 1.442695
  %v7733 = vpow.pop %v7732
  %v7734 = vmul.f32 %v7712, 1.442695
  %v7735 = vpow.pop %v7734
  %v7736 = vmul.f32 %v7713, 1.442695
  %v7737 = vpow.pop %v7736
  %v7738 = vmul.f32 %v7714, 1.442695
  %v7739 = vpow.pop %v7738
  %v7740 = vmul.f32 %v7715, 1.442695
  %v7741 = vpow.pop %v7740
  %v7742 = vmul.f32 %v7716, 1.442695
  %v7743 = vpow.pop %v7742
  %v7744 = vmul.f32 %v7717, 1.442695
  %v7745 = vpow.pop %v7744
  %v7746 = vmul.f32 %v7718, 1.442695
  %v7747 = vpow.pop %v7746
  %v7748 = vmul.f32 %v7719, 1.442695
  %v7749 = vpow.pop %v7748
  %v7750 = vmul.f32 %v7720, 1.442695
  %v7751 = vpow.pop %v7750
  %v7752 = vmul.f32 %v7721, 1.442695
  %v7753 = vpow.pop %v7752
  %v7754 = vmul.f32 %v7722, 1.442695
  %v7755 = vpow.pop %v7754
  %v7756 = vmul.f32 %v7723, 1.442695
  %v7757 = vpow.pop %v7756
  %v7758 = vmul.f32 %v7724, 1.442695
  %v7759 = vpow.pop %v7758
  %v7760 = vmul.f32 %v7725, 1.442695
  %v7761 = vpow.pop %v7760
  %v7762 = vmul.f32 %v7726, 1.442695
  %v7763 = vpow.pop %v7762
  %v7764 = vmul.f32 %v7727, 1.442695
  %v7765 = vpow.pop %v7764
  %v7766 = vmul.f32 %v7728, 1.442695
  %v7767 = vpow.pop %v7766
  %v7768 = vmul.f32 %v7729, 1.442695
  %v7769 = vpow.pop %v7768
  %v7770 = vsel %vm2651, %v7731, 0.0
  %7771 = vadd.xlane.f32.xlu0 %v7770
  %v7772 = vpop.xlane.xlu0 %7771
  %v7773 = vsel %vm2651, %v7733, 0.0
  %7774 = vadd.xlane.f32.xlu0 %v7773
  %v7775 = vpop.xlane.xlu0 %7774
  %v7776 = vsel %vm2651, %v7735, 0.0
  %7777 = vadd.xlane.f32.xlu0 %v7776
  %v7778 = vpop.xlane.xlu0 %7777
  %v7779 = vsel %vm2651, %v7737, 0.0
  %7780 = vadd.xlane.f32.xlu0 %v7779
  %v7781 = vpop.xlane.xlu0 %7780
  %v7782 = vsel %vm2664, %v7739, 0.0
  %7783 = vadd.xlane.f32.xlu0 %v7782
  %v7784 = vpop.xlane.xlu0 %7783
  %v7785 = vsel %vm2651, %v7741, 0.0
  %7786 = vadd.xlane.f32.xlu0 %v7785
  %v7787 = vpop.xlane.xlu0 %7786
  %v7788 = vsel %vm2651, %v7743, 0.0
  %7789 = vadd.xlane.f32.xlu0 %v7788
  %v7790 = vpop.xlane.xlu0 %7789
  %v7791 = vsel %vm2651, %v7745, 0.0
  %7792 = vadd.xlane.f32.xlu0 %v7791
  %v7793 = vpop.xlane.xlu0 %7792
  %v7794 = vsel %vm2651, %v7747, 0.0
  %7795 = vadd.xlane.f32.xlu0 %v7794
  %v7796 = vpop.xlane.xlu0 %7795
  %v7797 = vsel %vm2664, %v7749, 0.0
  %7798 = vadd.xlane.f32.xlu0 %v7797
  %v7799 = vpop.xlane.xlu0 %7798
  %v7800 = vsel %vm2651, %v7751, 0.0
  %7801 = vadd.xlane.f32.xlu0 %v7800
  %v7802 = vpop.xlane.xlu0 %7801
  %v7803 = vsel %vm2651, %v7753, 0.0
  %7804 = vadd.xlane.f32.xlu0 %v7803
  %v7805 = vpop.xlane.xlu0 %7804
  %v7806 = vsel %vm2651, %v7755, 0.0
  %7807 = vadd.xlane.f32.xlu0 %v7806
  %v7808 = vpop.xlane.xlu0 %7807
  %v7809 = vsel %vm2651, %v7757, 0.0
  %7810 = vadd.xlane.f32.xlu0 %v7809
  %v7811 = vpop.xlane.xlu0 %7810
  %v7812 = vsel %vm2664, %v7759, 0.0
  %7813 = vadd.xlane.f32.xlu0 %v7812
  %v7814 = vpop.xlane.xlu0 %7813
  %v7815 = vsel %vm2651, %v7761, 0.0
  %7816 = vadd.xlane.f32.xlu0 %v7815
  %v7817 = vpop.xlane.xlu0 %7816
  %v7818 = vsel %vm2651, %v7763, 0.0
  %7819 = vadd.xlane.f32.xlu0 %v7818
  %v7820 = vpop.xlane.xlu0 %7819
  %v7821 = vsel %vm2651, %v7765, 0.0
  %7822 = vadd.xlane.f32.xlu0 %v7821
  %v7823 = vpop.xlane.xlu0 %7822
  %v7824 = vsel %vm2651, %v7767, 0.0
  %7825 = vadd.xlane.f32.xlu0 %v7824
  %v7826 = vpop.xlane.xlu0 %7825
  %v7827 = vsel %vm2664, %v7769, 0.0
  %7828 = vadd.xlane.f32.xlu0 %v7827
  %v7829 = vpop.xlane.xlu0 %7828
  %v7830 = vrcp.pop %v7772
  %v7831 = vmul.f32 %v7731, %v7830
  %v7832 = vrcp.pop %v7775
  %v7833 = vmul.f32 %v7733, %v7832
  %v7834 = vrcp.pop %v7778
  %v7835 = vmul.f32 %v7735, %v7834
  %v7836 = vrcp.pop %v7781
  %v7837 = vmul.f32 %v7737, %v7836
  %v7838 = vrcp.pop %v7784
  %v7839 = vmul.f32 %v7739, %v7838
  %v7840 = vrcp.pop %v7787
  %v7841 = vmul.f32 %v7741, %v7840
  %v7842 = vrcp.pop %v7790
  %v7843 = vmul.f32 %v7743, %v7842
  %v7844 = vrcp.pop %v7793
  %v7845 = vmul.f32 %v7745, %v7844
  %v7846 = vrcp.pop %v7796
  %v7847 = vmul.f32 %v7747, %v7846
  %v7848 = vrcp.pop %v7799
  %v7849 = vmul.f32 %v7749, %v7848
  %v7850 = vrcp.pop %v7802
  %v7851 = vmul.f32 %v7751, %v7850
  %v7852 = vrcp.pop %v7805
  %v7853 = vmul.f32 %v7753, %v7852
  %v7854 = vrcp.pop %v7808
  %v7855 = vmul.f32 %v7755, %v7854
  %v7856 = vrcp.pop %v7811
  %v7857 = vmul.f32 %v7757, %v7856
  %v7858 = vrcp.pop %v7814
  %v7859 = vmul.f32 %v7759, %v7858
  %v7860 = vrcp.pop %v7817
  %v7861 = vmul.f32 %v7761, %v7860
  %v7862 = vrcp.pop %v7820
  %v7863 = vmul.f32 %v7763, %v7862
  %v7864 = vrcp.pop %v7823
  %v7865 = vmul.f32 %v7765, %v7864
  %v7866 = vrcp.pop %v7826
  %v7867 = vmul.f32 %v7767, %v7866
  %v7868 = vrcp.pop %v7829
  %v7869 = vmul.f32 %v7769, %v7868
  %7870 = vrot.lane.b32.xlu0 %v1263, 80
  %v7871 = vpop.permute.xlu0 %7870
  %7872 = vrot.lane.b32.xlu0 %v1268, 80
  %v7873 = vpop.permute.xlu0 %7872
  %7874 = vrot.lane.b32.xlu0 %v1273, 80
  %v7875 = vpop.permute.xlu0 %7874
  %7876 = vrot.lane.b32.xlu0 %v1278, 80
  %v7877 = vpop.permute.xlu0 %7876
  %7878 = vrot.lane.b32.xlu0 %v1283, 80
  %v7879 = vpop.permute.xlu0 %7878
  %v7885 = vsel %vm2651, %v7831, 0
  %v7888 = vsel %vm2651, %v7833, 0
  %v7891 = vsel %vm2651, %v7835, 0
  %v7894 = vsel %vm2651, %v7837, 0
  %v7897 = vsel %vm2651, %v7839, 0
  %v7899 = vsel %vm2888, %v7879, 0
  %7901 = vmatprep.subr.mxu0 0.0
  %7902 = vmatpush1.msra.mxu0 %v7871
  %7903 = vmatprep.subr.mxu0 0.0
  %7904 = vmatpush1.msra.mxu0 %v7873
  %7905 = vmatprep.subr.mxu0 0.0
  %7906 = vmatpush1.msra.mxu0 %v7875
  %7907 = vmatprep.subr.mxu0 0.0
  %7908 = vmatpush1.msra.mxu0 %v7877
  %7909 = vmatprep.subr.mxu0 0.0
  %7910 = vmatpush1.msra.mxu0 %v7899
  %7911 = vmatprep.subr.mxu0 0.0
  %7912 = vmatpush1.msra.mxu0 0.0
  %7913 = vmatprep.subr.mxu0 0.0
  %7914 = vmatpush1.msra.mxu0 0.0
  %7915 = vmatprep.subr.mxu0 0.0
  %7916 = vmatpush1.msra.mxu0 0.0
  %7917 = vmatprep.subr.mxu0 0.0
  %7918 = vmatpush1.msra.mxu0 0.0
  %7919 = vmatprep.subr.mxu0 0.0
  %7920 = vmatpush1.msra.mxu0 0.0
  %7921 = vmatprep.subr.mxu0 0.0
  %7922 = vmatpush1.msra.mxu0 0.0
  %7923 = vmatprep.subr.mxu0 0.0
  %7924 = vmatpush1.msra.mxu0 0.0
  %7925 = vmatprep.subr.mxu0 0.0
  %7926 = vmatpush1.msra.mxu0 0.0
  %7927 = vmatprep.subr.mxu0 0.0
  %7928 = vmatpush1.msra.mxu0 0.0
  %7929 = vmatprep.subr.mxu0 0.0
  %7930 = vmatpush1.msra.mxu0 0.0
  %7931 = vmatprep.subr.mxu0 0.0
  %7932 = vmatpush1.msra.mxu0 0.0
  %7933 = vmatprep.subr.mxu0 0.0
  %7934 = vmatpush1.msra.mxu0 0.0
  %7935 = vmatprep.subr.mxu0 0.0
  %7936 = vmatpush1.msra.mxu0 0.0
  %7937 = vmatprep.subr.mxu0 0.0
  %7938 = vmatpush1.msra.mxu0 0.0
  %7939 = vmatprep.subr.mxu0 0.0
  %7940 = vmatpush1.msra.mxu0 0.0
  %7941 = vmatprep.subr.mxu0 0.0
  %7942 = vmatpush1.msra.mxu0 0.0
  %7943 = vmatprep.subr.mxu0 0.0
  %7944 = vmatpush1.msra.mxu0 0.0
  %7945 = vmatprep.subr.mxu0 0.0
  %7946 = vmatpush1.msra.mxu0 0.0
  %7947 = vmatprep.subr.mxu0 0.0
  %7948 = vmatpush1.msra.mxu0 0.0
  %7949 = vmatprep.subr.mxu0 0.0
  %7950 = vmatpush1.msra.mxu0 0.0
  %7951 = vmatprep.subr.mxu0 0.0
  %7952 = vmatpush1.msra.mxu0 0.0
  %7953 = vmatprep.subr.mxu0 0.0
  %7954 = vmatpush1.msra.mxu0 0.0
  %7955 = vmatprep.subr.mxu0 0.0
  %7956 = vmatpush1.msra.mxu0 0.0
  %7957 = vmatprep.subr.mxu0 0.0
  %7958 = vmatpush1.msra.mxu0 0.0
  %7959 = vmatprep.subr.mxu0 0.0
  %7960 = vmatpush1.msra.mxu0 0.0
  %7961 = vmatprep.subr.mxu0 0.0
  %7962 = vmatpush1.msra.mxu0 0.0
  %7963 = vmatprep.subr.mxu0 0.0
  %7964 = vmatpush1.msra.mxu0 0.0
  %7965 = vmatprep.mubr.f32.mxu0 0.0
  %7966 = vmatmul.mubr.f32.gmra.mrb[0].mxu0 %v7885
  %v7967 = vpop.f32.mrb[0].mxu0
  %v7968 = vadd.f32 0.0, %v7967
  %v7969 = vpop.f32.mrb[0].mxu0
  %7970 = vmatprep.mubr.f32.mxu0 0.0
  %7971 = vmatmul.mubr.f32.gmra.mrb[0].mxu0 %v7888
  %v7972 = vpop.f32.mrb[0].mxu0
  %v7973 = vadd.f32 0.0, %v7972
  %v7974 = vpop.f32.mrb[0].mxu0
  %7975 = vmatprep.mubr.f32.mxu0 0.0
  %7976 = vmatmul.mubr.f32.gmra.mrb[0].mxu0 %v7891
  %v7977 = vpop.f32.mrb[0].mxu0
  %v7978 = vadd.f32 0.0, %v7977
  %v7979 = vpop.f32.mrb[0].mxu0
  %7980 = vmatprep.mubr.f32.mxu0 0.0
  %7981 = vmatmul.mubr.f32.gmra.mrb[0].mxu0 %v7894
  %v7982 = vpop.f32.mrb[0].mxu0
  %v7983 = vadd.f32 0.0, %v7982
  %v7984 = vpop.f32.mrb[0].mxu0
  %7985 = vmatprep.mubr.f32.mxu0 0.0
  %7986 = vmatmul.mubr.f32.gmra.mrb[0].mxu0 %v7897
  %v7987 = vpop.f32.mrb[0].mxu0
  %v7988 = vadd.f32 0.0, %v7987
  %v7989 = vpop.f32.mrb[0].mxu0
  %7990 = vdwg.mxu0
  %7991 = vrot.lane.b32.xlu0 %v1353, 80
  %v7992 = vpop.permute.xlu0 %7991
  %7993 = vrot.lane.b32.xlu0 %v1358, 80
  %v7994 = vpop.permute.xlu0 %7993
  %7995 = vrot.lane.b32.xlu0 %v1363, 80
  %v7996 = vpop.permute.xlu0 %7995
  %7997 = vrot.lane.b32.xlu0 %v1368, 80
  %v7998 = vpop.permute.xlu0 %7997
  %7999 = vrot.lane.b32.xlu0 %v1373, 80
  %v8000 = vpop.permute.xlu0 %7999
  %v8006 = vsel %vm2651, %v7841, 0
  %v8009 = vsel %vm2651, %v7843, 0
  %v8012 = vsel %vm2651, %v7845, 0
  %v8015 = vsel %vm2651, %v7847, 0
  %v8018 = vsel %vm2651, %v7849, 0
  %v8020 = vsel %vm2888, %v8000, 0
  %8022 = vmatprep.subr.mxu0 0.0
  %8023 = vmatpush1.msra.mxu0 %v7992
  %8024 = vmatprep.subr.mxu0 0.0
  %8025 = vmatpush1.msra.mxu0 %v7994
  %8026 = vmatprep.subr.mxu0 0.0
  %8027 = vmatpush1.msra.mxu0 %v7996
  %8028 = vmatprep.subr.mxu0 0.0
  %8029 = vmatpush1.msra.mxu0 %v7998
  %8030 = vmatprep.subr.mxu0 0.0
  %8031 = vmatpush1.msra.mxu0 %v8020
  %8032 = vmatprep.subr.mxu0 0.0
  %8033 = vmatpush1.msra.mxu0 0.0
  %8034 = vmatprep.subr.mxu0 0.0
  %8035 = vmatpush1.msra.mxu0 0.0
  %8036 = vmatprep.subr.mxu0 0.0
  %8037 = vmatpush1.msra.mxu0 0.0
  %8038 = vmatprep.subr.mxu0 0.0
  %8039 = vmatpush1.msra.mxu0 0.0
  %8040 = vmatprep.subr.mxu0 0.0
  %8041 = vmatpush1.msra.mxu0 0.0
  %8042 = vmatprep.subr.mxu0 0.0
  %8043 = vmatpush1.msra.mxu0 0.0
  %8044 = vmatprep.subr.mxu0 0.0
  %8045 = vmatpush1.msra.mxu0 0.0
  %8046 = vmatprep.subr.mxu0 0.0
  %8047 = vmatpush1.msra.mxu0 0.0
  %8048 = vmatprep.subr.mxu0 0.0
  %8049 = vmatpush1.msra.mxu0 0.0
  %8050 = vmatprep.subr.mxu0 0.0
  %8051 = vmatpush1.msra.mxu0 0.0
  %8052 = vmatprep.subr.mxu0 0.0
  %8053 = vmatpush1.msra.mxu0 0.0
  %8054 = vmatprep.subr.mxu0 0.0
  %8055 = vmatpush1.msra.mxu0 0.0
  %8056 = vmatprep.subr.mxu0 0.0
  %8057 = vmatpush1.msra.mxu0 0.0
  %8058 = vmatprep.subr.mxu0 0.0
  %8059 = vmatpush1.msra.mxu0 0.0
  %8060 = vmatprep.subr.mxu0 0.0
  %8061 = vmatpush1.msra.mxu0 0.0
  %8062 = vmatprep.subr.mxu0 0.0
  %8063 = vmatpush1.msra.mxu0 0.0
  %8064 = vmatprep.subr.mxu0 0.0
  %8065 = vmatpush1.msra.mxu0 0.0
  %8066 = vmatprep.subr.mxu0 0.0
  %8067 = vmatpush1.msra.mxu0 0.0
  %8068 = vmatprep.subr.mxu0 0.0
  %8069 = vmatpush1.msra.mxu0 0.0
  %8070 = vmatprep.subr.mxu0 0.0
  %8071 = vmatpush1.msra.mxu0 0.0
  %8072 = vmatprep.subr.mxu0 0.0
  %8073 = vmatpush1.msra.mxu0 0.0
  %8074 = vmatprep.subr.mxu0 0.0
  %8075 = vmatpush1.msra.mxu0 0.0
  %8076 = vmatprep.subr.mxu0 0.0
  %8077 = vmatpush1.msra.mxu0 0.0
  %8078 = vmatprep.subr.mxu0 0.0
  %8079 = vmatpush1.msra.mxu0 0.0
  %8080 = vmatprep.subr.mxu0 0.0
  %8081 = vmatpush1.msra.mxu0 0.0
  %8082 = vmatprep.subr.mxu0 0.0
  %8083 = vmatpush1.msra.mxu0 0.0
  %8084 = vmatprep.subr.mxu0 0.0
  %8085 = vmatpush1.msra.mxu0 0.0
  %8086 = vmatprep.mubr.f32.mxu0 0.0
  %8087 = vmatmul.mubr.f32.gmra.mrb[0].mxu0 %v8006
  %v8088 = vpop.f32.mrb[0].mxu0
  %v8089 = vadd.f32 0.0, %v8088
  %v8090 = vpop.f32.mrb[0].mxu0
  %8091 = vmatprep.mubr.f32.mxu0 0.0
  %8092 = vmatmul.mubr.f32.gmra.mrb[0].mxu0 %v8009
  %v8093 = vpop.f32.mrb[0].mxu0
  %v8094 = vadd.f32 0.0, %v8093
  %v8095 = vpop.f32.mrb[0].mxu0
  %8096 = vmatprep.mubr.f32.mxu0 0.0
  %8097 = vmatmul.mubr.f32.gmra.mrb[0].mxu0 %v8012
  %v8098 = vpop.f32.mrb[0].mxu0
  %v8099 = vadd.f32 0.0, %v8098
  %v8100 = vpop.f32.mrb[0].mxu0
  %8101 = vmatprep.mubr.f32.mxu0 0.0
  %8102 = vmatmul.mubr.f32.gmra.mrb[0].mxu0 %v8015
  %v8103 = vpop.f32.mrb[0].mxu0
  %v8104 = vadd.f32 0.0, %v8103
  %v8105 = vpop.f32.mrb[0].mxu0
  %8106 = vmatprep.mubr.f32.mxu0 0.0
  %8107 = vmatmul.mubr.f32.gmra.mrb[0].mxu0 %v8018
  %v8108 = vpop.f32.mrb[0].mxu0
  %v8109 = vadd.f32 0.0, %v8108
  %v8110 = vpop.f32.mrb[0].mxu0
  %8111 = vdwg.mxu0
  %8112 = vrot.lane.b32.xlu0 %v1443, 80
  %v8113 = vpop.permute.xlu0 %8112
  %8114 = vrot.lane.b32.xlu0 %v1448, 80
  %v8115 = vpop.permute.xlu0 %8114
  %8116 = vrot.lane.b32.xlu0 %v1453, 80
  %v8117 = vpop.permute.xlu0 %8116
  %8118 = vrot.lane.b32.xlu0 %v1458, 80
  %v8119 = vpop.permute.xlu0 %8118
  %8120 = vrot.lane.b32.xlu0 %v1463, 80
  %v8121 = vpop.permute.xlu0 %8120
  %v8127 = vsel %vm2651, %v7851, 0
  %v8130 = vsel %vm2651, %v7853, 0
  %v8133 = vsel %vm2651, %v7855, 0
  %v8136 = vsel %vm2651, %v7857, 0
  %v8139 = vsel %vm2651, %v7859, 0
  %v8141 = vsel %vm2888, %v8121, 0
  %8143 = vmatprep.subr.mxu0 0.0
  %8144 = vmatpush1.msra.mxu0 %v8113
  %8145 = vmatprep.subr.mxu0 0.0
  %8146 = vmatpush1.msra.mxu0 %v8115
  %8147 = vmatprep.subr.mxu0 0.0
  %8148 = vmatpush1.msra.mxu0 %v8117
  %8149 = vmatprep.subr.mxu0 0.0
  %8150 = vmatpush1.msra.mxu0 %v8119
  %8151 = vmatprep.subr.mxu0 0.0
  %8152 = vmatpush1.msra.mxu0 %v8141
  %8153 = vmatprep.subr.mxu0 0.0
  %8154 = vmatpush1.msra.mxu0 0.0
  %8155 = vmatprep.subr.mxu0 0.0
  %8156 = vmatpush1.msra.mxu0 0.0
  %8157 = vmatprep.subr.mxu0 0.0
  %8158 = vmatpush1.msra.mxu0 0.0
  %8159 = vmatprep.subr.mxu0 0.0
  %8160 = vmatpush1.msra.mxu0 0.0
  %8161 = vmatprep.subr.mxu0 0.0
  %8162 = vmatpush1.msra.mxu0 0.0
  %8163 = vmatprep.subr.mxu0 0.0
  %8164 = vmatpush1.msra.mxu0 0.0
  %8165 = vmatprep.subr.mxu0 0.0
  %8166 = vmatpush1.msra.mxu0 0.0
  %8167 = vmatprep.subr.mxu0 0.0
  %8168 = vmatpush1.msra.mxu0 0.0
  %8169 = vmatprep.subr.mxu0 0.0
  %8170 = vmatpush1.msra.mxu0 0.0
  %8171 = vmatprep.subr.mxu0 0.0
  %8172 = vmatpush1.msra.mxu0 0.0
  %8173 = vmatprep.subr.mxu0 0.0
  %8174 = vmatpush1.msra.mxu0 0.0
  %8175 = vmatprep.subr.mxu0 0.0
  %8176 = vmatpush1.msra.mxu0 0.0
  %8177 = vmatprep.subr.mxu0 0.0
  %8178 = vmatpush1.msra.mxu0 0.0
  %8179 = vmatprep.subr.mxu0 0.0
  %8180 = vmatpush1.msra.mxu0 0.0
  %8181 = vmatprep.subr.mxu0 0.0
  %8182 = vmatpush1.msra.mxu0 0.0
  %8183 = vmatprep.subr.mxu0 0.0
  %8184 = vmatpush1.msra.mxu0 0.0
  %8185 = vmatprep.subr.mxu0 0.0
  %8186 = vmatpush1.msra.mxu0 0.0
  %8187 = vmatprep.subr.mxu0 0.0
  %8188 = vmatpush1.msra.mxu0 0.0
  %8189 = vmatprep.subr.mxu0 0.0
  %8190 = vmatpush1.msra.mxu0 0.0
  %8191 = vmatprep.subr.mxu0 0.0
  %8192 = vmatpush1.msra.mxu0 0.0
  %8193 = vmatprep.subr.mxu0 0.0
  %8194 = vmatpush1.msra.mxu0 0.0
  %8195 = vmatprep.subr.mxu0 0.0
  %8196 = vmatpush1.msra.mxu0 0.0
  %8197 = vmatprep.subr.mxu0 0.0
  %8198 = vmatpush1.msra.mxu0 0.0
  %8199 = vmatprep.subr.mxu0 0.0
  %8200 = vmatpush1.msra.mxu0 0.0
  %8201 = vmatprep.subr.mxu0 0.0
  %8202 = vmatpush1.msra.mxu0 0.0
  %8203 = vmatprep.subr.mxu0 0.0
  %8204 = vmatpush1.msra.mxu0 0.0
  %8205 = vmatprep.subr.mxu0 0.0
  %8206 = vmatpush1.msra.mxu0 0.0
  %8207 = vmatprep.mubr.f32.mxu0 0.0
  %8208 = vmatmul.mubr.f32.gmra.mrb[0].mxu0 %v8127
  %v8209 = vpop.f32.mrb[0].mxu0
  %v8210 = vadd.f32 0.0, %v8209
  %v8211 = vpop.f32.mrb[0].mxu0
  %8212 = vmatprep.mubr.f32.mxu0 0.0
  %8213 = vmatmul.mubr.f32.gmra.mrb[0].mxu0 %v8130
  %v8214 = vpop.f32.mrb[0].mxu0
  %v8215 = vadd.f32 0.0, %v8214
  %v8216 = vpop.f32.mrb[0].mxu0
  %8217 = vmatprep.mubr.f32.mxu0 0.0
  %8218 = vmatmul.mubr.f32.gmra.mrb[0].mxu0 %v8133
  %v8219 = vpop.f32.mrb[0].mxu0
  %v8220 = vadd.f32 0.0, %v8219
  %v8221 = vpop.f32.mrb[0].mxu0
  %8222 = vmatprep.mubr.f32.mxu0 0.0
  %8223 = vmatmul.mubr.f32.gmra.mrb[0].mxu0 %v8136
  %v8224 = vpop.f32.mrb[0].mxu0
  %v8225 = vadd.f32 0.0, %v8224
  %v8226 = vpop.f32.mrb[0].mxu0
  %8227 = vmatprep.mubr.f32.mxu0 0.0
  %8228 = vmatmul.mubr.f32.gmra.mrb[0].mxu0 %v8139
  %v8229 = vpop.f32.mrb[0].mxu0
  %v8230 = vadd.f32 0.0, %v8229
  %v8231 = vpop.f32.mrb[0].mxu0
  %8232 = vdwg.mxu0
  %8233 = vrot.lane.b32.xlu0 %v1533, 80
  %v8234 = vpop.permute.xlu0 %8233
  %8235 = vrot.lane.b32.xlu0 %v1538, 80
  %v8236 = vpop.permute.xlu0 %8235
  %8237 = vrot.lane.b32.xlu0 %v1543, 80
  %v8238 = vpop.permute.xlu0 %8237
  %8239 = vrot.lane.b32.xlu0 %v1548, 80
  %v8240 = vpop.permute.xlu0 %8239
  %8241 = vrot.lane.b32.xlu0 %v1553, 80
  %v8242 = vpop.permute.xlu0 %8241
  %v8248 = vsel %vm2651, %v7861, 0
  %v8251 = vsel %vm2651, %v7863, 0
  %v8254 = vsel %vm2651, %v7865, 0
  %v8257 = vsel %vm2651, %v7867, 0
  %v8260 = vsel %vm2651, %v7869, 0
  %v8262 = vsel %vm2888, %v8242, 0
  %8264 = vmatprep.subr.mxu0 0.0
  %8265 = vmatpush1.msra.mxu0 %v8234
  %8266 = vmatprep.subr.mxu0 0.0
  %8267 = vmatpush1.msra.mxu0 %v8236
  %8268 = vmatprep.subr.mxu0 0.0
  %8269 = vmatpush1.msra.mxu0 %v8238
  %8270 = vmatprep.subr.mxu0 0.0
  %8271 = vmatpush1.msra.mxu0 %v8240
  %8272 = vmatprep.subr.mxu0 0.0
  %8273 = vmatpush1.msra.mxu0 %v8262
  %8274 = vmatprep.subr.mxu0 0.0
  %8275 = vmatpush1.msra.mxu0 0.0
  %8276 = vmatprep.subr.mxu0 0.0
  %8277 = vmatpush1.msra.mxu0 0.0
  %8278 = vmatprep.subr.mxu0 0.0
  %8279 = vmatpush1.msra.mxu0 0.0
  %8280 = vmatprep.subr.mxu0 0.0
  %8281 = vmatpush1.msra.mxu0 0.0
  %8282 = vmatprep.subr.mxu0 0.0
  %8283 = vmatpush1.msra.mxu0 0.0
  %8284 = vmatprep.subr.mxu0 0.0
  %8285 = vmatpush1.msra.mxu0 0.0
  %8286 = vmatprep.subr.mxu0 0.0
  %8287 = vmatpush1.msra.mxu0 0.0
  %8288 = vmatprep.subr.mxu0 0.0
  %8289 = vmatpush1.msra.mxu0 0.0
  %8290 = vmatprep.subr.mxu0 0.0
  %8291 = vmatpush1.msra.mxu0 0.0
  %8292 = vmatprep.subr.mxu0 0.0
  %8293 = vmatpush1.msra.mxu0 0.0
  %8294 = vmatprep.subr.mxu0 0.0
  %8295 = vmatpush1.msra.mxu0 0.0
  %8296 = vmatprep.subr.mxu0 0.0
  %8297 = vmatpush1.msra.mxu0 0.0
  %8298 = vmatprep.subr.mxu0 0.0
  %8299 = vmatpush1.msra.mxu0 0.0
  %8300 = vmatprep.subr.mxu0 0.0
  %8301 = vmatpush1.msra.mxu0 0.0
  %8302 = vmatprep.subr.mxu0 0.0
  %8303 = vmatpush1.msra.mxu0 0.0
  %8304 = vmatprep.subr.mxu0 0.0
  %8305 = vmatpush1.msra.mxu0 0.0
  %8306 = vmatprep.subr.mxu0 0.0
  %8307 = vmatpush1.msra.mxu0 0.0
  %8308 = vmatprep.subr.mxu0 0.0
  %8309 = vmatpush1.msra.mxu0 0.0
  %8310 = vmatprep.subr.mxu0 0.0
  %8311 = vmatpush1.msra.mxu0 0.0
  %8312 = vmatprep.subr.mxu0 0.0
  %8313 = vmatpush1.msra.mxu0 0.0
  %8314 = vmatprep.subr.mxu0 0.0
  %8315 = vmatpush1.msra.mxu0 0.0
  %8316 = vmatprep.subr.mxu0 0.0
  %8317 = vmatpush1.msra.mxu0 0.0
  %8318 = vmatprep.subr.mxu0 0.0
  %8319 = vmatpush1.msra.mxu0 0.0
  %8320 = vmatprep.subr.mxu0 0.0
  %8321 = vmatpush1.msra.mxu0 0.0
  %8322 = vmatprep.subr.mxu0 0.0
  %8323 = vmatpush1.msra.mxu0 0.0
  %8324 = vmatprep.subr.mxu0 0.0
  %8325 = vmatpush1.msra.mxu0 0.0
  %8326 = vmatprep.subr.mxu0 0.0
  %8327 = vmatpush1.msra.mxu0 0.0
  %8328 = vmatprep.mubr.f32.mxu0 0.0
  %8329 = vmatmul.mubr.f32.gmra.mrb[0].mxu0 %v8248
  %v8330 = vpop.f32.mrb[0].mxu0
  %v8331 = vadd.f32 0.0, %v8330
  %v8332 = vpop.f32.mrb[0].mxu0
  %8333 = vmatprep.mubr.f32.mxu0 0.0
  %8334 = vmatmul.mubr.f32.gmra.mrb[0].mxu0 %v8251
  %v8335 = vpop.f32.mrb[0].mxu0
  %v8336 = vadd.f32 0.0, %v8335
  %v8337 = vpop.f32.mrb[0].mxu0
  %8338 = vmatprep.mubr.f32.mxu0 0.0
  %8339 = vmatmul.mubr.f32.gmra.mrb[0].mxu0 %v8254
  %v8340 = vpop.f32.mrb[0].mxu0
  %v8341 = vadd.f32 0.0, %v8340
  %v8342 = vpop.f32.mrb[0].mxu0
  %8343 = vmatprep.mubr.f32.mxu0 0.0
  %8344 = vmatmul.mubr.f32.gmra.mrb[0].mxu0 %v8257
  %v8345 = vpop.f32.mrb[0].mxu0
  %v8346 = vadd.f32 0.0, %v8345
  %v8347 = vpop.f32.mrb[0].mxu0
  %8348 = vmatprep.mubr.f32.mxu0 0.0
  %8349 = vmatmul.mubr.f32.gmra.mrb[0].mxu0 %v8260
  %v8350 = vpop.f32.mrb[0].mxu0
  %v8351 = vadd.f32 0.0, %v8350
  %v8352 = vpop.f32.mrb[0].mxu0
  %8353 = vdwg.mxu0
  %8374 = vrot.lane.b32.xlu0 %v4628, 16
  %v8375 = vpop.permute.xlu0 %8374
  %8376 = vrot.lane.b32.xlu0 %v4633, 16
  %v8377 = vpop.permute.xlu0 %8376
  %8378 = vrot.lane.b32.xlu0 %v4638, 16
  %v8379 = vpop.permute.xlu0 %8378
  %8380 = vrot.lane.b32.xlu0 %v4643, 16
  %v8381 = vpop.permute.xlu0 %8380
  %8382 = vrot.lane.b32.xlu0 %v4648, 16
  %v8383 = vpop.permute.xlu0 %8382
  %8384 = vrot.lane.b32.xlu0 %v4753, 16
  %v8385 = vpop.permute.xlu0 %8384
  %8386 = vrot.lane.b32.xlu0 %v4758, 16
  %v8387 = vpop.permute.xlu0 %8386
  %8388 = vrot.lane.b32.xlu0 %v4763, 16
  %v8389 = vpop.permute.xlu0 %8388
  %8390 = vrot.lane.b32.xlu0 %v4768, 16
  %v8391 = vpop.permute.xlu0 %8390
  %8392 = vrot.lane.b32.xlu0 %v4773, 16
  %v8393 = vpop.permute.xlu0 %8392
  %8394 = vrot.lane.b32.xlu0 %v4878, 16
  %v8395 = vpop.permute.xlu0 %8394
  %8396 = vrot.lane.b32.xlu0 %v4883, 16
  %v8397 = vpop.permute.xlu0 %8396
  %8398 = vrot.lane.b32.xlu0 %v4888, 16
  %v8399 = vpop.permute.xlu0 %8398
  %8400 = vrot.lane.b32.xlu0 %v4893, 16
  %v8401 = vpop.permute.xlu0 %8400
  %8402 = vrot.lane.b32.xlu0 %v4898, 16
  %v8403 = vpop.permute.xlu0 %8402
  %8404 = vrot.lane.b32.xlu0 %v5003, 16
  %v8405 = vpop.permute.xlu0 %8404
  %8406 = vrot.lane.b32.xlu0 %v5008, 16
  %v8407 = vpop.permute.xlu0 %8406
  %8408 = vrot.lane.b32.xlu0 %v5013, 16
  %v8409 = vpop.permute.xlu0 %8408
  %8410 = vrot.lane.b32.xlu0 %v5018, 16
  %v8411 = vpop.permute.xlu0 %8410
  %8412 = vrot.lane.b32.xlu0 %v5023, 16
  %v8413 = vpop.permute.xlu0 %8412
  %8454 = vrot.lane.b32.xlu0 %v6304, 32
  %v8455 = vpop.permute.xlu0 %8454
  %8456 = vrot.lane.b32.xlu0 %v6309, 32
  %v8457 = vpop.permute.xlu0 %8456
  %8458 = vrot.lane.b32.xlu0 %v6314, 32
  %v8459 = vpop.permute.xlu0 %8458
  %8460 = vrot.lane.b32.xlu0 %v6319, 32
  %v8461 = vpop.permute.xlu0 %8460
  %8462 = vrot.lane.b32.xlu0 %v6324, 32
  %v8463 = vpop.permute.xlu0 %8462
  %8464 = vrot.lane.b32.xlu0 %v6425, 32
  %v8465 = vpop.permute.xlu0 %8464
  %8466 = vrot.lane.b32.xlu0 %v6430, 32
  %v8467 = vpop.permute.xlu0 %8466
  %8468 = vrot.lane.b32.xlu0 %v6435, 32
  %v8469 = vpop.permute.xlu0 %8468
  %8470 = vrot.lane.b32.xlu0 %v6440, 32
  %v8471 = vpop.permute.xlu0 %8470
  %8472 = vrot.lane.b32.xlu0 %v6445, 32
  %v8473 = vpop.permute.xlu0 %8472
  %8474 = vrot.lane.b32.xlu0 %v6546, 32
  %v8475 = vpop.permute.xlu0 %8474
  %8476 = vrot.lane.b32.xlu0 %v6551, 32
  %v8477 = vpop.permute.xlu0 %8476
  %8478 = vrot.lane.b32.xlu0 %v6556, 32
  %v8479 = vpop.permute.xlu0 %8478
  %8480 = vrot.lane.b32.xlu0 %v6561, 32
  %v8481 = vpop.permute.xlu0 %8480
  %8482 = vrot.lane.b32.xlu0 %v6566, 32
  %v8483 = vpop.permute.xlu0 %8482
  %8484 = vrot.lane.b32.xlu0 %v6667, 32
  %v8485 = vpop.permute.xlu0 %8484
  %8486 = vrot.lane.b32.xlu0 %v6672, 32
  %v8487 = vpop.permute.xlu0 %8486
  %8488 = vrot.lane.b32.xlu0 %v6677, 32
  %v8489 = vpop.permute.xlu0 %8488
  %8490 = vrot.lane.b32.xlu0 %v6682, 32
  %v8491 = vpop.permute.xlu0 %8490
  %8492 = vrot.lane.b32.xlu0 %v6687, 32
  %v8493 = vpop.permute.xlu0 %8492
  %8534 = vrot.lane.b32.xlu0 %v7968, 48
  %v8535 = vpop.permute.xlu0 %8534
  %8536 = vrot.lane.b32.xlu0 %v7973, 48
  %v8537 = vpop.permute.xlu0 %8536
  %8538 = vrot.lane.b32.xlu0 %v7978, 48
  %v8539 = vpop.permute.xlu0 %8538
  %8540 = vrot.lane.b32.xlu0 %v7983, 48
  %v8541 = vpop.permute.xlu0 %8540
  %8542 = vrot.lane.b32.xlu0 %v7988, 48
  %v8543 = vpop.permute.xlu0 %8542
  %8544 = vrot.lane.b32.xlu0 %v8089, 48
  %v8545 = vpop.permute.xlu0 %8544
  %8546 = vrot.lane.b32.xlu0 %v8094, 48
  %v8547 = vpop.permute.xlu0 %8546
  %8548 = vrot.lane.b32.xlu0 %v8099, 48
  %v8549 = vpop.permute.xlu0 %8548
  %8550 = vrot.lane.b32.xlu0 %v8104, 48
  %v8551 = vpop.permute.xlu0 %8550
  %8552 = vrot.lane.b32.xlu0 %v8109, 48
  %v8553 = vpop.permute.xlu0 %8552
  %8554 = vrot.lane.b32.xlu0 %v8210, 48
  %v8555 = vpop.permute.xlu0 %8554
  %8556 = vrot.lane.b32.xlu0 %v8215, 48
  %v8557 = vpop.permute.xlu0 %8556
  %8558 = vrot.lane.b32.xlu0 %v8220, 48
  %v8559 = vpop.permute.xlu0 %8558
  %8560 = vrot.lane.b32.xlu0 %v8225, 48
  %v8561 = vpop.permute.xlu0 %8560
  %8562 = vrot.lane.b32.xlu0 %v8230, 48
  %v8563 = vpop.permute.xlu0 %8562
  %8564 = vrot.lane.b32.xlu0 %v8331, 48
  %v8565 = vpop.permute.xlu0 %8564
  %8566 = vrot.lane.b32.xlu0 %v8336, 48
  %v8567 = vpop.permute.xlu0 %8566
  %8568 = vrot.lane.b32.xlu0 %v8341, 48
  %v8569 = vpop.permute.xlu0 %8568
  %8570 = vrot.lane.b32.xlu0 %v8346, 48
  %v8571 = vpop.permute.xlu0 %8570
  %8572 = vrot.lane.b32.xlu0 %v8351, 48
  %v8573 = vpop.permute.xlu0 %8572
  %v8594 = vsel %vm1868, %v2959, %v8375
  %v8595 = vsel %vm1868, %v2964, %v8377
  %v8596 = vsel %vm1868, %v2969, %v8379
  %v8597 = vsel %vm1868, %v2974, %v8381
  %v8598 = vsel %vm1868, %v2979, %v8383
  %v8599 = vsel %vm1868, %v3067, %v8385
  %v8600 = vsel %vm1868, %v3072, %v8387
  %v8601 = vsel %vm1868, %v3077, %v8389
  %v8602 = vsel %vm1868, %v3082, %v8391
  %v8603 = vsel %vm1868, %v3087, %v8393
  %v8604 = vsel %vm1868, %v3175, %v8395
  %v8605 = vsel %vm1868, %v3180, %v8397
  %v8606 = vsel %vm1868, %v3185, %v8399
  %v8607 = vsel %vm1868, %v3190, %v8401
  %v8608 = vsel %vm1868, %v3195, %v8403
  %v8609 = vsel %vm1868, %v3283, %v8405
  %v8610 = vsel %vm1868, %v3288, %v8407
  %v8611 = vsel %vm1868, %v3293, %v8409
  %v8612 = vsel %vm1868, %v3298, %v8411
  %v8613 = vsel %vm1868, %v3303, %v8413
  %vm8614 = vcmask 261120
  %v8615 = vsel %vm8614, %v8594, %v8455
  %v8616 = vsel %vm8614, %v8595, %v8457
  %v8617 = vsel %vm8614, %v8596, %v8459
  %v8618 = vsel %vm8614, %v8597, %v8461
  %v8619 = vsel %vm8614, %v8598, %v8463
  %v8620 = vsel %vm8614, %v8599, %v8465
  %v8621 = vsel %vm8614, %v8600, %v8467
  %v8622 = vsel %vm8614, %v8601, %v8469
  %v8623 = vsel %vm8614, %v8602, %v8471
  %v8624 = vsel %vm8614, %v8603, %v8473
  %v8625 = vsel %vm8614, %v8604, %v8475
  %v8626 = vsel %vm8614, %v8605, %v8477
  %v8627 = vsel %vm8614, %v8606, %v8479
  %v8628 = vsel %vm8614, %v8607, %v8481
  %v8629 = vsel %vm8614, %v8608, %v8483
  %v8630 = vsel %vm8614, %v8609, %v8485
  %v8631 = vsel %vm8614, %v8610, %v8487
  %v8632 = vsel %vm8614, %v8611, %v8489
  %v8633 = vsel %vm8614, %v8612, %v8491
  %v8634 = vsel %vm8614, %v8613, %v8493
  %vm8635 = vcmask 392192
  %v8636 = vsel %vm8635, %v8615, %v8535
  %v8637 = vsel %vm8635, %v8616, %v8537
  %v8638 = vsel %vm8635, %v8617, %v8539
  %v8639 = vsel %vm8635, %v8618, %v8541
  %v8640 = vsel %vm8635, %v8619, %v8543
  %v8641 = vsel %vm8635, %v8620, %v8545
  %v8642 = vsel %vm8635, %v8621, %v8547
  %v8643 = vsel %vm8635, %v8622, %v8549
  %v8644 = vsel %vm8635, %v8623, %v8551
  %v8645 = vsel %vm8635, %v8624, %v8553
  %v8646 = vsel %vm8635, %v8625, %v8555
  %v8647 = vsel %vm8635, %v8626, %v8557
  %v8648 = vsel %vm8635, %v8627, %v8559
  %v8649 = vsel %vm8635, %v8628, %v8561
  %v8650 = vsel %vm8635, %v8629, %v8563
  %v8651 = vsel %vm8635, %v8630, %v8565
  %v8652 = vsel %vm8635, %v8631, %v8567
  %v8653 = vsel %vm8635, %v8632, %v8569
  %v8654 = vsel %vm8635, %v8633, %v8571
  %v8655 = vsel %vm8635, %v8634, %v8573
  %vm8656 = vcmask 278528
  %v8657 = vsel %vm8656, %v1683, 0.0
  %8658 = vadd.xlane.f32.xlu0 %v8657
  %v8659 = vpop.xlane.xlu0 %8658
  %v8660 = vsel %vm8656, %v1690, 0.0
  %8661 = vadd.xlane.f32.xlu0 %v8660
  %v8662 = vpop.xlane.xlu0 %8661
  %v8663 = vsel %vm8656, %v1691, 0.0
  %8664 = vadd.xlane.f32.xlu0 %v8663
  %v8665 = vpop.xlane.xlu0 %8664
  %v8666 = vsel %vm8656, %v1692, 0.0
  %8667 = vadd.xlane.f32.xlu0 %v8666
  %v8668 = vpop.xlane.xlu0 %8667
  %v8669 = vmax.f32 %v8659, 1.0
  %v8670 = vmax.f32 %v8662, 1.0
  %v8671 = vmax.f32 %v8665, 1.0
  %v8672 = vmax.f32 %v8668, 1.0
  %v8673 = vsel %vm2651, %v1683, 0
  %v8676 = vsel %vm2888, %v8640, 0
  %8678 = vmatprep.subr.mxu0 0.0
  %8679 = vmatpush1.msra.mxu0 %v8636
  %8680 = vmatprep.subr.mxu0 0.0
  %8681 = vmatpush1.msra.mxu0 %v8637
  %8682 = vmatprep.subr.mxu0 0.0
  %8683 = vmatpush1.msra.mxu0 %v8638
  %8684 = vmatprep.subr.mxu0 0.0
  %8685 = vmatpush1.msra.mxu0 %v8639
  %8686 = vmatprep.subr.mxu0 0.0
  %8687 = vmatpush1.msra.mxu0 %v8676
  %8688 = vmatprep.subr.mxu0 0.0
  %8689 = vmatpush1.msra.mxu0 0.0
  %8690 = vmatprep.subr.mxu0 0.0
  %8691 = vmatpush1.msra.mxu0 0.0
  %8692 = vmatprep.subr.mxu0 0.0
  %8693 = vmatpush1.msra.mxu0 0.0
  %8694 = vmatprep.subr.mxu0 0.0
  %8695 = vmatpush1.msra.mxu0 0.0
  %8696 = vmatprep.subr.mxu0 0.0
  %8697 = vmatpush1.msra.mxu0 0.0
  %8698 = vmatprep.subr.mxu0 0.0
  %8699 = vmatpush1.msra.mxu0 0.0
  %8700 = vmatprep.subr.mxu0 0.0
  %8701 = vmatpush1.msra.mxu0 0.0
  %8702 = vmatprep.subr.mxu0 0.0
  %8703 = vmatpush1.msra.mxu0 0.0
  %8704 = vmatprep.subr.mxu0 0.0
  %8705 = vmatpush1.msra.mxu0 0.0
  %8706 = vmatprep.subr.mxu0 0.0
  %8707 = vmatpush1.msra.mxu0 0.0
  %8708 = vmatprep.subr.mxu0 0.0
  %8709 = vmatpush1.msra.mxu0 0.0
  %8710 = vmatprep.subr.mxu0 0.0
  %8711 = vmatpush1.msra.mxu0 0.0
  %8712 = vmatprep.subr.mxu0 0.0
  %8713 = vmatpush1.msra.mxu0 0.0
  %8714 = vmatprep.subr.mxu0 0.0
  %8715 = vmatpush1.msra.mxu0 0.0
  %8716 = vmatprep.subr.mxu0 0.0
  %8717 = vmatpush1.msra.mxu0 0.0
  %8718 = vmatprep.subr.mxu0 0.0
  %8719 = vmatpush1.msra.mxu0 0.0
  %8720 = vmatprep.subr.mxu0 0.0
  %8721 = vmatpush1.msra.mxu0 0.0
  %8722 = vmatprep.subr.mxu0 0.0
  %8723 = vmatpush1.msra.mxu0 0.0
  %8724 = vmatprep.subr.mxu0 0.0
  %8725 = vmatpush1.msra.mxu0 0.0
  %8726 = vmatprep.subr.mxu0 0.0
  %8727 = vmatpush1.msra.mxu0 0.0
  %8728 = vmatprep.subr.mxu0 0.0
  %8729 = vmatpush1.msra.mxu0 0.0
  %8730 = vmatprep.subr.mxu0 0.0
  %8731 = vmatpush1.msra.mxu0 0.0
  %8732 = vmatprep.subr.mxu0 0.0
  %8733 = vmatpush1.msra.mxu0 0.0
  %8734 = vmatprep.subr.mxu0 0.0
  %8735 = vmatpush1.msra.mxu0 0.0
  %8736 = vmatprep.subr.mxu0 0.0
  %8737 = vmatpush1.msra.mxu0 0.0
  %8738 = vmatprep.subr.mxu0 0.0
  %8739 = vmatpush1.msra.mxu0 0.0
  %8740 = vmatprep.subr.mxu0 0.0
  %8741 = vmatpush1.msra.mxu0 0.0
  %8742 = vmatprep.mubr.f32.mxu0 0.0
  %8743 = vmatmul.mubr.f32.gmra.mrb[0].mxu0 %v8673
  %v8744 = vpop.f32.mrb[0].mxu0
  %v8745 = vadd.f32 0.0, %v8744
  %v8746 = vpop.f32.mrb[0].mxu0
  %8747 = vdwg.mxu0
  %v8748 = vsel %vm2651, %v1690, 0
  %v8751 = vsel %vm2888, %v8645, 0
  %8753 = vmatprep.subr.mxu0 0.0
  %8754 = vmatpush1.msra.mxu0 %v8641
  %8755 = vmatprep.subr.mxu0 0.0
  %8756 = vmatpush1.msra.mxu0 %v8642
  %8757 = vmatprep.subr.mxu0 0.0
  %8758 = vmatpush1.msra.mxu0 %v8643
  %8759 = vmatprep.subr.mxu0 0.0
  %8760 = vmatpush1.msra.mxu0 %v8644
  %8761 = vmatprep.subr.mxu0 0.0
  %8762 = vmatpush1.msra.mxu0 %v8751
  %8763 = vmatprep.subr.mxu0 0.0
  %8764 = vmatpush1.msra.mxu0 0.0
  %8765 = vmatprep.subr.mxu0 0.0
  %8766 = vmatpush1.msra.mxu0 0.0
  %8767 = vmatprep.subr.mxu0 0.0
  %8768 = vmatpush1.msra.mxu0 0.0
  %8769 = vmatprep.subr.mxu0 0.0
  %8770 = vmatpush1.msra.mxu0 0.0
  %8771 = vmatprep.subr.mxu0 0.0
  %8772 = vmatpush1.msra.mxu0 0.0
  %8773 = vmatprep.subr.mxu0 0.0
  %8774 = vmatpush1.msra.mxu0 0.0
  %8775 = vmatprep.subr.mxu0 0.0
  %8776 = vmatpush1.msra.mxu0 0.0
  %8777 = vmatprep.subr.mxu0 0.0
  %8778 = vmatpush1.msra.mxu0 0.0
  %8779 = vmatprep.subr.mxu0 0.0
  %8780 = vmatpush1.msra.mxu0 0.0
  %8781 = vmatprep.subr.mxu0 0.0
  %8782 = vmatpush1.msra.mxu0 0.0
  %8783 = vmatprep.subr.mxu0 0.0
  %8784 = vmatpush1.msra.mxu0 0.0
  %8785 = vmatprep.subr.mxu0 0.0
  %8786 = vmatpush1.msra.mxu0 0.0
  %8787 = vmatprep.subr.mxu0 0.0
  %8788 = vmatpush1.msra.mxu0 0.0
  %8789 = vmatprep.subr.mxu0 0.0
  %8790 = vmatpush1.msra.mxu0 0.0
  %8791 = vmatprep.subr.mxu0 0.0
  %8792 = vmatpush1.msra.mxu0 0.0
  %8793 = vmatprep.subr.mxu0 0.0
  %8794 = vmatpush1.msra.mxu0 0.0
  %8795 = vmatprep.subr.mxu0 0.0
  %8796 = vmatpush1.msra.mxu0 0.0
  %8797 = vmatprep.subr.mxu0 0.0
  %8798 = vmatpush1.msra.mxu0 0.0
  %8799 = vmatprep.subr.mxu0 0.0
  %8800 = vmatpush1.msra.mxu0 0.0
  %8801 = vmatprep.subr.mxu0 0.0
  %8802 = vmatpush1.msra.mxu0 0.0
  %8803 = vmatprep.subr.mxu0 0.0
  %8804 = vmatpush1.msra.mxu0 0.0
  %8805 = vmatprep.subr.mxu0 0.0
  %8806 = vmatpush1.msra.mxu0 0.0
  %8807 = vmatprep.subr.mxu0 0.0
  %8808 = vmatpush1.msra.mxu0 0.0
  %8809 = vmatprep.subr.mxu0 0.0
  %8810 = vmatpush1.msra.mxu0 0.0
  %8811 = vmatprep.subr.mxu0 0.0
  %8812 = vmatpush1.msra.mxu0 0.0
  %8813 = vmatprep.subr.mxu0 0.0
  %8814 = vmatpush1.msra.mxu0 0.0
  %8815 = vmatprep.subr.mxu0 0.0
  %8816 = vmatpush1.msra.mxu0 0.0
  %8817 = vmatprep.mubr.f32.mxu0 0.0
  %8818 = vmatmul.mubr.f32.gmra.mrb[0].mxu0 %v8748
  %v8819 = vpop.f32.mrb[0].mxu0
  %v8820 = vadd.f32 0.0, %v8819
  %v8821 = vpop.f32.mrb[0].mxu0
  %8822 = vdwg.mxu0
  %v8823 = vsel %vm2651, %v1691, 0
  %v8826 = vsel %vm2888, %v8650, 0
  %8828 = vmatprep.subr.mxu0 0.0
  %8829 = vmatpush1.msra.mxu0 %v8646
  %8830 = vmatprep.subr.mxu0 0.0
  %8831 = vmatpush1.msra.mxu0 %v8647
  %8832 = vmatprep.subr.mxu0 0.0
  %8833 = vmatpush1.msra.mxu0 %v8648
  %8834 = vmatprep.subr.mxu0 0.0
  %8835 = vmatpush1.msra.mxu0 %v8649
  %8836 = vmatprep.subr.mxu0 0.0
  %8837 = vmatpush1.msra.mxu0 %v8826
  %8838 = vmatprep.subr.mxu0 0.0
  %8839 = vmatpush1.msra.mxu0 0.0
  %8840 = vmatprep.subr.mxu0 0.0
  %8841 = vmatpush1.msra.mxu0 0.0
  %8842 = vmatprep.subr.mxu0 0.0
  %8843 = vmatpush1.msra.mxu0 0.0
  %8844 = vmatprep.subr.mxu0 0.0
  %8845 = vmatpush1.msra.mxu0 0.0
  %8846 = vmatprep.subr.mxu0 0.0
  %8847 = vmatpush1.msra.mxu0 0.0
  %8848 = vmatprep.subr.mxu0 0.0
  %8849 = vmatpush1.msra.mxu0 0.0
  %8850 = vmatprep.subr.mxu0 0.0
  %8851 = vmatpush1.msra.mxu0 0.0
  %8852 = vmatprep.subr.mxu0 0.0
  %8853 = vmatpush1.msra.mxu0 0.0
  %8854 = vmatprep.subr.mxu0 0.0
  %8855 = vmatpush1.msra.mxu0 0.0
  %8856 = vmatprep.subr.mxu0 0.0
  %8857 = vmatpush1.msra.mxu0 0.0
  %8858 = vmatprep.subr.mxu0 0.0
  %8859 = vmatpush1.msra.mxu0 0.0
  %8860 = vmatprep.subr.mxu0 0.0
  %8861 = vmatpush1.msra.mxu0 0.0
  %8862 = vmatprep.subr.mxu0 0.0
  %8863 = vmatpush1.msra.mxu0 0.0
  %8864 = vmatprep.subr.mxu0 0.0
  %8865 = vmatpush1.msra.mxu0 0.0
  %8866 = vmatprep.subr.mxu0 0.0
  %8867 = vmatpush1.msra.mxu0 0.0
  %8868 = vmatprep.subr.mxu0 0.0
  %8869 = vmatpush1.msra.mxu0 0.0
  %8870 = vmatprep.subr.mxu0 0.0
  %8871 = vmatpush1.msra.mxu0 0.0
  %8872 = vmatprep.subr.mxu0 0.0
  %8873 = vmatpush1.msra.mxu0 0.0
  %8874 = vmatprep.subr.mxu0 0.0
  %8875 = vmatpush1.msra.mxu0 0.0
  %8876 = vmatprep.subr.mxu0 0.0
  %8877 = vmatpush1.msra.mxu0 0.0
  %8878 = vmatprep.subr.mxu0 0.0
  %8879 = vmatpush1.msra.mxu0 0.0
  %8880 = vmatprep.subr.mxu0 0.0
  %8881 = vmatpush1.msra.mxu0 0.0
  %8882 = vmatprep.subr.mxu0 0.0
  %8883 = vmatpush1.msra.mxu0 0.0
  %8884 = vmatprep.subr.mxu0 0.0
  %8885 = vmatpush1.msra.mxu0 0.0
  %8886 = vmatprep.subr.mxu0 0.0
  %8887 = vmatpush1.msra.mxu0 0.0
  %8888 = vmatprep.subr.mxu0 0.0
  %8889 = vmatpush1.msra.mxu0 0.0
  %8890 = vmatprep.subr.mxu0 0.0
  %8891 = vmatpush1.msra.mxu0 0.0
  %8892 = vmatprep.mubr.f32.mxu0 0.0
  %8893 = vmatmul.mubr.f32.gmra.mrb[0].mxu0 %v8823
  %v8894 = vpop.f32.mrb[0].mxu0
  %v8895 = vadd.f32 0.0, %v8894
  %v8896 = vpop.f32.mrb[0].mxu0
  %8897 = vdwg.mxu0
  %v8898 = vsel %vm2651, %v1692, 0
  %v8901 = vsel %vm2888, %v8655, 0
  %8903 = vmatprep.subr.mxu0 0.0
  %8904 = vmatpush1.msra.mxu0 %v8651
  %8905 = vmatprep.subr.mxu0 0.0
  %8906 = vmatpush1.msra.mxu0 %v8652
  %8907 = vmatprep.subr.mxu0 0.0
  %8908 = vmatpush1.msra.mxu0 %v8653
  %8909 = vmatprep.subr.mxu0 0.0
  %8910 = vmatpush1.msra.mxu0 %v8654
  %8911 = vmatprep.subr.mxu0 0.0
  %8912 = vmatpush1.msra.mxu0 %v8901
  %8913 = vmatprep.subr.mxu0 0.0
  %8914 = vmatpush1.msra.mxu0 0.0
  %8915 = vmatprep.subr.mxu0 0.0
  %8916 = vmatpush1.msra.mxu0 0.0
  %8917 = vmatprep.subr.mxu0 0.0
  %8918 = vmatpush1.msra.mxu0 0.0
  %8919 = vmatprep.subr.mxu0 0.0
  %8920 = vmatpush1.msra.mxu0 0.0
  %8921 = vmatprep.subr.mxu0 0.0
  %8922 = vmatpush1.msra.mxu0 0.0
  %8923 = vmatprep.subr.mxu0 0.0
  %8924 = vmatpush1.msra.mxu0 0.0
  %8925 = vmatprep.subr.mxu0 0.0
  %8926 = vmatpush1.msra.mxu0 0.0
  %8927 = vmatprep.subr.mxu0 0.0
  %8928 = vmatpush1.msra.mxu0 0.0
  %8929 = vmatprep.subr.mxu0 0.0
  %8930 = vmatpush1.msra.mxu0 0.0
  %8931 = vmatprep.subr.mxu0 0.0
  %8932 = vmatpush1.msra.mxu0 0.0
  %8933 = vmatprep.subr.mxu0 0.0
  %8934 = vmatpush1.msra.mxu0 0.0
  %8935 = vmatprep.subr.mxu0 0.0
  %8936 = vmatpush1.msra.mxu0 0.0
  %8937 = vmatprep.subr.mxu0 0.0
  %8938 = vmatpush1.msra.mxu0 0.0
  %8939 = vmatprep.subr.mxu0 0.0
  %8940 = vmatpush1.msra.mxu0 0.0
  %8941 = vmatprep.subr.mxu0 0.0
  %8942 = vmatpush1.msra.mxu0 0.0
  %8943 = vmatprep.subr.mxu0 0.0
  %8944 = vmatpush1.msra.mxu0 0.0
  %8945 = vmatprep.subr.mxu0 0.0
  %8946 = vmatpush1.msra.mxu0 0.0
  %8947 = vmatprep.subr.mxu0 0.0
  %8948 = vmatpush1.msra.mxu0 0.0
  %8949 = vmatprep.subr.mxu0 0.0
  %8950 = vmatpush1.msra.mxu0 0.0
  %8951 = vmatprep.subr.mxu0 0.0
  %8952 = vmatpush1.msra.mxu0 0.0
  %8953 = vmatprep.subr.mxu0 0.0
  %8954 = vmatpush1.msra.mxu0 0.0
  %8955 = vmatprep.subr.mxu0 0.0
  %8956 = vmatpush1.msra.mxu0 0.0
  %8957 = vmatprep.subr.mxu0 0.0
  %8958 = vmatpush1.msra.mxu0 0.0
  %8959 = vmatprep.subr.mxu0 0.0
  %8960 = vmatpush1.msra.mxu0 0.0
  %8961 = vmatprep.subr.mxu0 0.0
  %8962 = vmatpush1.msra.mxu0 0.0
  %8963 = vmatprep.subr.mxu0 0.0
  %8964 = vmatpush1.msra.mxu0 0.0
  %8965 = vmatprep.subr.mxu0 0.0
  %8966 = vmatpush1.msra.mxu0 0.0
  %8967 = vmatprep.mubr.f32.mxu0 0.0
  %8968 = vmatmul.mubr.f32.gmra.mrb[0].mxu0 %v8898
  %v8969 = vpop.f32.mrb[0].mxu0
  %v8970 = vadd.f32 0.0, %v8969
  %v8971 = vpop.f32.mrb[0].mxu0
  %8972 = vdwg.mxu0
  %v8973 = vrcp.pop %v8669
  %v8974 = vmul.f32 %v8745, %v8973
  %v8975 = vrcp.pop %v8670
  %v8976 = vmul.f32 %v8820, %v8975
  %v8977 = vrcp.pop %v8671
  %v8978 = vmul.f32 %v8895, %v8977
  %v8979 = vrcp.pop %v8672
  %v8980 = vmul.f32 %v8970, %v8979
  %v8981 = vld [vmem:[%s9] sm:$0xff]
  %v8982 = vld [vmem:[%s9 + $0x8] sm:$0xff]
  %v8983 = vld [vmem:[%s9 + $0x10] sm:$0xff]
  %v8984 = vld [vmem:[%s9 + $0x18] sm:$0xff]
  %v8985 = vld [vmem:[%s9 + $0x20] sm:$0xff]
  %v8986 = vld [vmem:[%s9 + $0x28] sm:$0xff]
  %v8987 = vld [vmem:[%s9 + $0x30] sm:$0xff]
  %v8988 = vld [vmem:[%s9 + $0x38] sm:$0xff]
  %v8990 = vsel %vm77, %v8974, 0
  %8992 = vmatprep.subr.mxu0 0.0
  %8993 = vmatpush1.msra.mxu0 %v8981
  %8994 = vmatprep.subr.mxu0 0.0
  %8995 = vmatpush1.msra.mxu0 %v8982
  %8996 = vmatprep.subr.mxu0 0.0
  %8997 = vmatpush1.msra.mxu0 %v8983
  %8998 = vmatprep.subr.mxu0 0.0
  %8999 = vmatpush1.msra.mxu0 %v8984
  %9000 = vmatprep.subr.mxu0 0.0
  %9001 = vmatpush1.msra.mxu0 %v8985
  %9002 = vmatprep.subr.mxu0 0.0
  %9003 = vmatpush1.msra.mxu0 %v8986
  %9004 = vmatprep.subr.mxu0 0.0
  %9005 = vmatpush1.msra.mxu0 %v8987
  %9006 = vmatprep.subr.mxu0 0.0
  %9007 = vmatpush1.msra.mxu0 %v8988
  %9008 = vmatprep.subr.mxu0 0.0
  %9009 = vmatpush1.msra.mxu0 0.0
  %9010 = vmatprep.subr.mxu0 0.0
  %9011 = vmatpush1.msra.mxu0 0.0
  %9012 = vmatprep.subr.mxu0 0.0
  %9013 = vmatpush1.msra.mxu0 0.0
  %9014 = vmatprep.subr.mxu0 0.0
  %9015 = vmatpush1.msra.mxu0 0.0
  %9016 = vmatprep.subr.mxu0 0.0
  %9017 = vmatpush1.msra.mxu0 0.0
  %9018 = vmatprep.subr.mxu0 0.0
  %9019 = vmatpush1.msra.mxu0 0.0
  %9020 = vmatprep.subr.mxu0 0.0
  %9021 = vmatpush1.msra.mxu0 0.0
  %9022 = vmatprep.subr.mxu0 0.0
  %9023 = vmatpush1.msra.mxu0 0.0
  %9024 = vmatprep.subr.mxu0 0.0
  %9025 = vmatpush1.msra.mxu0 0.0
  %9026 = vmatprep.subr.mxu0 0.0
  %9027 = vmatpush1.msra.mxu0 0.0
  %9028 = vmatprep.subr.mxu0 0.0
  %9029 = vmatpush1.msra.mxu0 0.0
  %9030 = vmatprep.subr.mxu0 0.0
  %9031 = vmatpush1.msra.mxu0 0.0
  %9032 = vmatprep.subr.mxu0 0.0
  %9033 = vmatpush1.msra.mxu0 0.0
  %9034 = vmatprep.subr.mxu0 0.0
  %9035 = vmatpush1.msra.mxu0 0.0
  %9036 = vmatprep.subr.mxu0 0.0
  %9037 = vmatpush1.msra.mxu0 0.0
  %9038 = vmatprep.subr.mxu0 0.0
  %9039 = vmatpush1.msra.mxu0 0.0
  %9040 = vmatprep.subr.mxu0 0.0
  %9041 = vmatpush1.msra.mxu0 0.0
  %9042 = vmatprep.subr.mxu0 0.0
  %9043 = vmatpush1.msra.mxu0 0.0
  %9044 = vmatprep.subr.mxu0 0.0
  %9045 = vmatpush1.msra.mxu0 0.0
  %9046 = vmatprep.subr.mxu0 0.0
  %9047 = vmatpush1.msra.mxu0 0.0
  %9048 = vmatprep.subr.mxu0 0.0
  %9049 = vmatpush1.msra.mxu0 0.0
  %9050 = vmatprep.subr.mxu0 0.0
  %9051 = vmatpush1.msra.mxu0 0.0
  %9052 = vmatprep.subr.mxu0 0.0
  %9053 = vmatpush1.msra.mxu0 0.0
  %9054 = vmatprep.subr.mxu0 0.0
  %9055 = vmatpush1.msra.mxu0 0.0
  %9056 = vmatprep.mubr.f32.mxu0 0.0
  %9057 = vmatmul.mubr.f32.gmra.mrb[0].mxu0 %v8990
  %v9058 = vpop.f32.mrb[0].mxu0
  %v9059 = vadd.f32 0.0, %v9058
  %v9060 = vpop.f32.mrb[0].mxu0
  %9061 = vdwg.mxu0
  %v9063 = vsel %vm77, %v8976, 0
  %9065 = vmatprep.subr.mxu0 0.0
  %9066 = vmatpush1.msra.mxu0 %v8981
  %9067 = vmatprep.subr.mxu0 0.0
  %9068 = vmatpush1.msra.mxu0 %v8982
  %9069 = vmatprep.subr.mxu0 0.0
  %9070 = vmatpush1.msra.mxu0 %v8983
  %9071 = vmatprep.subr.mxu0 0.0
  %9072 = vmatpush1.msra.mxu0 %v8984
  %9073 = vmatprep.subr.mxu0 0.0
  %9074 = vmatpush1.msra.mxu0 %v8985
  %9075 = vmatprep.subr.mxu0 0.0
  %9076 = vmatpush1.msra.mxu0 %v8986
  %9077 = vmatprep.subr.mxu0 0.0
  %9078 = vmatpush1.msra.mxu0 %v8987
  %9079 = vmatprep.subr.mxu0 0.0
  %9080 = vmatpush1.msra.mxu0 %v8988
  %9081 = vmatprep.subr.mxu0 0.0
  %9082 = vmatpush1.msra.mxu0 0.0
  %9083 = vmatprep.subr.mxu0 0.0
  %9084 = vmatpush1.msra.mxu0 0.0
  %9085 = vmatprep.subr.mxu0 0.0
  %9086 = vmatpush1.msra.mxu0 0.0
  %9087 = vmatprep.subr.mxu0 0.0
  %9088 = vmatpush1.msra.mxu0 0.0
  %9089 = vmatprep.subr.mxu0 0.0
  %9090 = vmatpush1.msra.mxu0 0.0
  %9091 = vmatprep.subr.mxu0 0.0
  %9092 = vmatpush1.msra.mxu0 0.0
  %9093 = vmatprep.subr.mxu0 0.0
  %9094 = vmatpush1.msra.mxu0 0.0
  %9095 = vmatprep.subr.mxu0 0.0
  %9096 = vmatpush1.msra.mxu0 0.0
  %9097 = vmatprep.subr.mxu0 0.0
  %9098 = vmatpush1.msra.mxu0 0.0
  %9099 = vmatprep.subr.mxu0 0.0
  %9100 = vmatpush1.msra.mxu0 0.0
  %9101 = vmatprep.subr.mxu0 0.0
  %9102 = vmatpush1.msra.mxu0 0.0
  %9103 = vmatprep.subr.mxu0 0.0
  %9104 = vmatpush1.msra.mxu0 0.0
  %9105 = vmatprep.subr.mxu0 0.0
  %9106 = vmatpush1.msra.mxu0 0.0
  %9107 = vmatprep.subr.mxu0 0.0
  %9108 = vmatpush1.msra.mxu0 0.0
  %9109 = vmatprep.subr.mxu0 0.0
  %9110 = vmatpush1.msra.mxu0 0.0
  %9111 = vmatprep.subr.mxu0 0.0
  %9112 = vmatpush1.msra.mxu0 0.0
  %9113 = vmatprep.subr.mxu0 0.0
  %9114 = vmatpush1.msra.mxu0 0.0
  %9115 = vmatprep.subr.mxu0 0.0
  %9116 = vmatpush1.msra.mxu0 0.0
  %9117 = vmatprep.subr.mxu0 0.0
  %9118 = vmatpush1.msra.mxu0 0.0
  %9119 = vmatprep.subr.mxu0 0.0
  %9120 = vmatpush1.msra.mxu0 0.0
  %9121 = vmatprep.subr.mxu0 0.0
  %9122 = vmatpush1.msra.mxu0 0.0
  %9123 = vmatprep.subr.mxu0 0.0
  %9124 = vmatpush1.msra.mxu0 0.0
  %9125 = vmatprep.subr.mxu0 0.0
  %9126 = vmatpush1.msra.mxu0 0.0
  %9127 = vmatprep.subr.mxu0 0.0
  %9128 = vmatpush1.msra.mxu0 0.0
  %9129 = vmatprep.mubr.f32.mxu0 0.0
  %9130 = vmatmul.mubr.f32.gmra.mrb[0].mxu0 %v9063
  %v9131 = vpop.f32.mrb[0].mxu0
  %v9132 = vadd.f32 0.0, %v9131
  %v9133 = vpop.f32.mrb[0].mxu0
  %9134 = vdwg.mxu0
  %v9136 = vsel %vm77, %v8978, 0
  %9138 = vmatprep.subr.mxu0 0.0
  %9139 = vmatpush1.msra.mxu0 %v8981
  %9140 = vmatprep.subr.mxu0 0.0
  %9141 = vmatpush1.msra.mxu0 %v8982
  %9142 = vmatprep.subr.mxu0 0.0
  %9143 = vmatpush1.msra.mxu0 %v8983
  %9144 = vmatprep.subr.mxu0 0.0
  %9145 = vmatpush1.msra.mxu0 %v8984
  %9146 = vmatprep.subr.mxu0 0.0
  %9147 = vmatpush1.msra.mxu0 %v8985
  %9148 = vmatprep.subr.mxu0 0.0
  %9149 = vmatpush1.msra.mxu0 %v8986
  %9150 = vmatprep.subr.mxu0 0.0
  %9151 = vmatpush1.msra.mxu0 %v8987
  %9152 = vmatprep.subr.mxu0 0.0
  %9153 = vmatpush1.msra.mxu0 %v8988
  %9154 = vmatprep.subr.mxu0 0.0
  %9155 = vmatpush1.msra.mxu0 0.0
  %9156 = vmatprep.subr.mxu0 0.0
  %9157 = vmatpush1.msra.mxu0 0.0
  %9158 = vmatprep.subr.mxu0 0.0
  %9159 = vmatpush1.msra.mxu0 0.0
  %9160 = vmatprep.subr.mxu0 0.0
  %9161 = vmatpush1.msra.mxu0 0.0
  %9162 = vmatprep.subr.mxu0 0.0
  %9163 = vmatpush1.msra.mxu0 0.0
  %9164 = vmatprep.subr.mxu0 0.0
  %9165 = vmatpush1.msra.mxu0 0.0
  %9166 = vmatprep.subr.mxu0 0.0
  %9167 = vmatpush1.msra.mxu0 0.0
  %9168 = vmatprep.subr.mxu0 0.0
  %9169 = vmatpush1.msra.mxu0 0.0
  %9170 = vmatprep.subr.mxu0 0.0
  %9171 = vmatpush1.msra.mxu0 0.0
  %9172 = vmatprep.subr.mxu0 0.0
  %9173 = vmatpush1.msra.mxu0 0.0
  %9174 = vmatprep.subr.mxu0 0.0
  %9175 = vmatpush1.msra.mxu0 0.0
  %9176 = vmatprep.subr.mxu0 0.0
  %9177 = vmatpush1.msra.mxu0 0.0
  %9178 = vmatprep.subr.mxu0 0.0
  %9179 = vmatpush1.msra.mxu0 0.0
  %9180 = vmatprep.subr.mxu0 0.0
  %9181 = vmatpush1.msra.mxu0 0.0
  %9182 = vmatprep.subr.mxu0 0.0
  %9183 = vmatpush1.msra.mxu0 0.0
  %9184 = vmatprep.subr.mxu0 0.0
  %9185 = vmatpush1.msra.mxu0 0.0
  %9186 = vmatprep.subr.mxu0 0.0
  %9187 = vmatpush1.msra.mxu0 0.0
  %9188 = vmatprep.subr.mxu0 0.0
  %9189 = vmatpush1.msra.mxu0 0.0
  %9190 = vmatprep.subr.mxu0 0.0
  %9191 = vmatpush1.msra.mxu0 0.0
  %9192 = vmatprep.subr.mxu0 0.0
  %9193 = vmatpush1.msra.mxu0 0.0
  %9194 = vmatprep.subr.mxu0 0.0
  %9195 = vmatpush1.msra.mxu0 0.0
  %9196 = vmatprep.subr.mxu0 0.0
  %9197 = vmatpush1.msra.mxu0 0.0
  %9198 = vmatprep.subr.mxu0 0.0
  %9199 = vmatpush1.msra.mxu0 0.0
  %9200 = vmatprep.subr.mxu0 0.0
  %9201 = vmatpush1.msra.mxu0 0.0
  %9202 = vmatprep.mubr.f32.mxu0 0.0
  %9203 = vmatmul.mubr.f32.gmra.mrb[0].mxu0 %v9136
  %v9204 = vpop.f32.mrb[0].mxu0
  %v9205 = vadd.f32 0.0, %v9204
  %v9206 = vpop.f32.mrb[0].mxu0
  %9207 = vdwg.mxu0
  %v9209 = vsel %vm77, %v8980, 0
  %9211 = vmatprep.subr.mxu0 0.0
  %9212 = vmatpush1.msra.mxu0 %v8981
  %9213 = vmatprep.subr.mxu0 0.0
  %9214 = vmatpush1.msra.mxu0 %v8982
  %9215 = vmatprep.subr.mxu0 0.0
  %9216 = vmatpush1.msra.mxu0 %v8983
  %9217 = vmatprep.subr.mxu0 0.0
  %9218 = vmatpush1.msra.mxu0 %v8984
  %9219 = vmatprep.subr.mxu0 0.0
  %9220 = vmatpush1.msra.mxu0 %v8985
  %9221 = vmatprep.subr.mxu0 0.0
  %9222 = vmatpush1.msra.mxu0 %v8986
  %9223 = vmatprep.subr.mxu0 0.0
  %9224 = vmatpush1.msra.mxu0 %v8987
  %9225 = vmatprep.subr.mxu0 0.0
  %9226 = vmatpush1.msra.mxu0 %v8988
  %9227 = vmatprep.subr.mxu0 0.0
  %9228 = vmatpush1.msra.mxu0 0.0
  %9229 = vmatprep.subr.mxu0 0.0
  %9230 = vmatpush1.msra.mxu0 0.0
  %9231 = vmatprep.subr.mxu0 0.0
  %9232 = vmatpush1.msra.mxu0 0.0
  %9233 = vmatprep.subr.mxu0 0.0
  %9234 = vmatpush1.msra.mxu0 0.0
  %9235 = vmatprep.subr.mxu0 0.0
  %9236 = vmatpush1.msra.mxu0 0.0
  %9237 = vmatprep.subr.mxu0 0.0
  %9238 = vmatpush1.msra.mxu0 0.0
  %9239 = vmatprep.subr.mxu0 0.0
  %9240 = vmatpush1.msra.mxu0 0.0
  %9241 = vmatprep.subr.mxu0 0.0
  %9242 = vmatpush1.msra.mxu0 0.0
  %9243 = vmatprep.subr.mxu0 0.0
  %9244 = vmatpush1.msra.mxu0 0.0
  %9245 = vmatprep.subr.mxu0 0.0
  %9246 = vmatpush1.msra.mxu0 0.0
  %9247 = vmatprep.subr.mxu0 0.0
  %9248 = vmatpush1.msra.mxu0 0.0
  %9249 = vmatprep.subr.mxu0 0.0
  %9250 = vmatpush1.msra.mxu0 0.0
  %9251 = vmatprep.subr.mxu0 0.0
  %9252 = vmatpush1.msra.mxu0 0.0
  %9253 = vmatprep.subr.mxu0 0.0
  %9254 = vmatpush1.msra.mxu0 0.0
  %9255 = vmatprep.subr.mxu0 0.0
  %9256 = vmatpush1.msra.mxu0 0.0
  %9257 = vmatprep.subr.mxu0 0.0
  %9258 = vmatpush1.msra.mxu0 0.0
  %9259 = vmatprep.subr.mxu0 0.0
  %9260 = vmatpush1.msra.mxu0 0.0
  %9261 = vmatprep.subr.mxu0 0.0
  %9262 = vmatpush1.msra.mxu0 0.0
  %9263 = vmatprep.subr.mxu0 0.0
  %9264 = vmatpush1.msra.mxu0 0.0
  %9265 = vmatprep.subr.mxu0 0.0
  %9266 = vmatpush1.msra.mxu0 0.0
  %9267 = vmatprep.subr.mxu0 0.0
  %9268 = vmatpush1.msra.mxu0 0.0
  %9269 = vmatprep.subr.mxu0 0.0
  %9270 = vmatpush1.msra.mxu0 0.0
  %9271 = vmatprep.subr.mxu0 0.0
  %9272 = vmatpush1.msra.mxu0 0.0
  %9273 = vmatprep.subr.mxu0 0.0
  %9274 = vmatpush1.msra.mxu0 0.0
  %9275 = vmatprep.mubr.f32.mxu0 0.0
  %9276 = vmatmul.mubr.f32.gmra.mrb[0].mxu0 %v9209
  %v9277 = vpop.f32.mrb[0].mxu0
  %v9278 = vadd.f32 0.0, %v9277
  %v9279 = vpop.f32.mrb[0].mxu0
  %9280 = vdwg.mxu0
  %v9281 = vmax.f32 %v9059, 0.0
  %v9282 = vmax.f32 %v9132, 0.0
  %v9283 = vmax.f32 %v9205, 0.0
  %v9284 = vmax.f32 %v9278, 0.0
  %v9285 = vld [vmem:[%s10] sm:$0xff]
  %v9286 = vld [vmem:[%s10 + $0x8] sm:$0xff]
  %v9287 = vld [vmem:[%s10 + $0x10] sm:$0xff]
  %v9288 = vld [vmem:[%s10 + $0x18] sm:$0xff]
  %v9290 = vsel %vm8614, %v9281, 0
  %9292 = vmatprep.subr.mxu0 0.0
  %9293 = vmatpush1.msra.mxu0 %v9285
  %9294 = vmatprep.subr.mxu0 0.0
  %9295 = vmatpush1.msra.mxu0 %v9286
  %9296 = vmatprep.subr.mxu0 0.0
  %9297 = vmatpush1.msra.mxu0 %v9287
  %9298 = vmatprep.subr.mxu0 0.0
  %9299 = vmatpush1.msra.mxu0 %v9288
  %9300 = vmatprep.subr.mxu0 0.0
  %9301 = vmatpush1.msra.mxu0 0.0
  %9302 = vmatprep.subr.mxu0 0.0
  %9303 = vmatpush1.msra.mxu0 0.0
  %9304 = vmatprep.subr.mxu0 0.0
  %9305 = vmatpush1.msra.mxu0 0.0
  %9306 = vmatprep.subr.mxu0 0.0
  %9307 = vmatpush1.msra.mxu0 0.0
  %9308 = vmatprep.subr.mxu0 0.0
  %9309 = vmatpush1.msra.mxu0 0.0
  %9310 = vmatprep.subr.mxu0 0.0
  %9311 = vmatpush1.msra.mxu0 0.0
  %9312 = vmatprep.subr.mxu0 0.0
  %9313 = vmatpush1.msra.mxu0 0.0
  %9314 = vmatprep.subr.mxu0 0.0
  %9315 = vmatpush1.msra.mxu0 0.0
  %9316 = vmatprep.subr.mxu0 0.0
  %9317 = vmatpush1.msra.mxu0 0.0
  %9318 = vmatprep.subr.mxu0 0.0
  %9319 = vmatpush1.msra.mxu0 0.0
  %9320 = vmatprep.subr.mxu0 0.0
  %9321 = vmatpush1.msra.mxu0 0.0
  %9322 = vmatprep.subr.mxu0 0.0
  %9323 = vmatpush1.msra.mxu0 0.0
  %9324 = vmatprep.subr.mxu0 0.0
  %9325 = vmatpush1.msra.mxu0 0.0
  %9326 = vmatprep.subr.mxu0 0.0
  %9327 = vmatpush1.msra.mxu0 0.0
  %9328 = vmatprep.subr.mxu0 0.0
  %9329 = vmatpush1.msra.mxu0 0.0
  %9330 = vmatprep.subr.mxu0 0.0
  %9331 = vmatpush1.msra.mxu0 0.0
  %9332 = vmatprep.subr.mxu0 0.0
  %9333 = vmatpush1.msra.mxu0 0.0
  %9334 = vmatprep.subr.mxu0 0.0
  %9335 = vmatpush1.msra.mxu0 0.0
  %9336 = vmatprep.subr.mxu0 0.0
  %9337 = vmatpush1.msra.mxu0 0.0
  %9338 = vmatprep.subr.mxu0 0.0
  %9339 = vmatpush1.msra.mxu0 0.0
  %9340 = vmatprep.subr.mxu0 0.0
  %9341 = vmatpush1.msra.mxu0 0.0
  %9342 = vmatprep.subr.mxu0 0.0
  %9343 = vmatpush1.msra.mxu0 0.0
  %9344 = vmatprep.subr.mxu0 0.0
  %9345 = vmatpush1.msra.mxu0 0.0
  %9346 = vmatprep.subr.mxu0 0.0
  %9347 = vmatpush1.msra.mxu0 0.0
  %9348 = vmatprep.subr.mxu0 0.0
  %9349 = vmatpush1.msra.mxu0 0.0
  %9350 = vmatprep.subr.mxu0 0.0
  %9351 = vmatpush1.msra.mxu0 0.0
  %9352 = vmatprep.subr.mxu0 0.0
  %9353 = vmatpush1.msra.mxu0 0.0
  %9354 = vmatprep.subr.mxu0 0.0
  %9355 = vmatpush1.msra.mxu0 0.0
  %9356 = vmatprep.mubr.f32.mxu0 0.0
  %9357 = vmatmul.mubr.f32.gmra.mrb[0].mxu0 %v9290
  %v9358 = vpop.f32.mrb[0].mxu0
  %v9359 = vadd.f32 0.0, %v9358
  %v9360 = vpop.f32.mrb[0].mxu0
  %9361 = vdwg.mxu0
  %v9363 = vsel %vm8614, %v9282, 0
  %9365 = vmatprep.subr.mxu0 0.0
  %9366 = vmatpush1.msra.mxu0 %v9285
  %9367 = vmatprep.subr.mxu0 0.0
  %9368 = vmatpush1.msra.mxu0 %v9286
  %9369 = vmatprep.subr.mxu0 0.0
  %9370 = vmatpush1.msra.mxu0 %v9287
  %9371 = vmatprep.subr.mxu0 0.0
  %9372 = vmatpush1.msra.mxu0 %v9288
  %9373 = vmatprep.subr.mxu0 0.0
  %9374 = vmatpush1.msra.mxu0 0.0
  %9375 = vmatprep.subr.mxu0 0.0
  %9376 = vmatpush1.msra.mxu0 0.0
  %9377 = vmatprep.subr.mxu0 0.0
  %9378 = vmatpush1.msra.mxu0 0.0
  %9379 = vmatprep.subr.mxu0 0.0
  %9380 = vmatpush1.msra.mxu0 0.0
  %9381 = vmatprep.subr.mxu0 0.0
  %9382 = vmatpush1.msra.mxu0 0.0
  %9383 = vmatprep.subr.mxu0 0.0
  %9384 = vmatpush1.msra.mxu0 0.0
  %9385 = vmatprep.subr.mxu0 0.0
  %9386 = vmatpush1.msra.mxu0 0.0
  %9387 = vmatprep.subr.mxu0 0.0
  %9388 = vmatpush1.msra.mxu0 0.0
  %9389 = vmatprep.subr.mxu0 0.0
  %9390 = vmatpush1.msra.mxu0 0.0
  %9391 = vmatprep.subr.mxu0 0.0
  %9392 = vmatpush1.msra.mxu0 0.0
  %9393 = vmatprep.subr.mxu0 0.0
  %9394 = vmatpush1.msra.mxu0 0.0
  %9395 = vmatprep.subr.mxu0 0.0
  %9396 = vmatpush1.msra.mxu0 0.0
  %9397 = vmatprep.subr.mxu0 0.0
  %9398 = vmatpush1.msra.mxu0 0.0
  %9399 = vmatprep.subr.mxu0 0.0
  %9400 = vmatpush1.msra.mxu0 0.0
  %9401 = vmatprep.subr.mxu0 0.0
  %9402 = vmatpush1.msra.mxu0 0.0
  %9403 = vmatprep.subr.mxu0 0.0
  %9404 = vmatpush1.msra.mxu0 0.0
  %9405 = vmatprep.subr.mxu0 0.0
  %9406 = vmatpush1.msra.mxu0 0.0
  %9407 = vmatprep.subr.mxu0 0.0
  %9408 = vmatpush1.msra.mxu0 0.0
  %9409 = vmatprep.subr.mxu0 0.0
  %9410 = vmatpush1.msra.mxu0 0.0
  %9411 = vmatprep.subr.mxu0 0.0
  %9412 = vmatpush1.msra.mxu0 0.0
  %9413 = vmatprep.subr.mxu0 0.0
  %9414 = vmatpush1.msra.mxu0 0.0
  %9415 = vmatprep.subr.mxu0 0.0
  %9416 = vmatpush1.msra.mxu0 0.0
  %9417 = vmatprep.subr.mxu0 0.0
  %9418 = vmatpush1.msra.mxu0 0.0
  %9419 = vmatprep.subr.mxu0 0.0
  %9420 = vmatpush1.msra.mxu0 0.0
  %9421 = vmatprep.subr.mxu0 0.0
  %9422 = vmatpush1.msra.mxu0 0.0
  %9423 = vmatprep.subr.mxu0 0.0
  %9424 = vmatpush1.msra.mxu0 0.0
  %9425 = vmatprep.subr.mxu0 0.0
  %9426 = vmatpush1.msra.mxu0 0.0
  %9427 = vmatprep.subr.mxu0 0.0
  %9428 = vmatpush1.msra.mxu0 0.0
  %9429 = vmatprep.mubr.f32.mxu0 0.0
  %9430 = vmatmul.mubr.f32.gmra.mrb[0].mxu0 %v9363
  %v9431 = vpop.f32.mrb[0].mxu0
  %v9432 = vadd.f32 0.0, %v9431
  %v9433 = vpop.f32.mrb[0].mxu0
  %9434 = vdwg.mxu0
  %v9436 = vsel %vm8614, %v9283, 0
  %9438 = vmatprep.subr.mxu0 0.0
  %9439 = vmatpush1.msra.mxu0 %v9285
  %9440 = vmatprep.subr.mxu0 0.0
  %9441 = vmatpush1.msra.mxu0 %v9286
  %9442 = vmatprep.subr.mxu0 0.0
  %9443 = vmatpush1.msra.mxu0 %v9287
  %9444 = vmatprep.subr.mxu0 0.0
  %9445 = vmatpush1.msra.mxu0 %v9288
  %9446 = vmatprep.subr.mxu0 0.0
  %9447 = vmatpush1.msra.mxu0 0.0
  %9448 = vmatprep.subr.mxu0 0.0
  %9449 = vmatpush1.msra.mxu0 0.0
  %9450 = vmatprep.subr.mxu0 0.0
  %9451 = vmatpush1.msra.mxu0 0.0
  %9452 = vmatprep.subr.mxu0 0.0
  %9453 = vmatpush1.msra.mxu0 0.0
  %9454 = vmatprep.subr.mxu0 0.0
  %9455 = vmatpush1.msra.mxu0 0.0
  %9456 = vmatprep.subr.mxu0 0.0
  %9457 = vmatpush1.msra.mxu0 0.0
  %9458 = vmatprep.subr.mxu0 0.0
  %9459 = vmatpush1.msra.mxu0 0.0
  %9460 = vmatprep.subr.mxu0 0.0
  %9461 = vmatpush1.msra.mxu0 0.0
  %9462 = vmatprep.subr.mxu0 0.0
  %9463 = vmatpush1.msra.mxu0 0.0
  %9464 = vmatprep.subr.mxu0 0.0
  %9465 = vmatpush1.msra.mxu0 0.0
  %9466 = vmatprep.subr.mxu0 0.0
  %9467 = vmatpush1.msra.mxu0 0.0
  %9468 = vmatprep.subr.mxu0 0.0
  %9469 = vmatpush1.msra.mxu0 0.0
  %9470 = vmatprep.subr.mxu0 0.0
  %9471 = vmatpush1.msra.mxu0 0.0
  %9472 = vmatprep.subr.mxu0 0.0
  %9473 = vmatpush1.msra.mxu0 0.0
  %9474 = vmatprep.subr.mxu0 0.0
  %9475 = vmatpush1.msra.mxu0 0.0
  %9476 = vmatprep.subr.mxu0 0.0
  %9477 = vmatpush1.msra.mxu0 0.0
  %9478 = vmatprep.subr.mxu0 0.0
  %9479 = vmatpush1.msra.mxu0 0.0
  %9480 = vmatprep.subr.mxu0 0.0
  %9481 = vmatpush1.msra.mxu0 0.0
  %9482 = vmatprep.subr.mxu0 0.0
  %9483 = vmatpush1.msra.mxu0 0.0
  %9484 = vmatprep.subr.mxu0 0.0
  %9485 = vmatpush1.msra.mxu0 0.0
  %9486 = vmatprep.subr.mxu0 0.0
  %9487 = vmatpush1.msra.mxu0 0.0
  %9488 = vmatprep.subr.mxu0 0.0
  %9489 = vmatpush1.msra.mxu0 0.0
  %9490 = vmatprep.subr.mxu0 0.0
  %9491 = vmatpush1.msra.mxu0 0.0
  %9492 = vmatprep.subr.mxu0 0.0
  %9493 = vmatpush1.msra.mxu0 0.0
  %9494 = vmatprep.subr.mxu0 0.0
  %9495 = vmatpush1.msra.mxu0 0.0
  %9496 = vmatprep.subr.mxu0 0.0
  %9497 = vmatpush1.msra.mxu0 0.0
  %9498 = vmatprep.subr.mxu0 0.0
  %9499 = vmatpush1.msra.mxu0 0.0
  %9500 = vmatprep.subr.mxu0 0.0
  %9501 = vmatpush1.msra.mxu0 0.0
  %9502 = vmatprep.mubr.f32.mxu0 0.0
  %9503 = vmatmul.mubr.f32.gmra.mrb[0].mxu0 %v9436
  %v9504 = vpop.f32.mrb[0].mxu0
  %v9505 = vadd.f32 0.0, %v9504
  %v9506 = vpop.f32.mrb[0].mxu0
  %9507 = vdwg.mxu0
  %v9509 = vsel %vm8614, %v9284, 0
  %9511 = vmatprep.subr.mxu0 0.0
  %9512 = vmatpush1.msra.mxu0 %v9285
  %9513 = vmatprep.subr.mxu0 0.0
  %9514 = vmatpush1.msra.mxu0 %v9286
  %9515 = vmatprep.subr.mxu0 0.0
  %9516 = vmatpush1.msra.mxu0 %v9287
  %9517 = vmatprep.subr.mxu0 0.0
  %9518 = vmatpush1.msra.mxu0 %v9288
  %9519 = vmatprep.subr.mxu0 0.0
  %9520 = vmatpush1.msra.mxu0 0.0
  %9521 = vmatprep.subr.mxu0 0.0
  %9522 = vmatpush1.msra.mxu0 0.0
  %9523 = vmatprep.subr.mxu0 0.0
  %9524 = vmatpush1.msra.mxu0 0.0
  %9525 = vmatprep.subr.mxu0 0.0
  %9526 = vmatpush1.msra.mxu0 0.0
  %9527 = vmatprep.subr.mxu0 0.0
  %9528 = vmatpush1.msra.mxu0 0.0
  %9529 = vmatprep.subr.mxu0 0.0
  %9530 = vmatpush1.msra.mxu0 0.0
  %9531 = vmatprep.subr.mxu0 0.0
  %9532 = vmatpush1.msra.mxu0 0.0
  %9533 = vmatprep.subr.mxu0 0.0
  %9534 = vmatpush1.msra.mxu0 0.0
  %9535 = vmatprep.subr.mxu0 0.0
  %9536 = vmatpush1.msra.mxu0 0.0
  %9537 = vmatprep.subr.mxu0 0.0
  %9538 = vmatpush1.msra.mxu0 0.0
  %9539 = vmatprep.subr.mxu0 0.0
  %9540 = vmatpush1.msra.mxu0 0.0
  %9541 = vmatprep.subr.mxu0 0.0
  %9542 = vmatpush1.msra.mxu0 0.0
  %9543 = vmatprep.subr.mxu0 0.0
  %9544 = vmatpush1.msra.mxu0 0.0
  %9545 = vmatprep.subr.mxu0 0.0
  %9546 = vmatpush1.msra.mxu0 0.0
  %9547 = vmatprep.subr.mxu0 0.0
  %9548 = vmatpush1.msra.mxu0 0.0
  %9549 = vmatprep.subr.mxu0 0.0
  %9550 = vmatpush1.msra.mxu0 0.0
  %9551 = vmatprep.subr.mxu0 0.0
  %9552 = vmatpush1.msra.mxu0 0.0
  %9553 = vmatprep.subr.mxu0 0.0
  %9554 = vmatpush1.msra.mxu0 0.0
  %9555 = vmatprep.subr.mxu0 0.0
  %9556 = vmatpush1.msra.mxu0 0.0
  %9557 = vmatprep.subr.mxu0 0.0
  %9558 = vmatpush1.msra.mxu0 0.0
  %9559 = vmatprep.subr.mxu0 0.0
  %9560 = vmatpush1.msra.mxu0 0.0
  %9561 = vmatprep.subr.mxu0 0.0
  %9562 = vmatpush1.msra.mxu0 0.0
  %9563 = vmatprep.subr.mxu0 0.0
  %9564 = vmatpush1.msra.mxu0 0.0
  %9565 = vmatprep.subr.mxu0 0.0
  %9566 = vmatpush1.msra.mxu0 0.0
  %9567 = vmatprep.subr.mxu0 0.0
  %9568 = vmatpush1.msra.mxu0 0.0
  %9569 = vmatprep.subr.mxu0 0.0
  %9570 = vmatpush1.msra.mxu0 0.0
  %9571 = vmatprep.subr.mxu0 0.0
  %9572 = vmatpush1.msra.mxu0 0.0
  %9573 = vmatprep.subr.mxu0 0.0
  %9574 = vmatpush1.msra.mxu0 0.0
  %9575 = vmatprep.mubr.f32.mxu0 0.0
  %9576 = vmatmul.mubr.f32.gmra.mrb[0].mxu0 %v9509
  %v9577 = vpop.f32.mrb[0].mxu0
  %v9578 = vadd.f32 0.0, %v9577
  %v9579 = vpop.f32.mrb[0].mxu0
  %9580 = vdwg.mxu0
  %v9581 = vld [vmem:[%s11] sm:$0xff]
  %v9582 = vld [vmem:[%s11 + $0x8] sm:$0xff]
  %v9583 = vld [vmem:[%s11 + $0x10] sm:$0xff]
  %v9584 = vld [vmem:[%s11 + $0x18] sm:$0xff]
  %v9586 = vsel %vm8614, %v9359, 0
  %9588 = vmatprep.subr.mxu0 0.0
  %9589 = vmatpush1.msra.mxu0 %v9581
  %9590 = vmatprep.subr.mxu0 0.0
  %9591 = vmatpush1.msra.mxu0 %v9582
  %9592 = vmatprep.subr.mxu0 0.0
  %9593 = vmatpush1.msra.mxu0 %v9583
  %9594 = vmatprep.subr.mxu0 0.0
  %9595 = vmatpush1.msra.mxu0 %v9584
  %9596 = vmatprep.subr.mxu0 0.0
  %9597 = vmatpush1.msra.mxu0 0.0
  %9598 = vmatprep.subr.mxu0 0.0
  %9599 = vmatpush1.msra.mxu0 0.0
  %9600 = vmatprep.subr.mxu0 0.0
  %9601 = vmatpush1.msra.mxu0 0.0
  %9602 = vmatprep.subr.mxu0 0.0
  %9603 = vmatpush1.msra.mxu0 0.0
  %9604 = vmatprep.subr.mxu0 0.0
  %9605 = vmatpush1.msra.mxu0 0.0
  %9606 = vmatprep.subr.mxu0 0.0
  %9607 = vmatpush1.msra.mxu0 0.0
  %9608 = vmatprep.subr.mxu0 0.0
  %9609 = vmatpush1.msra.mxu0 0.0
  %9610 = vmatprep.subr.mxu0 0.0
  %9611 = vmatpush1.msra.mxu0 0.0
  %9612 = vmatprep.subr.mxu0 0.0
  %9613 = vmatpush1.msra.mxu0 0.0
  %9614 = vmatprep.subr.mxu0 0.0
  %9615 = vmatpush1.msra.mxu0 0.0
  %9616 = vmatprep.subr.mxu0 0.0
  %9617 = vmatpush1.msra.mxu0 0.0
  %9618 = vmatprep.subr.mxu0 0.0
  %9619 = vmatpush1.msra.mxu0 0.0
  %9620 = vmatprep.subr.mxu0 0.0
  %9621 = vmatpush1.msra.mxu0 0.0
  %9622 = vmatprep.subr.mxu0 0.0
  %9623 = vmatpush1.msra.mxu0 0.0
  %9624 = vmatprep.subr.mxu0 0.0
  %9625 = vmatpush1.msra.mxu0 0.0
  %9626 = vmatprep.subr.mxu0 0.0
  %9627 = vmatpush1.msra.mxu0 0.0
  %9628 = vmatprep.subr.mxu0 0.0
  %9629 = vmatpush1.msra.mxu0 0.0
  %9630 = vmatprep.subr.mxu0 0.0
  %9631 = vmatpush1.msra.mxu0 0.0
  %9632 = vmatprep.subr.mxu0 0.0
  %9633 = vmatpush1.msra.mxu0 0.0
  %9634 = vmatprep.subr.mxu0 0.0
  %9635 = vmatpush1.msra.mxu0 0.0
  %9636 = vmatprep.subr.mxu0 0.0
  %9637 = vmatpush1.msra.mxu0 0.0
  %9638 = vmatprep.subr.mxu0 0.0
  %9639 = vmatpush1.msra.mxu0 0.0
  %9640 = vmatprep.subr.mxu0 0.0
  %9641 = vmatpush1.msra.mxu0 0.0
  %9642 = vmatprep.subr.mxu0 0.0
  %9643 = vmatpush1.msra.mxu0 0.0
  %9644 = vmatprep.subr.mxu0 0.0
  %9645 = vmatpush1.msra.mxu0 0.0
  %9646 = vmatprep.subr.mxu0 0.0
  %9647 = vmatpush1.msra.mxu0 0.0
  %9648 = vmatprep.subr.mxu0 0.0
  %9649 = vmatpush1.msra.mxu0 0.0
  %9650 = vmatprep.subr.mxu0 0.0
  %9651 = vmatpush1.msra.mxu0 0.0
  %9652 = vmatprep.mubr.f32.mxu0 0.0
  %9653 = vmatmul.mubr.f32.gmra.mrb[0].mxu0 %v9586
  %v9654 = vpop.f32.mrb[0].mxu0
  %v9655 = vadd.f32 0.0, %v9654
  %v9656 = vpop.f32.mrb[0].mxu0
  %9657 = vdwg.mxu0
  %v9659 = vsel %vm8614, %v9432, 0
  %9661 = vmatprep.subr.mxu0 0.0
  %9662 = vmatpush1.msra.mxu0 %v9581
  %9663 = vmatprep.subr.mxu0 0.0
  %9664 = vmatpush1.msra.mxu0 %v9582
  %9665 = vmatprep.subr.mxu0 0.0
  %9666 = vmatpush1.msra.mxu0 %v9583
  %9667 = vmatprep.subr.mxu0 0.0
  %9668 = vmatpush1.msra.mxu0 %v9584
  %9669 = vmatprep.subr.mxu0 0.0
  %9670 = vmatpush1.msra.mxu0 0.0
  %9671 = vmatprep.subr.mxu0 0.0
  %9672 = vmatpush1.msra.mxu0 0.0
  %9673 = vmatprep.subr.mxu0 0.0
  %9674 = vmatpush1.msra.mxu0 0.0
  %9675 = vmatprep.subr.mxu0 0.0
  %9676 = vmatpush1.msra.mxu0 0.0
  %9677 = vmatprep.subr.mxu0 0.0
  %9678 = vmatpush1.msra.mxu0 0.0
  %9679 = vmatprep.subr.mxu0 0.0
  %9680 = vmatpush1.msra.mxu0 0.0
  %9681 = vmatprep.subr.mxu0 0.0
  %9682 = vmatpush1.msra.mxu0 0.0
  %9683 = vmatprep.subr.mxu0 0.0
  %9684 = vmatpush1.msra.mxu0 0.0
  %9685 = vmatprep.subr.mxu0 0.0
  %9686 = vmatpush1.msra.mxu0 0.0
  %9687 = vmatprep.subr.mxu0 0.0
  %9688 = vmatpush1.msra.mxu0 0.0
  %9689 = vmatprep.subr.mxu0 0.0
  %9690 = vmatpush1.msra.mxu0 0.0
  %9691 = vmatprep.subr.mxu0 0.0
  %9692 = vmatpush1.msra.mxu0 0.0
  %9693 = vmatprep.subr.mxu0 0.0
  %9694 = vmatpush1.msra.mxu0 0.0
  %9695 = vmatprep.subr.mxu0 0.0
  %9696 = vmatpush1.msra.mxu0 0.0
  %9697 = vmatprep.subr.mxu0 0.0
  %9698 = vmatpush1.msra.mxu0 0.0
  %9699 = vmatprep.subr.mxu0 0.0
  %9700 = vmatpush1.msra.mxu0 0.0
  %9701 = vmatprep.subr.mxu0 0.0
  %9702 = vmatpush1.msra.mxu0 0.0
  %9703 = vmatprep.subr.mxu0 0.0
  %9704 = vmatpush1.msra.mxu0 0.0
  %9705 = vmatprep.subr.mxu0 0.0
  %9706 = vmatpush1.msra.mxu0 0.0
  %9707 = vmatprep.subr.mxu0 0.0
  %9708 = vmatpush1.msra.mxu0 0.0
  %9709 = vmatprep.subr.mxu0 0.0
  %9710 = vmatpush1.msra.mxu0 0.0
  %9711 = vmatprep.subr.mxu0 0.0
  %9712 = vmatpush1.msra.mxu0 0.0
  %9713 = vmatprep.subr.mxu0 0.0
  %9714 = vmatpush1.msra.mxu0 0.0
  %9715 = vmatprep.subr.mxu0 0.0
  %9716 = vmatpush1.msra.mxu0 0.0
  %9717 = vmatprep.subr.mxu0 0.0
  %9718 = vmatpush1.msra.mxu0 0.0
  %9719 = vmatprep.subr.mxu0 0.0
  %9720 = vmatpush1.msra.mxu0 0.0
  %9721 = vmatprep.subr.mxu0 0.0
  %9722 = vmatpush1.msra.mxu0 0.0
  %9723 = vmatprep.subr.mxu0 0.0
  %9724 = vmatpush1.msra.mxu0 0.0
  %9725 = vmatprep.mubr.f32.mxu0 0.0
  %9726 = vmatmul.mubr.f32.gmra.mrb[0].mxu0 %v9659
  %v9727 = vpop.f32.mrb[0].mxu0
  %v9728 = vadd.f32 0.0, %v9727
  %v9729 = vpop.f32.mrb[0].mxu0
  %9730 = vdwg.mxu0
  %v9732 = vsel %vm8614, %v9505, 0
  %9734 = vmatprep.subr.mxu0 0.0
  %9735 = vmatpush1.msra.mxu0 %v9581
  %9736 = vmatprep.subr.mxu0 0.0
  %9737 = vmatpush1.msra.mxu0 %v9582
  %9738 = vmatprep.subr.mxu0 0.0
  %9739 = vmatpush1.msra.mxu0 %v9583
  %9740 = vmatprep.subr.mxu0 0.0
  %9741 = vmatpush1.msra.mxu0 %v9584
  %9742 = vmatprep.subr.mxu0 0.0
  %9743 = vmatpush1.msra.mxu0 0.0
  %9744 = vmatprep.subr.mxu0 0.0
  %9745 = vmatpush1.msra.mxu0 0.0
  %9746 = vmatprep.subr.mxu0 0.0
  %9747 = vmatpush1.msra.mxu0 0.0
  %9748 = vmatprep.subr.mxu0 0.0
  %9749 = vmatpush1.msra.mxu0 0.0
  %9750 = vmatprep.subr.mxu0 0.0
  %9751 = vmatpush1.msra.mxu0 0.0
  %9752 = vmatprep.subr.mxu0 0.0
  %9753 = vmatpush1.msra.mxu0 0.0
  %9754 = vmatprep.subr.mxu0 0.0
  %9755 = vmatpush1.msra.mxu0 0.0
  %9756 = vmatprep.subr.mxu0 0.0
  %9757 = vmatpush1.msra.mxu0 0.0
  %9758 = vmatprep.subr.mxu0 0.0
  %9759 = vmatpush1.msra.mxu0 0.0
  %9760 = vmatprep.subr.mxu0 0.0
  %9761 = vmatpush1.msra.mxu0 0.0
  %9762 = vmatprep.subr.mxu0 0.0
  %9763 = vmatpush1.msra.mxu0 0.0
  %9764 = vmatprep.subr.mxu0 0.0
  %9765 = vmatpush1.msra.mxu0 0.0
  %9766 = vmatprep.subr.mxu0 0.0
  %9767 = vmatpush1.msra.mxu0 0.0
  %9768 = vmatprep.subr.mxu0 0.0
  %9769 = vmatpush1.msra.mxu0 0.0
  %9770 = vmatprep.subr.mxu0 0.0
  %9771 = vmatpush1.msra.mxu0 0.0
  %9772 = vmatprep.subr.mxu0 0.0
  %9773 = vmatpush1.msra.mxu0 0.0
  %9774 = vmatprep.subr.mxu0 0.0
  %9775 = vmatpush1.msra.mxu0 0.0
  %9776 = vmatprep.subr.mxu0 0.0
  %9777 = vmatpush1.msra.mxu0 0.0
  %9778 = vmatprep.subr.mxu0 0.0
  %9779 = vmatpush1.msra.mxu0 0.0
  %9780 = vmatprep.subr.mxu0 0.0
  %9781 = vmatpush1.msra.mxu0 0.0
  %9782 = vmatprep.subr.mxu0 0.0
  %9783 = vmatpush1.msra.mxu0 0.0
  %9784 = vmatprep.subr.mxu0 0.0
  %9785 = vmatpush1.msra.mxu0 0.0
  %9786 = vmatprep.subr.mxu0 0.0
  %9787 = vmatpush1.msra.mxu0 0.0
  %9788 = vmatprep.subr.mxu0 0.0
  %9789 = vmatpush1.msra.mxu0 0.0
  %9790 = vmatprep.subr.mxu0 0.0
  %9791 = vmatpush1.msra.mxu0 0.0
  %9792 = vmatprep.subr.mxu0 0.0
  %9793 = vmatpush1.msra.mxu0 0.0
  %9794 = vmatprep.subr.mxu0 0.0
  %9795 = vmatpush1.msra.mxu0 0.0
  %9796 = vmatprep.subr.mxu0 0.0
  %9797 = vmatpush1.msra.mxu0 0.0
  %9798 = vmatprep.mubr.f32.mxu0 0.0
  %9799 = vmatmul.mubr.f32.gmra.mrb[0].mxu0 %v9732
  %v9800 = vpop.f32.mrb[0].mxu0
  %v9801 = vadd.f32 0.0, %v9800
  %v9802 = vpop.f32.mrb[0].mxu0
  %9803 = vdwg.mxu0
  %v9805 = vsel %vm8614, %v9578, 0
  %9807 = vmatprep.subr.mxu0 0.0
  %9808 = vmatpush1.msra.mxu0 %v9581
  %9809 = vmatprep.subr.mxu0 0.0
  %9810 = vmatpush1.msra.mxu0 %v9582
  %9811 = vmatprep.subr.mxu0 0.0
  %9812 = vmatpush1.msra.mxu0 %v9583
  %9813 = vmatprep.subr.mxu0 0.0
  %9814 = vmatpush1.msra.mxu0 %v9584
  %9815 = vmatprep.subr.mxu0 0.0
  %9816 = vmatpush1.msra.mxu0 0.0
  %9817 = vmatprep.subr.mxu0 0.0
  %9818 = vmatpush1.msra.mxu0 0.0
  %9819 = vmatprep.subr.mxu0 0.0
  %9820 = vmatpush1.msra.mxu0 0.0
  %9821 = vmatprep.subr.mxu0 0.0
  %9822 = vmatpush1.msra.mxu0 0.0
  %9823 = vmatprep.subr.mxu0 0.0
  %9824 = vmatpush1.msra.mxu0 0.0
  %9825 = vmatprep.subr.mxu0 0.0
  %9826 = vmatpush1.msra.mxu0 0.0
  %9827 = vmatprep.subr.mxu0 0.0
  %9828 = vmatpush1.msra.mxu0 0.0
  %9829 = vmatprep.subr.mxu0 0.0
  %9830 = vmatpush1.msra.mxu0 0.0
  %9831 = vmatprep.subr.mxu0 0.0
  %9832 = vmatpush1.msra.mxu0 0.0
  %9833 = vmatprep.subr.mxu0 0.0
  %9834 = vmatpush1.msra.mxu0 0.0
  %9835 = vmatprep.subr.mxu0 0.0
  %9836 = vmatpush1.msra.mxu0 0.0
  %9837 = vmatprep.subr.mxu0 0.0
  %9838 = vmatpush1.msra.mxu0 0.0
  %9839 = vmatprep.subr.mxu0 0.0
  %9840 = vmatpush1.msra.mxu0 0.0
  %9841 = vmatprep.subr.mxu0 0.0
  %9842 = vmatpush1.msra.mxu0 0.0
  %9843 = vmatprep.subr.mxu0 0.0
  %9844 = vmatpush1.msra.mxu0 0.0
  %9845 = vmatprep.subr.mxu0 0.0
  %9846 = vmatpush1.msra.mxu0 0.0
  %9847 = vmatprep.subr.mxu0 0.0
  %9848 = vmatpush1.msra.mxu0 0.0
  %9849 = vmatprep.subr.mxu0 0.0
  %9850 = vmatpush1.msra.mxu0 0.0
  %9851 = vmatprep.subr.mxu0 0.0
  %9852 = vmatpush1.msra.mxu0 0.0
  %9853 = vmatprep.subr.mxu0 0.0
  %9854 = vmatpush1.msra.mxu0 0.0
  %9855 = vmatprep.subr.mxu0 0.0
  %9856 = vmatpush1.msra.mxu0 0.0
  %9857 = vmatprep.subr.mxu0 0.0
  %9858 = vmatpush1.msra.mxu0 0.0
  %9859 = vmatprep.subr.mxu0 0.0
  %9860 = vmatpush1.msra.mxu0 0.0
  %9861 = vmatprep.subr.mxu0 0.0
  %9862 = vmatpush1.msra.mxu0 0.0
  %9863 = vmatprep.subr.mxu0 0.0
  %9864 = vmatpush1.msra.mxu0 0.0
  %9865 = vmatprep.subr.mxu0 0.0
  %9866 = vmatpush1.msra.mxu0 0.0
  %9867 = vmatprep.subr.mxu0 0.0
  %9868 = vmatpush1.msra.mxu0 0.0
  %9869 = vmatprep.subr.mxu0 0.0
  %9870 = vmatpush1.msra.mxu0 0.0
  %9871 = vmatprep.mubr.f32.mxu0 0.0
  %9872 = vmatmul.mubr.f32.gmra.mrb[0].mxu0 %v9805
  %v9873 = vpop.f32.mrb[0].mxu0
  %v9874 = vadd.f32 0.0, %v9873
  %v9875 = vpop.f32.mrb[0].mxu0
  %9876 = vdwg.mxu0
  %v9877 = vld [vmem:[%s13] sm:$0xff]
  %v9878 = vld [vmem:[%s13 + $0x8] sm:$0xff]
  %v9879 = vld [vmem:[%s13 + $0x10] sm:$0xff]
  %v9880 = vld [vmem:[%s13 + $0x18] sm:$0xff]
  %9881 = vmatprep.subr.mxu0 0.0
  %9882 = vmatpush1.msra.mxu0 %v9877
  %9883 = vmatprep.subr.mxu0 0.0
  %9884 = vmatpush1.msra.mxu0 %v9878
  %9885 = vmatprep.subr.mxu0 0.0
  %9886 = vmatpush1.msra.mxu0 %v9879
  %9887 = vmatprep.subr.mxu0 0.0
  %9888 = vmatpush1.msra.mxu0 %v9880
  %9889 = vmatprep.subr.mxu0 0.0
  %9890 = vmatpush1.msra.mxu0 0.0
  %9891 = vmatprep.subr.mxu0 0.0
  %9892 = vmatpush1.msra.mxu0 0.0
  %9893 = vmatprep.subr.mxu0 0.0
  %9894 = vmatpush1.msra.mxu0 0.0
  %9895 = vmatprep.subr.mxu0 0.0
  %9896 = vmatpush1.msra.mxu0 0.0
  %9897 = vmatprep.subr.mxu0 0.0
  %9898 = vmatpush1.msra.mxu0 0.0
  %9899 = vmatprep.subr.mxu0 0.0
  %9900 = vmatpush1.msra.mxu0 0.0
  %9901 = vmatprep.subr.mxu0 0.0
  %9902 = vmatpush1.msra.mxu0 0.0
  %9903 = vmatprep.subr.mxu0 0.0
  %9904 = vmatpush1.msra.mxu0 0.0
  %9905 = vmatprep.subr.mxu0 0.0
  %9906 = vmatpush1.msra.mxu0 0.0
  %9907 = vmatprep.subr.mxu0 0.0
  %9908 = vmatpush1.msra.mxu0 0.0
  %9909 = vmatprep.subr.mxu0 0.0
  %9910 = vmatpush1.msra.mxu0 0.0
  %9911 = vmatprep.subr.mxu0 0.0
  %9912 = vmatpush1.msra.mxu0 0.0
  %9913 = vmatprep.subr.mxu0 0.0
  %9914 = vmatpush1.msra.mxu0 0.0
  %9915 = vmatprep.subr.mxu0 0.0
  %9916 = vmatpush1.msra.mxu0 0.0
  %9917 = vmatprep.subr.mxu0 0.0
  %9918 = vmatpush1.msra.mxu0 0.0
  %9919 = vmatprep.subr.mxu0 0.0
  %9920 = vmatpush1.msra.mxu0 0.0
  %9921 = vmatprep.subr.mxu0 0.0
  %9922 = vmatpush1.msra.mxu0 0.0
  %9923 = vmatprep.subr.mxu0 0.0
  %9924 = vmatpush1.msra.mxu0 0.0
  %9925 = vmatprep.subr.mxu0 0.0
  %9926 = vmatpush1.msra.mxu0 0.0
  %9927 = vmatprep.subr.mxu0 0.0
  %9928 = vmatpush1.msra.mxu0 0.0
  %9929 = vmatprep.subr.mxu0 0.0
  %9930 = vmatpush1.msra.mxu0 0.0
  %9931 = vmatprep.subr.mxu0 0.0
  %9932 = vmatpush1.msra.mxu0 0.0
  %9933 = vmatprep.subr.mxu0 0.0
  %9934 = vmatpush1.msra.mxu0 0.0
  %9935 = vmatprep.subr.mxu0 0.0
  %9936 = vmatpush1.msra.mxu0 0.0
  %9937 = vmatprep.subr.mxu0 0.0
  %9938 = vmatpush1.msra.mxu0 0.0
  %9939 = vmatprep.subr.mxu0 0.0
  %9940 = vmatpush1.msra.mxu0 0.0
  %9941 = vmatprep.subr.mxu0 0.0
  %9942 = vmatpush1.msra.mxu0 0.0
  %9943 = vmatprep.subr.mxu0 0.0
  %9944 = vmatpush1.msra.mxu0 0.0
  %9945 = vmatprep.mubr.f32.mxu0 0.0
  %9946 = vmatmul.mubr.f32.gmra.mrb[0].mxu0 %v9586
  %v9947 = vpop.f32.mrb[0].mxu0
  %v9948 = vadd.f32 0.0, %v9947
  %v9949 = vpop.f32.mrb[0].mxu0
  %9950 = vdwg.mxu0
  %9951 = vmatprep.subr.mxu0 0.0
  %9952 = vmatpush1.msra.mxu0 %v9877
  %9953 = vmatprep.subr.mxu0 0.0
  %9954 = vmatpush1.msra.mxu0 %v9878
  %9955 = vmatprep.subr.mxu0 0.0
  %9956 = vmatpush1.msra.mxu0 %v9879
  %9957 = vmatprep.subr.mxu0 0.0
  %9958 = vmatpush1.msra.mxu0 %v9880
  %9959 = vmatprep.subr.mxu0 0.0
  %9960 = vmatpush1.msra.mxu0 0.0
  %9961 = vmatprep.subr.mxu0 0.0
  %9962 = vmatpush1.msra.mxu0 0.0
  %9963 = vmatprep.subr.mxu0 0.0
  %9964 = vmatpush1.msra.mxu0 0.0
  %9965 = vmatprep.subr.mxu0 0.0
  %9966 = vmatpush1.msra.mxu0 0.0
  %9967 = vmatprep.subr.mxu0 0.0
  %9968 = vmatpush1.msra.mxu0 0.0
  %9969 = vmatprep.subr.mxu0 0.0
  %9970 = vmatpush1.msra.mxu0 0.0
  %9971 = vmatprep.subr.mxu0 0.0
  %9972 = vmatpush1.msra.mxu0 0.0
  %9973 = vmatprep.subr.mxu0 0.0
  %9974 = vmatpush1.msra.mxu0 0.0
  %9975 = vmatprep.subr.mxu0 0.0
  %9976 = vmatpush1.msra.mxu0 0.0
  %9977 = vmatprep.subr.mxu0 0.0
  %9978 = vmatpush1.msra.mxu0 0.0
  %9979 = vmatprep.subr.mxu0 0.0
  %9980 = vmatpush1.msra.mxu0 0.0
  %9981 = vmatprep.subr.mxu0 0.0
  %9982 = vmatpush1.msra.mxu0 0.0
  %9983 = vmatprep.subr.mxu0 0.0
  %9984 = vmatpush1.msra.mxu0 0.0
  %9985 = vmatprep.subr.mxu0 0.0
  %9986 = vmatpush1.msra.mxu0 0.0
  %9987 = vmatprep.subr.mxu0 0.0
  %9988 = vmatpush1.msra.mxu0 0.0
  %9989 = vmatprep.subr.mxu0 0.0
  %9990 = vmatpush1.msra.mxu0 0.0
  %9991 = vmatprep.subr.mxu0 0.0
  %9992 = vmatpush1.msra.mxu0 0.0
  %9993 = vmatprep.subr.mxu0 0.0
  %9994 = vmatpush1.msra.mxu0 0.0
  %9995 = vmatprep.subr.mxu0 0.0
  %9996 = vmatpush1.msra.mxu0 0.0
  %9997 = vmatprep.subr.mxu0 0.0
  %9998 = vmatpush1.msra.mxu0 0.0
  %9999 = vmatprep.subr.mxu0 0.0
  %10000 = vmatpush1.msra.mxu0 0.0
  %10001 = vmatprep.subr.mxu0 0.0
  %10002 = vmatpush1.msra.mxu0 0.0
  %10003 = vmatprep.subr.mxu0 0.0
  %10004 = vmatpush1.msra.mxu0 0.0
  %10005 = vmatprep.subr.mxu0 0.0
  %10006 = vmatpush1.msra.mxu0 0.0
  %10007 = vmatprep.subr.mxu0 0.0
  %10008 = vmatpush1.msra.mxu0 0.0
  %10009 = vmatprep.subr.mxu0 0.0
  %10010 = vmatpush1.msra.mxu0 0.0
  %10011 = vmatprep.subr.mxu0 0.0
  %10012 = vmatpush1.msra.mxu0 0.0
  %10013 = vmatprep.subr.mxu0 0.0
  %10014 = vmatpush1.msra.mxu0 0.0
  %10015 = vmatprep.mubr.f32.mxu0 0.0
  %10016 = vmatmul.mubr.f32.gmra.mrb[0].mxu0 %v9659
  %v10017 = vpop.f32.mrb[0].mxu0
  %v10018 = vadd.f32 0.0, %v10017
  %v10019 = vpop.f32.mrb[0].mxu0
  %10020 = vdwg.mxu0
  %10021 = vmatprep.subr.mxu0 0.0
  %10022 = vmatpush1.msra.mxu0 %v9877
  %10023 = vmatprep.subr.mxu0 0.0
  %10024 = vmatpush1.msra.mxu0 %v9878
  %10025 = vmatprep.subr.mxu0 0.0
  %10026 = vmatpush1.msra.mxu0 %v9879
  %10027 = vmatprep.subr.mxu0 0.0
  %10028 = vmatpush1.msra.mxu0 %v9880
  %10029 = vmatprep.subr.mxu0 0.0
  %10030 = vmatpush1.msra.mxu0 0.0
  %10031 = vmatprep.subr.mxu0 0.0
  %10032 = vmatpush1.msra.mxu0 0.0
  %10033 = vmatprep.subr.mxu0 0.0
  %10034 = vmatpush1.msra.mxu0 0.0
  %10035 = vmatprep.subr.mxu0 0.0
  %10036 = vmatpush1.msra.mxu0 0.0
  %10037 = vmatprep.subr.mxu0 0.0
  %10038 = vmatpush1.msra.mxu0 0.0
  %10039 = vmatprep.subr.mxu0 0.0
  %10040 = vmatpush1.msra.mxu0 0.0
  %10041 = vmatprep.subr.mxu0 0.0
  %10042 = vmatpush1.msra.mxu0 0.0
  %10043 = vmatprep.subr.mxu0 0.0
  %10044 = vmatpush1.msra.mxu0 0.0
  %10045 = vmatprep.subr.mxu0 0.0
  %10046 = vmatpush1.msra.mxu0 0.0
  %10047 = vmatprep.subr.mxu0 0.0
  %10048 = vmatpush1.msra.mxu0 0.0
  %10049 = vmatprep.subr.mxu0 0.0
  %10050 = vmatpush1.msra.mxu0 0.0
  %10051 = vmatprep.subr.mxu0 0.0
  %10052 = vmatpush1.msra.mxu0 0.0
  %10053 = vmatprep.subr.mxu0 0.0
  %10054 = vmatpush1.msra.mxu0 0.0
  %10055 = vmatprep.subr.mxu0 0.0
  %10056 = vmatpush1.msra.mxu0 0.0
  %10057 = vmatprep.subr.mxu0 0.0
  %10058 = vmatpush1.msra.mxu0 0.0
  %10059 = vmatprep.subr.mxu0 0.0
  %10060 = vmatpush1.msra.mxu0 0.0
  %10061 = vmatprep.subr.mxu0 0.0
  %10062 = vmatpush1.msra.mxu0 0.0
  %10063 = vmatprep.subr.mxu0 0.0
  %10064 = vmatpush1.msra.mxu0 0.0
  %10065 = vmatprep.subr.mxu0 0.0
  %10066 = vmatpush1.msra.mxu0 0.0
  %10067 = vmatprep.subr.mxu0 0.0
  %10068 = vmatpush1.msra.mxu0 0.0
  %10069 = vmatprep.subr.mxu0 0.0
  %10070 = vmatpush1.msra.mxu0 0.0
  %10071 = vmatprep.subr.mxu0 0.0
  %10072 = vmatpush1.msra.mxu0 0.0
  %10073 = vmatprep.subr.mxu0 0.0
  %10074 = vmatpush1.msra.mxu0 0.0
  %10075 = vmatprep.subr.mxu0 0.0
  %10076 = vmatpush1.msra.mxu0 0.0
  %10077 = vmatprep.subr.mxu0 0.0
  %10078 = vmatpush1.msra.mxu0 0.0
  %10079 = vmatprep.subr.mxu0 0.0
  %10080 = vmatpush1.msra.mxu0 0.0
  %10081 = vmatprep.subr.mxu0 0.0
  %10082 = vmatpush1.msra.mxu0 0.0
  %10083 = vmatprep.subr.mxu0 0.0
  %10084 = vmatpush1.msra.mxu0 0.0
  %10085 = vmatprep.mubr.f32.mxu0 0.0
  %10086 = vmatmul.mubr.f32.gmra.mrb[0].mxu0 %v9732
  %v10087 = vpop.f32.mrb[0].mxu0
  %v10088 = vadd.f32 0.0, %v10087
  %v10089 = vpop.f32.mrb[0].mxu0
  %10090 = vdwg.mxu0
  %10091 = vmatprep.subr.mxu0 0.0
  %10092 = vmatpush1.msra.mxu0 %v9877
  %10093 = vmatprep.subr.mxu0 0.0
  %10094 = vmatpush1.msra.mxu0 %v9878
  %10095 = vmatprep.subr.mxu0 0.0
  %10096 = vmatpush1.msra.mxu0 %v9879
  %10097 = vmatprep.subr.mxu0 0.0
  %10098 = vmatpush1.msra.mxu0 %v9880
  %10099 = vmatprep.subr.mxu0 0.0
  %10100 = vmatpush1.msra.mxu0 0.0
  %10101 = vmatprep.subr.mxu0 0.0
  %10102 = vmatpush1.msra.mxu0 0.0
  %10103 = vmatprep.subr.mxu0 0.0
  %10104 = vmatpush1.msra.mxu0 0.0
  %10105 = vmatprep.subr.mxu0 0.0
  %10106 = vmatpush1.msra.mxu0 0.0
  %10107 = vmatprep.subr.mxu0 0.0
  %10108 = vmatpush1.msra.mxu0 0.0
  %10109 = vmatprep.subr.mxu0 0.0
  %10110 = vmatpush1.msra.mxu0 0.0
  %10111 = vmatprep.subr.mxu0 0.0
  %10112 = vmatpush1.msra.mxu0 0.0
  %10113 = vmatprep.subr.mxu0 0.0
  %10114 = vmatpush1.msra.mxu0 0.0
  %10115 = vmatprep.subr.mxu0 0.0
  %10116 = vmatpush1.msra.mxu0 0.0
  %10117 = vmatprep.subr.mxu0 0.0
  %10118 = vmatpush1.msra.mxu0 0.0
  %10119 = vmatprep.subr.mxu0 0.0
  %10120 = vmatpush1.msra.mxu0 0.0
  %10121 = vmatprep.subr.mxu0 0.0
  %10122 = vmatpush1.msra.mxu0 0.0
  %10123 = vmatprep.subr.mxu0 0.0
  %10124 = vmatpush1.msra.mxu0 0.0
  %10125 = vmatprep.subr.mxu0 0.0
  %10126 = vmatpush1.msra.mxu0 0.0
  %10127 = vmatprep.subr.mxu0 0.0
  %10128 = vmatpush1.msra.mxu0 0.0
  %10129 = vmatprep.subr.mxu0 0.0
  %10130 = vmatpush1.msra.mxu0 0.0
  %10131 = vmatprep.subr.mxu0 0.0
  %10132 = vmatpush1.msra.mxu0 0.0
  %10133 = vmatprep.subr.mxu0 0.0
  %10134 = vmatpush1.msra.mxu0 0.0
  %10135 = vmatprep.subr.mxu0 0.0
  %10136 = vmatpush1.msra.mxu0 0.0
  %10137 = vmatprep.subr.mxu0 0.0
  %10138 = vmatpush1.msra.mxu0 0.0
  %10139 = vmatprep.subr.mxu0 0.0
  %10140 = vmatpush1.msra.mxu0 0.0
  %10141 = vmatprep.subr.mxu0 0.0
  %10142 = vmatpush1.msra.mxu0 0.0
  %10143 = vmatprep.subr.mxu0 0.0
  %10144 = vmatpush1.msra.mxu0 0.0
  %10145 = vmatprep.subr.mxu0 0.0
  %10146 = vmatpush1.msra.mxu0 0.0
  %10147 = vmatprep.subr.mxu0 0.0
  %10148 = vmatpush1.msra.mxu0 0.0
  %10149 = vmatprep.subr.mxu0 0.0
  %10150 = vmatpush1.msra.mxu0 0.0
  %10151 = vmatprep.subr.mxu0 0.0
  %10152 = vmatpush1.msra.mxu0 0.0
  %10153 = vmatprep.subr.mxu0 0.0
  %10154 = vmatpush1.msra.mxu0 0.0
  %10155 = vmatprep.mubr.f32.mxu0 0.0
  %10156 = vmatmul.mubr.f32.gmra.mrb[0].mxu0 %v9805
  %v10157 = vpop.f32.mrb[0].mxu0
  %v10158 = vadd.f32 0.0, %v10157
  %v10159 = vpop.f32.mrb[0].mxu0
  %10160 = vdwg.mxu0
  %v10162 = vsel %vm77, %v9655, 0
  %v10165 = vsel %vm77, %v8636, 0
  %v10168 = vsel %vm77, %v8637, 0
  %v10171 = vsel %vm77, %v8638, 0
  %v10174 = vsel %vm77, %v8639, 0
  %v10176 = vsel %vm77, %v8640, 0
  %10178 = vmatprep.subr.mxu0 0.0
  %10179 = vmatpush1.xpose.msra.mxu0 %v10165
  %10180 = vmatprep.subr.mxu0 0.0
  %10181 = vmatpush1.xpose.msra.mxu0 %v10168
  %10182 = vmatprep.subr.mxu0 0.0
  %10183 = vmatpush1.xpose.msra.mxu0 %v10171
  %10184 = vmatprep.subr.mxu0 0.0
  %10185 = vmatpush1.xpose.msra.mxu0 %v10174
  %10186 = vmatprep.subr.mxu0 0.0
  %10187 = vmatpush1.xpose.msra.mxu0 %v10176
  %10188 = vmatprep.subr.mxu0 0.0
  %10189 = vmatpush1.xpose.msra.mxu0 0.0
  %10190 = vmatprep.subr.mxu0 0.0
  %10191 = vmatpush1.xpose.msra.mxu0 0.0
  %10192 = vmatprep.subr.mxu0 0.0
  %10193 = vmatpush1.xpose.msra.mxu0 0.0
  %10194 = vmatprep.subr.mxu0 0.0
  %10195 = vmatpush1.xpose.msra.mxu0 0.0
  %10196 = vmatprep.subr.mxu0 0.0
  %10197 = vmatpush1.xpose.msra.mxu0 0.0
  %10198 = vmatprep.subr.mxu0 0.0
  %10199 = vmatpush1.xpose.msra.mxu0 0.0
  %10200 = vmatprep.subr.mxu0 0.0
  %10201 = vmatpush1.xpose.msra.mxu0 0.0
  %10202 = vmatprep.subr.mxu0 0.0
  %10203 = vmatpush1.xpose.msra.mxu0 0.0
  %10204 = vmatprep.subr.mxu0 0.0
  %10205 = vmatpush1.xpose.msra.mxu0 0.0
  %10206 = vmatprep.subr.mxu0 0.0
  %10207 = vmatpush1.xpose.msra.mxu0 0.0
  %10208 = vmatprep.subr.mxu0 0.0
  %10209 = vmatpush1.xpose.msra.mxu0 0.0
  %10210 = vmatprep.subr.mxu0 0.0
  %10211 = vmatpush1.xpose.msra.mxu0 0.0
  %10212 = vmatprep.subr.mxu0 0.0
  %10213 = vmatpush1.xpose.msra.mxu0 0.0
  %10214 = vmatprep.subr.mxu0 0.0
  %10215 = vmatpush1.xpose.msra.mxu0 0.0
  %10216 = vmatprep.subr.mxu0 0.0
  %10217 = vmatpush1.xpose.msra.mxu0 0.0
  %10218 = vmatprep.subr.mxu0 0.0
  %10219 = vmatpush1.xpose.msra.mxu0 0.0
  %10220 = vmatprep.subr.mxu0 0.0
  %10221 = vmatpush1.xpose.msra.mxu0 0.0
  %10222 = vmatprep.subr.mxu0 0.0
  %10223 = vmatpush1.xpose.msra.mxu0 0.0
  %10224 = vmatprep.subr.mxu0 0.0
  %10225 = vmatpush1.xpose.msra.mxu0 0.0
  %10226 = vmatprep.subr.mxu0 0.0
  %10227 = vmatpush1.xpose.msra.mxu0 0.0
  %10228 = vmatprep.subr.mxu0 0.0
  %10229 = vmatpush1.xpose.msra.mxu0 0.0
  %10230 = vmatprep.subr.mxu0 0.0
  %10231 = vmatpush1.xpose.msra.mxu0 0.0
  %10232 = vmatprep.subr.mxu0 0.0
  %10233 = vmatpush1.xpose.msra.mxu0 0.0
  %10234 = vmatprep.subr.mxu0 0.0
  %10235 = vmatpush1.xpose.msra.mxu0 0.0
  %10236 = vmatprep.subr.mxu0 0.0
  %10237 = vmatpush1.xpose.msra.mxu0 0.0
  %10238 = vmatprep.subr.mxu0 0.0
  %10239 = vmatpush1.xpose.msra.mxu0 0.0
  %10240 = vmatprep.subr.mxu0 0.0
  %10241 = vmatpush1.xpose.msra.mxu0 0.0
  %10242 = vmatprep.mubr.f32.mxu0 0.0
  %10243 = vmatmul.mubr.f32.gmra.mrb[0].mxu0 %v10162
  %v10244 = vpop.f32.mrb[0].mxu0
  %v10245 = vadd.f32 %v9948, %v10244
  %v10246 = vpop.f32.mrb[0].mxu0
  %10247 = vdwg.mxu0
  %v10249 = vsel %vm77, %v9728, 0
  %v10252 = vsel %vm77, %v8641, 0
  %v10255 = vsel %vm77, %v8642, 0
  %v10258 = vsel %vm77, %v8643, 0
  %v10261 = vsel %vm77, %v8644, 0
  %v10263 = vsel %vm77, %v8645, 0
  %10265 = vmatprep.subr.mxu0 0.0
  %10266 = vmatpush1.xpose.msra.mxu0 %v10252
  %10267 = vmatprep.subr.mxu0 0.0
  %10268 = vmatpush1.xpose.msra.mxu0 %v10255
  %10269 = vmatprep.subr.mxu0 0.0
  %10270 = vmatpush1.xpose.msra.mxu0 %v10258
  %10271 = vmatprep.subr.mxu0 0.0
  %10272 = vmatpush1.xpose.msra.mxu0 %v10261
  %10273 = vmatprep.subr.mxu0 0.0
  %10274 = vmatpush1.xpose.msra.mxu0 %v10263
  %10275 = vmatprep.subr.mxu0 0.0
  %10276 = vmatpush1.xpose.msra.mxu0 0.0
  %10277 = vmatprep.subr.mxu0 0.0
  %10278 = vmatpush1.xpose.msra.mxu0 0.0
  %10279 = vmatprep.subr.mxu0 0.0
  %10280 = vmatpush1.xpose.msra.mxu0 0.0
  %10281 = vmatprep.subr.mxu0 0.0
  %10282 = vmatpush1.xpose.msra.mxu0 0.0
  %10283 = vmatprep.subr.mxu0 0.0
  %10284 = vmatpush1.xpose.msra.mxu0 0.0
  %10285 = vmatprep.subr.mxu0 0.0
  %10286 = vmatpush1.xpose.msra.mxu0 0.0
  %10287 = vmatprep.subr.mxu0 0.0
  %10288 = vmatpush1.xpose.msra.mxu0 0.0
  %10289 = vmatprep.subr.mxu0 0.0
  %10290 = vmatpush1.xpose.msra.mxu0 0.0
  %10291 = vmatprep.subr.mxu0 0.0
  %10292 = vmatpush1.xpose.msra.mxu0 0.0
  %10293 = vmatprep.subr.mxu0 0.0
  %10294 = vmatpush1.xpose.msra.mxu0 0.0
  %10295 = vmatprep.subr.mxu0 0.0
  %10296 = vmatpush1.xpose.msra.mxu0 0.0
  %10297 = vmatprep.subr.mxu0 0.0
  %10298 = vmatpush1.xpose.msra.mxu0 0.0
  %10299 = vmatprep.subr.mxu0 0.0
  %10300 = vmatpush1.xpose.msra.mxu0 0.0
  %10301 = vmatprep.subr.mxu0 0.0
  %10302 = vmatpush1.xpose.msra.mxu0 0.0
  %10303 = vmatprep.subr.mxu0 0.0
  %10304 = vmatpush1.xpose.msra.mxu0 0.0
  %10305 = vmatprep.subr.mxu0 0.0
  %10306 = vmatpush1.xpose.msra.mxu0 0.0
  %10307 = vmatprep.subr.mxu0 0.0
  %10308 = vmatpush1.xpose.msra.mxu0 0.0
  %10309 = vmatprep.subr.mxu0 0.0
  %10310 = vmatpush1.xpose.msra.mxu0 0.0
  %10311 = vmatprep.subr.mxu0 0.0
  %10312 = vmatpush1.xpose.msra.mxu0 0.0
  %10313 = vmatprep.subr.mxu0 0.0
  %10314 = vmatpush1.xpose.msra.mxu0 0.0
  %10315 = vmatprep.subr.mxu0 0.0
  %10316 = vmatpush1.xpose.msra.mxu0 0.0
  %10317 = vmatprep.subr.mxu0 0.0
  %10318 = vmatpush1.xpose.msra.mxu0 0.0
  %10319 = vmatprep.subr.mxu0 0.0
  %10320 = vmatpush1.xpose.msra.mxu0 0.0
  %10321 = vmatprep.subr.mxu0 0.0
  %10322 = vmatpush1.xpose.msra.mxu0 0.0
  %10323 = vmatprep.subr.mxu0 0.0
  %10324 = vmatpush1.xpose.msra.mxu0 0.0
  %10325 = vmatprep.subr.mxu0 0.0
  %10326 = vmatpush1.xpose.msra.mxu0 0.0
  %10327 = vmatprep.subr.mxu0 0.0
  %10328 = vmatpush1.xpose.msra.mxu0 0.0
  %10329 = vmatprep.mubr.f32.mxu0 0.0
  %10330 = vmatmul.mubr.f32.gmra.mrb[0].mxu0 %v10249
  %v10331 = vpop.f32.mrb[0].mxu0
  %v10332 = vadd.f32 %v10018, %v10331
  %v10333 = vpop.f32.mrb[0].mxu0
  %10334 = vdwg.mxu0
  %v10336 = vsel %vm77, %v9801, 0
  %v10339 = vsel %vm77, %v8646, 0
  %v10342 = vsel %vm77, %v8647, 0
  %v10345 = vsel %vm77, %v8648, 0
  %v10348 = vsel %vm77, %v8649, 0
  %v10350 = vsel %vm77, %v8650, 0
  %10352 = vmatprep.subr.mxu0 0.0
  %10353 = vmatpush1.xpose.msra.mxu0 %v10339
  %10354 = vmatprep.subr.mxu0 0.0
  %10355 = vmatpush1.xpose.msra.mxu0 %v10342
  %10356 = vmatprep.subr.mxu0 0.0
  %10357 = vmatpush1.xpose.msra.mxu0 %v10345
  %10358 = vmatprep.subr.mxu0 0.0
  %10359 = vmatpush1.xpose.msra.mxu0 %v10348
  %10360 = vmatprep.subr.mxu0 0.0
  %10361 = vmatpush1.xpose.msra.mxu0 %v10350
  %10362 = vmatprep.subr.mxu0 0.0
  %10363 = vmatpush1.xpose.msra.mxu0 0.0
  %10364 = vmatprep.subr.mxu0 0.0
  %10365 = vmatpush1.xpose.msra.mxu0 0.0
  %10366 = vmatprep.subr.mxu0 0.0
  %10367 = vmatpush1.xpose.msra.mxu0 0.0
  %10368 = vmatprep.subr.mxu0 0.0
  %10369 = vmatpush1.xpose.msra.mxu0 0.0
  %10370 = vmatprep.subr.mxu0 0.0
  %10371 = vmatpush1.xpose.msra.mxu0 0.0
  %10372 = vmatprep.subr.mxu0 0.0
  %10373 = vmatpush1.xpose.msra.mxu0 0.0
  %10374 = vmatprep.subr.mxu0 0.0
  %10375 = vmatpush1.xpose.msra.mxu0 0.0
  %10376 = vmatprep.subr.mxu0 0.0
  %10377 = vmatpush1.xpose.msra.mxu0 0.0
  %10378 = vmatprep.subr.mxu0 0.0
  %10379 = vmatpush1.xpose.msra.mxu0 0.0
  %10380 = vmatprep.subr.mxu0 0.0
  %10381 = vmatpush1.xpose.msra.mxu0 0.0
  %10382 = vmatprep.subr.mxu0 0.0
  %10383 = vmatpush1.xpose.msra.mxu0 0.0
  %10384 = vmatprep.subr.mxu0 0.0
  %10385 = vmatpush1.xpose.msra.mxu0 0.0
  %10386 = vmatprep.subr.mxu0 0.0
  %10387 = vmatpush1.xpose.msra.mxu0 0.0
  %10388 = vmatprep.subr.mxu0 0.0
  %10389 = vmatpush1.xpose.msra.mxu0 0.0
  %10390 = vmatprep.subr.mxu0 0.0
  %10391 = vmatpush1.xpose.msra.mxu0 0.0
  %10392 = vmatprep.subr.mxu0 0.0
  %10393 = vmatpush1.xpose.msra.mxu0 0.0
  %10394 = vmatprep.subr.mxu0 0.0
  %10395 = vmatpush1.xpose.msra.mxu0 0.0
  %10396 = vmatprep.subr.mxu0 0.0
  %10397 = vmatpush1.xpose.msra.mxu0 0.0
  %10398 = vmatprep.subr.mxu0 0.0
  %10399 = vmatpush1.xpose.msra.mxu0 0.0
  %10400 = vmatprep.subr.mxu0 0.0
  %10401 = vmatpush1.xpose.msra.mxu0 0.0
  %10402 = vmatprep.subr.mxu0 0.0
  %10403 = vmatpush1.xpose.msra.mxu0 0.0
  %10404 = vmatprep.subr.mxu0 0.0
  %10405 = vmatpush1.xpose.msra.mxu0 0.0
  %10406 = vmatprep.subr.mxu0 0.0
  %10407 = vmatpush1.xpose.msra.mxu0 0.0
  %10408 = vmatprep.subr.mxu0 0.0
  %10409 = vmatpush1.xpose.msra.mxu0 0.0
  %10410 = vmatprep.subr.mxu0 0.0
  %10411 = vmatpush1.xpose.msra.mxu0 0.0
  %10412 = vmatprep.subr.mxu0 0.0
  %10413 = vmatpush1.xpose.msra.mxu0 0.0
  %10414 = vmatprep.subr.mxu0 0.0
  %10415 = vmatpush1.xpose.msra.mxu0 0.0
  %10416 = vmatprep.mubr.f32.mxu0 0.0
  %10417 = vmatmul.mubr.f32.gmra.mrb[0].mxu0 %v10336
  %v10418 = vpop.f32.mrb[0].mxu0
  %v10419 = vadd.f32 %v10088, %v10418
  %v10420 = vpop.f32.mrb[0].mxu0
  %10421 = vdwg.mxu0
  %v10423 = vsel %vm77, %v9874, 0
  %v10426 = vsel %vm77, %v8651, 0
  %v10429 = vsel %vm77, %v8652, 0
  %v10432 = vsel %vm77, %v8653, 0
  %v10435 = vsel %vm77, %v8654, 0
  %v10437 = vsel %vm77, %v8655, 0
  %10439 = vmatprep.subr.mxu0 0.0
  %10440 = vmatpush1.xpose.msra.mxu0 %v10426
  %10441 = vmatprep.subr.mxu0 0.0
  %10442 = vmatpush1.xpose.msra.mxu0 %v10429
  %10443 = vmatprep.subr.mxu0 0.0
  %10444 = vmatpush1.xpose.msra.mxu0 %v10432
  %10445 = vmatprep.subr.mxu0 0.0
  %10446 = vmatpush1.xpose.msra.mxu0 %v10435
  %10447 = vmatprep.subr.mxu0 0.0
  %10448 = vmatpush1.xpose.msra.mxu0 %v10437
  %10449 = vmatprep.subr.mxu0 0.0
  %10450 = vmatpush1.xpose.msra.mxu0 0.0
  %10451 = vmatprep.subr.mxu0 0.0
  %10452 = vmatpush1.xpose.msra.mxu0 0.0
  %10453 = vmatprep.subr.mxu0 0.0
  %10454 = vmatpush1.xpose.msra.mxu0 0.0
  %10455 = vmatprep.subr.mxu0 0.0
  %10456 = vmatpush1.xpose.msra.mxu0 0.0
  %10457 = vmatprep.subr.mxu0 0.0
  %10458 = vmatpush1.xpose.msra.mxu0 0.0
  %10459 = vmatprep.subr.mxu0 0.0
  %10460 = vmatpush1.xpose.msra.mxu0 0.0
  %10461 = vmatprep.subr.mxu0 0.0
  %10462 = vmatpush1.xpose.msra.mxu0 0.0
  %10463 = vmatprep.subr.mxu0 0.0
  %10464 = vmatpush1.xpose.msra.mxu0 0.0
  %10465 = vmatprep.subr.mxu0 0.0
  %10466 = vmatpush1.xpose.msra.mxu0 0.0
  %10467 = vmatprep.subr.mxu0 0.0
  %10468 = vmatpush1.xpose.msra.mxu0 0.0
  %10469 = vmatprep.subr.mxu0 0.0
  %10470 = vmatpush1.xpose.msra.mxu0 0.0
  %10471 = vmatprep.subr.mxu0 0.0
  %10472 = vmatpush1.xpose.msra.mxu0 0.0
  %10473 = vmatprep.subr.mxu0 0.0
  %10474 = vmatpush1.xpose.msra.mxu0 0.0
  %10475 = vmatprep.subr.mxu0 0.0
  %10476 = vmatpush1.xpose.msra.mxu0 0.0
  %10477 = vmatprep.subr.mxu0 0.0
  %10478 = vmatpush1.xpose.msra.mxu0 0.0
  %10479 = vmatprep.subr.mxu0 0.0
  %10480 = vmatpush1.xpose.msra.mxu0 0.0
  %10481 = vmatprep.subr.mxu0 0.0
  %10482 = vmatpush1.xpose.msra.mxu0 0.0
  %10483 = vmatprep.subr.mxu0 0.0
  %10484 = vmatpush1.xpose.msra.mxu0 0.0
  %10485 = vmatprep.subr.mxu0 0.0
  %10486 = vmatpush1.xpose.msra.mxu0 0.0
  %10487 = vmatprep.subr.mxu0 0.0
  %10488 = vmatpush1.xpose.msra.mxu0 0.0
  %10489 = vmatprep.subr.mxu0 0.0
  %10490 = vmatpush1.xpose.msra.mxu0 0.0
  %10491 = vmatprep.subr.mxu0 0.0
  %10492 = vmatpush1.xpose.msra.mxu0 0.0
  %10493 = vmatprep.subr.mxu0 0.0
  %10494 = vmatpush1.xpose.msra.mxu0 0.0
  %10495 = vmatprep.subr.mxu0 0.0
  %10496 = vmatpush1.xpose.msra.mxu0 0.0
  %10497 = vmatprep.subr.mxu0 0.0
  %10498 = vmatpush1.xpose.msra.mxu0 0.0
  %10499 = vmatprep.subr.mxu0 0.0
  %10500 = vmatpush1.xpose.msra.mxu0 0.0
  %10501 = vmatprep.subr.mxu0 0.0
  %10502 = vmatpush1.xpose.msra.mxu0 0.0
  %10503 = vmatprep.mubr.f32.mxu0 0.0
  %10504 = vmatmul.mubr.f32.gmra.mrb[0].mxu0 %v10423
  %v10505 = vpop.f32.mrb[0].mxu0
  %v10506 = vadd.f32 %v10158, %v10505
  %v10507 = vpop.f32.mrb[0].mxu0
  %10508 = vdwg.mxu0
  %v10509 = vmul.f32 %v10245, 0.17677669
  %v10510 = vmul.f32 %v10332, 0.17677669
  %v10511 = vmul.f32 %v10419, 0.17677669
  %v10512 = vmul.f32 %v10506, 0.17677669
  %v10513 = vsel %vm1697, %v10509, -3.4028235e+38
  %v10514 = vsel %vm1698, %v10510, -3.4028235e+38
  %v10515 = vsel %vm1699, %v10511, -3.4028235e+38
  %v10516 = vsel %vm1700, %v10512, -3.4028235e+38
  %v10517 = vsel %vm8656, %v10513, -inf
  %10518 = vmax.xlane.f32.xlu0 %v10517
  %v10519 = vpop.xlane.xlu0 %10518
  %v10520 = vsel %vm8656, %v10514, -inf
  %10521 = vmax.xlane.f32.xlu0 %v10520
  %v10522 = vpop.xlane.xlu0 %10521
  %v10523 = vsel %vm8656, %v10515, -inf
  %10524 = vmax.xlane.f32.xlu0 %v10523
  %v10525 = vpop.xlane.xlu0 %10524
  %v10526 = vsel %vm8656, %v10516, -inf
  %10527 = vmax.xlane.f32.xlu0 %v10526
  %v10528 = vpop.xlane.xlu0 %10527
  %v10529 = vsub.f32 %v10513, %v10519
  %v10530 = vsub.f32 %v10514, %v10522
  %v10531 = vsub.f32 %v10515, %v10525
  %v10532 = vsub.f32 %v10516, %v10528
  %v10533 = vmul.f32 %v10529, 1.442695
  %v10534 = vpow.pop %v10533
  %v10535 = vmul.f32 %v10530, 1.442695
  %v10536 = vpow.pop %v10535
  %v10537 = vmul.f32 %v10531, 1.442695
  %v10538 = vpow.pop %v10537
  %v10539 = vmul.f32 %v10532, 1.442695
  %v10540 = vpow.pop %v10539
  %v10541 = vsel %vm8656, %v10534, 0.0
  %10542 = vadd.xlane.f32.xlu0 %v10541
  %v10543 = vpop.xlane.xlu0 %10542
  %v10544 = vsel %vm8656, %v10536, 0.0
  %10545 = vadd.xlane.f32.xlu0 %v10544
  %v10546 = vpop.xlane.xlu0 %10545
  %v10547 = vsel %vm8656, %v10538, 0.0
  %10548 = vadd.xlane.f32.xlu0 %v10547
  %v10549 = vpop.xlane.xlu0 %10548
  %v10550 = vsel %vm8656, %v10540, 0.0
  %10551 = vadd.xlane.f32.xlu0 %v10550
  %v10552 = vpop.xlane.xlu0 %10551
  %v10553 = vrcp.pop %v10543
  %v10554 = vmul.f32 %v10534, %v10553
  %v10555 = vrcp.pop %v10546
  %v10556 = vmul.f32 %v10536, %v10555
  %v10557 = vrcp.pop %v10549
  %v10558 = vmul.f32 %v10538, %v10557
  %v10559 = vrcp.pop %v10552
  %v10560 = vmul.f32 %v10540, %v10559
  %v10562 = vsel %vm2651, %v10554, 0
  %10564 = vmatprep.subr.mxu0 0.0
  %10565 = vmatpush1.msra.mxu0 %v8636
  %10566 = vmatprep.subr.mxu0 0.0
  %10567 = vmatpush1.msra.mxu0 %v8637
  %10568 = vmatprep.subr.mxu0 0.0
  %10569 = vmatpush1.msra.mxu0 %v8638
  %10570 = vmatprep.subr.mxu0 0.0
  %10571 = vmatpush1.msra.mxu0 %v8639
  %10572 = vmatprep.subr.mxu0 0.0
  %10573 = vmatpush1.msra.mxu0 %v8676
  %10574 = vmatprep.subr.mxu0 0.0
  %10575 = vmatpush1.msra.mxu0 0.0
  %10576 = vmatprep.subr.mxu0 0.0
  %10577 = vmatpush1.msra.mxu0 0.0
  %10578 = vmatprep.subr.mxu0 0.0
  %10579 = vmatpush1.msra.mxu0 0.0
  %10580 = vmatprep.subr.mxu0 0.0
  %10581 = vmatpush1.msra.mxu0 0.0
  %10582 = vmatprep.subr.mxu0 0.0
  %10583 = vmatpush1.msra.mxu0 0.0
  %10584 = vmatprep.subr.mxu0 0.0
  %10585 = vmatpush1.msra.mxu0 0.0
  %10586 = vmatprep.subr.mxu0 0.0
  %10587 = vmatpush1.msra.mxu0 0.0
  %10588 = vmatprep.subr.mxu0 0.0
  %10589 = vmatpush1.msra.mxu0 0.0
  %10590 = vmatprep.subr.mxu0 0.0
  %10591 = vmatpush1.msra.mxu0 0.0
  %10592 = vmatprep.subr.mxu0 0.0
  %10593 = vmatpush1.msra.mxu0 0.0
  %10594 = vmatprep.subr.mxu0 0.0
  %10595 = vmatpush1.msra.mxu0 0.0
  %10596 = vmatprep.subr.mxu0 0.0
  %10597 = vmatpush1.msra.mxu0 0.0
  %10598 = vmatprep.subr.mxu0 0.0
  %10599 = vmatpush1.msra.mxu0 0.0
  %10600 = vmatprep.subr.mxu0 0.0
  %10601 = vmatpush1.msra.mxu0 0.0
  %10602 = vmatprep.subr.mxu0 0.0
  %10603 = vmatpush1.msra.mxu0 0.0
  %10604 = vmatprep.subr.mxu0 0.0
  %10605 = vmatpush1.msra.mxu0 0.0
  %10606 = vmatprep.subr.mxu0 0.0
  %10607 = vmatpush1.msra.mxu0 0.0
  %10608 = vmatprep.subr.mxu0 0.0
  %10609 = vmatpush1.msra.mxu0 0.0
  %10610 = vmatprep.subr.mxu0 0.0
  %10611 = vmatpush1.msra.mxu0 0.0
  %10612 = vmatprep.subr.mxu0 0.0
  %10613 = vmatpush1.msra.mxu0 0.0
  %10614 = vmatprep.subr.mxu0 0.0
  %10615 = vmatpush1.msra.mxu0 0.0
  %10616 = vmatprep.subr.mxu0 0.0
  %10617 = vmatpush1.msra.mxu0 0.0
  %10618 = vmatprep.subr.mxu0 0.0
  %10619 = vmatpush1.msra.mxu0 0.0
  %10620 = vmatprep.subr.mxu0 0.0
  %10621 = vmatpush1.msra.mxu0 0.0
  %10622 = vmatprep.subr.mxu0 0.0
  %10623 = vmatpush1.msra.mxu0 0.0
  %10624 = vmatprep.subr.mxu0 0.0
  %10625 = vmatpush1.msra.mxu0 0.0
  %10626 = vmatprep.subr.mxu0 0.0
  %10627 = vmatpush1.msra.mxu0 0.0
  %10628 = vmatprep.mubr.f32.mxu0 0.0
  %10629 = vmatmul.mubr.f32.gmra.mrb[0].mxu0 %v10562
  %v10630 = vpop.f32.mrb[0].mxu0
  %v10631 = vadd.f32 0.0, %v10630
  %v10632 = vpop.f32.mrb[0].mxu0
  %10633 = vdwg.mxu0
  %v10635 = vsel %vm2651, %v10556, 0
  %10637 = vmatprep.subr.mxu0 0.0
  %10638 = vmatpush1.msra.mxu0 %v8641
  %10639 = vmatprep.subr.mxu0 0.0
  %10640 = vmatpush1.msra.mxu0 %v8642
  %10641 = vmatprep.subr.mxu0 0.0
  %10642 = vmatpush1.msra.mxu0 %v8643
  %10643 = vmatprep.subr.mxu0 0.0
  %10644 = vmatpush1.msra.mxu0 %v8644
  %10645 = vmatprep.subr.mxu0 0.0
  %10646 = vmatpush1.msra.mxu0 %v8751
  %10647 = vmatprep.subr.mxu0 0.0
  %10648 = vmatpush1.msra.mxu0 0.0
  %10649 = vmatprep.subr.mxu0 0.0
  %10650 = vmatpush1.msra.mxu0 0.0
  %10651 = vmatprep.subr.mxu0 0.0
  %10652 = vmatpush1.msra.mxu0 0.0
  %10653 = vmatprep.subr.mxu0 0.0
  %10654 = vmatpush1.msra.mxu0 0.0
  %10655 = vmatprep.subr.mxu0 0.0
  %10656 = vmatpush1.msra.mxu0 0.0
  %10657 = vmatprep.subr.mxu0 0.0
  %10658 = vmatpush1.msra.mxu0 0.0
  %10659 = vmatprep.subr.mxu0 0.0
  %10660 = vmatpush1.msra.mxu0 0.0
  %10661 = vmatprep.subr.mxu0 0.0
  %10662 = vmatpush1.msra.mxu0 0.0
  %10663 = vmatprep.subr.mxu0 0.0
  %10664 = vmatpush1.msra.mxu0 0.0
  %10665 = vmatprep.subr.mxu0 0.0
  %10666 = vmatpush1.msra.mxu0 0.0
  %10667 = vmatprep.subr.mxu0 0.0
  %10668 = vmatpush1.msra.mxu0 0.0
  %10669 = vmatprep.subr.mxu0 0.0
  %10670 = vmatpush1.msra.mxu0 0.0
  %10671 = vmatprep.subr.mxu0 0.0
  %10672 = vmatpush1.msra.mxu0 0.0
  %10673 = vmatprep.subr.mxu0 0.0
  %10674 = vmatpush1.msra.mxu0 0.0
  %10675 = vmatprep.subr.mxu0 0.0
  %10676 = vmatpush1.msra.mxu0 0.0
  %10677 = vmatprep.subr.mxu0 0.0
  %10678 = vmatpush1.msra.mxu0 0.0
  %10679 = vmatprep.subr.mxu0 0.0
  %10680 = vmatpush1.msra.mxu0 0.0
  %10681 = vmatprep.subr.mxu0 0.0
  %10682 = vmatpush1.msra.mxu0 0.0
  %10683 = vmatprep.subr.mxu0 0.0
  %10684 = vmatpush1.msra.mxu0 0.0
  %10685 = vmatprep.subr.mxu0 0.0
  %10686 = vmatpush1.msra.mxu0 0.0
  %10687 = vmatprep.subr.mxu0 0.0
  %10688 = vmatpush1.msra.mxu0 0.0
  %10689 = vmatprep.subr.mxu0 0.0
  %10690 = vmatpush1.msra.mxu0 0.0
  %10691 = vmatprep.subr.mxu0 0.0
  %10692 = vmatpush1.msra.mxu0 0.0
  %10693 = vmatprep.subr.mxu0 0.0
  %10694 = vmatpush1.msra.mxu0 0.0
  %10695 = vmatprep.subr.mxu0 0.0
  %10696 = vmatpush1.msra.mxu0 0.0
  %10697 = vmatprep.subr.mxu0 0.0
  %10698 = vmatpush1.msra.mxu0 0.0
  %10699 = vmatprep.subr.mxu0 0.0
  %10700 = vmatpush1.msra.mxu0 0.0
  %10701 = vmatprep.mubr.f32.mxu0 0.0
  %10702 = vmatmul.mubr.f32.gmra.mrb[0].mxu0 %v10635
  %v10703 = vpop.f32.mrb[0].mxu0
  %v10704 = vadd.f32 0.0, %v10703
  %v10705 = vpop.f32.mrb[0].mxu0
  %10706 = vdwg.mxu0
  %v10708 = vsel %vm2651, %v10558, 0
  %10710 = vmatprep.subr.mxu0 0.0
  %10711 = vmatpush1.msra.mxu0 %v8646
  %10712 = vmatprep.subr.mxu0 0.0
  %10713 = vmatpush1.msra.mxu0 %v8647
  %10714 = vmatprep.subr.mxu0 0.0
  %10715 = vmatpush1.msra.mxu0 %v8648
  %10716 = vmatprep.subr.mxu0 0.0
  %10717 = vmatpush1.msra.mxu0 %v8649
  %10718 = vmatprep.subr.mxu0 0.0
  %10719 = vmatpush1.msra.mxu0 %v8826
  %10720 = vmatprep.subr.mxu0 0.0
  %10721 = vmatpush1.msra.mxu0 0.0
  %10722 = vmatprep.subr.mxu0 0.0
  %10723 = vmatpush1.msra.mxu0 0.0
  %10724 = vmatprep.subr.mxu0 0.0
  %10725 = vmatpush1.msra.mxu0 0.0
  %10726 = vmatprep.subr.mxu0 0.0
  %10727 = vmatpush1.msra.mxu0 0.0
  %10728 = vmatprep.subr.mxu0 0.0
  %10729 = vmatpush1.msra.mxu0 0.0
  %10730 = vmatprep.subr.mxu0 0.0
  %10731 = vmatpush1.msra.mxu0 0.0
  %10732 = vmatprep.subr.mxu0 0.0
  %10733 = vmatpush1.msra.mxu0 0.0
  %10734 = vmatprep.subr.mxu0 0.0
  %10735 = vmatpush1.msra.mxu0 0.0
  %10736 = vmatprep.subr.mxu0 0.0
  %10737 = vmatpush1.msra.mxu0 0.0
  %10738 = vmatprep.subr.mxu0 0.0
  %10739 = vmatpush1.msra.mxu0 0.0
  %10740 = vmatprep.subr.mxu0 0.0
  %10741 = vmatpush1.msra.mxu0 0.0
  %10742 = vmatprep.subr.mxu0 0.0
  %10743 = vmatpush1.msra.mxu0 0.0
  %10744 = vmatprep.subr.mxu0 0.0
  %10745 = vmatpush1.msra.mxu0 0.0
  %10746 = vmatprep.subr.mxu0 0.0
  %10747 = vmatpush1.msra.mxu0 0.0
  %10748 = vmatprep.subr.mxu0 0.0
  %10749 = vmatpush1.msra.mxu0 0.0
  %10750 = vmatprep.subr.mxu0 0.0
  %10751 = vmatpush1.msra.mxu0 0.0
  %10752 = vmatprep.subr.mxu0 0.0
  %10753 = vmatpush1.msra.mxu0 0.0
  %10754 = vmatprep.subr.mxu0 0.0
  %10755 = vmatpush1.msra.mxu0 0.0
  %10756 = vmatprep.subr.mxu0 0.0
  %10757 = vmatpush1.msra.mxu0 0.0
  %10758 = vmatprep.subr.mxu0 0.0
  %10759 = vmatpush1.msra.mxu0 0.0
  %10760 = vmatprep.subr.mxu0 0.0
  %10761 = vmatpush1.msra.mxu0 0.0
  %10762 = vmatprep.subr.mxu0 0.0
  %10763 = vmatpush1.msra.mxu0 0.0
  %10764 = vmatprep.subr.mxu0 0.0
  %10765 = vmatpush1.msra.mxu0 0.0
  %10766 = vmatprep.subr.mxu0 0.0
  %10767 = vmatpush1.msra.mxu0 0.0
  %10768 = vmatprep.subr.mxu0 0.0
  %10769 = vmatpush1.msra.mxu0 0.0
  %10770 = vmatprep.subr.mxu0 0.0
  %10771 = vmatpush1.msra.mxu0 0.0
  %10772 = vmatprep.subr.mxu0 0.0
  %10773 = vmatpush1.msra.mxu0 0.0
  %10774 = vmatprep.mubr.f32.mxu0 0.0
  %10775 = vmatmul.mubr.f32.gmra.mrb[0].mxu0 %v10708
  %v10776 = vpop.f32.mrb[0].mxu0
  %v10777 = vadd.f32 0.0, %v10776
  %v10778 = vpop.f32.mrb[0].mxu0
  %10779 = vdwg.mxu0
  %v10781 = vsel %vm2651, %v10560, 0
  %10783 = vmatprep.subr.mxu0 0.0
  %10784 = vmatpush1.msra.mxu0 %v8651
  %10785 = vmatprep.subr.mxu0 0.0
  %10786 = vmatpush1.msra.mxu0 %v8652
  %10787 = vmatprep.subr.mxu0 0.0
  %10788 = vmatpush1.msra.mxu0 %v8653
  %10789 = vmatprep.subr.mxu0 0.0
  %10790 = vmatpush1.msra.mxu0 %v8654
  %10791 = vmatprep.subr.mxu0 0.0
  %10792 = vmatpush1.msra.mxu0 %v8901
  %10793 = vmatprep.subr.mxu0 0.0
  %10794 = vmatpush1.msra.mxu0 0.0
  %10795 = vmatprep.subr.mxu0 0.0
  %10796 = vmatpush1.msra.mxu0 0.0
  %10797 = vmatprep.subr.mxu0 0.0
  %10798 = vmatpush1.msra.mxu0 0.0
  %10799 = vmatprep.subr.mxu0 0.0
  %10800 = vmatpush1.msra.mxu0 0.0
  %10801 = vmatprep.subr.mxu0 0.0
  %10802 = vmatpush1.msra.mxu0 0.0
  %10803 = vmatprep.subr.mxu0 0.0
  %10804 = vmatpush1.msra.mxu0 0.0
  %10805 = vmatprep.subr.mxu0 0.0
  %10806 = vmatpush1.msra.mxu0 0.0
  %10807 = vmatprep.subr.mxu0 0.0
  %10808 = vmatpush1.msra.mxu0 0.0
  %10809 = vmatprep.subr.mxu0 0.0
  %10810 = vmatpush1.msra.mxu0 0.0
  %10811 = vmatprep.subr.mxu0 0.0
  %10812 = vmatpush1.msra.mxu0 0.0
  %10813 = vmatprep.subr.mxu0 0.0
  %10814 = vmatpush1.msra.mxu0 0.0
  %10815 = vmatprep.subr.mxu0 0.0
  %10816 = vmatpush1.msra.mxu0 0.0
  %10817 = vmatprep.subr.mxu0 0.0
  %10818 = vmatpush1.msra.mxu0 0.0
  %10819 = vmatprep.subr.mxu0 0.0
  %10820 = vmatpush1.msra.mxu0 0.0
  %10821 = vmatprep.subr.mxu0 0.0
  %10822 = vmatpush1.msra.mxu0 0.0
  %10823 = vmatprep.subr.mxu0 0.0
  %10824 = vmatpush1.msra.mxu0 0.0
  %10825 = vmatprep.subr.mxu0 0.0
  %10826 = vmatpush1.msra.mxu0 0.0
  %10827 = vmatprep.subr.mxu0 0.0
  %10828 = vmatpush1.msra.mxu0 0.0
  %10829 = vmatprep.subr.mxu0 0.0
  %10830 = vmatpush1.msra.mxu0 0.0
  %10831 = vmatprep.subr.mxu0 0.0
  %10832 = vmatpush1.msra.mxu0 0.0
  %10833 = vmatprep.subr.mxu0 0.0
  %10834 = vmatpush1.msra.mxu0 0.0
  %10835 = vmatprep.subr.mxu0 0.0
  %10836 = vmatpush1.msra.mxu0 0.0
  %10837 = vmatprep.subr.mxu0 0.0
  %10838 = vmatpush1.msra.mxu0 0.0
  %10839 = vmatprep.subr.mxu0 0.0
  %10840 = vmatpush1.msra.mxu0 0.0
  %10841 = vmatprep.subr.mxu0 0.0
  %10842 = vmatpush1.msra.mxu0 0.0
  %10843 = vmatprep.subr.mxu0 0.0
  %10844 = vmatpush1.msra.mxu0 0.0
  %10845 = vmatprep.subr.mxu0 0.0
  %10846 = vmatpush1.msra.mxu0 0.0
  %10847 = vmatprep.mubr.f32.mxu0 0.0
  %10848 = vmatmul.mubr.f32.gmra.mrb[0].mxu0 %v10781
  %v10849 = vpop.f32.mrb[0].mxu0
  %v10850 = vadd.f32 0.0, %v10849
  %v10851 = vpop.f32.mrb[0].mxu0
  %10852 = vdwg.mxu0
  %v10853 = vld [vmem:[%s12] sm:$0xff]
  %v10854 = vld [vmem:[%s12 + $0x8] sm:$0xff]
  %v10855 = vld [vmem:[%s12 + $0x10] sm:$0xff]
  %v10856 = vld [vmem:[%s12 + $0x18] sm:$0xff]
  %v10857 = vld [vmem:[%s12 + $0x20] sm:$0xff]
  %v10858 = vld [vmem:[%s12 + $0x28] sm:$0xff]
  %v10859 = vld [vmem:[%s12 + $0x30] sm:$0xff]
  %v10860 = vld [vmem:[%s12 + $0x38] sm:$0xff]
  %v10862 = vsel %vm77, %v10631, 0
  %10864 = vmatprep.subr.mxu0 0.0
  %10865 = vmatpush1.msra.mxu0 %v10853
  %10866 = vmatprep.subr.mxu0 0.0
  %10867 = vmatpush1.msra.mxu0 %v10854
  %10868 = vmatprep.subr.mxu0 0.0
  %10869 = vmatpush1.msra.mxu0 %v10855
  %10870 = vmatprep.subr.mxu0 0.0
  %10871 = vmatpush1.msra.mxu0 %v10856
  %10872 = vmatprep.subr.mxu0 0.0
  %10873 = vmatpush1.msra.mxu0 %v10857
  %10874 = vmatprep.subr.mxu0 0.0
  %10875 = vmatpush1.msra.mxu0 %v10858
  %10876 = vmatprep.subr.mxu0 0.0
  %10877 = vmatpush1.msra.mxu0 %v10859
  %10878 = vmatprep.subr.mxu0 0.0
  %10879 = vmatpush1.msra.mxu0 %v10860
  %10880 = vmatprep.subr.mxu0 0.0
  %10881 = vmatpush1.msra.mxu0 0.0
  %10882 = vmatprep.subr.mxu0 0.0
  %10883 = vmatpush1.msra.mxu0 0.0
  %10884 = vmatprep.subr.mxu0 0.0
  %10885 = vmatpush1.msra.mxu0 0.0
  %10886 = vmatprep.subr.mxu0 0.0
  %10887 = vmatpush1.msra.mxu0 0.0
  %10888 = vmatprep.subr.mxu0 0.0
  %10889 = vmatpush1.msra.mxu0 0.0
  %10890 = vmatprep.subr.mxu0 0.0
  %10891 = vmatpush1.msra.mxu0 0.0
  %10892 = vmatprep.subr.mxu0 0.0
  %10893 = vmatpush1.msra.mxu0 0.0
  %10894 = vmatprep.subr.mxu0 0.0
  %10895 = vmatpush1.msra.mxu0 0.0
  %10896 = vmatprep.subr.mxu0 0.0
  %10897 = vmatpush1.msra.mxu0 0.0
  %10898 = vmatprep.subr.mxu0 0.0
  %10899 = vmatpush1.msra.mxu0 0.0
  %10900 = vmatprep.subr.mxu0 0.0
  %10901 = vmatpush1.msra.mxu0 0.0
  %10902 = vmatprep.subr.mxu0 0.0
  %10903 = vmatpush1.msra.mxu0 0.0
  %10904 = vmatprep.subr.mxu0 0.0
  %10905 = vmatpush1.msra.mxu0 0.0
  %10906 = vmatprep.subr.mxu0 0.0
  %10907 = vmatpush1.msra.mxu0 0.0
  %10908 = vmatprep.subr.mxu0 0.0
  %10909 = vmatpush1.msra.mxu0 0.0
  %10910 = vmatprep.subr.mxu0 0.0
  %10911 = vmatpush1.msra.mxu0 0.0
  %10912 = vmatprep.subr.mxu0 0.0
  %10913 = vmatpush1.msra.mxu0 0.0
  %10914 = vmatprep.subr.mxu0 0.0
  %10915 = vmatpush1.msra.mxu0 0.0
  %10916 = vmatprep.subr.mxu0 0.0
  %10917 = vmatpush1.msra.mxu0 0.0
  %10918 = vmatprep.subr.mxu0 0.0
  %10919 = vmatpush1.msra.mxu0 0.0
  %10920 = vmatprep.subr.mxu0 0.0
  %10921 = vmatpush1.msra.mxu0 0.0
  %10922 = vmatprep.subr.mxu0 0.0
  %10923 = vmatpush1.msra.mxu0 0.0
  %10924 = vmatprep.subr.mxu0 0.0
  %10925 = vmatpush1.msra.mxu0 0.0
  %10926 = vmatprep.subr.mxu0 0.0
  %10927 = vmatpush1.msra.mxu0 0.0
  %10928 = vmatprep.mubr.f32.mxu0 0.0
  %10929 = vmatmul.mubr.f32.gmra.mrb[0].mxu0 %v10862
  %v10930 = vpop.f32.mrb[0].mxu0
  %v10931 = vadd.f32 0.0, %v10930
  %v10932 = vpop.f32.mrb[0].mxu0
  %10933 = vdwg.mxu0
  %v10935 = vsel %vm77, %v10704, 0
  %10937 = vmatprep.subr.mxu0 0.0
  %10938 = vmatpush1.msra.mxu0 %v10853
  %10939 = vmatprep.subr.mxu0 0.0
  %10940 = vmatpush1.msra.mxu0 %v10854
  %10941 = vmatprep.subr.mxu0 0.0
  %10942 = vmatpush1.msra.mxu0 %v10855
  %10943 = vmatprep.subr.mxu0 0.0
  %10944 = vmatpush1.msra.mxu0 %v10856
  %10945 = vmatprep.subr.mxu0 0.0
  %10946 = vmatpush1.msra.mxu0 %v10857
  %10947 = vmatprep.subr.mxu0 0.0
  %10948 = vmatpush1.msra.mxu0 %v10858
  %10949 = vmatprep.subr.mxu0 0.0
  %10950 = vmatpush1.msra.mxu0 %v10859
  %10951 = vmatprep.subr.mxu0 0.0
  %10952 = vmatpush1.msra.mxu0 %v10860
  %10953 = vmatprep.subr.mxu0 0.0
  %10954 = vmatpush1.msra.mxu0 0.0
  %10955 = vmatprep.subr.mxu0 0.0
  %10956 = vmatpush1.msra.mxu0 0.0
  %10957 = vmatprep.subr.mxu0 0.0
  %10958 = vmatpush1.msra.mxu0 0.0
  %10959 = vmatprep.subr.mxu0 0.0
  %10960 = vmatpush1.msra.mxu0 0.0
  %10961 = vmatprep.subr.mxu0 0.0
  %10962 = vmatpush1.msra.mxu0 0.0
  %10963 = vmatprep.subr.mxu0 0.0
  %10964 = vmatpush1.msra.mxu0 0.0
  %10965 = vmatprep.subr.mxu0 0.0
  %10966 = vmatpush1.msra.mxu0 0.0
  %10967 = vmatprep.subr.mxu0 0.0
  %10968 = vmatpush1.msra.mxu0 0.0
  %10969 = vmatprep.subr.mxu0 0.0
  %10970 = vmatpush1.msra.mxu0 0.0
  %10971 = vmatprep.subr.mxu0 0.0
  %10972 = vmatpush1.msra.mxu0 0.0
  %10973 = vmatprep.subr.mxu0 0.0
  %10974 = vmatpush1.msra.mxu0 0.0
  %10975 = vmatprep.subr.mxu0 0.0
  %10976 = vmatpush1.msra.mxu0 0.0
  %10977 = vmatprep.subr.mxu0 0.0
  %10978 = vmatpush1.msra.mxu0 0.0
  %10979 = vmatprep.subr.mxu0 0.0
  %10980 = vmatpush1.msra.mxu0 0.0
  %10981 = vmatprep.subr.mxu0 0.0
  %10982 = vmatpush1.msra.mxu0 0.0
  %10983 = vmatprep.subr.mxu0 0.0
  %10984 = vmatpush1.msra.mxu0 0.0
  %10985 = vmatprep.subr.mxu0 0.0
  %10986 = vmatpush1.msra.mxu0 0.0
  %10987 = vmatprep.subr.mxu0 0.0
  %10988 = vmatpush1.msra.mxu0 0.0
  %10989 = vmatprep.subr.mxu0 0.0
  %10990 = vmatpush1.msra.mxu0 0.0
  %10991 = vmatprep.subr.mxu0 0.0
  %10992 = vmatpush1.msra.mxu0 0.0
  %10993 = vmatprep.subr.mxu0 0.0
  %10994 = vmatpush1.msra.mxu0 0.0
  %10995 = vmatprep.subr.mxu0 0.0
  %10996 = vmatpush1.msra.mxu0 0.0
  %10997 = vmatprep.subr.mxu0 0.0
  %10998 = vmatpush1.msra.mxu0 0.0
  %10999 = vmatprep.subr.mxu0 0.0
  %11000 = vmatpush1.msra.mxu0 0.0
  %11001 = vmatprep.mubr.f32.mxu0 0.0
  %11002 = vmatmul.mubr.f32.gmra.mrb[0].mxu0 %v10935
  %v11003 = vpop.f32.mrb[0].mxu0
  %v11004 = vadd.f32 0.0, %v11003
  %v11005 = vpop.f32.mrb[0].mxu0
  %11006 = vdwg.mxu0
  %v11008 = vsel %vm77, %v10777, 0
  %11010 = vmatprep.subr.mxu0 0.0
  %11011 = vmatpush1.msra.mxu0 %v10853
  %11012 = vmatprep.subr.mxu0 0.0
  %11013 = vmatpush1.msra.mxu0 %v10854
  %11014 = vmatprep.subr.mxu0 0.0
  %11015 = vmatpush1.msra.mxu0 %v10855
  %11016 = vmatprep.subr.mxu0 0.0
  %11017 = vmatpush1.msra.mxu0 %v10856
  %11018 = vmatprep.subr.mxu0 0.0
  %11019 = vmatpush1.msra.mxu0 %v10857
  %11020 = vmatprep.subr.mxu0 0.0
  %11021 = vmatpush1.msra.mxu0 %v10858
  %11022 = vmatprep.subr.mxu0 0.0
  %11023 = vmatpush1.msra.mxu0 %v10859
  %11024 = vmatprep.subr.mxu0 0.0
  %11025 = vmatpush1.msra.mxu0 %v10860
  %11026 = vmatprep.subr.mxu0 0.0
  %11027 = vmatpush1.msra.mxu0 0.0
  %11028 = vmatprep.subr.mxu0 0.0
  %11029 = vmatpush1.msra.mxu0 0.0
  %11030 = vmatprep.subr.mxu0 0.0
  %11031 = vmatpush1.msra.mxu0 0.0
  %11032 = vmatprep.subr.mxu0 0.0
  %11033 = vmatpush1.msra.mxu0 0.0
  %11034 = vmatprep.subr.mxu0 0.0
  %11035 = vmatpush1.msra.mxu0 0.0
  %11036 = vmatprep.subr.mxu0 0.0
  %11037 = vmatpush1.msra.mxu0 0.0
  %11038 = vmatprep.subr.mxu0 0.0
  %11039 = vmatpush1.msra.mxu0 0.0
  %11040 = vmatprep.subr.mxu0 0.0
  %11041 = vmatpush1.msra.mxu0 0.0
  %11042 = vmatprep.subr.mxu0 0.0
  %11043 = vmatpush1.msra.mxu0 0.0
  %11044 = vmatprep.subr.mxu0 0.0
  %11045 = vmatpush1.msra.mxu0 0.0
  %11046 = vmatprep.subr.mxu0 0.0
  %11047 = vmatpush1.msra.mxu0 0.0
  %11048 = vmatprep.subr.mxu0 0.0
  %11049 = vmatpush1.msra.mxu0 0.0
  %11050 = vmatprep.subr.mxu0 0.0
  %11051 = vmatpush1.msra.mxu0 0.0
  %11052 = vmatprep.subr.mxu0 0.0
  %11053 = vmatpush1.msra.mxu0 0.0
  %11054 = vmatprep.subr.mxu0 0.0
  %11055 = vmatpush1.msra.mxu0 0.0
  %11056 = vmatprep.subr.mxu0 0.0
  %11057 = vmatpush1.msra.mxu0 0.0
  %11058 = vmatprep.subr.mxu0 0.0
  %11059 = vmatpush1.msra.mxu0 0.0
  %11060 = vmatprep.subr.mxu0 0.0
  %11061 = vmatpush1.msra.mxu0 0.0
  %11062 = vmatprep.subr.mxu0 0.0
  %11063 = vmatpush1.msra.mxu0 0.0
  %11064 = vmatprep.subr.mxu0 0.0
  %11065 = vmatpush1.msra.mxu0 0.0
  %11066 = vmatprep.subr.mxu0 0.0
  %11067 = vmatpush1.msra.mxu0 0.0
  %11068 = vmatprep.subr.mxu0 0.0
  %11069 = vmatpush1.msra.mxu0 0.0
  %11070 = vmatprep.subr.mxu0 0.0
  %11071 = vmatpush1.msra.mxu0 0.0
  %11072 = vmatprep.subr.mxu0 0.0
  %11073 = vmatpush1.msra.mxu0 0.0
  %11074 = vmatprep.mubr.f32.mxu0 0.0
  %11075 = vmatmul.mubr.f32.gmra.mrb[0].mxu0 %v11008
  %v11076 = vpop.f32.mrb[0].mxu0
  %v11077 = vadd.f32 0.0, %v11076
  %v11078 = vpop.f32.mrb[0].mxu0
  %11079 = vdwg.mxu0
  %v11081 = vsel %vm77, %v10850, 0
  %11083 = vmatprep.subr.mxu0 0.0
  %11084 = vmatpush1.msra.mxu0 %v10853
  %11085 = vmatprep.subr.mxu0 0.0
  %11086 = vmatpush1.msra.mxu0 %v10854
  %11087 = vmatprep.subr.mxu0 0.0
  %11088 = vmatpush1.msra.mxu0 %v10855
  %11089 = vmatprep.subr.mxu0 0.0
  %11090 = vmatpush1.msra.mxu0 %v10856
  %11091 = vmatprep.subr.mxu0 0.0
  %11092 = vmatpush1.msra.mxu0 %v10857
  %11093 = vmatprep.subr.mxu0 0.0
  %11094 = vmatpush1.msra.mxu0 %v10858
  %11095 = vmatprep.subr.mxu0 0.0
  %11096 = vmatpush1.msra.mxu0 %v10859
  %11097 = vmatprep.subr.mxu0 0.0
  %11098 = vmatpush1.msra.mxu0 %v10860
  %11099 = vmatprep.subr.mxu0 0.0
  %11100 = vmatpush1.msra.mxu0 0.0
  %11101 = vmatprep.subr.mxu0 0.0
  %11102 = vmatpush1.msra.mxu0 0.0
  %11103 = vmatprep.subr.mxu0 0.0
  %11104 = vmatpush1.msra.mxu0 0.0
  %11105 = vmatprep.subr.mxu0 0.0
  %11106 = vmatpush1.msra.mxu0 0.0
  %11107 = vmatprep.subr.mxu0 0.0
  %11108 = vmatpush1.msra.mxu0 0.0
  %11109 = vmatprep.subr.mxu0 0.0
  %11110 = vmatpush1.msra.mxu0 0.0
  %11111 = vmatprep.subr.mxu0 0.0
  %11112 = vmatpush1.msra.mxu0 0.0
  %11113 = vmatprep.subr.mxu0 0.0
  %11114 = vmatpush1.msra.mxu0 0.0
  %11115 = vmatprep.subr.mxu0 0.0
  %11116 = vmatpush1.msra.mxu0 0.0
  %11117 = vmatprep.subr.mxu0 0.0
  %11118 = vmatpush1.msra.mxu0 0.0
  %11119 = vmatprep.subr.mxu0 0.0
  %11120 = vmatpush1.msra.mxu0 0.0
  %11121 = vmatprep.subr.mxu0 0.0
  %11122 = vmatpush1.msra.mxu0 0.0
  %11123 = vmatprep.subr.mxu0 0.0
  %11124 = vmatpush1.msra.mxu0 0.0
  %11125 = vmatprep.subr.mxu0 0.0
  %11126 = vmatpush1.msra.mxu0 0.0
  %11127 = vmatprep.subr.mxu0 0.0
  %11128 = vmatpush1.msra.mxu0 0.0
  %11129 = vmatprep.subr.mxu0 0.0
  %11130 = vmatpush1.msra.mxu0 0.0
  %11131 = vmatprep.subr.mxu0 0.0
  %11132 = vmatpush1.msra.mxu0 0.0
  %11133 = vmatprep.subr.mxu0 0.0
  %11134 = vmatpush1.msra.mxu0 0.0
  %11135 = vmatprep.subr.mxu0 0.0
  %11136 = vmatpush1.msra.mxu0 0.0
  %11137 = vmatprep.subr.mxu0 0.0
  %11138 = vmatpush1.msra.mxu0 0.0
  %11139 = vmatprep.subr.mxu0 0.0
  %11140 = vmatpush1.msra.mxu0 0.0
  %11141 = vmatprep.subr.mxu0 0.0
  %11142 = vmatpush1.msra.mxu0 0.0
  %11143 = vmatprep.subr.mxu0 0.0
  %11144 = vmatpush1.msra.mxu0 0.0
  %11145 = vmatprep.subr.mxu0 0.0
  %11146 = vmatpush1.msra.mxu0 0.0
  %11147 = vmatprep.mubr.f32.mxu0 0.0
  %11148 = vmatmul.mubr.f32.gmra.mrb[0].mxu0 %v11081
  %v11149 = vpop.f32.mrb[0].mxu0
  %v11150 = vadd.f32 0.0, %v11149
  %v11151 = vpop.f32.mrb[0].mxu0
  %11152 = vdwg.mxu0
  %vm11153 = vcmask 122880
  %11154 = vst.msk [vmem:[%s16] sm:$0x1] %vm11153, %v10931
  %11155 = vst.msk [vmem:[%s16 + $0x1] sm:$0x1] %vm11153, %v11004
  %11156 = vst.msk [vmem:[%s16 + $0x2] sm:$0x1] %vm11153, %v11077
  %11157 = vst.msk [vmem:[%s16 + $0x3] sm:$0x1] %vm11153, %v11150
  %v11158 = vld [vmem:[%s14] sm:$0xff]
  %v11159 = vld [vmem:[%s14 + $0x8] sm:$0xff]
  %v11160 = vld [vmem:[%s14 + $0x10] sm:$0xff]
  %v11161 = vld [vmem:[%s14 + $0x18] sm:$0xff]
  %v11162 = vld [vmem:[%s14 + $0x20] sm:$0xff]
  %v11163 = vld [vmem:[%s14 + $0x28] sm:$0xff]
  %v11164 = vld [vmem:[%s14 + $0x30] sm:$0xff]
  %v11165 = vld [vmem:[%s14 + $0x38] sm:$0xff]
  %11166 = vmatprep.subr.mxu0 0.0
  %11167 = vmatpush1.msra.mxu0 %v11158
  %11168 = vmatprep.subr.mxu0 0.0
  %11169 = vmatpush1.msra.mxu0 %v11159
  %11170 = vmatprep.subr.mxu0 0.0
  %11171 = vmatpush1.msra.mxu0 %v11160
  %11172 = vmatprep.subr.mxu0 0.0
  %11173 = vmatpush1.msra.mxu0 %v11161
  %11174 = vmatprep.subr.mxu0 0.0
  %11175 = vmatpush1.msra.mxu0 %v11162
  %11176 = vmatprep.subr.mxu0 0.0
  %11177 = vmatpush1.msra.mxu0 %v11163
  %11178 = vmatprep.subr.mxu0 0.0
  %11179 = vmatpush1.msra.mxu0 %v11164
  %11180 = vmatprep.subr.mxu0 0.0
  %11181 = vmatpush1.msra.mxu0 %v11165
  %11182 = vmatprep.subr.mxu0 0.0
  %11183 = vmatpush1.msra.mxu0 0.0
  %11184 = vmatprep.subr.mxu0 0.0
  %11185 = vmatpush1.msra.mxu0 0.0
  %11186 = vmatprep.subr.mxu0 0.0
  %11187 = vmatpush1.msra.mxu0 0.0
  %11188 = vmatprep.subr.mxu0 0.0
  %11189 = vmatpush1.msra.mxu0 0.0
  %11190 = vmatprep.subr.mxu0 0.0
  %11191 = vmatpush1.msra.mxu0 0.0
  %11192 = vmatprep.subr.mxu0 0.0
  %11193 = vmatpush1.msra.mxu0 0.0
  %11194 = vmatprep.subr.mxu0 0.0
  %11195 = vmatpush1.msra.mxu0 0.0
  %11196 = vmatprep.subr.mxu0 0.0
  %11197 = vmatpush1.msra.mxu0 0.0
  %11198 = vmatprep.subr.mxu0 0.0
  %11199 = vmatpush1.msra.mxu0 0.0
  %11200 = vmatprep.subr.mxu0 0.0
  %11201 = vmatpush1.msra.mxu0 0.0
  %11202 = vmatprep.subr.mxu0 0.0
  %11203 = vmatpush1.msra.mxu0 0.0
  %11204 = vmatprep.subr.mxu0 0.0
  %11205 = vmatpush1.msra.mxu0 0.0
  %11206 = vmatprep.subr.mxu0 0.0
  %11207 = vmatpush1.msra.mxu0 0.0
  %11208 = vmatprep.subr.mxu0 0.0
  %11209 = vmatpush1.msra.mxu0 0.0
  %11210 = vmatprep.subr.mxu0 0.0
  %11211 = vmatpush1.msra.mxu0 0.0
  %11212 = vmatprep.subr.mxu0 0.0
  %11213 = vmatpush1.msra.mxu0 0.0
  %11214 = vmatprep.subr.mxu0 0.0
  %11215 = vmatpush1.msra.mxu0 0.0
  %11216 = vmatprep.subr.mxu0 0.0
  %11217 = vmatpush1.msra.mxu0 0.0
  %11218 = vmatprep.subr.mxu0 0.0
  %11219 = vmatpush1.msra.mxu0 0.0
  %11220 = vmatprep.subr.mxu0 0.0
  %11221 = vmatpush1.msra.mxu0 0.0
  %11222 = vmatprep.subr.mxu0 0.0
  %11223 = vmatpush1.msra.mxu0 0.0
  %11224 = vmatprep.subr.mxu0 0.0
  %11225 = vmatpush1.msra.mxu0 0.0
  %11226 = vmatprep.subr.mxu0 0.0
  %11227 = vmatpush1.msra.mxu0 0.0
  %11228 = vmatprep.subr.mxu0 0.0
  %11229 = vmatpush1.msra.mxu0 0.0
  %11230 = vmatprep.mubr.f32.mxu0 0.0
  %11231 = vmatmul.mubr.f32.gmra.mrb[0].mxu0 %v10165
  %v11232 = vpop.f32.mrb[0].mxu0
  %v11233 = vadd.f32 0.0, %v11232
  %v11234 = vpop.f32.mrb[0].mxu0
  %11235 = vmatprep.mubr.f32.mxu0 0.0
  %11236 = vmatmul.mubr.f32.gmra.mrb[0].mxu0 %v10168
  %v11237 = vpop.f32.mrb[0].mxu0
  %v11238 = vadd.f32 0.0, %v11237
  %v11239 = vpop.f32.mrb[0].mxu0
  %11240 = vmatprep.mubr.f32.mxu0 0.0
  %11241 = vmatmul.mubr.f32.gmra.mrb[0].mxu0 %v10171
  %v11242 = vpop.f32.mrb[0].mxu0
  %v11243 = vadd.f32 0.0, %v11242
  %v11244 = vpop.f32.mrb[0].mxu0
  %11245 = vmatprep.mubr.f32.mxu0 0.0
  %11246 = vmatmul.mubr.f32.gmra.mrb[0].mxu0 %v10174
  %v11247 = vpop.f32.mrb[0].mxu0
  %v11248 = vadd.f32 0.0, %v11247
  %v11249 = vpop.f32.mrb[0].mxu0
  %11250 = vmatprep.mubr.f32.mxu0 0.0
  %11251 = vmatmul.mubr.f32.gmra.mrb[0].mxu0 %v10176
  %v11252 = vpop.f32.mrb[0].mxu0
  %v11253 = vadd.f32 0.0, %v11252
  %v11254 = vpop.f32.mrb[0].mxu0
  %11255 = vdwg.mxu0
  %11256 = vmatprep.subr.mxu0 0.0
  %11257 = vmatpush1.msra.mxu0 %v11158
  %11258 = vmatprep.subr.mxu0 0.0
  %11259 = vmatpush1.msra.mxu0 %v11159
  %11260 = vmatprep.subr.mxu0 0.0
  %11261 = vmatpush1.msra.mxu0 %v11160
  %11262 = vmatprep.subr.mxu0 0.0
  %11263 = vmatpush1.msra.mxu0 %v11161
  %11264 = vmatprep.subr.mxu0 0.0
  %11265 = vmatpush1.msra.mxu0 %v11162
  %11266 = vmatprep.subr.mxu0 0.0
  %11267 = vmatpush1.msra.mxu0 %v11163
  %11268 = vmatprep.subr.mxu0 0.0
  %11269 = vmatpush1.msra.mxu0 %v11164
  %11270 = vmatprep.subr.mxu0 0.0
  %11271 = vmatpush1.msra.mxu0 %v11165
  %11272 = vmatprep.subr.mxu0 0.0
  %11273 = vmatpush1.msra.mxu0 0.0
  %11274 = vmatprep.subr.mxu0 0.0
  %11275 = vmatpush1.msra.mxu0 0.0
  %11276 = vmatprep.subr.mxu0 0.0
  %11277 = vmatpush1.msra.mxu0 0.0
  %11278 = vmatprep.subr.mxu0 0.0
  %11279 = vmatpush1.msra.mxu0 0.0
  %11280 = vmatprep.subr.mxu0 0.0
  %11281 = vmatpush1.msra.mxu0 0.0
  %11282 = vmatprep.subr.mxu0 0.0
  %11283 = vmatpush1.msra.mxu0 0.0
  %11284 = vmatprep.subr.mxu0 0.0
  %11285 = vmatpush1.msra.mxu0 0.0
  %11286 = vmatprep.subr.mxu0 0.0
  %11287 = vmatpush1.msra.mxu0 0.0
  %11288 = vmatprep.subr.mxu0 0.0
  %11289 = vmatpush1.msra.mxu0 0.0
  %11290 = vmatprep.subr.mxu0 0.0
  %11291 = vmatpush1.msra.mxu0 0.0
  %11292 = vmatprep.subr.mxu0 0.0
  %11293 = vmatpush1.msra.mxu0 0.0
  %11294 = vmatprep.subr.mxu0 0.0
  %11295 = vmatpush1.msra.mxu0 0.0
  %11296 = vmatprep.subr.mxu0 0.0
  %11297 = vmatpush1.msra.mxu0 0.0
  %11298 = vmatprep.subr.mxu0 0.0
  %11299 = vmatpush1.msra.mxu0 0.0
  %11300 = vmatprep.subr.mxu0 0.0
  %11301 = vmatpush1.msra.mxu0 0.0
  %11302 = vmatprep.subr.mxu0 0.0
  %11303 = vmatpush1.msra.mxu0 0.0
  %11304 = vmatprep.subr.mxu0 0.0
  %11305 = vmatpush1.msra.mxu0 0.0
  %11306 = vmatprep.subr.mxu0 0.0
  %11307 = vmatpush1.msra.mxu0 0.0
  %11308 = vmatprep.subr.mxu0 0.0
  %11309 = vmatpush1.msra.mxu0 0.0
  %11310 = vmatprep.subr.mxu0 0.0
  %11311 = vmatpush1.msra.mxu0 0.0
  %11312 = vmatprep.subr.mxu0 0.0
  %11313 = vmatpush1.msra.mxu0 0.0
  %11314 = vmatprep.subr.mxu0 0.0
  %11315 = vmatpush1.msra.mxu0 0.0
  %11316 = vmatprep.subr.mxu0 0.0
  %11317 = vmatpush1.msra.mxu0 0.0
  %11318 = vmatprep.subr.mxu0 0.0
  %11319 = vmatpush1.msra.mxu0 0.0
  %11320 = vmatprep.mubr.f32.mxu0 0.0
  %11321 = vmatmul.mubr.f32.gmra.mrb[0].mxu0 %v10252
  %v11322 = vpop.f32.mrb[0].mxu0
  %v11323 = vadd.f32 0.0, %v11322
  %v11324 = vpop.f32.mrb[0].mxu0
  %11325 = vmatprep.mubr.f32.mxu0 0.0
  %11326 = vmatmul.mubr.f32.gmra.mrb[0].mxu0 %v10255
  %v11327 = vpop.f32.mrb[0].mxu0
  %v11328 = vadd.f32 0.0, %v11327
  %v11329 = vpop.f32.mrb[0].mxu0
  %11330 = vmatprep.mubr.f32.mxu0 0.0
  %11331 = vmatmul.mubr.f32.gmra.mrb[0].mxu0 %v10258
  %v11332 = vpop.f32.mrb[0].mxu0
  %v11333 = vadd.f32 0.0, %v11332
  %v11334 = vpop.f32.mrb[0].mxu0
  %11335 = vmatprep.mubr.f32.mxu0 0.0
  %11336 = vmatmul.mubr.f32.gmra.mrb[0].mxu0 %v10261
  %v11337 = vpop.f32.mrb[0].mxu0
  %v11338 = vadd.f32 0.0, %v11337
  %v11339 = vpop.f32.mrb[0].mxu0
  %11340 = vmatprep.mubr.f32.mxu0 0.0
  %11341 = vmatmul.mubr.f32.gmra.mrb[0].mxu0 %v10263
  %v11342 = vpop.f32.mrb[0].mxu0
  %v11343 = vadd.f32 0.0, %v11342
  %v11344 = vpop.f32.mrb[0].mxu0
  %11345 = vdwg.mxu0
  %11346 = vmatprep.subr.mxu0 0.0
  %11347 = vmatpush1.msra.mxu0 %v11158
  %11348 = vmatprep.subr.mxu0 0.0
  %11349 = vmatpush1.msra.mxu0 %v11159
  %11350 = vmatprep.subr.mxu0 0.0
  %11351 = vmatpush1.msra.mxu0 %v11160
  %11352 = vmatprep.subr.mxu0 0.0
  %11353 = vmatpush1.msra.mxu0 %v11161
  %11354 = vmatprep.subr.mxu0 0.0
  %11355 = vmatpush1.msra.mxu0 %v11162
  %11356 = vmatprep.subr.mxu0 0.0
  %11357 = vmatpush1.msra.mxu0 %v11163
  %11358 = vmatprep.subr.mxu0 0.0
  %11359 = vmatpush1.msra.mxu0 %v11164
  %11360 = vmatprep.subr.mxu0 0.0
  %11361 = vmatpush1.msra.mxu0 %v11165
  %11362 = vmatprep.subr.mxu0 0.0
  %11363 = vmatpush1.msra.mxu0 0.0
  %11364 = vmatprep.subr.mxu0 0.0
  %11365 = vmatpush1.msra.mxu0 0.0
  %11366 = vmatprep.subr.mxu0 0.0
  %11367 = vmatpush1.msra.mxu0 0.0
  %11368 = vmatprep.subr.mxu0 0.0
  %11369 = vmatpush1.msra.mxu0 0.0
  %11370 = vmatprep.subr.mxu0 0.0
  %11371 = vmatpush1.msra.mxu0 0.0
  %11372 = vmatprep.subr.mxu0 0.0
  %11373 = vmatpush1.msra.mxu0 0.0
  %11374 = vmatprep.subr.mxu0 0.0
  %11375 = vmatpush1.msra.mxu0 0.0
  %11376 = vmatprep.subr.mxu0 0.0
  %11377 = vmatpush1.msra.mxu0 0.0
  %11378 = vmatprep.subr.mxu0 0.0
  %11379 = vmatpush1.msra.mxu0 0.0
  %11380 = vmatprep.subr.mxu0 0.0
  %11381 = vmatpush1.msra.mxu0 0.0
  %11382 = vmatprep.subr.mxu0 0.0
  %11383 = vmatpush1.msra.mxu0 0.0
  %11384 = vmatprep.subr.mxu0 0.0
  %11385 = vmatpush1.msra.mxu0 0.0
  %11386 = vmatprep.subr.mxu0 0.0
  %11387 = vmatpush1.msra.mxu0 0.0
  %11388 = vmatprep.subr.mxu0 0.0
  %11389 = vmatpush1.msra.mxu0 0.0
  %11390 = vmatprep.subr.mxu0 0.0
  %11391 = vmatpush1.msra.mxu0 0.0
  %11392 = vmatprep.subr.mxu0 0.0
  %11393 = vmatpush1.msra.mxu0 0.0
  %11394 = vmatprep.subr.mxu0 0.0
  %11395 = vmatpush1.msra.mxu0 0.0
  %11396 = vmatprep.subr.mxu0 0.0
  %11397 = vmatpush1.msra.mxu0 0.0
  %11398 = vmatprep.subr.mxu0 0.0
  %11399 = vmatpush1.msra.mxu0 0.0
  %11400 = vmatprep.subr.mxu0 0.0
  %11401 = vmatpush1.msra.mxu0 0.0
  %11402 = vmatprep.subr.mxu0 0.0
  %11403 = vmatpush1.msra.mxu0 0.0
  %11404 = vmatprep.subr.mxu0 0.0
  %11405 = vmatpush1.msra.mxu0 0.0
  %11406 = vmatprep.subr.mxu0 0.0
  %11407 = vmatpush1.msra.mxu0 0.0
  %11408 = vmatprep.subr.mxu0 0.0
  %11409 = vmatpush1.msra.mxu0 0.0
  %11410 = vmatprep.mubr.f32.mxu0 0.0
  %11411 = vmatmul.mubr.f32.gmra.mrb[0].mxu0 %v10339
  %v11412 = vpop.f32.mrb[0].mxu0
  %v11413 = vadd.f32 0.0, %v11412
  %v11414 = vpop.f32.mrb[0].mxu0
  %11415 = vmatprep.mubr.f32.mxu0 0.0
  %11416 = vmatmul.mubr.f32.gmra.mrb[0].mxu0 %v10342
  %v11417 = vpop.f32.mrb[0].mxu0
  %v11418 = vadd.f32 0.0, %v11417
  %v11419 = vpop.f32.mrb[0].mxu0
  %11420 = vmatprep.mubr.f32.mxu0 0.0
  %11421 = vmatmul.mubr.f32.gmra.mrb[0].mxu0 %v10345
  %v11422 = vpop.f32.mrb[0].mxu0
  %v11423 = vadd.f32 0.0, %v11422
  %v11424 = vpop.f32.mrb[0].mxu0
  %11425 = vmatprep.mubr.f32.mxu0 0.0
  %11426 = vmatmul.mubr.f32.gmra.mrb[0].mxu0 %v10348
  %v11427 = vpop.f32.mrb[0].mxu0
  %v11428 = vadd.f32 0.0, %v11427
  %v11429 = vpop.f32.mrb[0].mxu0
  %11430 = vmatprep.mubr.f32.mxu0 0.0
  %11431 = vmatmul.mubr.f32.gmra.mrb[0].mxu0 %v10350
  %v11432 = vpop.f32.mrb[0].mxu0
  %v11433 = vadd.f32 0.0, %v11432
  %v11434 = vpop.f32.mrb[0].mxu0
  %11435 = vdwg.mxu0
  %11436 = vmatprep.subr.mxu0 0.0
  %11437 = vmatpush1.msra.mxu0 %v11158
  %11438 = vmatprep.subr.mxu0 0.0
  %11439 = vmatpush1.msra.mxu0 %v11159
  %11440 = vmatprep.subr.mxu0 0.0
  %11441 = vmatpush1.msra.mxu0 %v11160
  %11442 = vmatprep.subr.mxu0 0.0
  %11443 = vmatpush1.msra.mxu0 %v11161
  %11444 = vmatprep.subr.mxu0 0.0
  %11445 = vmatpush1.msra.mxu0 %v11162
  %11446 = vmatprep.subr.mxu0 0.0
  %11447 = vmatpush1.msra.mxu0 %v11163
  %11448 = vmatprep.subr.mxu0 0.0
  %11449 = vmatpush1.msra.mxu0 %v11164
  %11450 = vmatprep.subr.mxu0 0.0
  %11451 = vmatpush1.msra.mxu0 %v11165
  %11452 = vmatprep.subr.mxu0 0.0
  %11453 = vmatpush1.msra.mxu0 0.0
  %11454 = vmatprep.subr.mxu0 0.0
  %11455 = vmatpush1.msra.mxu0 0.0
  %11456 = vmatprep.subr.mxu0 0.0
  %11457 = vmatpush1.msra.mxu0 0.0
  %11458 = vmatprep.subr.mxu0 0.0
  %11459 = vmatpush1.msra.mxu0 0.0
  %11460 = vmatprep.subr.mxu0 0.0
  %11461 = vmatpush1.msra.mxu0 0.0
  %11462 = vmatprep.subr.mxu0 0.0
  %11463 = vmatpush1.msra.mxu0 0.0
  %11464 = vmatprep.subr.mxu0 0.0
  %11465 = vmatpush1.msra.mxu0 0.0
  %11466 = vmatprep.subr.mxu0 0.0
  %11467 = vmatpush1.msra.mxu0 0.0
  %11468 = vmatprep.subr.mxu0 0.0
  %11469 = vmatpush1.msra.mxu0 0.0
  %11470 = vmatprep.subr.mxu0 0.0
  %11471 = vmatpush1.msra.mxu0 0.0
  %11472 = vmatprep.subr.mxu0 0.0
  %11473 = vmatpush1.msra.mxu0 0.0
  %11474 = vmatprep.subr.mxu0 0.0
  %11475 = vmatpush1.msra.mxu0 0.0
  %11476 = vmatprep.subr.mxu0 0.0
  %11477 = vmatpush1.msra.mxu0 0.0
  %11478 = vmatprep.subr.mxu0 0.0
  %11479 = vmatpush1.msra.mxu0 0.0
  %11480 = vmatprep.subr.mxu0 0.0
  %11481 = vmatpush1.msra.mxu0 0.0
  %11482 = vmatprep.subr.mxu0 0.0
  %11483 = vmatpush1.msra.mxu0 0.0
  %11484 = vmatprep.subr.mxu0 0.0
  %11485 = vmatpush1.msra.mxu0 0.0
  %11486 = vmatprep.subr.mxu0 0.0
  %11487 = vmatpush1.msra.mxu0 0.0
  %11488 = vmatprep.subr.mxu0 0.0
  %11489 = vmatpush1.msra.mxu0 0.0
  %11490 = vmatprep.subr.mxu0 0.0
  %11491 = vmatpush1.msra.mxu0 0.0
  %11492 = vmatprep.subr.mxu0 0.0
  %11493 = vmatpush1.msra.mxu0 0.0
  %11494 = vmatprep.subr.mxu0 0.0
  %11495 = vmatpush1.msra.mxu0 0.0
  %11496 = vmatprep.subr.mxu0 0.0
  %11497 = vmatpush1.msra.mxu0 0.0
  %11498 = vmatprep.subr.mxu0 0.0
  %11499 = vmatpush1.msra.mxu0 0.0
  %11500 = vmatprep.mubr.f32.mxu0 0.0
  %11501 = vmatmul.mubr.f32.gmra.mrb[0].mxu0 %v10426
  %v11502 = vpop.f32.mrb[0].mxu0
  %v11503 = vadd.f32 0.0, %v11502
  %v11504 = vpop.f32.mrb[0].mxu0
  %11505 = vmatprep.mubr.f32.mxu0 0.0
  %11506 = vmatmul.mubr.f32.gmra.mrb[0].mxu0 %v10429
  %v11507 = vpop.f32.mrb[0].mxu0
  %v11508 = vadd.f32 0.0, %v11507
  %v11509 = vpop.f32.mrb[0].mxu0
  %11510 = vmatprep.mubr.f32.mxu0 0.0
  %11511 = vmatmul.mubr.f32.gmra.mrb[0].mxu0 %v10432
  %v11512 = vpop.f32.mrb[0].mxu0
  %v11513 = vadd.f32 0.0, %v11512
  %v11514 = vpop.f32.mrb[0].mxu0
  %11515 = vmatprep.mubr.f32.mxu0 0.0
  %11516 = vmatmul.mubr.f32.gmra.mrb[0].mxu0 %v10435
  %v11517 = vpop.f32.mrb[0].mxu0
  %v11518 = vadd.f32 0.0, %v11517
  %v11519 = vpop.f32.mrb[0].mxu0
  %11520 = vmatprep.mubr.f32.mxu0 0.0
  %11521 = vmatmul.mubr.f32.gmra.mrb[0].mxu0 %v10437
  %v11522 = vpop.f32.mrb[0].mxu0
  %v11523 = vadd.f32 0.0, %v11522
  %v11524 = vpop.f32.mrb[0].mxu0
  %11525 = vdwg.mxu0
  %11526 = vst.msk [vmem:[%s15] sm:$0xff] %vm77, %v11233
  %11527 = vst.msk [vmem:[%s15 + $0x8] sm:$0xff] %vm77, %v11238
  %11528 = vst.msk [vmem:[%s15 + $0x10] sm:$0xff] %vm77, %v11243
  %11529 = vst.msk [vmem:[%s15 + $0x18] sm:$0xff] %vm77, %v11248
  %11530 = vst.msk [vmem:[%s15 + $0x20] sm:$0x7] %vm90, %v11253
  %11531 = vst.msk [vmem:[%s15 + $0x28] sm:$0xff] %vm77, %v11323
  %11532 = vst.msk [vmem:[%s15 + $0x30] sm:$0xff] %vm77, %v11328
  %11533 = vst.msk [vmem:[%s15 + $0x38] sm:$0xff] %vm77, %v11333
  %11534 = vst.msk [vmem:[%s15 + $0x40] sm:$0xff] %vm77, %v11338
  %11535 = vst.msk [vmem:[%s15 + $0x48] sm:$0x7] %vm90, %v11343
  %11536 = vst.msk [vmem:[%s15 + $0x50] sm:$0xff] %vm77, %v11413
  %11537 = vst.msk [vmem:[%s15 + $0x58] sm:$0xff] %vm77, %v11418
  %11538 = vst.msk [vmem:[%s15 + $0x60] sm:$0xff] %vm77, %v11423
  %11539 = vst.msk [vmem:[%s15 + $0x68] sm:$0xff] %vm77, %v11428
  %11540 = vst.msk [vmem:[%s15 + $0x70] sm:$0x7] %vm90, %v11433
  %11541 = vst.msk [vmem:[%s15 + $0x78] sm:$0xff] %vm77, %v11503
  %11542 = vst.msk [vmem:[%s15 + $0x80] sm:$0xff] %vm77, %v11508
  %11543 = vst.msk [vmem:[%s15 + $0x88] sm:$0xff] %vm77, %v11513
  %11544 = vst.msk [vmem:[%s15 + $0x90] sm:$0xff] %vm77, %v11518
  %11545 = vst.msk [vmem:[%s15 + $0x98] sm:$0x7] %vm90, %v11523
  // Predicated region
  $region62: #{_transformer_forward.4} parent=0 // pred_check
    _
  $region63: #{_transformer_forward.4} parent=0 // pred_check_branch
    %11547 = sbr.rel (0) target = $region65
  $region64: #{_transformer_forward.4} parent=0 // pred_region
    _
  $region65: #{_transformer_forward.4} parent=0 // pred_fallthru
    _
  // Predicated region
  $region66: #{_transformer_forward.4} parent=0 // pred_check
    _
  $region67: #{_transformer_forward.4} parent=0 // pred_check_branch
    %11549 = sbr.rel (0) target = $region69
  $region68: #{_transformer_forward.4} parent=0 // pred_region
    _
  $region69: #{_transformer_forward.4} parent=0 // pred_fallthru
    _
  // Predicated region
  $region70: #{_transformer_forward.4} parent=0 // pred_check
    _
  $region71: #{_transformer_forward.4} parent=0 // pred_check_branch
    %11551 = sbr.rel (0) target = $region73
  $region72: #{_transformer_forward.4} parent=0 // pred_region
    _
  $region73: #{_transformer_forward.4} parent=0 // pred_fallthru
    _
  // Predicated region
  $region74: #{_transformer_forward.4} parent=0 // pred_check
    _
  $region75: #{_transformer_forward.4} parent=0 // pred_check_branch
    %11553 = sbr.rel (0) target = $region77
  $region76: #{_transformer_forward.4} parent=0 // pred_region
    _
  $region77: #{_transformer_forward.4} parent=0 // pred_fallthru
    _

</llo_original>
